<compile_context>
chip_gen: v7x
topology: tpu7x:2x2x1
jax: 0.10.0
libtpu: 0.0.40
codegen_flags: <defaults>
</compile_context>

<pallas_src>
import functools

import jax
import jax.numpy as jnp
from jax.experimental import pallas as pl
from jax.experimental.pallas import tpu as pltpu


# ----------------------------------------------------------------------------- kernel helpers

def _layer_norm(y, gamma, beta):
    # y: (M, D) f32; gamma/beta: (1, D) f32.  eps = 1e-5 (PyTorch default).
    # One-pass statistics: var = E[x^2] - E[x]^2 (independent lane reductions).
    mean = jnp.mean(y, axis=-1, keepdims=True)
    msq = jnp.mean(y * y, axis=-1, keepdims=True)
    var = jnp.maximum(msq - mean * mean, 0.0)
    return (y - mean) * jax.lax.rsqrt(var + 1e-5) * gamma + beta


def _mm(x_f32, w_bf16, b_f32):
    # bf16 MXU inputs, f32 accumulation, f32 bias add.
    return jnp.dot(x_f32.astype(jnp.bfloat16), w_bf16,
                   preferred_element_type=jnp.float32) + b_f32


def _split_heads(x2d, num_heads):
    # (S, D) -> (H, S, dh) via lane slices + a leading-axis stack (no lane reshape,
    # no transpose); result feeds leading-batch-dim einsums.
    s, d = x2d.shape
    dh = d // num_heads
    return jnp.stack([x2d[:, h * dh:(h + 1) * dh] for h in range(num_heads)], axis=0)


def _mha(qh, kh, vh, bias):
    # qh: (H, Sq, dh) bf16 (scale folded into weights); kh/vh: (H, Skv, dh) bf16.
    # Two batched MXU ops per attention (scores, P@V); softmax kept in f32.
    s = jnp.einsum('hqd,hkd->hqk', qh, kh, preferred_element_type=jnp.float32)
    if bias is not None:
        s = s + bias                               # additive causal bias (0 / -1e30)
    m = jnp.max(s, axis=-1, keepdims=True)
    p = jnp.exp(s - m)
    p = p * pl.reciprocal(jnp.sum(p, axis=-1, keepdims=True), approx=True)
    return jnp.einsum('hqk,hkd->hqd', p.astype(jnp.bfloat16), vh,
                      preferred_element_type=jnp.float32)        # (H, Sq, dh) f32


def _proj_heads(head_outs, wo_heads_bf16, bias_f32):
    # head_outs: list over batch of (H, S, dh) f32; wo_heads: (H, dh, D) bf16.
    # concat(heads) @ Wo  ==  sum_h head_h @ Wo_h  -> one batched matmul + sum,
    # no lane-concatenate.  Batch is folded back into the matmul M dimension.
    o_all = head_outs[0] if len(head_outs) == 1 else jnp.concatenate(head_outs, axis=1)
    prj = jnp.einsum('hmd,hde->hme', o_all.astype(jnp.bfloat16), wo_heads_bf16,
                     preferred_element_type=jnp.float32)          # (H, M, D)
    return jnp.sum(prj, axis=0) + bias_f32                        # (M, D)


# ----------------------------------------------------------------------------- fused kernel

def _decoder_kernel(tgt_ref, enc_ref, pe_ref,
                    wqkv_s_ref, bqkv_s_ref, wo_s_ref, bo_s_ref,
                    wq_c_ref, bq_c_ref, wkv_c_ref, bkv_c_ref, wo_c_ref, bo_c_ref,
                    w1_ref, b1_ref, w2_ref, b2_ref,
                    lng_ref, lnb_ref,
                    wf_ref, bf_ref,
                    out_ref,
                    *, num_layers, num_heads, block_batch):
    # One grid step == `block_batch` batch elements; activations are kept flattened
    # as (block_batch*S, D) so every projection runs with M = block_batch*S.
    m_tgt, d = tgt_ref.shape
    s_tgt = m_tgt // block_batch
    m_src = enc_ref.shape[0]
    s_src = m_src // block_batch

    # Positional encoding (pre-tiled by the wrapper to (block_batch*S, D)).
    x = tgt_ref[...] + pe_ref[...]                                 # (M, D) f32

    # Causal additive bias, computed once and pre-broadcast to all heads.
    row = jax.lax.broadcasted_iota(jnp.int32, (s_tgt, s_tgt), 0)
    col = jax.lax.broadcasted_iota(jnp.int32, (s_tgt, s_tgt), 1)
    causal_bias = jnp.where(row >= col, 0.0, -1e30).astype(jnp.float32)
    causal_bias = jnp.broadcast_to(causal_bias[None], (num_heads, s_tgt, s_tgt))

    # ---- hoisted, loop-invariant cross-attention K/V projection (all layers) ------
    enc_bf = enc_ref[...].astype(jnp.bfloat16)                     # cast once
    enc_kv = jnp.dot(enc_bf, wkv_c_ref[...],
                     preferred_element_type=jnp.float32) + bkv_c_ref[...]  # (M_src, 2*D*L)
    enc_k, enc_v = [], []
    for l in range(num_layers):
        base = l * 2 * d
        k_l, v_l = [], []
        for b in range(block_batch):
            rows = slice(b * s_src, (b + 1) * s_src)
            k_l.append(_split_heads(enc_kv[rows, base:base + d],
                                    num_heads).astype(jnp.bfloat16))
            v_l.append(_split_heads(enc_kv[rows, base + d:base + 2 * d],
                                    num_heads).astype(jnp.bfloat16))
        enc_k.append(k_l)
        enc_v.append(v_l)

    for l in range(num_layers):
        gam = lng_ref[l]                         # (3, D) f32
        bet = lnb_ref[l]

        # ---------------- causal self-attention (fused QKV projection) -------------
        qkv = _mm(x, wqkv_s_ref[l], bqkv_s_ref[l])                 # (M, 3D) f32
        outs = []
        for b in range(block_batch):
            rows = slice(b * s_tgt, (b + 1) * s_tgt)
            qh = _split_heads(qkv[rows, :d], num_heads).astype(jnp.bfloat16)
            kh = _split_heads(qkv[rows, d:2 * d], num_heads).astype(jnp.bfloat16)
            vh = _split_heads(qkv[rows, 2 * d:], num_heads).astype(jnp.bfloat16)
            outs.append(_mha(qh, kh, vh, causal_bias))
        a = _proj_heads(outs, wo_s_ref[l], bo_s_ref[l])            # (M, D)
        x = _layer_norm(x + a, gam[0:1], bet[0:1])

        # ---------------- cross-attention (K/V hoisted above) ----------------------
        qc = _mm(x, wq_c_ref[l], bq_c_ref[l])                      # (M, D), scale folded
        outs = []
        for b in range(block_batch):
            rows = slice(b * s_tgt, (b + 1) * s_tgt)
            qh = _split_heads(qc[rows], num_heads).astype(jnp.bfloat16)
            outs.append(_mha(qh, enc_k[l][b], enc_v[l][b], None))
        a = _proj_heads(outs, wo_c_ref[l], bo_c_ref[l])
        x = _layer_norm(x + a, gam[1:2], bet[1:2])

        # ---------------- position-wise feed-forward --------------------------------
        h = jnp.maximum(_mm(x, w1_ref[l], b1_ref[l]), 0.0)
        f = _mm(h, w2_ref[l], b2_ref[l])
        x = _layer_norm(x + f, gam[2:3], bet[2:3])

    # ---------------- final vocab projection (lane-dense, padded to 128) ------------
    out_ref[...] = _mm(x, wf_ref[...], bf_ref[...]).astype(out_ref.dtype)


# ----------------------------------------------------------------------------- wrapper

@functools.partial(jax.jit, static_argnames=("num_heads", "vocab", "batch_blocks"))
def decoder_forward(target, encoder_output, params, *, num_heads, vocab,
                    batch_blocks=1):
    # batch_blocks=1 (default): one grid step, batch folded into matmul M (best on the
    # single-TensorCore v5e/v6e).  On v7x use batch_blocks=2 so the "parallel" grid
    # axis feeds both TensorCores.
    B, S, D = target.shape
    S_src = encoder_output.shape[1]
    L = params["wqkv_s"].shape[0]
    Vpad = params["wf"].shape[1]
    assert B % batch_blocks == 0
    bb = B // batch_blocks                       # batch elements per grid step

    # Free, wrapper-side layout prep: fold batch into the row (M) dimension.
    tgt2d = target.reshape(B * S, D)
    enc2d = encoder_output.reshape(B * S_src, D)
    pe2d = jnp.tile(params["pe"][:S], (bb, 1))   # (bb*S, D) -> one VPU add in-kernel

    kern = functools.partial(_decoder_kernel, num_layers=L, num_heads=num_heads,
                             block_batch=bb)

    inputs = (tgt2d, enc2d, pe2d,
              params["wqkv_s"], params["bqkv_s"], params["wo_s"], params["bo_s"],
              params["wq_c"], params["bq_c"], params["wkv_c"], params["bkv_c"],
              params["wo_c"], params["bo_c"],
              params["w1"], params["b1"], params["w2"], params["b2"],
              params["lng"], params["lnb"],
              params["wf"], params["bf"])

    def full_block(a):
        # Whole-array block, constant index map -> not re-DMA'd between grid steps.
        return pl.BlockSpec(a.shape, lambda i, _nd=a.ndim: (0,) * _nd)

    in_specs = [pl.BlockSpec((bb * S, D), lambda i: (i, 0)),
                pl.BlockSpec((bb * S_src, D), lambda i: (i, 0))]
    in_specs += [full_block(a) for a in inputs[2:]]

    out2d = pl.pallas_call(
        kern,
        out_shape=jax.ShapeDtypeStruct((B * S, Vpad), jnp.float32),
        grid=(batch_blocks,),
        in_specs=in_specs,
        out_specs=pl.BlockSpec((bb * S, Vpad), lambda i: (i, 0)),
        compiler_params=pltpu.CompilerParams(dimension_semantics=("parallel",)),
    )(*inputs)

    return out2d.reshape(B, S, Vpad)[:, :, :vocab]


# ----------------------------------------------------------------------------- params

def sinusoidal_pe(max_len, d_model):
    pos = jnp.arange(max_len, dtype=jnp.float32)[:, None]
    i = jnp.arange(0, d_model, 2, dtype=jnp.float32)
    div = jnp.exp(-jnp.log(10000.0) * i / d_model)
    pe = jnp.zeros((max_len, d_model), jnp.float32)
    pe = pe.at[:, 0::2].set(jnp.sin(pos * div))
    pe = pe.at[:, 1::2].set(jnp.cos(pos * div))
    return pe


def _round_up(x, m):
    return ((x + m - 1) // m) * m


def init_params(key, num_layers, d_model, num_heads, d_ff, vocab, max_seq):
    L, D, F, H = num_layers, d_model, d_ff, num_heads
    dh = D // H
    scale = 1.0 / float(dh) ** 0.5
    Vpad = _round_up(vocab, 128)
    ks = jax.random.split(key, 8)

    def rnd(k, shape):
        return jax.random.normal(k, shape, jnp.float32) * 0.02

    # Self-attention fused QKV; fold 1/sqrt(dh) into the Q columns (in f32, pre-cast).
    wqkv = rnd(ks[0], (L, D, 3 * D))
    wqkv = wqkv.at[:, :, :D].multiply(scale)
    # Cross-attention Q: scale folded as well (biases are zero so no bias scaling).
    wq_c = rnd(ks[2], (L, D, D)) * scale
    # Cross-attention K/V for ALL layers fused along the output dim (layer-major
    # columns) -> the encoder output is projected once, outside the layer loop.
    wkv_c = rnd(ks[3], (D, 2 * D * L))
    # Output projections stored head-split (H, dh, D) so the per-head attention
    # output is projected with one batched matmul + sum (no lane-concatenate).
    wo_s = rnd(ks[1], (L, D, D)).reshape(L, H, dh, D)
    wo_c = rnd(ks[4], (L, D, D)).reshape(L, H, dh, D)

    # Final vocab projection padded to a lane-dense 128-multiple.
    wf = rnd(ks[7], (D, vocab))
    wf = jnp.pad(wf, ((0, 0), (0, Vpad - vocab)))

    bf16 = lambda a: a.astype(jnp.bfloat16)      # matmul weights stored in bf16
    return dict(
        wqkv_s=bf16(wqkv), bqkv_s=jnp.zeros((L, 1, 3 * D), jnp.float32),
        wo_s=bf16(wo_s),   bo_s=jnp.zeros((L, 1, D), jnp.float32),
        wq_c=bf16(wq_c),   bq_c=jnp.zeros((L, 1, D), jnp.float32),
        wkv_c=bf16(wkv_c), bkv_c=jnp.zeros((1, 2 * D * L), jnp.float32),
        wo_c=bf16(wo_c),   bo_c=jnp.zeros((L, 1, D), jnp.float32),
        w1=bf16(rnd(ks[5], (L, D, F))), b1=jnp.zeros((L, 1, F), jnp.float32),
        w2=bf16(rnd(ks[6], (L, F, D))), b2=jnp.zeros((L, 1, D), jnp.float32),
        lng=jnp.ones((L, 3, D), jnp.float32), lnb=jnp.zeros((L, 3, D), jnp.float32),
        wf=bf16(wf), bf=jnp.zeros((1, Vpad), jnp.float32),
        pe=sinusoidal_pe(max_seq, D),
    )


# ----------------------------------------------------------------------------- main

if __name__ == "__main__":
    num_layers = 2
    d_model = 32
    num_heads = 4
    d_ff = 64
    target_vocab_size = 48
    max_seq_length = 16
    B, S_tgt, S_src = 2, 8, 8

    key = jax.random.PRNGKey(0)
    k_tgt, k_enc, k_par = jax.random.split(key, 3)
    target = jax.random.normal(k_tgt, (B, S_tgt, d_model), jnp.float32)
    encoder_output = jax.random.normal(k_enc, (B, S_src, d_model), jnp.float32)

    params = init_params(k_par, num_layers, d_model, num_heads, d_ff,
                         target_vocab_size, max_seq_length)

    out = decoder_forward(target, encoder_output, params,
                          num_heads=num_heads, vocab=target_vocab_size)
    out = jax.block_until_ready(out)

    assert out.shape == (B, S_tgt, target_vocab_size), out.shape
    assert bool(jnp.all(jnp.isfinite(out)))
    print("KERNEL_OK")
</pallas_src>

<mosaic_0001>
module attributes {stable_mosaic.version = 11 : i64} {
  func.func @_decoder_kernel(%arg0: i32, %arg1: memref<16x32xf32, #tpu.memory_space<vmem>>, %arg2: memref<16x32xf32, #tpu.memory_space<vmem>>, %arg3: memref<16x32xf32, #tpu.memory_space<vmem>>, %arg4: memref<2x32x96xbf16, #tpu.memory_space<vmem>>, %arg5: memref<2x1x96xf32, #tpu.memory_space<vmem>>, %arg6: memref<2x4x8x32xbf16, #tpu.memory_space<vmem>>, %arg7: memref<2x1x32xf32, #tpu.memory_space<vmem>>, %arg8: memref<2x32x32xbf16, #tpu.memory_space<vmem>>, %arg9: memref<2x1x32xf32, #tpu.memory_space<vmem>>, %arg10: memref<32x128xbf16, #tpu.memory_space<vmem>>, %arg11: memref<1x128xf32, #tpu.memory_space<vmem>>, %arg12: memref<2x4x8x32xbf16, #tpu.memory_space<vmem>>, %arg13: memref<2x1x32xf32, #tpu.memory_space<vmem>>, %arg14: memref<2x32x64xbf16, #tpu.memory_space<vmem>>, %arg15: memref<2x1x64xf32, #tpu.memory_space<vmem>>, %arg16: memref<2x64x32xbf16, #tpu.memory_space<vmem>>, %arg17: memref<2x1x32xf32, #tpu.memory_space<vmem>>, %arg18: memref<2x3x32xf32, #tpu.memory_space<vmem>>, %arg19: memref<2x3x32xf32, #tpu.memory_space<vmem>>, %arg20: memref<32x128xbf16, #tpu.memory_space<vmem>>, %arg21: memref<1x128xf32, #tpu.memory_space<vmem>>, %arg22: memref<16x128xf32, #tpu.memory_space<vmem>>) attributes {dimension_semantics = [#tpu.dimension_semantics<parallel>], iteration_bounds = array<i64: 1>, scalar_prefetch = 0 : i64, scratch_operands = 0 : i64, tpu.core_type = #tpu.core_type<tc>, window_params = [{transform_indices = @transform_0, window_bounds = array<i64: 16, 32>}, {transform_indices = @transform_1, window_bounds = array<i64: 16, 32>}, {pipeline_mode = #tpu.pipeline_mode<synchronous>, transform_indices = @transform_2, window_bounds = array<i64: 16, 32>}, {pipeline_mode = #tpu.pipeline_mode<synchronous>, transform_indices = @transform_3, window_bounds = array<i64: 2, 32, 96>}, {pipeline_mode = #tpu.pipeline_mode<synchronous>, transform_indices = @transform_4, window_bounds = array<i64: 2, 1, 96>}, {pipeline_mode = #tpu.pipeline_mode<synchronous>, transform_indices = @transform_5, window_bounds = array<i64: 2, 4, 8, 32>}, {pipeline_mode = #tpu.pipeline_mode<synchronous>, transform_indices = @transform_6, window_bounds = array<i64: 2, 1, 32>}, {pipeline_mode = #tpu.pipeline_mode<synchronous>, transform_indices = @transform_7, window_bounds = array<i64: 2, 32, 32>}, {pipeline_mode = #tpu.pipeline_mode<synchronous>, transform_indices = @transform_8, window_bounds = array<i64: 2, 1, 32>}, {pipeline_mode = #tpu.pipeline_mode<synchronous>, transform_indices = @transform_9, window_bounds = array<i64: 32, 128>}, {pipeline_mode = #tpu.pipeline_mode<synchronous>, transform_indices = @transform_10, window_bounds = array<i64: 1, 128>}, {pipeline_mode = #tpu.pipeline_mode<synchronous>, transform_indices = @transform_11, window_bounds = array<i64: 2, 4, 8, 32>}, {pipeline_mode = #tpu.pipeline_mode<synchronous>, transform_indices = @transform_12, window_bounds = array<i64: 2, 1, 32>}, {pipeline_mode = #tpu.pipeline_mode<synchronous>, transform_indices = @transform_13, window_bounds = array<i64: 2, 32, 64>}, {pipeline_mode = #tpu.pipeline_mode<synchronous>, transform_indices = @transform_14, window_bounds = array<i64: 2, 1, 64>}, {pipeline_mode = #tpu.pipeline_mode<synchronous>, transform_indices = @transform_15, window_bounds = array<i64: 2, 64, 32>}, {pipeline_mode = #tpu.pipeline_mode<synchronous>, transform_indices = @transform_16, window_bounds = array<i64: 2, 1, 32>}, {pipeline_mode = #tpu.pipeline_mode<synchronous>, transform_indices = @transform_17, window_bounds = array<i64: 2, 3, 32>}, {pipeline_mode = #tpu.pipeline_mode<synchronous>, transform_indices = @transform_18, window_bounds = array<i64: 2, 3, 32>}, {pipeline_mode = #tpu.pipeline_mode<synchronous>, transform_indices = @transform_19, window_bounds = array<i64: 32, 128>}, {pipeline_mode = #tpu.pipeline_mode<synchronous>, transform_indices = @transform_20, window_bounds = array<i64: 1, 128>}, {transform_indices = @transform_21, window_bounds = array<i64: 16, 128>}]} {
    %c0 = arith.constant 0 : index
    %c0_0 = arith.constant 0 : index
    %0 = vector.load %arg1[%c0, %c0_0] : memref<16x32xf32, #tpu.memory_space<vmem>>, vector<16x32xf32>
    %c0_1 = arith.constant 0 : index
    %c0_2 = arith.constant 0 : index
    %1 = vector.load %arg3[%c0_1, %c0_2] : memref<16x32xf32, #tpu.memory_space<vmem>>, vector<16x32xf32>
    %2 = arith.addf %0, %1 : vector<16x32xf32>
    %3 = tpu.iota {dimensions = array<i32: 0>} : vector<8x8xi32>
    %4 = tpu.iota {dimensions = array<i32: 1>} : vector<8x8xi32>
    %5 = arith.cmpi sge, %3, %4 : vector<8x8xi32>
    %cst = arith.constant 0.000000e+00 : f32
    %cst_3 = arith.constant -1.000000e+30 : f32
    %6 = vector.broadcast %cst : f32 to vector<8x8xf32>
    %7 = vector.broadcast %cst_3 : f32 to vector<8x8xf32>
    %8 = arith.select %5, %6, %7 : vector<8x8xi1>, vector<8x8xf32>
    %9 = vector.shape_cast %8 : vector<8x8xf32> to vector<1x8x8xf32>
    %10 = vector.shape_cast %9 : vector<1x8x8xf32> to vector<1x8x8xf32>
    %11 = vector.broadcast %10 : vector<1x8x8xf32> to vector<4x8x8xf32>
    %c0_4 = arith.constant 0 : index
    %c0_5 = arith.constant 0 : index
    %12 = vector.load %arg2[%c0_4, %c0_5] : memref<16x32xf32, #tpu.memory_space<vmem>>, vector<16x32xf32>
    %13 = arith.truncf %12 : vector<16x32xf32> to vector<16x32xbf16>
    %c0_6 = arith.constant 0 : index
    %c0_7 = arith.constant 0 : index
    %14 = vector.load %arg10[%c0_6, %c0_7] : memref<32x128xbf16, #tpu.memory_space<vmem>>, vector<32x128xbf16>
    %cst_8 = arith.constant dense<0.000000e+00> : vector<16x128xf32>
    %15 = tpu.matmul %13, %14, %cst_8 {dimension_numbers = #tpu.dot_dimension_numbers<[1], [0], [0], [1], [0, 0, 1, 1], [], []>} : vector<16x32xbf16>, vector<32x128xbf16>, vector<16x128xf32> -> vector<16x128xf32>
    %c0_9 = arith.constant 0 : index
    %c0_10 = arith.constant 0 : index
    %16 = vector.load %arg11[%c0_9, %c0_10] : memref<1x128xf32, #tpu.memory_space<vmem>>, vector<1x128xf32>
    %17 = vector.broadcast %16 : vector<1x128xf32> to vector<16x128xf32>
    %18 = arith.addf %15, %17 : vector<16x128xf32>
    %19 = vector.extract_strided_slice %18 {offsets = [0, 0], sizes = [8, 32], strides = [1, 1]} : vector<16x128xf32> to vector<8x32xf32>
    %20 = vector.extract_strided_slice %19 {offsets = [0, 0], sizes = [8, 8], strides = [1, 1]} : vector<8x32xf32> to vector<8x8xf32>
    %21 = vector.extract_strided_slice %19 {offsets = [0, 8], sizes = [8, 8], strides = [1, 1]} : vector<8x32xf32> to vector<8x8xf32>
    %22 = vector.extract_strided_slice %19 {offsets = [0, 16], sizes = [8, 8], strides = [1, 1]} : vector<8x32xf32> to vector<8x8xf32>
    %23 = vector.extract_strided_slice %19 {offsets = [0, 24], sizes = [8, 8], strides = [1, 1]} : vector<8x32xf32> to vector<8x8xf32>
    %24 = vector.shape_cast %20 : vector<8x8xf32> to vector<1x8x8xf32>
    %25 = vector.shape_cast %21 : vector<8x8xf32> to vector<1x8x8xf32>
    %26 = vector.shape_cast %22 : vector<8x8xf32> to vector<1x8x8xf32>
    %27 = vector.shape_cast %23 : vector<8x8xf32> to vector<1x8x8xf32>
    %28 = tpu.concatenate %24, %25, %26, %27 in 0 : vector<1x8x8xf32>, vector<1x8x8xf32>, vector<1x8x8xf32>, vector<1x8x8xf32> -> vector<4x8x8xf32>
    %29 = arith.truncf %28 : vector<4x8x8xf32> to vector<4x8x8xbf16>
    %30 = vector.extract_strided_slice %18 {offsets = [0, 32], sizes = [8, 32], strides = [1, 1]} : vector<16x128xf32> to vector<8x32xf32>
    %31 = vector.extract_strided_slice %30 {offsets = [0, 0], sizes = [8, 8], strides = [1, 1]} : vector<8x32xf32> to vector<8x8xf32>
    %32 = vector.extract_strided_slice %30 {offsets = [0, 8], sizes = [8, 8], strides = [1, 1]} : vector<8x32xf32> to vector<8x8xf32>
    %33 = vector.extract_strided_slice %30 {offsets = [0, 16], sizes = [8, 8], strides = [1, 1]} : vector<8x32xf32> to vector<8x8xf32>
    %34 = vector.extract_strided_slice %30 {offsets = [0, 24], sizes = [8, 8], strides = [1, 1]} : vector<8x32xf32> to vector<8x8xf32>
    %35 = vector.shape_cast %31 : vector<8x8xf32> to vector<1x8x8xf32>
    %36 = vector.shape_cast %32 : vector<8x8xf32> to vector<1x8x8xf32>
    %37 = vector.shape_cast %33 : vector<8x8xf32> to vector<1x8x8xf32>
    %38 = vector.shape_cast %34 : vector<8x8xf32> to vector<1x8x8xf32>
    %39 = tpu.concatenate %35, %36, %37, %38 in 0 : vector<1x8x8xf32>, vector<1x8x8xf32>, vector<1x8x8xf32>, vector<1x8x8xf32> -> vector<4x8x8xf32>
    %40 = arith.truncf %39 : vector<4x8x8xf32> to vector<4x8x8xbf16>
    %41 = vector.extract_strided_slice %18 {offsets = [8, 0], sizes = [8, 32], strides = [1, 1]} : vector<16x128xf32> to vector<8x32xf32>
    %42 = vector.extract_strided_slice %41 {offsets = [0, 0], sizes = [8, 8], strides = [1, 1]} : vector<8x32xf32> to vector<8x8xf32>
    %43 = vector.extract_strided_slice %41 {offsets = [0, 8], sizes = [8, 8], strides = [1, 1]} : vector<8x32xf32> to vector<8x8xf32>
    %44 = vector.extract_strided_slice %41 {offsets = [0, 16], sizes = [8, 8], strides = [1, 1]} : vector<8x32xf32> to vector<8x8xf32>
    %45 = vector.extract_strided_slice %41 {offsets = [0, 24], sizes = [8, 8], strides = [1, 1]} : vector<8x32xf32> to vector<8x8xf32>
    %46 = vector.shape_cast %42 : vector<8x8xf32> to vector<1x8x8xf32>
    %47 = vector.shape_cast %43 : vector<8x8xf32> to vector<1x8x8xf32>
    %48 = vector.shape_cast %44 : vector<8x8xf32> to vector<1x8x8xf32>
    %49 = vector.shape_cast %45 : vector<8x8xf32> to vector<1x8x8xf32>
    %50 = tpu.concatenate %46, %47, %48, %49 in 0 : vector<1x8x8xf32>, vector<1x8x8xf32>, vector<1x8x8xf32>, vector<1x8x8xf32> -> vector<4x8x8xf32>
    %51 = arith.truncf %50 : vector<4x8x8xf32> to vector<4x8x8xbf16>
    %52 = vector.extract_strided_slice %18 {offsets = [8, 32], sizes = [8, 32], strides = [1, 1]} : vector<16x128xf32> to vector<8x32xf32>
    %53 = vector.extract_strided_slice %52 {offsets = [0, 0], sizes = [8, 8], strides = [1, 1]} : vector<8x32xf32> to vector<8x8xf32>
    %54 = vector.extract_strided_slice %52 {offsets = [0, 8], sizes = [8, 8], strides = [1, 1]} : vector<8x32xf32> to vector<8x8xf32>
    %55 = vector.extract_strided_slice %52 {offsets = [0, 16], sizes = [8, 8], strides = [1, 1]} : vector<8x32xf32> to vector<8x8xf32>
    %56 = vector.extract_strided_slice %52 {offsets = [0, 24], sizes = [8, 8], strides = [1, 1]} : vector<8x32xf32> to vector<8x8xf32>
    %57 = vector.shape_cast %53 : vector<8x8xf32> to vector<1x8x8xf32>
    %58 = vector.shape_cast %54 : vector<8x8xf32> to vector<1x8x8xf32>
    %59 = vector.shape_cast %55 : vector<8x8xf32> to vector<1x8x8xf32>
    %60 = vector.shape_cast %56 : vector<8x8xf32> to vector<1x8x8xf32>
    %61 = tpu.concatenate %57, %58, %59, %60 in 0 : vector<1x8x8xf32>, vector<1x8x8xf32>, vector<1x8x8xf32>, vector<1x8x8xf32> -> vector<4x8x8xf32>
    %62 = arith.truncf %61 : vector<4x8x8xf32> to vector<4x8x8xbf16>
    %63 = vector.extract_strided_slice %18 {offsets = [0, 64], sizes = [8, 32], strides = [1, 1]} : vector<16x128xf32> to vector<8x32xf32>
    %64 = vector.extract_strided_slice %63 {offsets = [0, 0], sizes = [8, 8], strides = [1, 1]} : vector<8x32xf32> to vector<8x8xf32>
    %65 = vector.extract_strided_slice %63 {offsets = [0, 8], sizes = [8, 8], strides = [1, 1]} : vector<8x32xf32> to vector<8x8xf32>
    %66 = vector.extract_strided_slice %63 {offsets = [0, 16], sizes = [8, 8], strides = [1, 1]} : vector<8x32xf32> to vector<8x8xf32>
    %67 = vector.extract_strided_slice %63 {offsets = [0, 24], sizes = [8, 8], strides = [1, 1]} : vector<8x32xf32> to vector<8x8xf32>
    %68 = vector.shape_cast %64 : vector<8x8xf32> to vector<1x8x8xf32>
    %69 = vector.shape_cast %65 : vector<8x8xf32> to vector<1x8x8xf32>
    %70 = vector.shape_cast %66 : vector<8x8xf32> to vector<1x8x8xf32>
    %71 = vector.shape_cast %67 : vector<8x8xf32> to vector<1x8x8xf32>
    %72 = tpu.concatenate %68, %69, %70, %71 in 0 : vector<1x8x8xf32>, vector<1x8x8xf32>, vector<1x8x8xf32>, vector<1x8x8xf32> -> vector<4x8x8xf32>
    %73 = arith.truncf %72 : vector<4x8x8xf32> to vector<4x8x8xbf16>
    %74 = vector.extract_strided_slice %18 {offsets = [0, 96], sizes = [8, 32], strides = [1, 1]} : vector<16x128xf32> to vector<8x32xf32>
    %75 = vector.extract_strided_slice %74 {offsets = [0, 0], sizes = [8, 8], strides = [1, 1]} : vector<8x32xf32> to vector<8x8xf32>
    %76 = vector.extract_strided_slice %74 {offsets = [0, 8], sizes = [8, 8], strides = [1, 1]} : vector<8x32xf32> to vector<8x8xf32>
    %77 = vector.extract_strided_slice %74 {offsets = [0, 16], sizes = [8, 8], strides = [1, 1]} : vector<8x32xf32> to vector<8x8xf32>
    %78 = vector.extract_strided_slice %74 {offsets = [0, 24], sizes = [8, 8], strides = [1, 1]} : vector<8x32xf32> to vector<8x8xf32>
    %79 = vector.shape_cast %75 : vector<8x8xf32> to vector<1x8x8xf32>
    %80 = vector.shape_cast %76 : vector<8x8xf32> to vector<1x8x8xf32>
    %81 = vector.shape_cast %77 : vector<8x8xf32> to vector<1x8x8xf32>
    %82 = vector.shape_cast %78 : vector<8x8xf32> to vector<1x8x8xf32>
    %83 = tpu.concatenate %79, %80, %81, %82 in 0 : vector<1x8x8xf32>, vector<1x8x8xf32>, vector<1x8x8xf32>, vector<1x8x8xf32> -> vector<4x8x8xf32>
    %84 = arith.truncf %83 : vector<4x8x8xf32> to vector<4x8x8xbf16>
    %85 = vector.extract_strided_slice %18 {offsets = [8, 64], sizes = [8, 32], strides = [1, 1]} : vector<16x128xf32> to vector<8x32xf32>
    %86 = vector.extract_strided_slice %85 {offsets = [0, 0], sizes = [8, 8], strides = [1, 1]} : vector<8x32xf32> to vector<8x8xf32>
    %87 = vector.extract_strided_slice %85 {offsets = [0, 8], sizes = [8, 8], strides = [1, 1]} : vector<8x32xf32> to vector<8x8xf32>
    %88 = vector.extract_strided_slice %85 {offsets = [0, 16], sizes = [8, 8], strides = [1, 1]} : vector<8x32xf32> to vector<8x8xf32>
    %89 = vector.extract_strided_slice %85 {offsets = [0, 24], sizes = [8, 8], strides = [1, 1]} : vector<8x32xf32> to vector<8x8xf32>
    %90 = vector.shape_cast %86 : vector<8x8xf32> to vector<1x8x8xf32>
    %91 = vector.shape_cast %87 : vector<8x8xf32> to vector<1x8x8xf32>
    %92 = vector.shape_cast %88 : vector<8x8xf32> to vector<1x8x8xf32>
    %93 = vector.shape_cast %89 : vector<8x8xf32> to vector<1x8x8xf32>
    %94 = tpu.concatenate %90, %91, %92, %93 in 0 : vector<1x8x8xf32>, vector<1x8x8xf32>, vector<1x8x8xf32>, vector<1x8x8xf32> -> vector<4x8x8xf32>
    %95 = arith.truncf %94 : vector<4x8x8xf32> to vector<4x8x8xbf16>
    %96 = vector.extract_strided_slice %18 {offsets = [8, 96], sizes = [8, 32], strides = [1, 1]} : vector<16x128xf32> to vector<8x32xf32>
    %97 = vector.extract_strided_slice %96 {offsets = [0, 0], sizes = [8, 8], strides = [1, 1]} : vector<8x32xf32> to vector<8x8xf32>
    %98 = vector.extract_strided_slice %96 {offsets = [0, 8], sizes = [8, 8], strides = [1, 1]} : vector<8x32xf32> to vector<8x8xf32>
    %99 = vector.extract_strided_slice %96 {offsets = [0, 16], sizes = [8, 8], strides = [1, 1]} : vector<8x32xf32> to vector<8x8xf32>
    %100 = vector.extract_strided_slice %96 {offsets = [0, 24], sizes = [8, 8], strides = [1, 1]} : vector<8x32xf32> to vector<8x8xf32>
    %101 = vector.shape_cast %97 : vector<8x8xf32> to vector<1x8x8xf32>
    %102 = vector.shape_cast %98 : vector<8x8xf32> to vector<1x8x8xf32>
    %103 = vector.shape_cast %99 : vector<8x8xf32> to vector<1x8x8xf32>
    %104 = vector.shape_cast %100 : vector<8x8xf32> to vector<1x8x8xf32>
    %105 = tpu.concatenate %101, %102, %103, %104 in 0 : vector<1x8x8xf32>, vector<1x8x8xf32>, vector<1x8x8xf32>, vector<1x8x8xf32> -> vector<4x8x8xf32>
    %106 = arith.truncf %105 : vector<4x8x8xf32> to vector<4x8x8xbf16>
    %c0_11 = arith.constant 0 : index
    %c0_12 = arith.constant 0 : index
    %c0_13 = arith.constant 0 : index
    %107 = vector.load %arg18[%c0_11, %c0_12, %c0_13] : memref<2x3x32xf32, #tpu.memory_space<vmem>>, vector<1x3x32xf32>
    %108 = vector.shape_cast %107 : vector<1x3x32xf32> to vector<3x32xf32>
    %c0_14 = arith.constant 0 : index
    %c0_15 = arith.constant 0 : index
    %c0_16 = arith.constant 0 : index
    %109 = vector.load %arg19[%c0_14, %c0_15, %c0_16] : memref<2x3x32xf32, #tpu.memory_space<vmem>>, vector<1x3x32xf32>
    %110 = vector.shape_cast %109 : vector<1x3x32xf32> to vector<3x32xf32>
    %c0_17 = arith.constant 0 : index
    %c0_18 = arith.constant 0 : index
    %c0_19 = arith.constant 0 : index
    %111 = vector.load %arg4[%c0_17, %c0_18, %c0_19] : memref<2x32x96xbf16, #tpu.memory_space<vmem>>, vector<1x32x96xbf16>
    %112 = vector.shape_cast %111 : vector<1x32x96xbf16> to vector<32x96xbf16>
    %c0_20 = arith.constant 0 : index
    %c0_21 = arith.constant 0 : index
    %c0_22 = arith.constant 0 : index
    %113 = vector.load %arg5[%c0_20, %c0_21, %c0_22] : memref<2x1x96xf32, #tpu.memory_space<vmem>>, vector<1x1x96xf32>
    %114 = vector.shape_cast %113 : vector<1x1x96xf32> to vector<1x96xf32>
    %115 = arith.truncf %2 : vector<16x32xf32> to vector<16x32xbf16>
    %cst_23 = arith.constant dense<0.000000e+00> : vector<16x96xf32>
    %116 = tpu.matmul %115, %112, %cst_23 {dimension_numbers = #tpu.dot_dimension_numbers<[1], [0], [0], [1], [0, 0, 1, 1], [], []>} : vector<16x32xbf16>, vector<32x96xbf16>, vector<16x96xf32> -> vector<16x96xf32>
    %117 = vector.broadcast %114 : vector<1x96xf32> to vector<16x96xf32>
    %118 = arith.addf %116, %117 : vector<16x96xf32>
    %119 = vector.extract_strided_slice %118 {offsets = [0, 0], sizes = [8, 32], strides = [1, 1]} : vector<16x96xf32> to vector<8x32xf32>
    %120 = vector.extract_strided_slice %119 {offsets = [0, 0], sizes = [8, 8], strides = [1, 1]} : vector<8x32xf32> to vector<8x8xf32>
    %121 = vector.extract_strided_slice %119 {offsets = [0, 8], sizes = [8, 8], strides = [1, 1]} : vector<8x32xf32> to vector<8x8xf32>
    %122 = vector.extract_strided_slice %119 {offsets = [0, 16], sizes = [8, 8], strides = [1, 1]} : vector<8x32xf32> to vector<8x8xf32>
    %123 = vector.extract_strided_slice %119 {offsets = [0, 24], sizes = [8, 8], strides = [1, 1]} : vector<8x32xf32> to vector<8x8xf32>
    %124 = vector.shape_cast %120 : vector<8x8xf32> to vector<1x8x8xf32>
    %125 = vector.shape_cast %121 : vector<8x8xf32> to vector<1x8x8xf32>
    %126 = vector.shape_cast %122 : vector<8x8xf32> to vector<1x8x8xf32>
    %127 = vector.shape_cast %123 : vector<8x8xf32> to vector<1x8x8xf32>
    %128 = tpu.concatenate %124, %125, %126, %127 in 0 : vector<1x8x8xf32>, vector<1x8x8xf32>, vector<1x8x8xf32>, vector<1x8x8xf32> -> vector<4x8x8xf32>
    %129 = arith.truncf %128 : vector<4x8x8xf32> to vector<4x8x8xbf16>
    %130 = vector.extract_strided_slice %118 {offsets = [0, 32], sizes = [8, 32], strides = [1, 1]} : vector<16x96xf32> to vector<8x32xf32>
    %131 = vector.extract_strided_slice %130 {offsets = [0, 0], sizes = [8, 8], strides = [1, 1]} : vector<8x32xf32> to vector<8x8xf32>
    %132 = vector.extract_strided_slice %130 {offsets = [0, 8], sizes = [8, 8], strides = [1, 1]} : vector<8x32xf32> to vector<8x8xf32>
    %133 = vector.extract_strided_slice %130 {offsets = [0, 16], sizes = [8, 8], strides = [1, 1]} : vector<8x32xf32> to vector<8x8xf32>
    %134 = vector.extract_strided_slice %130 {offsets = [0, 24], sizes = [8, 8], strides = [1, 1]} : vector<8x32xf32> to vector<8x8xf32>
    %135 = vector.shape_cast %131 : vector<8x8xf32> to vector<1x8x8xf32>
    %136 = vector.shape_cast %132 : vector<8x8xf32> to vector<1x8x8xf32>
    %137 = vector.shape_cast %133 : vector<8x8xf32> to vector<1x8x8xf32>
    %138 = vector.shape_cast %134 : vector<8x8xf32> to vector<1x8x8xf32>
    %139 = tpu.concatenate %135, %136, %137, %138 in 0 : vector<1x8x8xf32>, vector<1x8x8xf32>, vector<1x8x8xf32>, vector<1x8x8xf32> -> vector<4x8x8xf32>
    %140 = arith.truncf %139 : vector<4x8x8xf32> to vector<4x8x8xbf16>
    %141 = vector.extract_strided_slice %118 {offsets = [0, 64], sizes = [8, 32], strides = [1, 1]} : vector<16x96xf32> to vector<8x32xf32>
    %142 = vector.extract_strided_slice %141 {offsets = [0, 0], sizes = [8, 8], strides = [1, 1]} : vector<8x32xf32> to vector<8x8xf32>
    %143 = vector.extract_strided_slice %141 {offsets = [0, 8], sizes = [8, 8], strides = [1, 1]} : vector<8x32xf32> to vector<8x8xf32>
    %144 = vector.extract_strided_slice %141 {offsets = [0, 16], sizes = [8, 8], strides = [1, 1]} : vector<8x32xf32> to vector<8x8xf32>
    %145 = vector.extract_strided_slice %141 {offsets = [0, 24], sizes = [8, 8], strides = [1, 1]} : vector<8x32xf32> to vector<8x8xf32>
    %146 = vector.shape_cast %142 : vector<8x8xf32> to vector<1x8x8xf32>
    %147 = vector.shape_cast %143 : vector<8x8xf32> to vector<1x8x8xf32>
    %148 = vector.shape_cast %144 : vector<8x8xf32> to vector<1x8x8xf32>
    %149 = vector.shape_cast %145 : vector<8x8xf32> to vector<1x8x8xf32>
    %150 = tpu.concatenate %146, %147, %148, %149 in 0 : vector<1x8x8xf32>, vector<1x8x8xf32>, vector<1x8x8xf32>, vector<1x8x8xf32> -> vector<4x8x8xf32>
    %151 = arith.truncf %150 : vector<4x8x8xf32> to vector<4x8x8xbf16>
    "tpu.trace_start"() <{level = 10 : i32, message = "hqd,hkd->hqk"}> : () -> ()
    %cst_24 = arith.constant dense<0.000000e+00> : vector<4x8x8xf32>
    %152 = tpu.matmul %129, %140, %cst_24 {dimension_numbers = #tpu.dot_dimension_numbers<[2], [2], [1], [1], [0, 0, 0, 1, 1, 1], [0], [0]>} : vector<4x8x8xbf16>, vector<4x8x8xbf16>, vector<4x8x8xf32> -> vector<4x8x8xf32>
    "tpu.trace_stop"() : () -> ()
    %153 = arith.addf %152, %11 : vector<4x8x8xf32>
    %cst_25 = arith.constant dense<0xFF800000> : vector<4x8xf32>
    %154 = vector.multi_reduction <maximumf>, %153, %cst_25 [2] : vector<4x8x8xf32> to vector<4x8xf32>
    %155 = vector.shape_cast %154 : vector<4x8xf32> to vector<4x8x1xf32>
    %156 = vector.broadcast %155 : vector<4x8x1xf32> to vector<4x8x8xf32>
    %157 = arith.subf %153, %156 : vector<4x8x8xf32>
    %158 = math.exp %157 : vector<4x8x8xf32>
    %cst_26 = arith.constant dense<0.000000e+00> : vector<4x8xf32>
    %159 = vector.multi_reduction <add>, %158, %cst_26 [2] : vector<4x8x8xf32> to vector<4x8xf32>
    %160 = vector.shape_cast %159 : vector<4x8xf32> to vector<4x8x1xf32>
    %161 = tpu.reciprocal %160 {approx = true} : vector<4x8x1xf32> -> vector<4x8x1xf32>
    %162 = vector.broadcast %161 : vector<4x8x1xf32> to vector<4x8x8xf32>
    %163 = arith.mulf %158, %162 : vector<4x8x8xf32>
    %164 = arith.truncf %163 : vector<4x8x8xf32> to vector<4x8x8xbf16>
    "tpu.trace_start"() <{level = 10 : i32, message = "hqk,hkd->hqd"}> : () -> ()
    %cst_27 = arith.constant dense<0.000000e+00> : vector<4x8x8xf32>
    %165 = tpu.matmul %164, %151, %cst_27 {dimension_numbers = #tpu.dot_dimension_numbers<[2], [1], [1], [2], [0, 0, 0, 1, 1, 2], [0], [0]>} : vector<4x8x8xbf16>, vector<4x8x8xbf16>, vector<4x8x8xf32> -> vector<4x8x8xf32>
    "tpu.trace_stop"() : () -> ()
    %166 = vector.extract_strided_slice %118 {offsets = [8, 0], sizes = [8, 32], strides = [1, 1]} : vector<16x96xf32> to vector<8x32xf32>
    %167 = vector.extract_strided_slice %166 {offsets = [0, 0], sizes = [8, 8], strides = [1, 1]} : vector<8x32xf32> to vector<8x8xf32>
    %168 = vector.extract_strided_slice %166 {offsets = [0, 8], sizes = [8, 8], strides = [1, 1]} : vector<8x32xf32> to vector<8x8xf32>
    %169 = vector.extract_strided_slice %166 {offsets = [0, 16], sizes = [8, 8], strides = [1, 1]} : vector<8x32xf32> to vector<8x8xf32>
    %170 = vector.extract_strided_slice %166 {offsets = [0, 24], sizes = [8, 8], strides = [1, 1]} : vector<8x32xf32> to vector<8x8xf32>
    %171 = vector.shape_cast %167 : vector<8x8xf32> to vector<1x8x8xf32>
    %172 = vector.shape_cast %168 : vector<8x8xf32> to vector<1x8x8xf32>
    %173 = vector.shape_cast %169 : vector<8x8xf32> to vector<1x8x8xf32>
    %174 = vector.shape_cast %170 : vector<8x8xf32> to vector<1x8x8xf32>
    %175 = tpu.concatenate %171, %172, %173, %174 in 0 : vector<1x8x8xf32>, vector<1x8x8xf32>, vector<1x8x8xf32>, vector<1x8x8xf32> -> vector<4x8x8xf32>
    %176 = arith.truncf %175 : vector<4x8x8xf32> to vector<4x8x8xbf16>
    %177 = vector.extract_strided_slice %118 {offsets = [8, 32], sizes = [8, 32], strides = [1, 1]} : vector<16x96xf32> to vector<8x32xf32>
    %178 = vector.extract_strided_slice %177 {offsets = [0, 0], sizes = [8, 8], strides = [1, 1]} : vector<8x32xf32> to vector<8x8xf32>
    %179 = vector.extract_strided_slice %177 {offsets = [0, 8], sizes = [8, 8], strides = [1, 1]} : vector<8x32xf32> to vector<8x8xf32>
    %180 = vector.extract_strided_slice %177 {offsets = [0, 16], sizes = [8, 8], strides = [1, 1]} : vector<8x32xf32> to vector<8x8xf32>
    %181 = vector.extract_strided_slice %177 {offsets = [0, 24], sizes = [8, 8], strides = [1, 1]} : vector<8x32xf32> to vector<8x8xf32>
    %182 = vector.shape_cast %178 : vector<8x8xf32> to vector<1x8x8xf32>
    %183 = vector.shape_cast %179 : vector<8x8xf32> to vector<1x8x8xf32>
    %184 = vector.shape_cast %180 : vector<8x8xf32> to vector<1x8x8xf32>
    %185 = vector.shape_cast %181 : vector<8x8xf32> to vector<1x8x8xf32>
    %186 = tpu.concatenate %182, %183, %184, %185 in 0 : vector<1x8x8xf32>, vector<1x8x8xf32>, vector<1x8x8xf32>, vector<1x8x8xf32> -> vector<4x8x8xf32>
    %187 = arith.truncf %186 : vector<4x8x8xf32> to vector<4x8x8xbf16>
    %188 = vector.extract_strided_slice %118 {offsets = [8, 64], sizes = [8, 32], strides = [1, 1]} : vector<16x96xf32> to vector<8x32xf32>
    %189 = vector.extract_strided_slice %188 {offsets = [0, 0], sizes = [8, 8], strides = [1, 1]} : vector<8x32xf32> to vector<8x8xf32>
    %190 = vector.extract_strided_slice %188 {offsets = [0, 8], sizes = [8, 8], strides = [1, 1]} : vector<8x32xf32> to vector<8x8xf32>
    %191 = vector.extract_strided_slice %188 {offsets = [0, 16], sizes = [8, 8], strides = [1, 1]} : vector<8x32xf32> to vector<8x8xf32>
    %192 = vector.extract_strided_slice %188 {offsets = [0, 24], sizes = [8, 8], strides = [1, 1]} : vector<8x32xf32> to vector<8x8xf32>
    %193 = vector.shape_cast %189 : vector<8x8xf32> to vector<1x8x8xf32>
    %194 = vector.shape_cast %190 : vector<8x8xf32> to vector<1x8x8xf32>
    %195 = vector.shape_cast %191 : vector<8x8xf32> to vector<1x8x8xf32>
    %196 = vector.shape_cast %192 : vector<8x8xf32> to vector<1x8x8xf32>
    %197 = tpu.concatenate %193, %194, %195, %196 in 0 : vector<1x8x8xf32>, vector<1x8x8xf32>, vector<1x8x8xf32>, vector<1x8x8xf32> -> vector<4x8x8xf32>
    %198 = arith.truncf %197 : vector<4x8x8xf32> to vector<4x8x8xbf16>
    "tpu.trace_start"() <{level = 10 : i32, message = "hqd,hkd->hqk"}> : () -> ()
    %cst_28 = arith.constant dense<0.000000e+00> : vector<4x8x8xf32>
    %199 = tpu.matmul %176, %187, %cst_28 {dimension_numbers = #tpu.dot_dimension_numbers<[2], [2], [1], [1], [0, 0, 0, 1, 1, 1], [0], [0]>} : vector<4x8x8xbf16>, vector<4x8x8xbf16>, vector<4x8x8xf32> -> vector<4x8x8xf32>
    "tpu.trace_stop"() : () -> ()
    %200 = arith.addf %199, %11 : vector<4x8x8xf32>
    %cst_29 = arith.constant dense<0xFF800000> : vector<4x8xf32>
    %201 = vector.multi_reduction <maximumf>, %200, %cst_29 [2] : vector<4x8x8xf32> to vector<4x8xf32>
    %202 = vector.shape_cast %201 : vector<4x8xf32> to vector<4x8x1xf32>
    %203 = vector.broadcast %202 : vector<4x8x1xf32> to vector<4x8x8xf32>
    %204 = arith.subf %200, %203 : vector<4x8x8xf32>
    %205 = math.exp %204 : vector<4x8x8xf32>
    %cst_30 = arith.constant dense<0.000000e+00> : vector<4x8xf32>
    %206 = vector.multi_reduction <add>, %205, %cst_30 [2] : vector<4x8x8xf32> to vector<4x8xf32>
    %207 = vector.shape_cast %206 : vector<4x8xf32> to vector<4x8x1xf32>
    %208 = tpu.reciprocal %207 {approx = true} : vector<4x8x1xf32> -> vector<4x8x1xf32>
    %209 = vector.broadcast %208 : vector<4x8x1xf32> to vector<4x8x8xf32>
    %210 = arith.mulf %205, %209 : vector<4x8x8xf32>
    %211 = arith.truncf %210 : vector<4x8x8xf32> to vector<4x8x8xbf16>
    "tpu.trace_start"() <{level = 10 : i32, message = "hqk,hkd->hqd"}> : () -> ()
    %cst_31 = arith.constant dense<0.000000e+00> : vector<4x8x8xf32>
    %212 = tpu.matmul %211, %198, %cst_31 {dimension_numbers = #tpu.dot_dimension_numbers<[2], [1], [1], [2], [0, 0, 0, 1, 1, 2], [0], [0]>} : vector<4x8x8xbf16>, vector<4x8x8xbf16>, vector<4x8x8xf32> -> vector<4x8x8xf32>
    "tpu.trace_stop"() : () -> ()
    %c0_32 = arith.constant 0 : index
    %c0_33 = arith.constant 0 : index
    %c0_34 = arith.constant 0 : index
    %c0_35 = arith.constant 0 : index
    %213 = vector.load %arg6[%c0_32, %c0_33, %c0_34, %c0_35] : memref<2x4x8x32xbf16, #tpu.memory_space<vmem>>, vector<1x4x8x32xbf16>
    %214 = vector.shape_cast %213 : vector<1x4x8x32xbf16> to vector<4x8x32xbf16>
    %c0_36 = arith.constant 0 : index
    %c0_37 = arith.constant 0 : index
    %c0_38 = arith.constant 0 : index
    %215 = vector.load %arg7[%c0_36, %c0_37, %c0_38] : memref<2x1x32xf32, #tpu.memory_space<vmem>>, vector<1x1x32xf32>
    %216 = vector.shape_cast %215 : vector<1x1x32xf32> to vector<1x32xf32>
    %217 = tpu.concatenate %165, %212 in 1 : vector<4x8x8xf32>, vector<4x8x8xf32> -> vector<4x16x8xf32>
    %218 = arith.truncf %217 : vector<4x16x8xf32> to vector<4x16x8xbf16>
    "tpu.trace_start"() <{level = 10 : i32, message = "hmd,hde->hme"}> : () -> ()
    %cst_39 = arith.constant dense<0.000000e+00> : vector<4x16x32xf32>
    %219 = tpu.matmul %218, %214, %cst_39 {dimension_numbers = #tpu.dot_dimension_numbers<[2], [1], [1], [2], [0, 0, 0, 1, 1, 2], [0], [0]>} : vector<4x16x8xbf16>, vector<4x8x32xbf16>, vector<4x16x32xf32> -> vector<4x16x32xf32>
    "tpu.trace_stop"() : () -> ()
    %cst_40 = arith.constant dense<0.000000e+00> : vector<16x32xf32>
    %220 = vector.multi_reduction <add>, %219, %cst_40 [0] : vector<4x16x32xf32> to vector<16x32xf32>
    %221 = vector.broadcast %216 : vector<1x32xf32> to vector<16x32xf32>
    %222 = arith.addf %220, %221 : vector<16x32xf32>
    %223 = arith.addf %2, %222 : vector<16x32xf32>
    %224 = vector.extract_strided_slice %108 {offsets = [0, 0], sizes = [1, 32], strides = [1, 1]} : vector<3x32xf32> to vector<1x32xf32>
    %225 = vector.extract_strided_slice %110 {offsets = [0, 0], sizes = [1, 32], strides = [1, 1]} : vector<3x32xf32> to vector<1x32xf32>
    %cst_41 = arith.constant dense<0.000000e+00> : vector<16xf32>
    %226 = vector.multi_reduction <add>, %223, %cst_41 [1] : vector<16x32xf32> to vector<16xf32>
    %227 = vector.shape_cast %226 : vector<16xf32> to vector<16x1xf32>
    %cst_42 = arith.constant 3.200000e+01 : f32
    %228 = vector.broadcast %cst_42 : f32 to vector<16x1xf32>
    %229 = arith.divf %227, %228 : vector<16x1xf32>
    %230 = arith.mulf %223, %223 : vector<16x32xf32>
    %cst_43 = arith.constant dense<0.000000e+00> : vector<16xf32>
    %231 = vector.multi_reduction <add>, %230, %cst_43 [1] : vector<16x32xf32> to vector<16xf32>
    %232 = vector.shape_cast %231 : vector<16xf32> to vector<16x1xf32>
    %cst_44 = arith.constant 3.200000e+01 : f32
    %233 = vector.broadcast %cst_44 : f32 to vector<16x1xf32>
    %234 = arith.divf %232, %233 : vector<16x1xf32>
    %235 = arith.mulf %229, %229 : vector<16x1xf32>
    %236 = arith.subf %234, %235 : vector<16x1xf32>
    %cst_45 = arith.constant 0.000000e+00 : f32
    %237 = vector.broadcast %cst_45 : f32 to vector<16x1xf32>
    %238 = arith.maximumf %236, %237 : vector<16x1xf32>
    %239 = vector.broadcast %229 : vector<16x1xf32> to vector<16x32xf32>
    %240 = arith.subf %223, %239 : vector<16x32xf32>
    %cst_46 = arith.constant 9.99999974E-6 : f32
    %241 = vector.broadcast %cst_46 : f32 to vector<16x1xf32>
    %242 = arith.addf %238, %241 : vector<16x1xf32>
    %243 = math.rsqrt %242 : vector<16x1xf32>
    %244 = vector.broadcast %243 : vector<16x1xf32> to vector<16x32xf32>
    %245 = arith.mulf %240, %244 : vector<16x32xf32>
    %246 = vector.broadcast %224 : vector<1x32xf32> to vector<16x32xf32>
    %247 = arith.mulf %245, %246 : vector<16x32xf32>
    %248 = vector.broadcast %225 : vector<1x32xf32> to vector<16x32xf32>
    %249 = arith.addf %247, %248 : vector<16x32xf32>
    %c0_47 = arith.constant 0 : index
    %c0_48 = arith.constant 0 : index
    %c0_49 = arith.constant 0 : index
    %250 = vector.load %arg8[%c0_47, %c0_48, %c0_49] : memref<2x32x32xbf16, #tpu.memory_space<vmem>>, vector<1x32x32xbf16>
    %251 = vector.shape_cast %250 : vector<1x32x32xbf16> to vector<32x32xbf16>
    %c0_50 = arith.constant 0 : index
    %c0_51 = arith.constant 0 : index
    %c0_52 = arith.constant 0 : index
    %252 = vector.load %arg9[%c0_50, %c0_51, %c0_52] : memref<2x1x32xf32, #tpu.memory_space<vmem>>, vector<1x1x32xf32>
    %253 = vector.shape_cast %252 : vector<1x1x32xf32> to vector<1x32xf32>
    %254 = arith.truncf %249 : vector<16x32xf32> to vector<16x32xbf16>
    %cst_53 = arith.constant dense<0.000000e+00> : vector<16x32xf32>
    %255 = tpu.matmul %254, %251, %cst_53 {dimension_numbers = #tpu.dot_dimension_numbers<[1], [0], [0], [1], [0, 0, 1, 1], [], []>} : vector<16x32xbf16>, vector<32x32xbf16>, vector<16x32xf32> -> vector<16x32xf32>
    %256 = vector.broadcast %253 : vector<1x32xf32> to vector<16x32xf32>
    %257 = arith.addf %255, %256 : vector<16x32xf32>
    %258 = vector.extract_strided_slice %257 {offsets = [0, 0], sizes = [8, 32], strides = [1, 1]} : vector<16x32xf32> to vector<8x32xf32>
    %259 = vector.extract_strided_slice %258 {offsets = [0, 0], sizes = [8, 8], strides = [1, 1]} : vector<8x32xf32> to vector<8x8xf32>
    %260 = vector.extract_strided_slice %258 {offsets = [0, 8], sizes = [8, 8], strides = [1, 1]} : vector<8x32xf32> to vector<8x8xf32>
    %261 = vector.extract_strided_slice %258 {offsets = [0, 16], sizes = [8, 8], strides = [1, 1]} : vector<8x32xf32> to vector<8x8xf32>
    %262 = vector.extract_strided_slice %258 {offsets = [0, 24], sizes = [8, 8], strides = [1, 1]} : vector<8x32xf32> to vector<8x8xf32>
    %263 = vector.shape_cast %259 : vector<8x8xf32> to vector<1x8x8xf32>
    %264 = vector.shape_cast %260 : vector<8x8xf32> to vector<1x8x8xf32>
    %265 = vector.shape_cast %261 : vector<8x8xf32> to vector<1x8x8xf32>
    %266 = vector.shape_cast %262 : vector<8x8xf32> to vector<1x8x8xf32>
    %267 = tpu.concatenate %263, %264, %265, %266 in 0 : vector<1x8x8xf32>, vector<1x8x8xf32>, vector<1x8x8xf32>, vector<1x8x8xf32> -> vector<4x8x8xf32>
    %268 = arith.truncf %267 : vector<4x8x8xf32> to vector<4x8x8xbf16>
    "tpu.trace_start"() <{level = 10 : i32, message = "hqd,hkd->hqk"}> : () -> ()
    %cst_54 = arith.constant dense<0.000000e+00> : vector<4x8x8xf32>
    %269 = tpu.matmul %268, %29, %cst_54 {dimension_numbers = #tpu.dot_dimension_numbers<[2], [2], [1], [1], [0, 0, 0, 1, 1, 1], [0], [0]>} : vector<4x8x8xbf16>, vector<4x8x8xbf16>, vector<4x8x8xf32> -> vector<4x8x8xf32>
    "tpu.trace_stop"() : () -> ()
    %cst_55 = arith.constant dense<0xFF800000> : vector<4x8xf32>
    %270 = vector.multi_reduction <maximumf>, %269, %cst_55 [2] : vector<4x8x8xf32> to vector<4x8xf32>
    %271 = vector.shape_cast %270 : vector<4x8xf32> to vector<4x8x1xf32>
    %272 = vector.broadcast %271 : vector<4x8x1xf32> to vector<4x8x8xf32>
    %273 = arith.subf %269, %272 : vector<4x8x8xf32>
    %274 = math.exp %273 : vector<4x8x8xf32>
    %cst_56 = arith.constant dense<0.000000e+00> : vector<4x8xf32>
    %275 = vector.multi_reduction <add>, %274, %cst_56 [2] : vector<4x8x8xf32> to vector<4x8xf32>
    %276 = vector.shape_cast %275 : vector<4x8xf32> to vector<4x8x1xf32>
    %277 = tpu.reciprocal %276 {approx = true} : vector<4x8x1xf32> -> vector<4x8x1xf32>
    %278 = vector.broadcast %277 : vector<4x8x1xf32> to vector<4x8x8xf32>
    %279 = arith.mulf %274, %278 : vector<4x8x8xf32>
    %280 = arith.truncf %279 : vector<4x8x8xf32> to vector<4x8x8xbf16>
    "tpu.trace_start"() <{level = 10 : i32, message = "hqk,hkd->hqd"}> : () -> ()
    %cst_57 = arith.constant dense<0.000000e+00> : vector<4x8x8xf32>
    %281 = tpu.matmul %280, %40, %cst_57 {dimension_numbers = #tpu.dot_dimension_numbers<[2], [1], [1], [2], [0, 0, 0, 1, 1, 2], [0], [0]>} : vector<4x8x8xbf16>, vector<4x8x8xbf16>, vector<4x8x8xf32> -> vector<4x8x8xf32>
    "tpu.trace_stop"() : () -> ()
    %282 = vector.extract_strided_slice %257 {offsets = [8, 0], sizes = [8, 32], strides = [1, 1]} : vector<16x32xf32> to vector<8x32xf32>
    %283 = vector.extract_strided_slice %282 {offsets = [0, 0], sizes = [8, 8], strides = [1, 1]} : vector<8x32xf32> to vector<8x8xf32>
    %284 = vector.extract_strided_slice %282 {offsets = [0, 8], sizes = [8, 8], strides = [1, 1]} : vector<8x32xf32> to vector<8x8xf32>
    %285 = vector.extract_strided_slice %282 {offsets = [0, 16], sizes = [8, 8], strides = [1, 1]} : vector<8x32xf32> to vector<8x8xf32>
    %286 = vector.extract_strided_slice %282 {offsets = [0, 24], sizes = [8, 8], strides = [1, 1]} : vector<8x32xf32> to vector<8x8xf32>
    %287 = vector.shape_cast %283 : vector<8x8xf32> to vector<1x8x8xf32>
    %288 = vector.shape_cast %284 : vector<8x8xf32> to vector<1x8x8xf32>
    %289 = vector.shape_cast %285 : vector<8x8xf32> to vector<1x8x8xf32>
    %290 = vector.shape_cast %286 : vector<8x8xf32> to vector<1x8x8xf32>
    %291 = tpu.concatenate %287, %288, %289, %290 in 0 : vector<1x8x8xf32>, vector<1x8x8xf32>, vector<1x8x8xf32>, vector<1x8x8xf32> -> vector<4x8x8xf32>
    %292 = arith.truncf %291 : vector<4x8x8xf32> to vector<4x8x8xbf16>
    "tpu.trace_start"() <{level = 10 : i32, message = "hqd,hkd->hqk"}> : () -> ()
    %cst_58 = arith.constant dense<0.000000e+00> : vector<4x8x8xf32>
    %293 = tpu.matmul %292, %51, %cst_58 {dimension_numbers = #tpu.dot_dimension_numbers<[2], [2], [1], [1], [0, 0, 0, 1, 1, 1], [0], [0]>} : vector<4x8x8xbf16>, vector<4x8x8xbf16>, vector<4x8x8xf32> -> vector<4x8x8xf32>
    "tpu.trace_stop"() : () -> ()
    %cst_59 = arith.constant dense<0xFF800000> : vector<4x8xf32>
    %294 = vector.multi_reduction <maximumf>, %293, %cst_59 [2] : vector<4x8x8xf32> to vector<4x8xf32>
    %295 = vector.shape_cast %294 : vector<4x8xf32> to vector<4x8x1xf32>
    %296 = vector.broadcast %295 : vector<4x8x1xf32> to vector<4x8x8xf32>
    %297 = arith.subf %293, %296 : vector<4x8x8xf32>
    %298 = math.exp %297 : vector<4x8x8xf32>
    %cst_60 = arith.constant dense<0.000000e+00> : vector<4x8xf32>
    %299 = vector.multi_reduction <add>, %298, %cst_60 [2] : vector<4x8x8xf32> to vector<4x8xf32>
    %300 = vector.shape_cast %299 : vector<4x8xf32> to vector<4x8x1xf32>
    %301 = tpu.reciprocal %300 {approx = true} : vector<4x8x1xf32> -> vector<4x8x1xf32>
    %302 = vector.broadcast %301 : vector<4x8x1xf32> to vector<4x8x8xf32>
    %303 = arith.mulf %298, %302 : vector<4x8x8xf32>
    %304 = arith.truncf %303 : vector<4x8x8xf32> to vector<4x8x8xbf16>
    "tpu.trace_start"() <{level = 10 : i32, message = "hqk,hkd->hqd"}> : () -> ()
    %cst_61 = arith.constant dense<0.000000e+00> : vector<4x8x8xf32>
    %305 = tpu.matmul %304, %62, %cst_61 {dimension_numbers = #tpu.dot_dimension_numbers<[2], [1], [1], [2], [0, 0, 0, 1, 1, 2], [0], [0]>} : vector<4x8x8xbf16>, vector<4x8x8xbf16>, vector<4x8x8xf32> -> vector<4x8x8xf32>
    "tpu.trace_stop"() : () -> ()
    %c0_62 = arith.constant 0 : index
    %c0_63 = arith.constant 0 : index
    %c0_64 = arith.constant 0 : index
    %c0_65 = arith.constant 0 : index
    %306 = vector.load %arg12[%c0_62, %c0_63, %c0_64, %c0_65] : memref<2x4x8x32xbf16, #tpu.memory_space<vmem>>, vector<1x4x8x32xbf16>
    %307 = vector.shape_cast %306 : vector<1x4x8x32xbf16> to vector<4x8x32xbf16>
    %c0_66 = arith.constant 0 : index
    %c0_67 = arith.constant 0 : index
    %c0_68 = arith.constant 0 : index
    %308 = vector.load %arg13[%c0_66, %c0_67, %c0_68] : memref<2x1x32xf32, #tpu.memory_space<vmem>>, vector<1x1x32xf32>
    %309 = vector.shape_cast %308 : vector<1x1x32xf32> to vector<1x32xf32>
    %310 = tpu.concatenate %281, %305 in 1 : vector<4x8x8xf32>, vector<4x8x8xf32> -> vector<4x16x8xf32>
    %311 = arith.truncf %310 : vector<4x16x8xf32> to vector<4x16x8xbf16>
    "tpu.trace_start"() <{level = 10 : i32, message = "hmd,hde->hme"}> : () -> ()
    %cst_69 = arith.constant dense<0.000000e+00> : vector<4x16x32xf32>
    %312 = tpu.matmul %311, %307, %cst_69 {dimension_numbers = #tpu.dot_dimension_numbers<[2], [1], [1], [2], [0, 0, 0, 1, 1, 2], [0], [0]>} : vector<4x16x8xbf16>, vector<4x8x32xbf16>, vector<4x16x32xf32> -> vector<4x16x32xf32>
    "tpu.trace_stop"() : () -> ()
    %cst_70 = arith.constant dense<0.000000e+00> : vector<16x32xf32>
    %313 = vector.multi_reduction <add>, %312, %cst_70 [0] : vector<4x16x32xf32> to vector<16x32xf32>
    %314 = vector.broadcast %309 : vector<1x32xf32> to vector<16x32xf32>
    %315 = arith.addf %313, %314 : vector<16x32xf32>
    %316 = arith.addf %249, %315 : vector<16x32xf32>
    %317 = vector.extract_strided_slice %108 {offsets = [1, 0], sizes = [1, 32], strides = [1, 1]} : vector<3x32xf32> to vector<1x32xf32>
    %318 = vector.extract_strided_slice %110 {offsets = [1, 0], sizes = [1, 32], strides = [1, 1]} : vector<3x32xf32> to vector<1x32xf32>
    %cst_71 = arith.constant dense<0.000000e+00> : vector<16xf32>
    %319 = vector.multi_reduction <add>, %316, %cst_71 [1] : vector<16x32xf32> to vector<16xf32>
    %320 = vector.shape_cast %319 : vector<16xf32> to vector<16x1xf32>
    %cst_72 = arith.constant 3.200000e+01 : f32
    %321 = vector.broadcast %cst_72 : f32 to vector<16x1xf32>
    %322 = arith.divf %320, %321 : vector<16x1xf32>
    %323 = arith.mulf %316, %316 : vector<16x32xf32>
    %cst_73 = arith.constant dense<0.000000e+00> : vector<16xf32>
    %324 = vector.multi_reduction <add>, %323, %cst_73 [1] : vector<16x32xf32> to vector<16xf32>
    %325 = vector.shape_cast %324 : vector<16xf32> to vector<16x1xf32>
    %cst_74 = arith.constant 3.200000e+01 : f32
    %326 = vector.broadcast %cst_74 : f32 to vector<16x1xf32>
    %327 = arith.divf %325, %326 : vector<16x1xf32>
    %328 = arith.mulf %322, %322 : vector<16x1xf32>
    %329 = arith.subf %327, %328 : vector<16x1xf32>
    %cst_75 = arith.constant 0.000000e+00 : f32
    %330 = vector.broadcast %cst_75 : f32 to vector<16x1xf32>
    %331 = arith.maximumf %329, %330 : vector<16x1xf32>
    %332 = vector.broadcast %322 : vector<16x1xf32> to vector<16x32xf32>
    %333 = arith.subf %316, %332 : vector<16x32xf32>
    %cst_76 = arith.constant 9.99999974E-6 : f32
    %334 = vector.broadcast %cst_76 : f32 to vector<16x1xf32>
    %335 = arith.addf %331, %334 : vector<16x1xf32>
    %336 = math.rsqrt %335 : vector<16x1xf32>
    %337 = vector.broadcast %336 : vector<16x1xf32> to vector<16x32xf32>
    %338 = arith.mulf %333, %337 : vector<16x32xf32>
    %339 = vector.broadcast %317 : vector<1x32xf32> to vector<16x32xf32>
    %340 = arith.mulf %338, %339 : vector<16x32xf32>
    %341 = vector.broadcast %318 : vector<1x32xf32> to vector<16x32xf32>
    %342 = arith.addf %340, %341 : vector<16x32xf32>
    %c0_77 = arith.constant 0 : index
    %c0_78 = arith.constant 0 : index
    %c0_79 = arith.constant 0 : index
    %343 = vector.load %arg14[%c0_77, %c0_78, %c0_79] : memref<2x32x64xbf16, #tpu.memory_space<vmem>>, vector<1x32x64xbf16>
    %344 = vector.shape_cast %343 : vector<1x32x64xbf16> to vector<32x64xbf16>
    %c0_80 = arith.constant 0 : index
    %c0_81 = arith.constant 0 : index
    %c0_82 = arith.constant 0 : index
    %345 = vector.load %arg15[%c0_80, %c0_81, %c0_82] : memref<2x1x64xf32, #tpu.memory_space<vmem>>, vector<1x1x64xf32>
    %346 = vector.shape_cast %345 : vector<1x1x64xf32> to vector<1x64xf32>
    %347 = arith.truncf %342 : vector<16x32xf32> to vector<16x32xbf16>
    %cst_83 = arith.constant dense<0.000000e+00> : vector<16x64xf32>
    %348 = tpu.matmul %347, %344, %cst_83 {dimension_numbers = #tpu.dot_dimension_numbers<[1], [0], [0], [1], [0, 0, 1, 1], [], []>} : vector<16x32xbf16>, vector<32x64xbf16>, vector<16x64xf32> -> vector<16x64xf32>
    %349 = vector.broadcast %346 : vector<1x64xf32> to vector<16x64xf32>
    %350 = arith.addf %348, %349 : vector<16x64xf32>
    %cst_84 = arith.constant 0.000000e+00 : f32
    %351 = vector.broadcast %cst_84 : f32 to vector<16x64xf32>
    %352 = arith.maximumf %350, %351 : vector<16x64xf32>
    %c0_85 = arith.constant 0 : index
    %c0_86 = arith.constant 0 : index
    %c0_87 = arith.constant 0 : index
    %353 = vector.load %arg16[%c0_85, %c0_86, %c0_87] : memref<2x64x32xbf16, #tpu.memory_space<vmem>>, vector<1x64x32xbf16>
    %354 = vector.shape_cast %353 : vector<1x64x32xbf16> to vector<64x32xbf16>
    %c0_88 = arith.constant 0 : index
    %c0_89 = arith.constant 0 : index
    %c0_90 = arith.constant 0 : index
    %355 = vector.load %arg17[%c0_88, %c0_89, %c0_90] : memref<2x1x32xf32, #tpu.memory_space<vmem>>, vector<1x1x32xf32>
    %356 = vector.shape_cast %355 : vector<1x1x32xf32> to vector<1x32xf32>
    %357 = arith.truncf %352 : vector<16x64xf32> to vector<16x64xbf16>
    %cst_91 = arith.constant dense<0.000000e+00> : vector<16x32xf32>
    %358 = tpu.matmul %357, %354, %cst_91 {dimension_numbers = #tpu.dot_dimension_numbers<[1], [0], [0], [1], [0, 0, 1, 1], [], []>} : vector<16x64xbf16>, vector<64x32xbf16>, vector<16x32xf32> -> vector<16x32xf32>
    %359 = vector.broadcast %356 : vector<1x32xf32> to vector<16x32xf32>
    %360 = arith.addf %358, %359 : vector<16x32xf32>
    %361 = arith.addf %342, %360 : vector<16x32xf32>
    %362 = vector.extract_strided_slice %108 {offsets = [2, 0], sizes = [1, 32], strides = [1, 1]} : vector<3x32xf32> to vector<1x32xf32>
    %363 = vector.extract_strided_slice %110 {offsets = [2, 0], sizes = [1, 32], strides = [1, 1]} : vector<3x32xf32> to vector<1x32xf32>
    %cst_92 = arith.constant dense<0.000000e+00> : vector<16xf32>
    %364 = vector.multi_reduction <add>, %361, %cst_92 [1] : vector<16x32xf32> to vector<16xf32>
    %365 = vector.shape_cast %364 : vector<16xf32> to vector<16x1xf32>
    %cst_93 = arith.constant 3.200000e+01 : f32
    %366 = vector.broadcast %cst_93 : f32 to vector<16x1xf32>
    %367 = arith.divf %365, %366 : vector<16x1xf32>
    %368 = arith.mulf %361, %361 : vector<16x32xf32>
    %cst_94 = arith.constant dense<0.000000e+00> : vector<16xf32>
    %369 = vector.multi_reduction <add>, %368, %cst_94 [1] : vector<16x32xf32> to vector<16xf32>
    %370 = vector.shape_cast %369 : vector<16xf32> to vector<16x1xf32>
    %cst_95 = arith.constant 3.200000e+01 : f32
    %371 = vector.broadcast %cst_95 : f32 to vector<16x1xf32>
    %372 = arith.divf %370, %371 : vector<16x1xf32>
    %373 = arith.mulf %367, %367 : vector<16x1xf32>
    %374 = arith.subf %372, %373 : vector<16x1xf32>
    %cst_96 = arith.constant 0.000000e+00 : f32
    %375 = vector.broadcast %cst_96 : f32 to vector<16x1xf32>
    %376 = arith.maximumf %374, %375 : vector<16x1xf32>
    %377 = vector.broadcast %367 : vector<16x1xf32> to vector<16x32xf32>
    %378 = arith.subf %361, %377 : vector<16x32xf32>
    %cst_97 = arith.constant 9.99999974E-6 : f32
    %379 = vector.broadcast %cst_97 : f32 to vector<16x1xf32>
    %380 = arith.addf %376, %379 : vector<16x1xf32>
    %381 = math.rsqrt %380 : vector<16x1xf32>
    %382 = vector.broadcast %381 : vector<16x1xf32> to vector<16x32xf32>
    %383 = arith.mulf %378, %382 : vector<16x32xf32>
    %384 = vector.broadcast %362 : vector<1x32xf32> to vector<16x32xf32>
    %385 = arith.mulf %383, %384 : vector<16x32xf32>
    %386 = vector.broadcast %363 : vector<1x32xf32> to vector<16x32xf32>
    %387 = arith.addf %385, %386 : vector<16x32xf32>
    %c1 = arith.constant 1 : index
    %c0_98 = arith.constant 0 : index
    %c0_99 = arith.constant 0 : index
    %388 = vector.load %arg18[%c1, %c0_98, %c0_99] : memref<2x3x32xf32, #tpu.memory_space<vmem>>, vector<1x3x32xf32>
    %389 = vector.shape_cast %388 : vector<1x3x32xf32> to vector<3x32xf32>
    %c1_100 = arith.constant 1 : index
    %c0_101 = arith.constant 0 : index
    %c0_102 = arith.constant 0 : index
    %390 = vector.load %arg19[%c1_100, %c0_101, %c0_102] : memref<2x3x32xf32, #tpu.memory_space<vmem>>, vector<1x3x32xf32>
    %391 = vector.shape_cast %390 : vector<1x3x32xf32> to vector<3x32xf32>
    %c1_103 = arith.constant 1 : index
    %c0_104 = arith.constant 0 : index
    %c0_105 = arith.constant 0 : index
    %392 = vector.load %arg4[%c1_103, %c0_104, %c0_105] : memref<2x32x96xbf16, #tpu.memory_space<vmem>>, vector<1x32x96xbf16>
    %393 = vector.shape_cast %392 : vector<1x32x96xbf16> to vector<32x96xbf16>
    %c1_106 = arith.constant 1 : index
    %c0_107 = arith.constant 0 : index
    %c0_108 = arith.constant 0 : index
    %394 = vector.load %arg5[%c1_106, %c0_107, %c0_108] : memref<2x1x96xf32, #tpu.memory_space<vmem>>, vector<1x1x96xf32>
    %395 = vector.shape_cast %394 : vector<1x1x96xf32> to vector<1x96xf32>
    %396 = arith.truncf %387 : vector<16x32xf32> to vector<16x32xbf16>
    %cst_109 = arith.constant dense<0.000000e+00> : vector<16x96xf32>
    %397 = tpu.matmul %396, %393, %cst_109 {dimension_numbers = #tpu.dot_dimension_numbers<[1], [0], [0], [1], [0, 0, 1, 1], [], []>} : vector<16x32xbf16>, vector<32x96xbf16>, vector<16x96xf32> -> vector<16x96xf32>
    %398 = vector.broadcast %395 : vector<1x96xf32> to vector<16x96xf32>
    %399 = arith.addf %397, %398 : vector<16x96xf32>
    %400 = vector.extract_strided_slice %399 {offsets = [0, 0], sizes = [8, 32], strides = [1, 1]} : vector<16x96xf32> to vector<8x32xf32>
    %401 = vector.extract_strided_slice %400 {offsets = [0, 0], sizes = [8, 8], strides = [1, 1]} : vector<8x32xf32> to vector<8x8xf32>
    %402 = vector.extract_strided_slice %400 {offsets = [0, 8], sizes = [8, 8], strides = [1, 1]} : vector<8x32xf32> to vector<8x8xf32>
    %403 = vector.extract_strided_slice %400 {offsets = [0, 16], sizes = [8, 8], strides = [1, 1]} : vector<8x32xf32> to vector<8x8xf32>
    %404 = vector.extract_strided_slice %400 {offsets = [0, 24], sizes = [8, 8], strides = [1, 1]} : vector<8x32xf32> to vector<8x8xf32>
    %405 = vector.shape_cast %401 : vector<8x8xf32> to vector<1x8x8xf32>
    %406 = vector.shape_cast %402 : vector<8x8xf32> to vector<1x8x8xf32>
    %407 = vector.shape_cast %403 : vector<8x8xf32> to vector<1x8x8xf32>
    %408 = vector.shape_cast %404 : vector<8x8xf32> to vector<1x8x8xf32>
    %409 = tpu.concatenate %405, %406, %407, %408 in 0 : vector<1x8x8xf32>, vector<1x8x8xf32>, vector<1x8x8xf32>, vector<1x8x8xf32> -> vector<4x8x8xf32>
    %410 = arith.truncf %409 : vector<4x8x8xf32> to vector<4x8x8xbf16>
    %411 = vector.extract_strided_slice %399 {offsets = [0, 32], sizes = [8, 32], strides = [1, 1]} : vector<16x96xf32> to vector<8x32xf32>
    %412 = vector.extract_strided_slice %411 {offsets = [0, 0], sizes = [8, 8], strides = [1, 1]} : vector<8x32xf32> to vector<8x8xf32>
    %413 = vector.extract_strided_slice %411 {offsets = [0, 8], sizes = [8, 8], strides = [1, 1]} : vector<8x32xf32> to vector<8x8xf32>
    %414 = vector.extract_strided_slice %411 {offsets = [0, 16], sizes = [8, 8], strides = [1, 1]} : vector<8x32xf32> to vector<8x8xf32>
    %415 = vector.extract_strided_slice %411 {offsets = [0, 24], sizes = [8, 8], strides = [1, 1]} : vector<8x32xf32> to vector<8x8xf32>
    %416 = vector.shape_cast %412 : vector<8x8xf32> to vector<1x8x8xf32>
    %417 = vector.shape_cast %413 : vector<8x8xf32> to vector<1x8x8xf32>
    %418 = vector.shape_cast %414 : vector<8x8xf32> to vector<1x8x8xf32>
    %419 = vector.shape_cast %415 : vector<8x8xf32> to vector<1x8x8xf32>
    %420 = tpu.concatenate %416, %417, %418, %419 in 0 : vector<1x8x8xf32>, vector<1x8x8xf32>, vector<1x8x8xf32>, vector<1x8x8xf32> -> vector<4x8x8xf32>
    %421 = arith.truncf %420 : vector<4x8x8xf32> to vector<4x8x8xbf16>
    %422 = vector.extract_strided_slice %399 {offsets = [0, 64], sizes = [8, 32], strides = [1, 1]} : vector<16x96xf32> to vector<8x32xf32>
    %423 = vector.extract_strided_slice %422 {offsets = [0, 0], sizes = [8, 8], strides = [1, 1]} : vector<8x32xf32> to vector<8x8xf32>
    %424 = vector.extract_strided_slice %422 {offsets = [0, 8], sizes = [8, 8], strides = [1, 1]} : vector<8x32xf32> to vector<8x8xf32>
    %425 = vector.extract_strided_slice %422 {offsets = [0, 16], sizes = [8, 8], strides = [1, 1]} : vector<8x32xf32> to vector<8x8xf32>
    %426 = vector.extract_strided_slice %422 {offsets = [0, 24], sizes = [8, 8], strides = [1, 1]} : vector<8x32xf32> to vector<8x8xf32>
    %427 = vector.shape_cast %423 : vector<8x8xf32> to vector<1x8x8xf32>
    %428 = vector.shape_cast %424 : vector<8x8xf32> to vector<1x8x8xf32>
    %429 = vector.shape_cast %425 : vector<8x8xf32> to vector<1x8x8xf32>
    %430 = vector.shape_cast %426 : vector<8x8xf32> to vector<1x8x8xf32>
    %431 = tpu.concatenate %427, %428, %429, %430 in 0 : vector<1x8x8xf32>, vector<1x8x8xf32>, vector<1x8x8xf32>, vector<1x8x8xf32> -> vector<4x8x8xf32>
    %432 = arith.truncf %431 : vector<4x8x8xf32> to vector<4x8x8xbf16>
    "tpu.trace_start"() <{level = 10 : i32, message = "hqd,hkd->hqk"}> : () -> ()
    %cst_110 = arith.constant dense<0.000000e+00> : vector<4x8x8xf32>
    %433 = tpu.matmul %410, %421, %cst_110 {dimension_numbers = #tpu.dot_dimension_numbers<[2], [2], [1], [1], [0, 0, 0, 1, 1, 1], [0], [0]>} : vector<4x8x8xbf16>, vector<4x8x8xbf16>, vector<4x8x8xf32> -> vector<4x8x8xf32>
    "tpu.trace_stop"() : () -> ()
    %434 = arith.addf %433, %11 : vector<4x8x8xf32>
    %cst_111 = arith.constant dense<0xFF800000> : vector<4x8xf32>
    %435 = vector.multi_reduction <maximumf>, %434, %cst_111 [2] : vector<4x8x8xf32> to vector<4x8xf32>
    %436 = vector.shape_cast %435 : vector<4x8xf32> to vector<4x8x1xf32>
    %437 = vector.broadcast %436 : vector<4x8x1xf32> to vector<4x8x8xf32>
    %438 = arith.subf %434, %437 : vector<4x8x8xf32>
    %439 = math.exp %438 : vector<4x8x8xf32>
    %cst_112 = arith.constant dense<0.000000e+00> : vector<4x8xf32>
    %440 = vector.multi_reduction <add>, %439, %cst_112 [2] : vector<4x8x8xf32> to vector<4x8xf32>
    %441 = vector.shape_cast %440 : vector<4x8xf32> to vector<4x8x1xf32>
    %442 = tpu.reciprocal %441 {approx = true} : vector<4x8x1xf32> -> vector<4x8x1xf32>
    %443 = vector.broadcast %442 : vector<4x8x1xf32> to vector<4x8x8xf32>
    %444 = arith.mulf %439, %443 : vector<4x8x8xf32>
    %445 = arith.truncf %444 : vector<4x8x8xf32> to vector<4x8x8xbf16>
    "tpu.trace_start"() <{level = 10 : i32, message = "hqk,hkd->hqd"}> : () -> ()
    %cst_113 = arith.constant dense<0.000000e+00> : vector<4x8x8xf32>
    %446 = tpu.matmul %445, %432, %cst_113 {dimension_numbers = #tpu.dot_dimension_numbers<[2], [1], [1], [2], [0, 0, 0, 1, 1, 2], [0], [0]>} : vector<4x8x8xbf16>, vector<4x8x8xbf16>, vector<4x8x8xf32> -> vector<4x8x8xf32>
    "tpu.trace_stop"() : () -> ()
    %447 = vector.extract_strided_slice %399 {offsets = [8, 0], sizes = [8, 32], strides = [1, 1]} : vector<16x96xf32> to vector<8x32xf32>
    %448 = vector.extract_strided_slice %447 {offsets = [0, 0], sizes = [8, 8], strides = [1, 1]} : vector<8x32xf32> to vector<8x8xf32>
    %449 = vector.extract_strided_slice %447 {offsets = [0, 8], sizes = [8, 8], strides = [1, 1]} : vector<8x32xf32> to vector<8x8xf32>
    %450 = vector.extract_strided_slice %447 {offsets = [0, 16], sizes = [8, 8], strides = [1, 1]} : vector<8x32xf32> to vector<8x8xf32>
    %451 = vector.extract_strided_slice %447 {offsets = [0, 24], sizes = [8, 8], strides = [1, 1]} : vector<8x32xf32> to vector<8x8xf32>
    %452 = vector.shape_cast %448 : vector<8x8xf32> to vector<1x8x8xf32>
    %453 = vector.shape_cast %449 : vector<8x8xf32> to vector<1x8x8xf32>
    %454 = vector.shape_cast %450 : vector<8x8xf32> to vector<1x8x8xf32>
    %455 = vector.shape_cast %451 : vector<8x8xf32> to vector<1x8x8xf32>
    %456 = tpu.concatenate %452, %453, %454, %455 in 0 : vector<1x8x8xf32>, vector<1x8x8xf32>, vector<1x8x8xf32>, vector<1x8x8xf32> -> vector<4x8x8xf32>
    %457 = arith.truncf %456 : vector<4x8x8xf32> to vector<4x8x8xbf16>
    %458 = vector.extract_strided_slice %399 {offsets = [8, 32], sizes = [8, 32], strides = [1, 1]} : vector<16x96xf32> to vector<8x32xf32>
    %459 = vector.extract_strided_slice %458 {offsets = [0, 0], sizes = [8, 8], strides = [1, 1]} : vector<8x32xf32> to vector<8x8xf32>
    %460 = vector.extract_strided_slice %458 {offsets = [0, 8], sizes = [8, 8], strides = [1, 1]} : vector<8x32xf32> to vector<8x8xf32>
    %461 = vector.extract_strided_slice %458 {offsets = [0, 16], sizes = [8, 8], strides = [1, 1]} : vector<8x32xf32> to vector<8x8xf32>
    %462 = vector.extract_strided_slice %458 {offsets = [0, 24], sizes = [8, 8], strides = [1, 1]} : vector<8x32xf32> to vector<8x8xf32>
    %463 = vector.shape_cast %459 : vector<8x8xf32> to vector<1x8x8xf32>
    %464 = vector.shape_cast %460 : vector<8x8xf32> to vector<1x8x8xf32>
    %465 = vector.shape_cast %461 : vector<8x8xf32> to vector<1x8x8xf32>
    %466 = vector.shape_cast %462 : vector<8x8xf32> to vector<1x8x8xf32>
    %467 = tpu.concatenate %463, %464, %465, %466 in 0 : vector<1x8x8xf32>, vector<1x8x8xf32>, vector<1x8x8xf32>, vector<1x8x8xf32> -> vector<4x8x8xf32>
    %468 = arith.truncf %467 : vector<4x8x8xf32> to vector<4x8x8xbf16>
    %469 = vector.extract_strided_slice %399 {offsets = [8, 64], sizes = [8, 32], strides = [1, 1]} : vector<16x96xf32> to vector<8x32xf32>
    %470 = vector.extract_strided_slice %469 {offsets = [0, 0], sizes = [8, 8], strides = [1, 1]} : vector<8x32xf32> to vector<8x8xf32>
    %471 = vector.extract_strided_slice %469 {offsets = [0, 8], sizes = [8, 8], strides = [1, 1]} : vector<8x32xf32> to vector<8x8xf32>
    %472 = vector.extract_strided_slice %469 {offsets = [0, 16], sizes = [8, 8], strides = [1, 1]} : vector<8x32xf32> to vector<8x8xf32>
    %473 = vector.extract_strided_slice %469 {offsets = [0, 24], sizes = [8, 8], strides = [1, 1]} : vector<8x32xf32> to vector<8x8xf32>
    %474 = vector.shape_cast %470 : vector<8x8xf32> to vector<1x8x8xf32>
    %475 = vector.shape_cast %471 : vector<8x8xf32> to vector<1x8x8xf32>
    %476 = vector.shape_cast %472 : vector<8x8xf32> to vector<1x8x8xf32>
    %477 = vector.shape_cast %473 : vector<8x8xf32> to vector<1x8x8xf32>
    %478 = tpu.concatenate %474, %475, %476, %477 in 0 : vector<1x8x8xf32>, vector<1x8x8xf32>, vector<1x8x8xf32>, vector<1x8x8xf32> -> vector<4x8x8xf32>
    %479 = arith.truncf %478 : vector<4x8x8xf32> to vector<4x8x8xbf16>
    "tpu.trace_start"() <{level = 10 : i32, message = "hqd,hkd->hqk"}> : () -> ()
    %cst_114 = arith.constant dense<0.000000e+00> : vector<4x8x8xf32>
    %480 = tpu.matmul %457, %468, %cst_114 {dimension_numbers = #tpu.dot_dimension_numbers<[2], [2], [1], [1], [0, 0, 0, 1, 1, 1], [0], [0]>} : vector<4x8x8xbf16>, vector<4x8x8xbf16>, vector<4x8x8xf32> -> vector<4x8x8xf32>
    "tpu.trace_stop"() : () -> ()
    %481 = arith.addf %480, %11 : vector<4x8x8xf32>
    %cst_115 = arith.constant dense<0xFF800000> : vector<4x8xf32>
    %482 = vector.multi_reduction <maximumf>, %481, %cst_115 [2] : vector<4x8x8xf32> to vector<4x8xf32>
    %483 = vector.shape_cast %482 : vector<4x8xf32> to vector<4x8x1xf32>
    %484 = vector.broadcast %483 : vector<4x8x1xf32> to vector<4x8x8xf32>
    %485 = arith.subf %481, %484 : vector<4x8x8xf32>
    %486 = math.exp %485 : vector<4x8x8xf32>
    %cst_116 = arith.constant dense<0.000000e+00> : vector<4x8xf32>
    %487 = vector.multi_reduction <add>, %486, %cst_116 [2] : vector<4x8x8xf32> to vector<4x8xf32>
    %488 = vector.shape_cast %487 : vector<4x8xf32> to vector<4x8x1xf32>
    %489 = tpu.reciprocal %488 {approx = true} : vector<4x8x1xf32> -> vector<4x8x1xf32>
    %490 = vector.broadcast %489 : vector<4x8x1xf32> to vector<4x8x8xf32>
    %491 = arith.mulf %486, %490 : vector<4x8x8xf32>
    %492 = arith.truncf %491 : vector<4x8x8xf32> to vector<4x8x8xbf16>
    "tpu.trace_start"() <{level = 10 : i32, message = "hqk,hkd->hqd"}> : () -> ()
    %cst_117 = arith.constant dense<0.000000e+00> : vector<4x8x8xf32>
    %493 = tpu.matmul %492, %479, %cst_117 {dimension_numbers = #tpu.dot_dimension_numbers<[2], [1], [1], [2], [0, 0, 0, 1, 1, 2], [0], [0]>} : vector<4x8x8xbf16>, vector<4x8x8xbf16>, vector<4x8x8xf32> -> vector<4x8x8xf32>
    "tpu.trace_stop"() : () -> ()
    %c1_118 = arith.constant 1 : index
    %c0_119 = arith.constant 0 : index
    %c0_120 = arith.constant 0 : index
    %c0_121 = arith.constant 0 : index
    %494 = vector.load %arg6[%c1_118, %c0_119, %c0_120, %c0_121] : memref<2x4x8x32xbf16, #tpu.memory_space<vmem>>, vector<1x4x8x32xbf16>
    %495 = vector.shape_cast %494 : vector<1x4x8x32xbf16> to vector<4x8x32xbf16>
    %c1_122 = arith.constant 1 : index
    %c0_123 = arith.constant 0 : index
    %c0_124 = arith.constant 0 : index
    %496 = vector.load %arg7[%c1_122, %c0_123, %c0_124] : memref<2x1x32xf32, #tpu.memory_space<vmem>>, vector<1x1x32xf32>
    %497 = vector.shape_cast %496 : vector<1x1x32xf32> to vector<1x32xf32>
    %498 = tpu.concatenate %446, %493 in 1 : vector<4x8x8xf32>, vector<4x8x8xf32> -> vector<4x16x8xf32>
    %499 = arith.truncf %498 : vector<4x16x8xf32> to vector<4x16x8xbf16>
    "tpu.trace_start"() <{level = 10 : i32, message = "hmd,hde->hme"}> : () -> ()
    %cst_125 = arith.constant dense<0.000000e+00> : vector<4x16x32xf32>
    %500 = tpu.matmul %499, %495, %cst_125 {dimension_numbers = #tpu.dot_dimension_numbers<[2], [1], [1], [2], [0, 0, 0, 1, 1, 2], [0], [0]>} : vector<4x16x8xbf16>, vector<4x8x32xbf16>, vector<4x16x32xf32> -> vector<4x16x32xf32>
    "tpu.trace_stop"() : () -> ()
    %cst_126 = arith.constant dense<0.000000e+00> : vector<16x32xf32>
    %501 = vector.multi_reduction <add>, %500, %cst_126 [0] : vector<4x16x32xf32> to vector<16x32xf32>
    %502 = vector.broadcast %497 : vector<1x32xf32> to vector<16x32xf32>
    %503 = arith.addf %501, %502 : vector<16x32xf32>
    %504 = arith.addf %387, %503 : vector<16x32xf32>
    %505 = vector.extract_strided_slice %389 {offsets = [0, 0], sizes = [1, 32], strides = [1, 1]} : vector<3x32xf32> to vector<1x32xf32>
    %506 = vector.extract_strided_slice %391 {offsets = [0, 0], sizes = [1, 32], strides = [1, 1]} : vector<3x32xf32> to vector<1x32xf32>
    %cst_127 = arith.constant dense<0.000000e+00> : vector<16xf32>
    %507 = vector.multi_reduction <add>, %504, %cst_127 [1] : vector<16x32xf32> to vector<16xf32>
    %508 = vector.shape_cast %507 : vector<16xf32> to vector<16x1xf32>
    %cst_128 = arith.constant 3.200000e+01 : f32
    %509 = vector.broadcast %cst_128 : f32 to vector<16x1xf32>
    %510 = arith.divf %508, %509 : vector<16x1xf32>
    %511 = arith.mulf %504, %504 : vector<16x32xf32>
    %cst_129 = arith.constant dense<0.000000e+00> : vector<16xf32>
    %512 = vector.multi_reduction <add>, %511, %cst_129 [1] : vector<16x32xf32> to vector<16xf32>
    %513 = vector.shape_cast %512 : vector<16xf32> to vector<16x1xf32>
    %cst_130 = arith.constant 3.200000e+01 : f32
    %514 = vector.broadcast %cst_130 : f32 to vector<16x1xf32>
    %515 = arith.divf %513, %514 : vector<16x1xf32>
    %516 = arith.mulf %510, %510 : vector<16x1xf32>
    %517 = arith.subf %515, %516 : vector<16x1xf32>
    %cst_131 = arith.constant 0.000000e+00 : f32
    %518 = vector.broadcast %cst_131 : f32 to vector<16x1xf32>
    %519 = arith.maximumf %517, %518 : vector<16x1xf32>
    %520 = vector.broadcast %510 : vector<16x1xf32> to vector<16x32xf32>
    %521 = arith.subf %504, %520 : vector<16x32xf32>
    %cst_132 = arith.constant 9.99999974E-6 : f32
    %522 = vector.broadcast %cst_132 : f32 to vector<16x1xf32>
    %523 = arith.addf %519, %522 : vector<16x1xf32>
    %524 = math.rsqrt %523 : vector<16x1xf32>
    %525 = vector.broadcast %524 : vector<16x1xf32> to vector<16x32xf32>
    %526 = arith.mulf %521, %525 : vector<16x32xf32>
    %527 = vector.broadcast %505 : vector<1x32xf32> to vector<16x32xf32>
    %528 = arith.mulf %526, %527 : vector<16x32xf32>
    %529 = vector.broadcast %506 : vector<1x32xf32> to vector<16x32xf32>
    %530 = arith.addf %528, %529 : vector<16x32xf32>
    %c1_133 = arith.constant 1 : index
    %c0_134 = arith.constant 0 : index
    %c0_135 = arith.constant 0 : index
    %531 = vector.load %arg8[%c1_133, %c0_134, %c0_135] : memref<2x32x32xbf16, #tpu.memory_space<vmem>>, vector<1x32x32xbf16>
    %532 = vector.shape_cast %531 : vector<1x32x32xbf16> to vector<32x32xbf16>
    %c1_136 = arith.constant 1 : index
    %c0_137 = arith.constant 0 : index
    %c0_138 = arith.constant 0 : index
    %533 = vector.load %arg9[%c1_136, %c0_137, %c0_138] : memref<2x1x32xf32, #tpu.memory_space<vmem>>, vector<1x1x32xf32>
    %534 = vector.shape_cast %533 : vector<1x1x32xf32> to vector<1x32xf32>
    %535 = arith.truncf %530 : vector<16x32xf32> to vector<16x32xbf16>
    %cst_139 = arith.constant dense<0.000000e+00> : vector<16x32xf32>
    %536 = tpu.matmul %535, %532, %cst_139 {dimension_numbers = #tpu.dot_dimension_numbers<[1], [0], [0], [1], [0, 0, 1, 1], [], []>} : vector<16x32xbf16>, vector<32x32xbf16>, vector<16x32xf32> -> vector<16x32xf32>
    %537 = vector.broadcast %534 : vector<1x32xf32> to vector<16x32xf32>
    %538 = arith.addf %536, %537 : vector<16x32xf32>
    %539 = vector.extract_strided_slice %538 {offsets = [0, 0], sizes = [8, 32], strides = [1, 1]} : vector<16x32xf32> to vector<8x32xf32>
    %540 = vector.extract_strided_slice %539 {offsets = [0, 0], sizes = [8, 8], strides = [1, 1]} : vector<8x32xf32> to vector<8x8xf32>
    %541 = vector.extract_strided_slice %539 {offsets = [0, 8], sizes = [8, 8], strides = [1, 1]} : vector<8x32xf32> to vector<8x8xf32>
    %542 = vector.extract_strided_slice %539 {offsets = [0, 16], sizes = [8, 8], strides = [1, 1]} : vector<8x32xf32> to vector<8x8xf32>
    %543 = vector.extract_strided_slice %539 {offsets = [0, 24], sizes = [8, 8], strides = [1, 1]} : vector<8x32xf32> to vector<8x8xf32>
    %544 = vector.shape_cast %540 : vector<8x8xf32> to vector<1x8x8xf32>
    %545 = vector.shape_cast %541 : vector<8x8xf32> to vector<1x8x8xf32>
    %546 = vector.shape_cast %542 : vector<8x8xf32> to vector<1x8x8xf32>
    %547 = vector.shape_cast %543 : vector<8x8xf32> to vector<1x8x8xf32>
    %548 = tpu.concatenate %544, %545, %546, %547 in 0 : vector<1x8x8xf32>, vector<1x8x8xf32>, vector<1x8x8xf32>, vector<1x8x8xf32> -> vector<4x8x8xf32>
    %549 = arith.truncf %548 : vector<4x8x8xf32> to vector<4x8x8xbf16>
    "tpu.trace_start"() <{level = 10 : i32, message = "hqd,hkd->hqk"}> : () -> ()
    %cst_140 = arith.constant dense<0.000000e+00> : vector<4x8x8xf32>
    %550 = tpu.matmul %549, %73, %cst_140 {dimension_numbers = #tpu.dot_dimension_numbers<[2], [2], [1], [1], [0, 0, 0, 1, 1, 1], [0], [0]>} : vector<4x8x8xbf16>, vector<4x8x8xbf16>, vector<4x8x8xf32> -> vector<4x8x8xf32>
    "tpu.trace_stop"() : () -> ()
    %cst_141 = arith.constant dense<0xFF800000> : vector<4x8xf32>
    %551 = vector.multi_reduction <maximumf>, %550, %cst_141 [2] : vector<4x8x8xf32> to vector<4x8xf32>
    %552 = vector.shape_cast %551 : vector<4x8xf32> to vector<4x8x1xf32>
    %553 = vector.broadcast %552 : vector<4x8x1xf32> to vector<4x8x8xf32>
    %554 = arith.subf %550, %553 : vector<4x8x8xf32>
    %555 = math.exp %554 : vector<4x8x8xf32>
    %cst_142 = arith.constant dense<0.000000e+00> : vector<4x8xf32>
    %556 = vector.multi_reduction <add>, %555, %cst_142 [2] : vector<4x8x8xf32> to vector<4x8xf32>
    %557 = vector.shape_cast %556 : vector<4x8xf32> to vector<4x8x1xf32>
    %558 = tpu.reciprocal %557 {approx = true} : vector<4x8x1xf32> -> vector<4x8x1xf32>
    %559 = vector.broadcast %558 : vector<4x8x1xf32> to vector<4x8x8xf32>
    %560 = arith.mulf %555, %559 : vector<4x8x8xf32>
    %561 = arith.truncf %560 : vector<4x8x8xf32> to vector<4x8x8xbf16>
    "tpu.trace_start"() <{level = 10 : i32, message = "hqk,hkd->hqd"}> : () -> ()
    %cst_143 = arith.constant dense<0.000000e+00> : vector<4x8x8xf32>
    %562 = tpu.matmul %561, %84, %cst_143 {dimension_numbers = #tpu.dot_dimension_numbers<[2], [1], [1], [2], [0, 0, 0, 1, 1, 2], [0], [0]>} : vector<4x8x8xbf16>, vector<4x8x8xbf16>, vector<4x8x8xf32> -> vector<4x8x8xf32>
    "tpu.trace_stop"() : () -> ()
    %563 = vector.extract_strided_slice %538 {offsets = [8, 0], sizes = [8, 32], strides = [1, 1]} : vector<16x32xf32> to vector<8x32xf32>
    %564 = vector.extract_strided_slice %563 {offsets = [0, 0], sizes = [8, 8], strides = [1, 1]} : vector<8x32xf32> to vector<8x8xf32>
    %565 = vector.extract_strided_slice %563 {offsets = [0, 8], sizes = [8, 8], strides = [1, 1]} : vector<8x32xf32> to vector<8x8xf32>
    %566 = vector.extract_strided_slice %563 {offsets = [0, 16], sizes = [8, 8], strides = [1, 1]} : vector<8x32xf32> to vector<8x8xf32>
    %567 = vector.extract_strided_slice %563 {offsets = [0, 24], sizes = [8, 8], strides = [1, 1]} : vector<8x32xf32> to vector<8x8xf32>
    %568 = vector.shape_cast %564 : vector<8x8xf32> to vector<1x8x8xf32>
    %569 = vector.shape_cast %565 : vector<8x8xf32> to vector<1x8x8xf32>
    %570 = vector.shape_cast %566 : vector<8x8xf32> to vector<1x8x8xf32>
    %571 = vector.shape_cast %567 : vector<8x8xf32> to vector<1x8x8xf32>
    %572 = tpu.concatenate %568, %569, %570, %571 in 0 : vector<1x8x8xf32>, vector<1x8x8xf32>, vector<1x8x8xf32>, vector<1x8x8xf32> -> vector<4x8x8xf32>
    %573 = arith.truncf %572 : vector<4x8x8xf32> to vector<4x8x8xbf16>
    "tpu.trace_start"() <{level = 10 : i32, message = "hqd,hkd->hqk"}> : () -> ()
    %cst_144 = arith.constant dense<0.000000e+00> : vector<4x8x8xf32>
    %574 = tpu.matmul %573, %95, %cst_144 {dimension_numbers = #tpu.dot_dimension_numbers<[2], [2], [1], [1], [0, 0, 0, 1, 1, 1], [0], [0]>} : vector<4x8x8xbf16>, vector<4x8x8xbf16>, vector<4x8x8xf32> -> vector<4x8x8xf32>
    "tpu.trace_stop"() : () -> ()
    %cst_145 = arith.constant dense<0xFF800000> : vector<4x8xf32>
    %575 = vector.multi_reduction <maximumf>, %574, %cst_145 [2] : vector<4x8x8xf32> to vector<4x8xf32>
    %576 = vector.shape_cast %575 : vector<4x8xf32> to vector<4x8x1xf32>
    %577 = vector.broadcast %576 : vector<4x8x1xf32> to vector<4x8x8xf32>
    %578 = arith.subf %574, %577 : vector<4x8x8xf32>
    %579 = math.exp %578 : vector<4x8x8xf32>
    %cst_146 = arith.constant dense<0.000000e+00> : vector<4x8xf32>
    %580 = vector.multi_reduction <add>, %579, %cst_146 [2] : vector<4x8x8xf32> to vector<4x8xf32>
    %581 = vector.shape_cast %580 : vector<4x8xf32> to vector<4x8x1xf32>
    %582 = tpu.reciprocal %581 {approx = true} : vector<4x8x1xf32> -> vector<4x8x1xf32>
    %583 = vector.broadcast %582 : vector<4x8x1xf32> to vector<4x8x8xf32>
    %584 = arith.mulf %579, %583 : vector<4x8x8xf32>
    %585 = arith.truncf %584 : vector<4x8x8xf32> to vector<4x8x8xbf16>
    "tpu.trace_start"() <{level = 10 : i32, message = "hqk,hkd->hqd"}> : () -> ()
    %cst_147 = arith.constant dense<0.000000e+00> : vector<4x8x8xf32>
    %586 = tpu.matmul %585, %106, %cst_147 {dimension_numbers = #tpu.dot_dimension_numbers<[2], [1], [1], [2], [0, 0, 0, 1, 1, 2], [0], [0]>} : vector<4x8x8xbf16>, vector<4x8x8xbf16>, vector<4x8x8xf32> -> vector<4x8x8xf32>
    "tpu.trace_stop"() : () -> ()
    %c1_148 = arith.constant 1 : index
    %c0_149 = arith.constant 0 : index
    %c0_150 = arith.constant 0 : index
    %c0_151 = arith.constant 0 : index
    %587 = vector.load %arg12[%c1_148, %c0_149, %c0_150, %c0_151] : memref<2x4x8x32xbf16, #tpu.memory_space<vmem>>, vector<1x4x8x32xbf16>
    %588 = vector.shape_cast %587 : vector<1x4x8x32xbf16> to vector<4x8x32xbf16>
    %c1_152 = arith.constant 1 : index
    %c0_153 = arith.constant 0 : index
    %c0_154 = arith.constant 0 : index
    %589 = vector.load %arg13[%c1_152, %c0_153, %c0_154] : memref<2x1x32xf32, #tpu.memory_space<vmem>>, vector<1x1x32xf32>
    %590 = vector.shape_cast %589 : vector<1x1x32xf32> to vector<1x32xf32>
    %591 = tpu.concatenate %562, %586 in 1 : vector<4x8x8xf32>, vector<4x8x8xf32> -> vector<4x16x8xf32>
    %592 = arith.truncf %591 : vector<4x16x8xf32> to vector<4x16x8xbf16>
    "tpu.trace_start"() <{level = 10 : i32, message = "hmd,hde->hme"}> : () -> ()
    %cst_155 = arith.constant dense<0.000000e+00> : vector<4x16x32xf32>
    %593 = tpu.matmul %592, %588, %cst_155 {dimension_numbers = #tpu.dot_dimension_numbers<[2], [1], [1], [2], [0, 0, 0, 1, 1, 2], [0], [0]>} : vector<4x16x8xbf16>, vector<4x8x32xbf16>, vector<4x16x32xf32> -> vector<4x16x32xf32>
    "tpu.trace_stop"() : () -> ()
    %cst_156 = arith.constant dense<0.000000e+00> : vector<16x32xf32>
    %594 = vector.multi_reduction <add>, %593, %cst_156 [0] : vector<4x16x32xf32> to vector<16x32xf32>
    %595 = vector.broadcast %590 : vector<1x32xf32> to vector<16x32xf32>
    %596 = arith.addf %594, %595 : vector<16x32xf32>
    %597 = arith.addf %530, %596 : vector<16x32xf32>
    %598 = vector.extract_strided_slice %389 {offsets = [1, 0], sizes = [1, 32], strides = [1, 1]} : vector<3x32xf32> to vector<1x32xf32>
    %599 = vector.extract_strided_slice %391 {offsets = [1, 0], sizes = [1, 32], strides = [1, 1]} : vector<3x32xf32> to vector<1x32xf32>
    %cst_157 = arith.constant dense<0.000000e+00> : vector<16xf32>
    %600 = vector.multi_reduction <add>, %597, %cst_157 [1] : vector<16x32xf32> to vector<16xf32>
    %601 = vector.shape_cast %600 : vector<16xf32> to vector<16x1xf32>
    %cst_158 = arith.constant 3.200000e+01 : f32
    %602 = vector.broadcast %cst_158 : f32 to vector<16x1xf32>
    %603 = arith.divf %601, %602 : vector<16x1xf32>
    %604 = arith.mulf %597, %597 : vector<16x32xf32>
    %cst_159 = arith.constant dense<0.000000e+00> : vector<16xf32>
    %605 = vector.multi_reduction <add>, %604, %cst_159 [1] : vector<16x32xf32> to vector<16xf32>
    %606 = vector.shape_cast %605 : vector<16xf32> to vector<16x1xf32>
    %cst_160 = arith.constant 3.200000e+01 : f32
    %607 = vector.broadcast %cst_160 : f32 to vector<16x1xf32>
    %608 = arith.divf %606, %607 : vector<16x1xf32>
    %609 = arith.mulf %603, %603 : vector<16x1xf32>
    %610 = arith.subf %608, %609 : vector<16x1xf32>
    %cst_161 = arith.constant 0.000000e+00 : f32
    %611 = vector.broadcast %cst_161 : f32 to vector<16x1xf32>
    %612 = arith.maximumf %610, %611 : vector<16x1xf32>
    %613 = vector.broadcast %603 : vector<16x1xf32> to vector<16x32xf32>
    %614 = arith.subf %597, %613 : vector<16x32xf32>
    %cst_162 = arith.constant 9.99999974E-6 : f32
    %615 = vector.broadcast %cst_162 : f32 to vector<16x1xf32>
    %616 = arith.addf %612, %615 : vector<16x1xf32>
    %617 = math.rsqrt %616 : vector<16x1xf32>
    %618 = vector.broadcast %617 : vector<16x1xf32> to vector<16x32xf32>
    %619 = arith.mulf %614, %618 : vector<16x32xf32>
    %620 = vector.broadcast %598 : vector<1x32xf32> to vector<16x32xf32>
    %621 = arith.mulf %619, %620 : vector<16x32xf32>
    %622 = vector.broadcast %599 : vector<1x32xf32> to vector<16x32xf32>
    %623 = arith.addf %621, %622 : vector<16x32xf32>
    %c1_163 = arith.constant 1 : index
    %c0_164 = arith.constant 0 : index
    %c0_165 = arith.constant 0 : index
    %624 = vector.load %arg14[%c1_163, %c0_164, %c0_165] : memref<2x32x64xbf16, #tpu.memory_space<vmem>>, vector<1x32x64xbf16>
    %625 = vector.shape_cast %624 : vector<1x32x64xbf16> to vector<32x64xbf16>
    %c1_166 = arith.constant 1 : index
    %c0_167 = arith.constant 0 : index
    %c0_168 = arith.constant 0 : index
    %626 = vector.load %arg15[%c1_166, %c0_167, %c0_168] : memref<2x1x64xf32, #tpu.memory_space<vmem>>, vector<1x1x64xf32>
    %627 = vector.shape_cast %626 : vector<1x1x64xf32> to vector<1x64xf32>
    %628 = arith.truncf %623 : vector<16x32xf32> to vector<16x32xbf16>
    %cst_169 = arith.constant dense<0.000000e+00> : vector<16x64xf32>
    %629 = tpu.matmul %628, %625, %cst_169 {dimension_numbers = #tpu.dot_dimension_numbers<[1], [0], [0], [1], [0, 0, 1, 1], [], []>} : vector<16x32xbf16>, vector<32x64xbf16>, vector<16x64xf32> -> vector<16x64xf32>
    %630 = vector.broadcast %627 : vector<1x64xf32> to vector<16x64xf32>
    %631 = arith.addf %629, %630 : vector<16x64xf32>
    %cst_170 = arith.constant 0.000000e+00 : f32
    %632 = vector.broadcast %cst_170 : f32 to vector<16x64xf32>
    %633 = arith.maximumf %631, %632 : vector<16x64xf32>
    %c1_171 = arith.constant 1 : index
    %c0_172 = arith.constant 0 : index
    %c0_173 = arith.constant 0 : index
    %634 = vector.load %arg16[%c1_171, %c0_172, %c0_173] : memref<2x64x32xbf16, #tpu.memory_space<vmem>>, vector<1x64x32xbf16>
    %635 = vector.shape_cast %634 : vector<1x64x32xbf16> to vector<64x32xbf16>
    %c1_174 = arith.constant 1 : index
    %c0_175 = arith.constant 0 : index
    %c0_176 = arith.constant 0 : index
    %636 = vector.load %arg17[%c1_174, %c0_175, %c0_176] : memref<2x1x32xf32, #tpu.memory_space<vmem>>, vector<1x1x32xf32>
    %637 = vector.shape_cast %636 : vector<1x1x32xf32> to vector<1x32xf32>
    %638 = arith.truncf %633 : vector<16x64xf32> to vector<16x64xbf16>
    %cst_177 = arith.constant dense<0.000000e+00> : vector<16x32xf32>
    %639 = tpu.matmul %638, %635, %cst_177 {dimension_numbers = #tpu.dot_dimension_numbers<[1], [0], [0], [1], [0, 0, 1, 1], [], []>} : vector<16x64xbf16>, vector<64x32xbf16>, vector<16x32xf32> -> vector<16x32xf32>
    %640 = vector.broadcast %637 : vector<1x32xf32> to vector<16x32xf32>
    %641 = arith.addf %639, %640 : vector<16x32xf32>
    %642 = arith.addf %623, %641 : vector<16x32xf32>
    %643 = vector.extract_strided_slice %389 {offsets = [2, 0], sizes = [1, 32], strides = [1, 1]} : vector<3x32xf32> to vector<1x32xf32>
    %644 = vector.extract_strided_slice %391 {offsets = [2, 0], sizes = [1, 32], strides = [1, 1]} : vector<3x32xf32> to vector<1x32xf32>
    %cst_178 = arith.constant dense<0.000000e+00> : vector<16xf32>
    %645 = vector.multi_reduction <add>, %642, %cst_178 [1] : vector<16x32xf32> to vector<16xf32>
    %646 = vector.shape_cast %645 : vector<16xf32> to vector<16x1xf32>
    %cst_179 = arith.constant 3.200000e+01 : f32
    %647 = vector.broadcast %cst_179 : f32 to vector<16x1xf32>
    %648 = arith.divf %646, %647 : vector<16x1xf32>
    %649 = arith.mulf %642, %642 : vector<16x32xf32>
    %cst_180 = arith.constant dense<0.000000e+00> : vector<16xf32>
    %650 = vector.multi_reduction <add>, %649, %cst_180 [1] : vector<16x32xf32> to vector<16xf32>
    %651 = vector.shape_cast %650 : vector<16xf32> to vector<16x1xf32>
    %cst_181 = arith.constant 3.200000e+01 : f32
    %652 = vector.broadcast %cst_181 : f32 to vector<16x1xf32>
    %653 = arith.divf %651, %652 : vector<16x1xf32>
    %654 = arith.mulf %648, %648 : vector<16x1xf32>
    %655 = arith.subf %653, %654 : vector<16x1xf32>
    %cst_182 = arith.constant 0.000000e+00 : f32
    %656 = vector.broadcast %cst_182 : f32 to vector<16x1xf32>
    %657 = arith.maximumf %655, %656 : vector<16x1xf32>
    %658 = vector.broadcast %648 : vector<16x1xf32> to vector<16x32xf32>
    %659 = arith.subf %642, %658 : vector<16x32xf32>
    %cst_183 = arith.constant 9.99999974E-6 : f32
    %660 = vector.broadcast %cst_183 : f32 to vector<16x1xf32>
    %661 = arith.addf %657, %660 : vector<16x1xf32>
    %662 = math.rsqrt %661 : vector<16x1xf32>
    %663 = vector.broadcast %662 : vector<16x1xf32> to vector<16x32xf32>
    %664 = arith.mulf %659, %663 : vector<16x32xf32>
    %665 = vector.broadcast %643 : vector<1x32xf32> to vector<16x32xf32>
    %666 = arith.mulf %664, %665 : vector<16x32xf32>
    %667 = vector.broadcast %644 : vector<1x32xf32> to vector<16x32xf32>
    %668 = arith.addf %666, %667 : vector<16x32xf32>
    %c0_184 = arith.constant 0 : index
    %c0_185 = arith.constant 0 : index
    %669 = vector.load %arg20[%c0_184, %c0_185] : memref<32x128xbf16, #tpu.memory_space<vmem>>, vector<32x128xbf16>
    %c0_186 = arith.constant 0 : index
    %c0_187 = arith.constant 0 : index
    %670 = vector.load %arg21[%c0_186, %c0_187] : memref<1x128xf32, #tpu.memory_space<vmem>>, vector<1x128xf32>
    %671 = arith.truncf %668 : vector<16x32xf32> to vector<16x32xbf16>
    %cst_188 = arith.constant dense<0.000000e+00> : vector<16x128xf32>
    %672 = tpu.matmul %671, %669, %cst_188 {dimension_numbers = #tpu.dot_dimension_numbers<[1], [0], [0], [1], [0, 0, 1, 1], [], []>} : vector<16x32xbf16>, vector<32x128xbf16>, vector<16x128xf32> -> vector<16x128xf32>
    %673 = vector.broadcast %670 : vector<1x128xf32> to vector<16x128xf32>
    %674 = arith.addf %672, %673 : vector<16x128xf32>
    %c0_189 = arith.constant 0 : index
    %c0_190 = arith.constant 0 : index
    %675 = vector.load %arg22[%c0_189, %c0_190] : memref<16x128xf32, #tpu.memory_space<vmem>>, vector<16x128xf32>
    tpu.vector_store %arg22[%c0_189, %c0_190], %674 {strides = array<i32>} : memref<16x128xf32, #tpu.memory_space<vmem>>, vector<16x128xf32>,
    return
  }
  func.func @transform_0(%arg0: i32) -> (i32, i32) {
    %c0_i32 = arith.constant 0 : i32
    %c0_i32_0 = arith.constant 0 : i32
    return %arg0, %c0_i32 : i32, i32
  }
  func.func @transform_1(%arg0: i32) -> (i32, i32) {
    %c0_i32 = arith.constant 0 : i32
    %c0_i32_0 = arith.constant 0 : i32
    return %arg0, %c0_i32 : i32, i32
  }
  func.func @transform_2(%arg0: i32) -> (i32, i32) {
    %c0_i32 = arith.constant 0 : i32
    %c0_i32_0 = arith.constant 0 : i32
    %c0_i32_1 = arith.constant 0 : i32
    return %c0_i32, %c0_i32_0 : i32, i32
  }
  func.func @transform_3(%arg0: i32) -> (i32, i32, i32) {
    %c0_i32 = arith.constant 0 : i32
    %c0_i32_0 = arith.constant 0 : i32
    %c0_i32_1 = arith.constant 0 : i32
    %c0_i32_2 = arith.constant 0 : i32
    return %c0_i32, %c0_i32_0, %c0_i32_1 : i32, i32, i32
  }
  func.func @transform_4(%arg0: i32) -> (i32, i32, i32) {
    %c0_i32 = arith.constant 0 : i32
    %c0_i32_0 = arith.constant 0 : i32
    %c0_i32_1 = arith.constant 0 : i32
    %c0_i32_2 = arith.constant 0 : i32
    return %c0_i32, %c0_i32_0, %c0_i32_1 : i32, i32, i32
  }
  func.func @transform_5(%arg0: i32) -> (i32, i32, i32, i32) {
    %c0_i32 = arith.constant 0 : i32
    %c0_i32_0 = arith.constant 0 : i32
    %c0_i32_1 = arith.constant 0 : i32
    %c0_i32_2 = arith.constant 0 : i32
    %c0_i32_3 = arith.constant 0 : i32
    return %c0_i32, %c0_i32_0, %c0_i32_1, %c0_i32_2 : i32, i32, i32, i32
  }
  func.func @transform_6(%arg0: i32) -> (i32, i32, i32) {
    %c0_i32 = arith.constant 0 : i32
    %c0_i32_0 = arith.constant 0 : i32
    %c0_i32_1 = arith.constant 0 : i32
    %c0_i32_2 = arith.constant 0 : i32
    return %c0_i32, %c0_i32_0, %c0_i32_1 : i32, i32, i32
  }
  func.func @transform_7(%arg0: i32) -> (i32, i32, i32) {
    %c0_i32 = arith.constant 0 : i32
    %c0_i32_0 = arith.constant 0 : i32
    %c0_i32_1 = arith.constant 0 : i32
    %c0_i32_2 = arith.constant 0 : i32
    return %c0_i32, %c0_i32_0, %c0_i32_1 : i32, i32, i32
  }
  func.func @transform_8(%arg0: i32) -> (i32, i32, i32) {
    %c0_i32 = arith.constant 0 : i32
    %c0_i32_0 = arith.constant 0 : i32
    %c0_i32_1 = arith.constant 0 : i32
    %c0_i32_2 = arith.constant 0 : i32
    return %c0_i32, %c0_i32_0, %c0_i32_1 : i32, i32, i32
  }
  func.func @transform_9(%arg0: i32) -> (i32, i32) {
    %c0_i32 = arith.constant 0 : i32
    %c0_i32_0 = arith.constant 0 : i32
    %c0_i32_1 = arith.constant 0 : i32
    return %c0_i32, %c0_i32_0 : i32, i32
  }
  func.func @transform_10(%arg0: i32) -> (i32, i32) {
    %c0_i32 = arith.constant 0 : i32
    %c0_i32_0 = arith.constant 0 : i32
    %c0_i32_1 = arith.constant 0 : i32
    return %c0_i32, %c0_i32_0 : i32, i32
  }
  func.func @transform_11(%arg0: i32) -> (i32, i32, i32, i32) {
    %c0_i32 = arith.constant 0 : i32
    %c0_i32_0 = arith.constant 0 : i32
    %c0_i32_1 = arith.constant 0 : i32
    %c0_i32_2 = arith.constant 0 : i32
    %c0_i32_3 = arith.constant 0 : i32
    return %c0_i32, %c0_i32_0, %c0_i32_1, %c0_i32_2 : i32, i32, i32, i32
  }
  func.func @transform_12(%arg0: i32) -> (i32, i32, i32) {
    %c0_i32 = arith.constant 0 : i32
    %c0_i32_0 = arith.constant 0 : i32
    %c0_i32_1 = arith.constant 0 : i32
    %c0_i32_2 = arith.constant 0 : i32
    return %c0_i32, %c0_i32_0, %c0_i32_1 : i32, i32, i32
  }
  func.func @transform_13(%arg0: i32) -> (i32, i32, i32) {
    %c0_i32 = arith.constant 0 : i32
    %c0_i32_0 = arith.constant 0 : i32
    %c0_i32_1 = arith.constant 0 : i32
    %c0_i32_2 = arith.constant 0 : i32
    return %c0_i32, %c0_i32_0, %c0_i32_1 : i32, i32, i32
  }
  func.func @transform_14(%arg0: i32) -> (i32, i32, i32) {
    %c0_i32 = arith.constant 0 : i32
    %c0_i32_0 = arith.constant 0 : i32
    %c0_i32_1 = arith.constant 0 : i32
    %c0_i32_2 = arith.constant 0 : i32
    return %c0_i32, %c0_i32_0, %c0_i32_1 : i32, i32, i32
  }
  func.func @transform_15(%arg0: i32) -> (i32, i32, i32) {
    %c0_i32 = arith.constant 0 : i32
    %c0_i32_0 = arith.constant 0 : i32
    %c0_i32_1 = arith.constant 0 : i32
    %c0_i32_2 = arith.constant 0 : i32
    return %c0_i32, %c0_i32_0, %c0_i32_1 : i32, i32, i32
  }
  func.func @transform_16(%arg0: i32) -> (i32, i32, i32) {
    %c0_i32 = arith.constant 0 : i32
    %c0_i32_0 = arith.constant 0 : i32
    %c0_i32_1 = arith.constant 0 : i32
    %c0_i32_2 = arith.constant 0 : i32
    return %c0_i32, %c0_i32_0, %c0_i32_1 : i32, i32, i32
  }
  func.func @transform_17(%arg0: i32) -> (i32, i32, i32) {
    %c0_i32 = arith.constant 0 : i32
    %c0_i32_0 = arith.constant 0 : i32
    %c0_i32_1 = arith.constant 0 : i32
    %c0_i32_2 = arith.constant 0 : i32
    return %c0_i32, %c0_i32_0, %c0_i32_1 : i32, i32, i32
  }
  func.func @transform_18(%arg0: i32) -> (i32, i32, i32) {
    %c0_i32 = arith.constant 0 : i32
    %c0_i32_0 = arith.constant 0 : i32
    %c0_i32_1 = arith.constant 0 : i32
    %c0_i32_2 = arith.constant 0 : i32
    return %c0_i32, %c0_i32_0, %c0_i32_1 : i32, i32, i32
  }
  func.func @transform_19(%arg0: i32) -> (i32, i32) {
    %c0_i32 = arith.constant 0 : i32
    %c0_i32_0 = arith.constant 0 : i32
    %c0_i32_1 = arith.constant 0 : i32
    return %c0_i32, %c0_i32_0 : i32, i32
  }
  func.func @transform_20(%arg0: i32) -> (i32, i32) {
    %c0_i32 = arith.constant 0 : i32
    %c0_i32_0 = arith.constant 0 : i32
    %c0_i32_1 = arith.constant 0 : i32
    return %c0_i32, %c0_i32_0 : i32, i32
  }
  func.func @transform_21(%arg0: i32) -> (i32, i32) {
    %c0_i32 = arith.constant 0 : i32
    %c0_i32_0 = arith.constant 0 : i32
    return %arg0, %c0_i32 : i32, i32
  }
}

</mosaic_0001>

<llo_original>
// kernel: decoder_forward.1
$region0: #{decoder_forward.1}
  #allocation0 [shape = 'u32[]', space=smem, size = 0x4, offset = 0x4, fixed_abs, tag = 'smem constant byte address 0x4 - core index']
  #allocation1 [shape = 'u32[144,128]{1,0:T(1,128)}', space=vmem, size = 0x12000, scoped, tag = 'internal scratch']
  %s0 = inlined_call_operand.vmem [shape: f32[16,32], index: 0, kind: input, shape index: {}]
  %s1 = inlined_call_operand.hbm [shape: f32[16,32], index: 1, kind: input, shape index: {}]
  %s2 = inlined_call_operand.vmem [shape: f32[16,32], index: 2, kind: input, shape index: {}]
  %s3 = inlined_call_operand.vmem [shape: bf16[2,32,96], index: 3, kind: input, shape index: {}]
  %s4 = inlined_call_operand.vmem [shape: f32[2,1,96], index: 4, kind: input, shape index: {}]
  %s5 = inlined_call_operand.vmem [shape: bf16[2,4,8,32], index: 5, kind: input, shape index: {}]
  %s6 = inlined_call_operand.vmem [shape: f32[2,1,32], index: 6, kind: input, shape index: {}]
  %s7 = inlined_call_operand.vmem [shape: bf16[2,32,32], index: 7, kind: input, shape index: {}]
  %s8 = inlined_call_operand.vmem [shape: f32[2,1,32], index: 8, kind: input, shape index: {}]
  %s9 = inlined_call_operand.vmem [shape: bf16[32,128], index: 9, kind: input, shape index: {}]
  %s10 = inlined_call_operand.hbm [shape: f32[1,128], index: 10, kind: input, shape index: {}]
  %s11 = inlined_call_operand.vmem [shape: bf16[2,4,8,32], index: 11, kind: input, shape index: {}]
  %s12 = inlined_call_operand.vmem [shape: f32[2,1,32], index: 12, kind: input, shape index: {}]
  %s13 = inlined_call_operand.hbm [shape: bf16[2,32,64], index: 13, kind: input, shape index: {}]
  %s14 = inlined_call_operand.hbm [shape: f32[2,1,64], index: 14, kind: input, shape index: {}]
  %s15 = inlined_call_operand.vmem [shape: bf16[2,64,32], index: 15, kind: input, shape index: {}]
  %s16 = inlined_call_operand.hbm [shape: f32[2,1,32], index: 16, kind: input, shape index: {}]
  %s17 = inlined_call_operand.vmem [shape: f32[2,3,32], index: 17, kind: input, shape index: {}]
  %s18 = inlined_call_operand.vmem [shape: f32[2,3,32], index: 18, kind: input, shape index: {}]
  %s19 = inlined_call_operand.vmem [shape: bf16[32,128], index: 19, kind: input, shape index: {}]
  %s20 = inlined_call_operand.hbm [shape: f32[1,128], index: 20, kind: input, shape index: {}]
  %s21 = inlined_call_operand.hbm [shape: f32[16,128], index: 21, kind: output, shape index: {}]
  %s22 = sld [smem:[#allocation0]]
  $region118: #{decoder_forward.1} parent=0
    _
  %s24 = ssub.s32 1, %s22
  %s25 = scalar_select 0, %s24, %s22
  $region1: #{decoder_forward.1} parent=0
    #allocation2 [shape = 'u8[8192]{0}', space=vmem, size = 0x2000, scoped, tag = 'input window, operand 1, single buffered']
    #allocation3 [shape = 's32[1]{0}', space=sflag, size = 0x4, scoped, tag = 'scoped memory for decoder_forward.1']
    #allocation4 [shape = 's32[1]{0}', space=sflag, size = 0x4, scoped, tag = 'scoped memory for decoder_forward.1']
    #allocation5 [shape = 'u8[512]{0}', space=vmem, size = 0x400, scoped, tag = 'input window, operand 10, single buffered']
    #allocation6 [shape = 's32[1]{0}', space=sflag, size = 0x4, scoped, tag = 'scoped memory for decoder_forward.1']
    #allocation7 [shape = 'u8[16384]{0}', space=vmem, size = 0x4000, scoped, tag = 'input window, operand 13, single buffered']
    #allocation8 [shape = 'u8[1024]{0}', space=vmem, size = 0x400, scoped, tag = 'input window, operand 14, single buffered']
    #allocation9 [shape = 's32[1]{0}', space=sflag, size = 0x4, scoped, tag = 'scoped memory for decoder_forward.1']
    #allocation10 [shape = 'u8[1024]{0}', space=vmem, size = 0x400, scoped, tag = 'input window, operand 16, single buffered']
    #allocation11 [shape = 'u8[512]{0}', space=vmem, size = 0x400, scoped, tag = 'input window, operand 20, single buffered']
    #allocation12 [shape = 's32[1]{0}', space=sflag, size = 0x4, scoped, tag = 'scoped memory for decoder_forward.1']
    #allocation13 [shape = 'u8[8192]{0}', space=vmem, size = 0x2000, scoped, tag = 'output window, operand 0, single buffered']
    %26 = vsyncpa [#allocation3], 0
    %27 = vsyncpa [#allocation6], 0
    %28 = vsyncpa [#allocation9], 0
    %29 = vsyncpa [#allocation12], 0
    %30 = vsyncpa [#allocation4], 0
    // Predicated region
    $region2: #{decoder_forward.1} parent=1 // pred_check
      _
    $region3: #{decoder_forward.1} parent=1 // pred_check_branch
      %32 = sbr.rel (0) target = $region5
    $region4: #{decoder_forward.1} parent=1 // pred_region
      _
    $region5: #{decoder_forward.1} parent=1 // pred_fallthru
      _
    // Predicated region
    $region6: #{decoder_forward.1} parent=1 // pred_check
      _
    $region7: #{decoder_forward.1} parent=1 // pred_check_branch
      %34 = sbr.rel (0) target = $region9
    $region8: #{decoder_forward.1} parent=1 // pred_region
      %s36 = ssub.s32 256, 256
      %37 = vsyncadd [#allocation3], %s36
      %s38 = sshll.u32 [#allocation2], 4
      %s39 = int_to_ptr.vmem [resolvable:$true] %s38
      %44 = dma.hbm_to_vmem [thread:$0]  %s1, 256, %s39, [#allocation3], 128, 128, 8
    $region9: #{decoder_forward.1} parent=1 // pred_fallthru
      _
    // Predicated region
    $region10: #{decoder_forward.1} parent=1 // pred_check
      _
    $region11: #{decoder_forward.1} parent=1 // pred_check_branch
      %46 = sbr.rel (0) target = $region13
    $region12: #{decoder_forward.1} parent=1 // pred_region
      _
    $region13: #{decoder_forward.1} parent=1 // pred_fallthru
      _
    // Predicated region
    $region14: #{decoder_forward.1} parent=1 // pred_check
      _
    $region15: #{decoder_forward.1} parent=1 // pred_check_branch
      %48 = sbr.rel (0) target = $region17
    $region16: #{decoder_forward.1} parent=1 // pred_region
      _
    $region17: #{decoder_forward.1} parent=1 // pred_fallthru
      _
    // Predicated region
    $region18: #{decoder_forward.1} parent=1 // pred_check
      _
    $region19: #{decoder_forward.1} parent=1 // pred_check_branch
      %50 = sbr.rel (0) target = $region21
    $region20: #{decoder_forward.1} parent=1 // pred_region
      _
    $region21: #{decoder_forward.1} parent=1 // pred_fallthru
      _
    // Predicated region
    $region22: #{decoder_forward.1} parent=1 // pred_check
      _
    $region23: #{decoder_forward.1} parent=1 // pred_check_branch
      %52 = sbr.rel (0) target = $region25
    $region24: #{decoder_forward.1} parent=1 // pred_region
      _
    $region25: #{decoder_forward.1} parent=1 // pred_fallthru
      _
    // Predicated region
    $region26: #{decoder_forward.1} parent=1 // pred_check
      _
    $region27: #{decoder_forward.1} parent=1 // pred_check_branch
      %54 = sbr.rel (0) target = $region29
    $region28: #{decoder_forward.1} parent=1 // pred_region
      _
    $region29: #{decoder_forward.1} parent=1 // pred_fallthru
      _
    // Predicated region
    $region30: #{decoder_forward.1} parent=1 // pred_check
      _
    $region31: #{decoder_forward.1} parent=1 // pred_check_branch
      %56 = sbr.rel (0) target = $region33
    $region32: #{decoder_forward.1} parent=1 // pred_region
      _
    $region33: #{decoder_forward.1} parent=1 // pred_fallthru
      _
    // Predicated region
    $region34: #{decoder_forward.1} parent=1 // pred_check
      _
    $region35: #{decoder_forward.1} parent=1 // pred_check_branch
      %58 = sbr.rel (0) target = $region37
    $region36: #{decoder_forward.1} parent=1 // pred_region
      _
    $region37: #{decoder_forward.1} parent=1 // pred_fallthru
      _
    // Predicated region
    $region38: #{decoder_forward.1} parent=1 // pred_check
      _
    $region39: #{decoder_forward.1} parent=1 // pred_check_branch
      %60 = sbr.rel (0) target = $region41
    $region40: #{decoder_forward.1} parent=1 // pred_region
      _
    $region41: #{decoder_forward.1} parent=1 // pred_fallthru
      _
    // Predicated region
    $region42: #{decoder_forward.1} parent=1 // pred_check
      _
    $region43: #{decoder_forward.1} parent=1 // pred_check_branch
      %62 = sbr.rel (0) target = $region45
    $region44: #{decoder_forward.1} parent=1 // pred_region
      %s64 = ssub.s32 16, 16
      %65 = vsyncadd [#allocation6], %s64
      %s67 = sshll.u32 [#allocation5], 4
      %s68 = int_to_ptr.vmem [resolvable:$true] %s67
      %70 = dma.hbm_to_vmem [thread:$0]  %s10, 16, %s68, [#allocation6]
    $region45: #{decoder_forward.1} parent=1 // pred_fallthru
      _
    // Predicated region
    $region46: #{decoder_forward.1} parent=1 // pred_check
      _
    $region47: #{decoder_forward.1} parent=1 // pred_check_branch
      %72 = sbr.rel (0) target = $region49
    $region48: #{decoder_forward.1} parent=1 // pred_region
      _
    $region49: #{decoder_forward.1} parent=1 // pred_fallthru
      _
    // Predicated region
    $region50: #{decoder_forward.1} parent=1 // pred_check
      _
    $region51: #{decoder_forward.1} parent=1 // pred_check_branch
      %74 = sbr.rel (0) target = $region53
    $region52: #{decoder_forward.1} parent=1 // pred_region
      _
    $region53: #{decoder_forward.1} parent=1 // pred_fallthru
      _
    // Predicated region
    $region54: #{decoder_forward.1} parent=1 // pred_check
      _
    $region55: #{decoder_forward.1} parent=1 // pred_check_branch
      %76 = sbr.rel (0) target = $region57
    $region56: #{decoder_forward.1} parent=1 // pred_region
      %s78 = ssub.s32 512, 512
      %79 = vsyncadd [#allocation6], %s78
      %s80 = sshll.u32 [#allocation7], 4
      %s81 = int_to_ptr.vmem [resolvable:$true] %s80
      %86 = dma.hbm_to_vmem [thread:$0]  %s13, 512, %s81, [#allocation6], 64, 64, 4
    $region57: #{decoder_forward.1} parent=1 // pred_fallthru
      _
    // Predicated region
    $region58: #{decoder_forward.1} parent=1 // pred_check
      _
    $region59: #{decoder_forward.1} parent=1 // pred_check_branch
      %88 = sbr.rel (0) target = $region61
    $region60: #{decoder_forward.1} parent=1 // pred_region
      %s90 = ssub.s32 32, 32
      %91 = vsyncadd [#allocation9], %s90
      %s92 = sshll.u32 [#allocation8], 4
      %s93 = int_to_ptr.vmem [resolvable:$true] %s92
      %98 = dma.hbm_to_vmem [thread:$0]  %s14, 32, %s93, [#allocation9], 16, 16, 1
    $region61: #{decoder_forward.1} parent=1 // pred_fallthru
      _
    // Predicated region
    $region62: #{decoder_forward.1} parent=1 // pred_check
      _
    $region63: #{decoder_forward.1} parent=1 // pred_check_branch
      %100 = sbr.rel (0) target = $region65
    $region64: #{decoder_forward.1} parent=1 // pred_region
      _
    $region65: #{decoder_forward.1} parent=1 // pred_fallthru
      _
    // Predicated region
    $region66: #{decoder_forward.1} parent=1 // pred_check
      _
    $region67: #{decoder_forward.1} parent=1 // pred_check_branch
      %102 = sbr.rel (0) target = $region69
    $region68: #{decoder_forward.1} parent=1 // pred_region
      %s104 = ssub.s32 32, 32
      %105 = vsyncadd [#allocation9], %s104
      %s106 = sshll.u32 [#allocation10], 4
      %s107 = int_to_ptr.vmem [resolvable:$true] %s106
      %112 = dma.hbm_to_vmem [thread:$0]  %s16, 32, %s107, [#allocation9], 16, 16, 1
    $region69: #{decoder_forward.1} parent=1 // pred_fallthru
      _
    // Predicated region
    $region70: #{decoder_forward.1} parent=1 // pred_check
      _
    $region71: #{decoder_forward.1} parent=1 // pred_check_branch
      %114 = sbr.rel (0) target = $region73
    $region72: #{decoder_forward.1} parent=1 // pred_region
      _
    $region73: #{decoder_forward.1} parent=1 // pred_fallthru
      _
    // Predicated region
    $region74: #{decoder_forward.1} parent=1 // pred_check
      _
    $region75: #{decoder_forward.1} parent=1 // pred_check_branch
      %116 = sbr.rel (0) target = $region77
    $region76: #{decoder_forward.1} parent=1 // pred_region
      _
    $region77: #{decoder_forward.1} parent=1 // pred_fallthru
      _
    // Predicated region
    $region78: #{decoder_forward.1} parent=1 // pred_check
      _
    $region79: #{decoder_forward.1} parent=1 // pred_check_branch
      %118 = sbr.rel (0) target = $region81
    $region80: #{decoder_forward.1} parent=1 // pred_region
      _
    $region81: #{decoder_forward.1} parent=1 // pred_fallthru
      _
    // Predicated region
    $region82: #{decoder_forward.1} parent=1 // pred_check
      _
    $region83: #{decoder_forward.1} parent=1 // pred_check_branch
      %120 = sbr.rel (0) target = $region85
    $region84: #{decoder_forward.1} parent=1 // pred_region
      %s122 = ssub.s32 16, 16
      %123 = vsyncadd [#allocation12], %s122
      %s125 = sshll.u32 [#allocation11], 4
      %s126 = int_to_ptr.vmem [resolvable:$true] %s125
      %128 = dma.hbm_to_vmem [thread:$0]  %s20, 16, %s126, [#allocation12]
    $region85: #{decoder_forward.1} parent=1 // pred_fallthru
      _
    // Predicated region
    $region86: #{decoder_forward.1} parent=1 // pred_check
      _
    $region87: #{decoder_forward.1} parent=1 // pred_check_branch
      %130 = sbr.rel (0) target = $region89
    $region88: #{decoder_forward.1} parent=1 // pred_region
      %131 = dma.done [#allocation3], 256
    $region89: #{decoder_forward.1} parent=1 // pred_fallthru
      _
    // Predicated region
    $region90: #{decoder_forward.1} parent=1 // pred_check
      _
    $region91: #{decoder_forward.1} parent=1 // pred_check_branch
      %133 = sbr.rel (0) target = $region93
    $region92: #{decoder_forward.1} parent=1 // pred_region
      %134 = dma.done [#allocation6], 16
    $region93: #{decoder_forward.1} parent=1 // pred_fallthru
      _
    // Predicated region
    $region94: #{decoder_forward.1} parent=1 // pred_check
      _
    $region95: #{decoder_forward.1} parent=1 // pred_check_branch
      %136 = sbr.rel (0) target = $region97
    $region96: #{decoder_forward.1} parent=1 // pred_region
      %137 = dma.done [#allocation6], 512
    $region97: #{decoder_forward.1} parent=1 // pred_fallthru
      _
    // Predicated region
    $region98: #{decoder_forward.1} parent=1 // pred_check
      _
    $region99: #{decoder_forward.1} parent=1 // pred_check_branch
      %139 = sbr.rel (0) target = $region101
    $region100: #{decoder_forward.1} parent=1 // pred_region
      %140 = dma.done [#allocation9], 32
    $region101: #{decoder_forward.1} parent=1 // pred_fallthru
      _
    // Predicated region
    $region102: #{decoder_forward.1} parent=1 // pred_check
      _
    $region103: #{decoder_forward.1} parent=1 // pred_check_branch
      %142 = sbr.rel (0) target = $region105
    $region104: #{decoder_forward.1} parent=1 // pred_region
      %143 = dma.done [#allocation9], 32
    $region105: #{decoder_forward.1} parent=1 // pred_fallthru
      _
    // Predicated region
    $region106: #{decoder_forward.1} parent=1 // pred_check
      _
    $region107: #{decoder_forward.1} parent=1 // pred_check_branch
      %145 = sbr.rel (0) target = $region109
    $region108: #{decoder_forward.1} parent=1 // pred_region
      %146 = dma.done [#allocation12], 16
    $region109: #{decoder_forward.1} parent=1 // pred_fallthru
      _
    %v148 = vld [vmem:[%s0] sm:$0xff]
    %v149 = vld [vmem:[%s0 + $0x8] sm:$0xff]
    %v150 = vld [vmem:[%s2] sm:$0xff]
    %v151 = vld [vmem:[%s2 + $0x8] sm:$0xff]
    %v152 = vadd.f32 %v148, %v150
    %v153 = vadd.f32 %v149, %v151
    %v154 = vlaneseq
    %v155 = vshrl.u32 %v154, 7
    %v156 = vlaneseq
    %v157 = vand.u32 %v156, 127
    %vm158 = vcmp.ge.s32.totalorder %v155, %v157
    %v159 = vsel %vm158, 0.0, -1e+30
    %v160 = vld [vmem:[#allocation2] sm:$0xff]
    %v161 = vld [vmem:[#allocation2 + $0x8] sm:$0xff]
    %v162 = vpack.c.bf16 %v161, %v160
    %v163 = vld [vmem:[%s9] sm:$0xf]
    %v164 = vld [vmem:[%s9 + $0x4] sm:$0xf]
    %v165 = vld [vmem:[%s9 + $0x8] sm:$0xf]
    %v166 = vld [vmem:[%s9 + $0xc] sm:$0xf]
    %v167 = vld [vmem:[#allocation5] sm:$0x1]
    %v169 = vlaneseq
    %v170 = vshrl.u32 %v169, 7
    %v171 = vsub.s32 0, %v170
    %v172 = vrot.slane %v167, %v171
    %v178 = vunpack.c.l.b16 %v163
    %v179 = vunpack.c.l.b16 %v164
    %v180 = vunpack.c.l.b16 %v165
    %v181 = vunpack.c.l.b16 %v166
    %v182 = vpack.c.b16 %v179, %v178
    %v183 = vpack.c.b16 %v181, %v180
    %vm186 = vcmask 261120
    %v188 = vsel %vm186, %v162, 0
    %190 = vmatprep.subr.bf16.mxu0 0
    %191 = vmatpush1.bf16.msra.mxu0 %v182
    %192 = vmatprep.subr.bf16.mxu0 0
    %193 = vmatpush1.bf16.msra.mxu0 %v183
    %194 = vmatprep.subr.bf16.mxu0 0
    %195 = vmatpush1.bf16.msra.mxu0 0
    %196 = vmatprep.subr.bf16.mxu0 0
    %197 = vmatpush1.bf16.msra.mxu0 0
    %198 = vmatprep.subr.bf16.mxu0 0
    %199 = vmatpush1.bf16.msra.mxu0 0
    %200 = vmatprep.subr.bf16.mxu0 0
    %201 = vmatpush1.bf16.msra.mxu0 0
    %202 = vmatprep.subr.bf16.mxu0 0
    %203 = vmatpush1.bf16.msra.mxu0 0
    %204 = vmatprep.subr.bf16.mxu0 0
    %205 = vmatpush1.bf16.msra.mxu0 0
    %206 = vmatprep.subr.bf16.mxu0 0
    %207 = vmatpush1.bf16.msra.mxu0 0
    %208 = vmatprep.subr.bf16.mxu0 0
    %209 = vmatpush1.bf16.msra.mxu0 0
    %210 = vmatprep.subr.bf16.mxu0 0
    %211 = vmatpush1.bf16.msra.mxu0 0
    %212 = vmatprep.subr.bf16.mxu0 0
    %213 = vmatpush1.bf16.msra.mxu0 0
    %214 = vmatprep.subr.bf16.mxu0 0
    %215 = vmatpush1.bf16.msra.mxu0 0
    %216 = vmatprep.subr.bf16.mxu0 0
    %217 = vmatpush1.bf16.msra.mxu0 0
    %218 = vmatprep.subr.bf16.mxu0 0
    %219 = vmatpush1.bf16.msra.mxu0 0
    %220 = vmatprep.subr.bf16.mxu0 0
    %221 = vmatpush1.bf16.msra.mxu0 0
    %222 = vmatprep.mubr.bf16.mxu0 0
    %223 = vmatmul.mubr.bf16.gmra.mrb[0].mxu0 %v188
    %v224 = vpop.f32.mrb[0].mxu0
    %v225 = vadd.f32 %v172, %v224
    %v226 = vpop.f32.mrb[0].mxu0
    %v227 = vpop.f32.mrb[0].mxu0
    %v228 = vadd.f32 %v172, %v227
    %v229 = vpop.f32.mrb[0].mxu0
    %230 = vdwg.mxu0
    %232 = vrot.lane.b32.xlu0 %v225, 120
    %v233 = vpop.permute.xlu0 %232
    %235 = vrot.lane.b32.xlu0 %v225, 112
    %v236 = vpop.permute.xlu0 %235
    %238 = vrot.lane.b32.xlu0 %v225, 104
    %v239 = vpop.permute.xlu0 %238
    %v241 = vpack.c.bf16 %v225, %v225
    %v242 = vpack.c.bf16 %v233, %v233
    %v243 = vpack.c.bf16 %v236, %v236
    %v244 = vpack.c.bf16 %v239, %v239
    %246 = vrot.lane.b32.xlu0 %v228, 120
    %v247 = vpop.permute.xlu0 %246
    %249 = vrot.lane.b32.xlu0 %v228, 112
    %v250 = vpop.permute.xlu0 %249
    %252 = vrot.lane.b32.xlu0 %v228, 104
    %v253 = vpop.permute.xlu0 %252
    %v255 = vpack.c.bf16 %v228, %v228
    %v256 = vpack.c.bf16 %v247, %v247
    %v257 = vpack.c.bf16 %v250, %v250
    %v258 = vpack.c.bf16 %v253, %v253
    %v259 = vld [vmem:[%s17] sm:$0x7]
    %v260 = vld [vmem:[%s18] sm:$0x7]
    %v261 = vld [vmem:[%s3] sm:$0xf]
    %v262 = vld [vmem:[%s3 + $0x4] sm:$0xf]
    %v263 = vld [vmem:[%s3 + $0x8] sm:$0xf]
    %v264 = vld [vmem:[%s3 + $0xc] sm:$0xf]
    %v265 = vld [vmem:[%s4] sm:$0x1]
    %v266 = vpack.c.bf16 %v153, %v152
    %v268 = vlaneseq
    %v269 = vshrl.u32 %v268, 7
    %v270 = vsub.s32 0, %v269
    %v271 = vrot.slane %v265, %v270
    %v277 = vunpack.c.l.b16 %v261
    %v278 = vunpack.c.l.b16 %v262
    %v279 = vunpack.c.l.b16 %v263
    %v280 = vunpack.c.l.b16 %v264
    %v281 = vpack.c.b16 %v278, %v277
    %v282 = vpack.c.b16 %v280, %v279
    %v286 = vsel %vm186, %v266, 0
    %288 = vmatprep.subr.bf16.mxu0 0
    %289 = vmatpush1.bf16.msra.mxu0 %v281
    %290 = vmatprep.subr.bf16.mxu0 0
    %291 = vmatpush1.bf16.msra.mxu0 %v282
    %292 = vmatprep.subr.bf16.mxu0 0
    %293 = vmatpush1.bf16.msra.mxu0 0
    %294 = vmatprep.subr.bf16.mxu0 0
    %295 = vmatpush1.bf16.msra.mxu0 0
    %296 = vmatprep.subr.bf16.mxu0 0
    %297 = vmatpush1.bf16.msra.mxu0 0
    %298 = vmatprep.subr.bf16.mxu0 0
    %299 = vmatpush1.bf16.msra.mxu0 0
    %300 = vmatprep.subr.bf16.mxu0 0
    %301 = vmatpush1.bf16.msra.mxu0 0
    %302 = vmatprep.subr.bf16.mxu0 0
    %303 = vmatpush1.bf16.msra.mxu0 0
    %304 = vmatprep.subr.bf16.mxu0 0
    %305 = vmatpush1.bf16.msra.mxu0 0
    %306 = vmatprep.subr.bf16.mxu0 0
    %307 = vmatpush1.bf16.msra.mxu0 0
    %308 = vmatprep.subr.bf16.mxu0 0
    %309 = vmatpush1.bf16.msra.mxu0 0
    %310 = vmatprep.subr.bf16.mxu0 0
    %311 = vmatpush1.bf16.msra.mxu0 0
    %312 = vmatprep.subr.bf16.mxu0 0
    %313 = vmatpush1.bf16.msra.mxu0 0
    %314 = vmatprep.subr.bf16.mxu0 0
    %315 = vmatpush1.bf16.msra.mxu0 0
    %316 = vmatprep.subr.bf16.mxu0 0
    %317 = vmatpush1.bf16.msra.mxu0 0
    %318 = vmatprep.subr.bf16.mxu0 0
    %319 = vmatpush1.bf16.msra.mxu0 0
    %320 = vmatprep.mubr.bf16.mxu0 0
    %321 = vmatmul.mubr.bf16.gmra.mrb[0].mxu0 %v286
    %v322 = vpop.f32.mrb[0].mxu0
    %v323 = vadd.f32 %v271, %v322
    %v324 = vpop.f32.mrb[0].mxu0
    %v325 = vpop.f32.mrb[0].mxu0
    %v326 = vadd.f32 %v271, %v325
    %v327 = vpop.f32.mrb[0].mxu0
    %328 = vdwg.mxu0
    %330 = vrot.lane.b32.xlu0 %v323, 120
    %v331 = vpop.permute.xlu0 %330
    %333 = vrot.lane.b32.xlu0 %v323, 112
    %v334 = vpop.permute.xlu0 %333
    %336 = vrot.lane.b32.xlu0 %v323, 104
    %v337 = vpop.permute.xlu0 %336
    %v339 = vpack.c.bf16 %v323, %v323
    %v340 = vpack.c.bf16 %v331, %v331
    %v341 = vpack.c.bf16 %v334, %v334
    %v342 = vpack.c.bf16 %v337, %v337
    %344 = vrot.lane.b32.xlu0 %v339, 96
    %v345 = vpop.permute.xlu0 %344
    %vm346 = vcmask 64512
    %v348 = vsel %vm346, %v339, 0
    %v351 = vsel %vm346, %v345, 0
    %353 = vmatprep.subr.bf16.mxu0 0
    %354 = vmatpush1.bf16.xpose.msra.mxu0 %v351
    %355 = vmatprep.subr.bf16.mxu0 0
    %356 = vmatpush1.bf16.xpose.msra.mxu0 0
    %357 = vmatprep.subr.bf16.mxu0 0
    %358 = vmatpush1.bf16.xpose.msra.mxu0 0
    %359 = vmatprep.subr.bf16.mxu0 0
    %360 = vmatpush1.bf16.xpose.msra.mxu0 0
    %361 = vmatprep.subr.bf16.mxu0 0
    %362 = vmatpush1.bf16.xpose.msra.mxu0 0
    %363 = vmatprep.subr.bf16.mxu0 0
    %364 = vmatpush1.bf16.xpose.msra.mxu0 0
    %365 = vmatprep.subr.bf16.mxu0 0
    %366 = vmatpush1.bf16.xpose.msra.mxu0 0
    %367 = vmatprep.subr.bf16.mxu0 0
    %368 = vmatpush1.bf16.xpose.msra.mxu0 0
    %369 = vmatprep.subr.bf16.mxu0 0
    %370 = vmatpush1.bf16.xpose.msra.mxu0 0
    %371 = vmatprep.subr.bf16.mxu0 0
    %372 = vmatpush1.bf16.xpose.msra.mxu0 0
    %373 = vmatprep.subr.bf16.mxu0 0
    %374 = vmatpush1.bf16.xpose.msra.mxu0 0
    %375 = vmatprep.subr.bf16.mxu0 0
    %376 = vmatpush1.bf16.xpose.msra.mxu0 0
    %377 = vmatprep.subr.bf16.mxu0 0
    %378 = vmatpush1.bf16.xpose.msra.mxu0 0
    %379 = vmatprep.subr.bf16.mxu0 0
    %380 = vmatpush1.bf16.xpose.msra.mxu0 0
    %381 = vmatprep.subr.bf16.mxu0 0
    %382 = vmatpush1.bf16.xpose.msra.mxu0 0
    %383 = vmatprep.subr.bf16.mxu0 0
    %384 = vmatpush1.bf16.xpose.msra.mxu0 0
    %385 = vmatprep.mubr.bf16.mxu0 0
    %386 = vmatmul.mubr.bf16.gmra.mrb[0].mxu0 %v348
    %v387 = vpop.f32.mrb[0].mxu0
    %v388 = vadd.f32 %v159, %v387
    %v389 = vpop.f32.mrb[0].mxu0
    %v390 = vpop.f32.mrb[0].mxu0
    %v391 = vpop.f32.mrb[0].mxu0
    %392 = vdwg.mxu0
    %394 = vrot.lane.b32.xlu0 %v340, 96
    %v395 = vpop.permute.xlu0 %394
    %v397 = vsel %vm346, %v340, 0
    %v400 = vsel %vm346, %v395, 0
    %402 = vmatprep.subr.bf16.mxu0 0
    %403 = vmatpush1.bf16.xpose.msra.mxu0 %v400
    %404 = vmatprep.subr.bf16.mxu0 0
    %405 = vmatpush1.bf16.xpose.msra.mxu0 0
    %406 = vmatprep.subr.bf16.mxu0 0
    %407 = vmatpush1.bf16.xpose.msra.mxu0 0
    %408 = vmatprep.subr.bf16.mxu0 0
    %409 = vmatpush1.bf16.xpose.msra.mxu0 0
    %410 = vmatprep.subr.bf16.mxu0 0
    %411 = vmatpush1.bf16.xpose.msra.mxu0 0
    %412 = vmatprep.subr.bf16.mxu0 0
    %413 = vmatpush1.bf16.xpose.msra.mxu0 0
    %414 = vmatprep.subr.bf16.mxu0 0
    %415 = vmatpush1.bf16.xpose.msra.mxu0 0
    %416 = vmatprep.subr.bf16.mxu0 0
    %417 = vmatpush1.bf16.xpose.msra.mxu0 0
    %418 = vmatprep.subr.bf16.mxu0 0
    %419 = vmatpush1.bf16.xpose.msra.mxu0 0
    %420 = vmatprep.subr.bf16.mxu0 0
    %421 = vmatpush1.bf16.xpose.msra.mxu0 0
    %422 = vmatprep.subr.bf16.mxu0 0
    %423 = vmatpush1.bf16.xpose.msra.mxu0 0
    %424 = vmatprep.subr.bf16.mxu0 0
    %425 = vmatpush1.bf16.xpose.msra.mxu0 0
    %426 = vmatprep.subr.bf16.mxu0 0
    %427 = vmatpush1.bf16.xpose.msra.mxu0 0
    %428 = vmatprep.subr.bf16.mxu0 0
    %429 = vmatpush1.bf16.xpose.msra.mxu0 0
    %430 = vmatprep.subr.bf16.mxu0 0
    %431 = vmatpush1.bf16.xpose.msra.mxu0 0
    %432 = vmatprep.subr.bf16.mxu0 0
    %433 = vmatpush1.bf16.xpose.msra.mxu0 0
    %434 = vmatprep.mubr.bf16.mxu0 0
    %435 = vmatmul.mubr.bf16.gmra.mrb[0].mxu0 %v397
    %v436 = vpop.f32.mrb[0].mxu0
    %v437 = vadd.f32 %v159, %v436
    %v438 = vpop.f32.mrb[0].mxu0
    %v439 = vpop.f32.mrb[0].mxu0
    %v440 = vpop.f32.mrb[0].mxu0
    %441 = vdwg.mxu0
    %443 = vrot.lane.b32.xlu0 %v341, 96
    %v444 = vpop.permute.xlu0 %443
    %v446 = vsel %vm346, %v341, 0
    %v449 = vsel %vm346, %v444, 0
    %451 = vmatprep.subr.bf16.mxu0 0
    %452 = vmatpush1.bf16.xpose.msra.mxu0 %v449
    %453 = vmatprep.subr.bf16.mxu0 0
    %454 = vmatpush1.bf16.xpose.msra.mxu0 0
    %455 = vmatprep.subr.bf16.mxu0 0
    %456 = vmatpush1.bf16.xpose.msra.mxu0 0
    %457 = vmatprep.subr.bf16.mxu0 0
    %458 = vmatpush1.bf16.xpose.msra.mxu0 0
    %459 = vmatprep.subr.bf16.mxu0 0
    %460 = vmatpush1.bf16.xpose.msra.mxu0 0
    %461 = vmatprep.subr.bf16.mxu0 0
    %462 = vmatpush1.bf16.xpose.msra.mxu0 0
    %463 = vmatprep.subr.bf16.mxu0 0
    %464 = vmatpush1.bf16.xpose.msra.mxu0 0
    %465 = vmatprep.subr.bf16.mxu0 0
    %466 = vmatpush1.bf16.xpose.msra.mxu0 0
    %467 = vmatprep.subr.bf16.mxu0 0
    %468 = vmatpush1.bf16.xpose.msra.mxu0 0
    %469 = vmatprep.subr.bf16.mxu0 0
    %470 = vmatpush1.bf16.xpose.msra.mxu0 0
    %471 = vmatprep.subr.bf16.mxu0 0
    %472 = vmatpush1.bf16.xpose.msra.mxu0 0
    %473 = vmatprep.subr.bf16.mxu0 0
    %474 = vmatpush1.bf16.xpose.msra.mxu0 0
    %475 = vmatprep.subr.bf16.mxu0 0
    %476 = vmatpush1.bf16.xpose.msra.mxu0 0
    %477 = vmatprep.subr.bf16.mxu0 0
    %478 = vmatpush1.bf16.xpose.msra.mxu0 0
    %479 = vmatprep.subr.bf16.mxu0 0
    %480 = vmatpush1.bf16.xpose.msra.mxu0 0
    %481 = vmatprep.subr.bf16.mxu0 0
    %482 = vmatpush1.bf16.xpose.msra.mxu0 0
    %483 = vmatprep.mubr.bf16.mxu0 0
    %484 = vmatmul.mubr.bf16.gmra.mrb[0].mxu0 %v446
    %v485 = vpop.f32.mrb[0].mxu0
    %v486 = vadd.f32 %v159, %v485
    %v487 = vpop.f32.mrb[0].mxu0
    %v488 = vpop.f32.mrb[0].mxu0
    %v489 = vpop.f32.mrb[0].mxu0
    %490 = vdwg.mxu0
    %492 = vrot.lane.b32.xlu0 %v342, 96
    %v493 = vpop.permute.xlu0 %492
    %v495 = vsel %vm346, %v342, 0
    %v498 = vsel %vm346, %v493, 0
    %500 = vmatprep.subr.bf16.mxu0 0
    %501 = vmatpush1.bf16.xpose.msra.mxu0 %v498
    %502 = vmatprep.subr.bf16.mxu0 0
    %503 = vmatpush1.bf16.xpose.msra.mxu0 0
    %504 = vmatprep.subr.bf16.mxu0 0
    %505 = vmatpush1.bf16.xpose.msra.mxu0 0
    %506 = vmatprep.subr.bf16.mxu0 0
    %507 = vmatpush1.bf16.xpose.msra.mxu0 0
    %508 = vmatprep.subr.bf16.mxu0 0
    %509 = vmatpush1.bf16.xpose.msra.mxu0 0
    %510 = vmatprep.subr.bf16.mxu0 0
    %511 = vmatpush1.bf16.xpose.msra.mxu0 0
    %512 = vmatprep.subr.bf16.mxu0 0
    %513 = vmatpush1.bf16.xpose.msra.mxu0 0
    %514 = vmatprep.subr.bf16.mxu0 0
    %515 = vmatpush1.bf16.xpose.msra.mxu0 0
    %516 = vmatprep.subr.bf16.mxu0 0
    %517 = vmatpush1.bf16.xpose.msra.mxu0 0
    %518 = vmatprep.subr.bf16.mxu0 0
    %519 = vmatpush1.bf16.xpose.msra.mxu0 0
    %520 = vmatprep.subr.bf16.mxu0 0
    %521 = vmatpush1.bf16.xpose.msra.mxu0 0
    %522 = vmatprep.subr.bf16.mxu0 0
    %523 = vmatpush1.bf16.xpose.msra.mxu0 0
    %524 = vmatprep.subr.bf16.mxu0 0
    %525 = vmatpush1.bf16.xpose.msra.mxu0 0
    %526 = vmatprep.subr.bf16.mxu0 0
    %527 = vmatpush1.bf16.xpose.msra.mxu0 0
    %528 = vmatprep.subr.bf16.mxu0 0
    %529 = vmatpush1.bf16.xpose.msra.mxu0 0
    %530 = vmatprep.subr.bf16.mxu0 0
    %531 = vmatpush1.bf16.xpose.msra.mxu0 0
    %532 = vmatprep.mubr.bf16.mxu0 0
    %533 = vmatmul.mubr.bf16.gmra.mrb[0].mxu0 %v495
    %v534 = vpop.f32.mrb[0].mxu0
    %v535 = vadd.f32 %v159, %v534
    %v536 = vpop.f32.mrb[0].mxu0
    %v537 = vpop.f32.mrb[0].mxu0
    %v538 = vpop.f32.mrb[0].mxu0
    %539 = vdwg.mxu0
    %v540 = vsel %vm346, %v388, -inf
    %541 = vmax.xlane.f32.xlu0 %v540
    %v542 = vpop.xlane.xlu0 %541
    %v543 = vsel %vm346, %v437, -inf
    %544 = vmax.xlane.f32.xlu0 %v543
    %v545 = vpop.xlane.xlu0 %544
    %v546 = vsel %vm346, %v486, -inf
    %547 = vmax.xlane.f32.xlu0 %v546
    %v548 = vpop.xlane.xlu0 %547
    %v549 = vsel %vm346, %v535, -inf
    %550 = vmax.xlane.f32.xlu0 %v549
    %v551 = vpop.xlane.xlu0 %550
    %v552 = vsub.f32 %v388, %v542
    %v553 = vsub.f32 %v437, %v545
    %v554 = vsub.f32 %v486, %v548
    %v555 = vsub.f32 %v535, %v551
    %v556 = vmul.f32 %v552, 1.442695
    %v557 = vpow.pop %v556
    %v558 = vmul.f32 %v553, 1.442695
    %v559 = vpow.pop %v558
    %v560 = vmul.f32 %v554, 1.442695
    %v561 = vpow.pop %v560
    %v562 = vmul.f32 %v555, 1.442695
    %v563 = vpow.pop %v562
    %v564 = vsel %vm346, %v557, 0.0
    %565 = vadd.xlane.f32.xlu0 %v564
    %v566 = vpop.xlane.xlu0 %565
    %v567 = vsel %vm346, %v559, 0.0
    %568 = vadd.xlane.f32.xlu0 %v567
    %v569 = vpop.xlane.xlu0 %568
    %v570 = vsel %vm346, %v561, 0.0
    %571 = vadd.xlane.f32.xlu0 %v570
    %v572 = vpop.xlane.xlu0 %571
    %v573 = vsel %vm346, %v563, 0.0
    %574 = vadd.xlane.f32.xlu0 %v573
    %v575 = vpop.xlane.xlu0 %574
    %v576 = vrcp.pop %v566
    %v577 = vrcp.pop %v569
    %v578 = vrcp.pop %v572
    %v579 = vrcp.pop %v575
    %v580 = vmul.f32 %v557, %v576
    %v581 = vmul.f32 %v559, %v577
    %v582 = vmul.f32 %v561, %v578
    %v583 = vmul.f32 %v563, %v579
    %v584 = vpack.c.bf16 %v580, %v580
    %v585 = vpack.c.bf16 %v581, %v581
    %v586 = vpack.c.bf16 %v582, %v582
    %v587 = vpack.c.bf16 %v583, %v583
    %588 = vrot.lane.b32.xlu0 %v339, 64
    %v589 = vpop.permute.xlu0 %588
    %v591 = vsel %vm346, %v584, 0
    %vm593 = vcmask 1043456
    %v595 = vsel %vm593, %v589, 0
    %597 = vmatprep.subr.bf16.mxu0 0
    %598 = vmatpush1.bf16.msra.mxu0 %v595
    %599 = vmatprep.subr.bf16.mxu0 0
    %600 = vmatpush1.bf16.msra.mxu0 0
    %601 = vmatprep.subr.bf16.mxu0 0
    %602 = vmatpush1.bf16.msra.mxu0 0
    %603 = vmatprep.subr.bf16.mxu0 0
    %604 = vmatpush1.bf16.msra.mxu0 0
    %605 = vmatprep.subr.bf16.mxu0 0
    %606 = vmatpush1.bf16.msra.mxu0 0
    %607 = vmatprep.subr.bf16.mxu0 0
    %608 = vmatpush1.bf16.msra.mxu0 0
    %609 = vmatprep.subr.bf16.mxu0 0
    %610 = vmatpush1.bf16.msra.mxu0 0
    %611 = vmatprep.subr.bf16.mxu0 0
    %612 = vmatpush1.bf16.msra.mxu0 0
    %613 = vmatprep.subr.bf16.mxu0 0
    %614 = vmatpush1.bf16.msra.mxu0 0
    %615 = vmatprep.subr.bf16.mxu0 0
    %616 = vmatpush1.bf16.msra.mxu0 0
    %617 = vmatprep.subr.bf16.mxu0 0
    %618 = vmatpush1.bf16.msra.mxu0 0
    %619 = vmatprep.subr.bf16.mxu0 0
    %620 = vmatpush1.bf16.msra.mxu0 0
    %621 = vmatprep.subr.bf16.mxu0 0
    %622 = vmatpush1.bf16.msra.mxu0 0
    %623 = vmatprep.subr.bf16.mxu0 0
    %624 = vmatpush1.bf16.msra.mxu0 0
    %625 = vmatprep.subr.bf16.mxu0 0
    %626 = vmatpush1.bf16.msra.mxu0 0
    %627 = vmatprep.subr.bf16.mxu0 0
    %628 = vmatpush1.bf16.msra.mxu0 0
    %629 = vmatprep.mubr.bf16.mxu0 0
    %630 = vmatmul.mubr.bf16.gmra.mrb[0].mxu0 %v591
    %v631 = vpop.f32.mrb[0].mxu0
    %v632 = vadd.f32 0.0, %v631
    %v633 = vpop.f32.mrb[0].mxu0
    %v634 = vpop.f32.mrb[0].mxu0
    %v635 = vpop.f32.mrb[0].mxu0
    %636 = vdwg.mxu0
    %637 = vrot.lane.b32.xlu0 %v340, 64
    %v638 = vpop.permute.xlu0 %637
    %v640 = vsel %vm346, %v585, 0
    %v643 = vsel %vm593, %v638, 0
    %645 = vmatprep.subr.bf16.mxu0 0
    %646 = vmatpush1.bf16.msra.mxu0 %v643
    %647 = vmatprep.subr.bf16.mxu0 0
    %648 = vmatpush1.bf16.msra.mxu0 0
    %649 = vmatprep.subr.bf16.mxu0 0
    %650 = vmatpush1.bf16.msra.mxu0 0
    %651 = vmatprep.subr.bf16.mxu0 0
    %652 = vmatpush1.bf16.msra.mxu0 0
    %653 = vmatprep.subr.bf16.mxu0 0
    %654 = vmatpush1.bf16.msra.mxu0 0
    %655 = vmatprep.subr.bf16.mxu0 0
    %656 = vmatpush1.bf16.msra.mxu0 0
    %657 = vmatprep.subr.bf16.mxu0 0
    %658 = vmatpush1.bf16.msra.mxu0 0
    %659 = vmatprep.subr.bf16.mxu0 0
    %660 = vmatpush1.bf16.msra.mxu0 0
    %661 = vmatprep.subr.bf16.mxu0 0
    %662 = vmatpush1.bf16.msra.mxu0 0
    %663 = vmatprep.subr.bf16.mxu0 0
    %664 = vmatpush1.bf16.msra.mxu0 0
    %665 = vmatprep.subr.bf16.mxu0 0
    %666 = vmatpush1.bf16.msra.mxu0 0
    %667 = vmatprep.subr.bf16.mxu0 0
    %668 = vmatpush1.bf16.msra.mxu0 0
    %669 = vmatprep.subr.bf16.mxu0 0
    %670 = vmatpush1.bf16.msra.mxu0 0
    %671 = vmatprep.subr.bf16.mxu0 0
    %672 = vmatpush1.bf16.msra.mxu0 0
    %673 = vmatprep.subr.bf16.mxu0 0
    %674 = vmatpush1.bf16.msra.mxu0 0
    %675 = vmatprep.subr.bf16.mxu0 0
    %676 = vmatpush1.bf16.msra.mxu0 0
    %677 = vmatprep.mubr.bf16.mxu0 0
    %678 = vmatmul.mubr.bf16.gmra.mrb[0].mxu0 %v640
    %v679 = vpop.f32.mrb[0].mxu0
    %v680 = vadd.f32 0.0, %v679
    %v681 = vpop.f32.mrb[0].mxu0
    %v682 = vpop.f32.mrb[0].mxu0
    %v683 = vpop.f32.mrb[0].mxu0
    %684 = vdwg.mxu0
    %685 = vrot.lane.b32.xlu0 %v341, 64
    %v686 = vpop.permute.xlu0 %685
    %v688 = vsel %vm346, %v586, 0
    %v691 = vsel %vm593, %v686, 0
    %693 = vmatprep.subr.bf16.mxu0 0
    %694 = vmatpush1.bf16.msra.mxu0 %v691
    %695 = vmatprep.subr.bf16.mxu0 0
    %696 = vmatpush1.bf16.msra.mxu0 0
    %697 = vmatprep.subr.bf16.mxu0 0
    %698 = vmatpush1.bf16.msra.mxu0 0
    %699 = vmatprep.subr.bf16.mxu0 0
    %700 = vmatpush1.bf16.msra.mxu0 0
    %701 = vmatprep.subr.bf16.mxu0 0
    %702 = vmatpush1.bf16.msra.mxu0 0
    %703 = vmatprep.subr.bf16.mxu0 0
    %704 = vmatpush1.bf16.msra.mxu0 0
    %705 = vmatprep.subr.bf16.mxu0 0
    %706 = vmatpush1.bf16.msra.mxu0 0
    %707 = vmatprep.subr.bf16.mxu0 0
    %708 = vmatpush1.bf16.msra.mxu0 0
    %709 = vmatprep.subr.bf16.mxu0 0
    %710 = vmatpush1.bf16.msra.mxu0 0
    %711 = vmatprep.subr.bf16.mxu0 0
    %712 = vmatpush1.bf16.msra.mxu0 0
    %713 = vmatprep.subr.bf16.mxu0 0
    %714 = vmatpush1.bf16.msra.mxu0 0
    %715 = vmatprep.subr.bf16.mxu0 0
    %716 = vmatpush1.bf16.msra.mxu0 0
    %717 = vmatprep.subr.bf16.mxu0 0
    %718 = vmatpush1.bf16.msra.mxu0 0
    %719 = vmatprep.subr.bf16.mxu0 0
    %720 = vmatpush1.bf16.msra.mxu0 0
    %721 = vmatprep.subr.bf16.mxu0 0
    %722 = vmatpush1.bf16.msra.mxu0 0
    %723 = vmatprep.subr.bf16.mxu0 0
    %724 = vmatpush1.bf16.msra.mxu0 0
    %725 = vmatprep.mubr.bf16.mxu0 0
    %726 = vmatmul.mubr.bf16.gmra.mrb[0].mxu0 %v688
    %v727 = vpop.f32.mrb[0].mxu0
    %v728 = vadd.f32 0.0, %v727
    %v729 = vpop.f32.mrb[0].mxu0
    %v730 = vpop.f32.mrb[0].mxu0
    %v731 = vpop.f32.mrb[0].mxu0
    %732 = vdwg.mxu0
    %733 = vrot.lane.b32.xlu0 %v342, 64
    %v734 = vpop.permute.xlu0 %733
    %v736 = vsel %vm346, %v587, 0
    %v739 = vsel %vm593, %v734, 0
    %741 = vmatprep.subr.bf16.mxu0 0
    %742 = vmatpush1.bf16.msra.mxu0 %v739
    %743 = vmatprep.subr.bf16.mxu0 0
    %744 = vmatpush1.bf16.msra.mxu0 0
    %745 = vmatprep.subr.bf16.mxu0 0
    %746 = vmatpush1.bf16.msra.mxu0 0
    %747 = vmatprep.subr.bf16.mxu0 0
    %748 = vmatpush1.bf16.msra.mxu0 0
    %749 = vmatprep.subr.bf16.mxu0 0
    %750 = vmatpush1.bf16.msra.mxu0 0
    %751 = vmatprep.subr.bf16.mxu0 0
    %752 = vmatpush1.bf16.msra.mxu0 0
    %753 = vmatprep.subr.bf16.mxu0 0
    %754 = vmatpush1.bf16.msra.mxu0 0
    %755 = vmatprep.subr.bf16.mxu0 0
    %756 = vmatpush1.bf16.msra.mxu0 0
    %757 = vmatprep.subr.bf16.mxu0 0
    %758 = vmatpush1.bf16.msra.mxu0 0
    %759 = vmatprep.subr.bf16.mxu0 0
    %760 = vmatpush1.bf16.msra.mxu0 0
    %761 = vmatprep.subr.bf16.mxu0 0
    %762 = vmatpush1.bf16.msra.mxu0 0
    %763 = vmatprep.subr.bf16.mxu0 0
    %764 = vmatpush1.bf16.msra.mxu0 0
    %765 = vmatprep.subr.bf16.mxu0 0
    %766 = vmatpush1.bf16.msra.mxu0 0
    %767 = vmatprep.subr.bf16.mxu0 0
    %768 = vmatpush1.bf16.msra.mxu0 0
    %769 = vmatprep.subr.bf16.mxu0 0
    %770 = vmatpush1.bf16.msra.mxu0 0
    %771 = vmatprep.subr.bf16.mxu0 0
    %772 = vmatpush1.bf16.msra.mxu0 0
    %773 = vmatprep.mubr.bf16.mxu0 0
    %774 = vmatmul.mubr.bf16.gmra.mrb[0].mxu0 %v736
    %v775 = vpop.f32.mrb[0].mxu0
    %v776 = vadd.f32 0.0, %v775
    %v777 = vpop.f32.mrb[0].mxu0
    %v778 = vpop.f32.mrb[0].mxu0
    %v779 = vpop.f32.mrb[0].mxu0
    %780 = vdwg.mxu0
    %782 = vrot.lane.b32.xlu0 %v326, 120
    %v783 = vpop.permute.xlu0 %782
    %785 = vrot.lane.b32.xlu0 %v326, 112
    %v786 = vpop.permute.xlu0 %785
    %788 = vrot.lane.b32.xlu0 %v326, 104
    %v789 = vpop.permute.xlu0 %788
    %v791 = vpack.c.bf16 %v326, %v326
    %v792 = vpack.c.bf16 %v783, %v783
    %v793 = vpack.c.bf16 %v786, %v786
    %v794 = vpack.c.bf16 %v789, %v789
    %796 = vrot.lane.b32.xlu0 %v791, 96
    %v797 = vpop.permute.xlu0 %796
    %v799 = vsel %vm346, %v791, 0
    %v802 = vsel %vm346, %v797, 0
    %804 = vmatprep.subr.bf16.mxu0 0
    %805 = vmatpush1.bf16.xpose.msra.mxu0 %v802
    %806 = vmatprep.subr.bf16.mxu0 0
    %807 = vmatpush1.bf16.xpose.msra.mxu0 0
    %808 = vmatprep.subr.bf16.mxu0 0
    %809 = vmatpush1.bf16.xpose.msra.mxu0 0
    %810 = vmatprep.subr.bf16.mxu0 0
    %811 = vmatpush1.bf16.xpose.msra.mxu0 0
    %812 = vmatprep.subr.bf16.mxu0 0
    %813 = vmatpush1.bf16.xpose.msra.mxu0 0
    %814 = vmatprep.subr.bf16.mxu0 0
    %815 = vmatpush1.bf16.xpose.msra.mxu0 0
    %816 = vmatprep.subr.bf16.mxu0 0
    %817 = vmatpush1.bf16.xpose.msra.mxu0 0
    %818 = vmatprep.subr.bf16.mxu0 0
    %819 = vmatpush1.bf16.xpose.msra.mxu0 0
    %820 = vmatprep.subr.bf16.mxu0 0
    %821 = vmatpush1.bf16.xpose.msra.mxu0 0
    %822 = vmatprep.subr.bf16.mxu0 0
    %823 = vmatpush1.bf16.xpose.msra.mxu0 0
    %824 = vmatprep.subr.bf16.mxu0 0
    %825 = vmatpush1.bf16.xpose.msra.mxu0 0
    %826 = vmatprep.subr.bf16.mxu0 0
    %827 = vmatpush1.bf16.xpose.msra.mxu0 0
    %828 = vmatprep.subr.bf16.mxu0 0
    %829 = vmatpush1.bf16.xpose.msra.mxu0 0
    %830 = vmatprep.subr.bf16.mxu0 0
    %831 = vmatpush1.bf16.xpose.msra.mxu0 0
    %832 = vmatprep.subr.bf16.mxu0 0
    %833 = vmatpush1.bf16.xpose.msra.mxu0 0
    %834 = vmatprep.subr.bf16.mxu0 0
    %835 = vmatpush1.bf16.xpose.msra.mxu0 0
    %836 = vmatprep.mubr.bf16.mxu0 0
    %837 = vmatmul.mubr.bf16.gmra.mrb[0].mxu0 %v799
    %v838 = vpop.f32.mrb[0].mxu0
    %v839 = vadd.f32 %v159, %v838
    %v840 = vpop.f32.mrb[0].mxu0
    %v841 = vpop.f32.mrb[0].mxu0
    %v842 = vpop.f32.mrb[0].mxu0
    %843 = vdwg.mxu0
    %845 = vrot.lane.b32.xlu0 %v792, 96
    %v846 = vpop.permute.xlu0 %845
    %v848 = vsel %vm346, %v792, 0
    %v851 = vsel %vm346, %v846, 0
    %853 = vmatprep.subr.bf16.mxu0 0
    %854 = vmatpush1.bf16.xpose.msra.mxu0 %v851
    %855 = vmatprep.subr.bf16.mxu0 0
    %856 = vmatpush1.bf16.xpose.msra.mxu0 0
    %857 = vmatprep.subr.bf16.mxu0 0
    %858 = vmatpush1.bf16.xpose.msra.mxu0 0
    %859 = vmatprep.subr.bf16.mxu0 0
    %860 = vmatpush1.bf16.xpose.msra.mxu0 0
    %861 = vmatprep.subr.bf16.mxu0 0
    %862 = vmatpush1.bf16.xpose.msra.mxu0 0
    %863 = vmatprep.subr.bf16.mxu0 0
    %864 = vmatpush1.bf16.xpose.msra.mxu0 0
    %865 = vmatprep.subr.bf16.mxu0 0
    %866 = vmatpush1.bf16.xpose.msra.mxu0 0
    %867 = vmatprep.subr.bf16.mxu0 0
    %868 = vmatpush1.bf16.xpose.msra.mxu0 0
    %869 = vmatprep.subr.bf16.mxu0 0
    %870 = vmatpush1.bf16.xpose.msra.mxu0 0
    %871 = vmatprep.subr.bf16.mxu0 0
    %872 = vmatpush1.bf16.xpose.msra.mxu0 0
    %873 = vmatprep.subr.bf16.mxu0 0
    %874 = vmatpush1.bf16.xpose.msra.mxu0 0
    %875 = vmatprep.subr.bf16.mxu0 0
    %876 = vmatpush1.bf16.xpose.msra.mxu0 0
    %877 = vmatprep.subr.bf16.mxu0 0
    %878 = vmatpush1.bf16.xpose.msra.mxu0 0
    %879 = vmatprep.subr.bf16.mxu0 0
    %880 = vmatpush1.bf16.xpose.msra.mxu0 0
    %881 = vmatprep.subr.bf16.mxu0 0
    %882 = vmatpush1.bf16.xpose.msra.mxu0 0
    %883 = vmatprep.subr.bf16.mxu0 0
    %884 = vmatpush1.bf16.xpose.msra.mxu0 0
    %885 = vmatprep.mubr.bf16.mxu0 0
    %886 = vmatmul.mubr.bf16.gmra.mrb[0].mxu0 %v848
    %v887 = vpop.f32.mrb[0].mxu0
    %v888 = vadd.f32 %v159, %v887
    %v889 = vpop.f32.mrb[0].mxu0
    %v890 = vpop.f32.mrb[0].mxu0
    %v891 = vpop.f32.mrb[0].mxu0
    %892 = vdwg.mxu0
    %894 = vrot.lane.b32.xlu0 %v793, 96
    %v895 = vpop.permute.xlu0 %894
    %v897 = vsel %vm346, %v793, 0
    %v900 = vsel %vm346, %v895, 0
    %902 = vmatprep.subr.bf16.mxu0 0
    %903 = vmatpush1.bf16.xpose.msra.mxu0 %v900
    %904 = vmatprep.subr.bf16.mxu0 0
    %905 = vmatpush1.bf16.xpose.msra.mxu0 0
    %906 = vmatprep.subr.bf16.mxu0 0
    %907 = vmatpush1.bf16.xpose.msra.mxu0 0
    %908 = vmatprep.subr.bf16.mxu0 0
    %909 = vmatpush1.bf16.xpose.msra.mxu0 0
    %910 = vmatprep.subr.bf16.mxu0 0
    %911 = vmatpush1.bf16.xpose.msra.mxu0 0
    %912 = vmatprep.subr.bf16.mxu0 0
    %913 = vmatpush1.bf16.xpose.msra.mxu0 0
    %914 = vmatprep.subr.bf16.mxu0 0
    %915 = vmatpush1.bf16.xpose.msra.mxu0 0
    %916 = vmatprep.subr.bf16.mxu0 0
    %917 = vmatpush1.bf16.xpose.msra.mxu0 0
    %918 = vmatprep.subr.bf16.mxu0 0
    %919 = vmatpush1.bf16.xpose.msra.mxu0 0
    %920 = vmatprep.subr.bf16.mxu0 0
    %921 = vmatpush1.bf16.xpose.msra.mxu0 0
    %922 = vmatprep.subr.bf16.mxu0 0
    %923 = vmatpush1.bf16.xpose.msra.mxu0 0
    %924 = vmatprep.subr.bf16.mxu0 0
    %925 = vmatpush1.bf16.xpose.msra.mxu0 0
    %926 = vmatprep.subr.bf16.mxu0 0
    %927 = vmatpush1.bf16.xpose.msra.mxu0 0
    %928 = vmatprep.subr.bf16.mxu0 0
    %929 = vmatpush1.bf16.xpose.msra.mxu0 0
    %930 = vmatprep.subr.bf16.mxu0 0
    %931 = vmatpush1.bf16.xpose.msra.mxu0 0
    %932 = vmatprep.subr.bf16.mxu0 0
    %933 = vmatpush1.bf16.xpose.msra.mxu0 0
    %934 = vmatprep.mubr.bf16.mxu0 0
    %935 = vmatmul.mubr.bf16.gmra.mrb[0].mxu0 %v897
    %v936 = vpop.f32.mrb[0].mxu0
    %v937 = vadd.f32 %v159, %v936
    %v938 = vpop.f32.mrb[0].mxu0
    %v939 = vpop.f32.mrb[0].mxu0
    %v940 = vpop.f32.mrb[0].mxu0
    %941 = vdwg.mxu0
    %943 = vrot.lane.b32.xlu0 %v794, 96
    %v944 = vpop.permute.xlu0 %943
    %v946 = vsel %vm346, %v794, 0
    %v949 = vsel %vm346, %v944, 0
    %951 = vmatprep.subr.bf16.mxu0 0
    %952 = vmatpush1.bf16.xpose.msra.mxu0 %v949
    %953 = vmatprep.subr.bf16.mxu0 0
    %954 = vmatpush1.bf16.xpose.msra.mxu0 0
    %955 = vmatprep.subr.bf16.mxu0 0
    %956 = vmatpush1.bf16.xpose.msra.mxu0 0
    %957 = vmatprep.subr.bf16.mxu0 0
    %958 = vmatpush1.bf16.xpose.msra.mxu0 0
    %959 = vmatprep.subr.bf16.mxu0 0
    %960 = vmatpush1.bf16.xpose.msra.mxu0 0
    %961 = vmatprep.subr.bf16.mxu0 0
    %962 = vmatpush1.bf16.xpose.msra.mxu0 0
    %963 = vmatprep.subr.bf16.mxu0 0
    %964 = vmatpush1.bf16.xpose.msra.mxu0 0
    %965 = vmatprep.subr.bf16.mxu0 0
    %966 = vmatpush1.bf16.xpose.msra.mxu0 0
    %967 = vmatprep.subr.bf16.mxu0 0
    %968 = vmatpush1.bf16.xpose.msra.mxu0 0
    %969 = vmatprep.subr.bf16.mxu0 0
    %970 = vmatpush1.bf16.xpose.msra.mxu0 0
    %971 = vmatprep.subr.bf16.mxu0 0
    %972 = vmatpush1.bf16.xpose.msra.mxu0 0
    %973 = vmatprep.subr.bf16.mxu0 0
    %974 = vmatpush1.bf16.xpose.msra.mxu0 0
    %975 = vmatprep.subr.bf16.mxu0 0
    %976 = vmatpush1.bf16.xpose.msra.mxu0 0
    %977 = vmatprep.subr.bf16.mxu0 0
    %978 = vmatpush1.bf16.xpose.msra.mxu0 0
    %979 = vmatprep.subr.bf16.mxu0 0
    %980 = vmatpush1.bf16.xpose.msra.mxu0 0
    %981 = vmatprep.subr.bf16.mxu0 0
    %982 = vmatpush1.bf16.xpose.msra.mxu0 0
    %983 = vmatprep.mubr.bf16.mxu0 0
    %984 = vmatmul.mubr.bf16.gmra.mrb[0].mxu0 %v946
    %v985 = vpop.f32.mrb[0].mxu0
    %v986 = vadd.f32 %v159, %v985
    %v987 = vpop.f32.mrb[0].mxu0
    %v988 = vpop.f32.mrb[0].mxu0
    %v989 = vpop.f32.mrb[0].mxu0
    %990 = vdwg.mxu0
    %v991 = vsel %vm346, %v839, -inf
    %992 = vmax.xlane.f32.xlu0 %v991
    %v993 = vpop.xlane.xlu0 %992
    %v994 = vsel %vm346, %v888, -inf
    %995 = vmax.xlane.f32.xlu0 %v994
    %v996 = vpop.xlane.xlu0 %995
    %v997 = vsel %vm346, %v937, -inf
    %998 = vmax.xlane.f32.xlu0 %v997
    %v999 = vpop.xlane.xlu0 %998
    %v1000 = vsel %vm346, %v986, -inf
    %1001 = vmax.xlane.f32.xlu0 %v1000
    %v1002 = vpop.xlane.xlu0 %1001
    %v1003 = vsub.f32 %v839, %v993
    %v1004 = vsub.f32 %v888, %v996
    %v1005 = vsub.f32 %v937, %v999
    %v1006 = vsub.f32 %v986, %v1002
    %v1007 = vmul.f32 %v1003, 1.442695
    %v1008 = vpow.pop %v1007
    %v1009 = vmul.f32 %v1004, 1.442695
    %v1010 = vpow.pop %v1009
    %v1011 = vmul.f32 %v1005, 1.442695
    %v1012 = vpow.pop %v1011
    %v1013 = vmul.f32 %v1006, 1.442695
    %v1014 = vpow.pop %v1013
    %v1015 = vsel %vm346, %v1008, 0.0
    %1016 = vadd.xlane.f32.xlu0 %v1015
    %v1017 = vpop.xlane.xlu0 %1016
    %v1018 = vsel %vm346, %v1010, 0.0
    %1019 = vadd.xlane.f32.xlu0 %v1018
    %v1020 = vpop.xlane.xlu0 %1019
    %v1021 = vsel %vm346, %v1012, 0.0
    %1022 = vadd.xlane.f32.xlu0 %v1021
    %v1023 = vpop.xlane.xlu0 %1022
    %v1024 = vsel %vm346, %v1014, 0.0
    %1025 = vadd.xlane.f32.xlu0 %v1024
    %v1026 = vpop.xlane.xlu0 %1025
    %v1027 = vrcp.pop %v1017
    %v1028 = vrcp.pop %v1020
    %v1029 = vrcp.pop %v1023
    %v1030 = vrcp.pop %v1026
    %v1031 = vmul.f32 %v1008, %v1027
    %v1032 = vmul.f32 %v1010, %v1028
    %v1033 = vmul.f32 %v1012, %v1029
    %v1034 = vmul.f32 %v1014, %v1030
    %v1035 = vpack.c.bf16 %v1031, %v1031
    %v1036 = vpack.c.bf16 %v1032, %v1032
    %v1037 = vpack.c.bf16 %v1033, %v1033
    %v1038 = vpack.c.bf16 %v1034, %v1034
    %1039 = vrot.lane.b32.xlu0 %v791, 64
    %v1040 = vpop.permute.xlu0 %1039
    %v1042 = vsel %vm346, %v1035, 0
    %v1045 = vsel %vm593, %v1040, 0
    %1047 = vmatprep.subr.bf16.mxu0 0
    %1048 = vmatpush1.bf16.msra.mxu0 %v1045
    %1049 = vmatprep.subr.bf16.mxu0 0
    %1050 = vmatpush1.bf16.msra.mxu0 0
    %1051 = vmatprep.subr.bf16.mxu0 0
    %1052 = vmatpush1.bf16.msra.mxu0 0
    %1053 = vmatprep.subr.bf16.mxu0 0
    %1054 = vmatpush1.bf16.msra.mxu0 0
    %1055 = vmatprep.subr.bf16.mxu0 0
    %1056 = vmatpush1.bf16.msra.mxu0 0
    %1057 = vmatprep.subr.bf16.mxu0 0
    %1058 = vmatpush1.bf16.msra.mxu0 0
    %1059 = vmatprep.subr.bf16.mxu0 0
    %1060 = vmatpush1.bf16.msra.mxu0 0
    %1061 = vmatprep.subr.bf16.mxu0 0
    %1062 = vmatpush1.bf16.msra.mxu0 0
    %1063 = vmatprep.subr.bf16.mxu0 0
    %1064 = vmatpush1.bf16.msra.mxu0 0
    %1065 = vmatprep.subr.bf16.mxu0 0
    %1066 = vmatpush1.bf16.msra.mxu0 0
    %1067 = vmatprep.subr.bf16.mxu0 0
    %1068 = vmatpush1.bf16.msra.mxu0 0
    %1069 = vmatprep.subr.bf16.mxu0 0
    %1070 = vmatpush1.bf16.msra.mxu0 0
    %1071 = vmatprep.subr.bf16.mxu0 0
    %1072 = vmatpush1.bf16.msra.mxu0 0
    %1073 = vmatprep.subr.bf16.mxu0 0
    %1074 = vmatpush1.bf16.msra.mxu0 0
    %1075 = vmatprep.subr.bf16.mxu0 0
    %1076 = vmatpush1.bf16.msra.mxu0 0
    %1077 = vmatprep.subr.bf16.mxu0 0
    %1078 = vmatpush1.bf16.msra.mxu0 0
    %1079 = vmatprep.mubr.bf16.mxu0 0
    %1080 = vmatmul.mubr.bf16.gmra.mrb[0].mxu0 %v1042
    %v1081 = vpop.f32.mrb[0].mxu0
    %v1082 = vadd.f32 0.0, %v1081
    %v1083 = vpop.f32.mrb[0].mxu0
    %v1084 = vpop.f32.mrb[0].mxu0
    %v1085 = vpop.f32.mrb[0].mxu0
    %1086 = vdwg.mxu0
    %1087 = vrot.lane.b32.xlu0 %v792, 64
    %v1088 = vpop.permute.xlu0 %1087
    %v1090 = vsel %vm346, %v1036, 0
    %v1093 = vsel %vm593, %v1088, 0
    %1095 = vmatprep.subr.bf16.mxu0 0
    %1096 = vmatpush1.bf16.msra.mxu0 %v1093
    %1097 = vmatprep.subr.bf16.mxu0 0
    %1098 = vmatpush1.bf16.msra.mxu0 0
    %1099 = vmatprep.subr.bf16.mxu0 0
    %1100 = vmatpush1.bf16.msra.mxu0 0
    %1101 = vmatprep.subr.bf16.mxu0 0
    %1102 = vmatpush1.bf16.msra.mxu0 0
    %1103 = vmatprep.subr.bf16.mxu0 0
    %1104 = vmatpush1.bf16.msra.mxu0 0
    %1105 = vmatprep.subr.bf16.mxu0 0
    %1106 = vmatpush1.bf16.msra.mxu0 0
    %1107 = vmatprep.subr.bf16.mxu0 0
    %1108 = vmatpush1.bf16.msra.mxu0 0
    %1109 = vmatprep.subr.bf16.mxu0 0
    %1110 = vmatpush1.bf16.msra.mxu0 0
    %1111 = vmatprep.subr.bf16.mxu0 0
    %1112 = vmatpush1.bf16.msra.mxu0 0
    %1113 = vmatprep.subr.bf16.mxu0 0
    %1114 = vmatpush1.bf16.msra.mxu0 0
    %1115 = vmatprep.subr.bf16.mxu0 0
    %1116 = vmatpush1.bf16.msra.mxu0 0
    %1117 = vmatprep.subr.bf16.mxu0 0
    %1118 = vmatpush1.bf16.msra.mxu0 0
    %1119 = vmatprep.subr.bf16.mxu0 0
    %1120 = vmatpush1.bf16.msra.mxu0 0
    %1121 = vmatprep.subr.bf16.mxu0 0
    %1122 = vmatpush1.bf16.msra.mxu0 0
    %1123 = vmatprep.subr.bf16.mxu0 0
    %1124 = vmatpush1.bf16.msra.mxu0 0
    %1125 = vmatprep.subr.bf16.mxu0 0
    %1126 = vmatpush1.bf16.msra.mxu0 0
    %1127 = vmatprep.mubr.bf16.mxu0 0
    %1128 = vmatmul.mubr.bf16.gmra.mrb[0].mxu0 %v1090
    %v1129 = vpop.f32.mrb[0].mxu0
    %v1130 = vadd.f32 0.0, %v1129
    %v1131 = vpop.f32.mrb[0].mxu0
    %v1132 = vpop.f32.mrb[0].mxu0
    %v1133 = vpop.f32.mrb[0].mxu0
    %1134 = vdwg.mxu0
    %1135 = vrot.lane.b32.xlu0 %v793, 64
    %v1136 = vpop.permute.xlu0 %1135
    %v1138 = vsel %vm346, %v1037, 0
    %v1141 = vsel %vm593, %v1136, 0
    %1143 = vmatprep.subr.bf16.mxu0 0
    %1144 = vmatpush1.bf16.msra.mxu0 %v1141
    %1145 = vmatprep.subr.bf16.mxu0 0
    %1146 = vmatpush1.bf16.msra.mxu0 0
    %1147 = vmatprep.subr.bf16.mxu0 0
    %1148 = vmatpush1.bf16.msra.mxu0 0
    %1149 = vmatprep.subr.bf16.mxu0 0
    %1150 = vmatpush1.bf16.msra.mxu0 0
    %1151 = vmatprep.subr.bf16.mxu0 0
    %1152 = vmatpush1.bf16.msra.mxu0 0
    %1153 = vmatprep.subr.bf16.mxu0 0
    %1154 = vmatpush1.bf16.msra.mxu0 0
    %1155 = vmatprep.subr.bf16.mxu0 0
    %1156 = vmatpush1.bf16.msra.mxu0 0
    %1157 = vmatprep.subr.bf16.mxu0 0
    %1158 = vmatpush1.bf16.msra.mxu0 0
    %1159 = vmatprep.subr.bf16.mxu0 0
    %1160 = vmatpush1.bf16.msra.mxu0 0
    %1161 = vmatprep.subr.bf16.mxu0 0
    %1162 = vmatpush1.bf16.msra.mxu0 0
    %1163 = vmatprep.subr.bf16.mxu0 0
    %1164 = vmatpush1.bf16.msra.mxu0 0
    %1165 = vmatprep.subr.bf16.mxu0 0
    %1166 = vmatpush1.bf16.msra.mxu0 0
    %1167 = vmatprep.subr.bf16.mxu0 0
    %1168 = vmatpush1.bf16.msra.mxu0 0
    %1169 = vmatprep.subr.bf16.mxu0 0
    %1170 = vmatpush1.bf16.msra.mxu0 0
    %1171 = vmatprep.subr.bf16.mxu0 0
    %1172 = vmatpush1.bf16.msra.mxu0 0
    %1173 = vmatprep.subr.bf16.mxu0 0
    %1174 = vmatpush1.bf16.msra.mxu0 0
    %1175 = vmatprep.mubr.bf16.mxu0 0
    %1176 = vmatmul.mubr.bf16.gmra.mrb[0].mxu0 %v1138
    %v1177 = vpop.f32.mrb[0].mxu0
    %v1178 = vadd.f32 0.0, %v1177
    %v1179 = vpop.f32.mrb[0].mxu0
    %v1180 = vpop.f32.mrb[0].mxu0
    %v1181 = vpop.f32.mrb[0].mxu0
    %1182 = vdwg.mxu0
    %1183 = vrot.lane.b32.xlu0 %v794, 64
    %v1184 = vpop.permute.xlu0 %1183
    %v1186 = vsel %vm346, %v1038, 0
    %v1189 = vsel %vm593, %v1184, 0
    %1191 = vmatprep.subr.bf16.mxu0 0
    %1192 = vmatpush1.bf16.msra.mxu0 %v1189
    %1193 = vmatprep.subr.bf16.mxu0 0
    %1194 = vmatpush1.bf16.msra.mxu0 0
    %1195 = vmatprep.subr.bf16.mxu0 0
    %1196 = vmatpush1.bf16.msra.mxu0 0
    %1197 = vmatprep.subr.bf16.mxu0 0
    %1198 = vmatpush1.bf16.msra.mxu0 0
    %1199 = vmatprep.subr.bf16.mxu0 0
    %1200 = vmatpush1.bf16.msra.mxu0 0
    %1201 = vmatprep.subr.bf16.mxu0 0
    %1202 = vmatpush1.bf16.msra.mxu0 0
    %1203 = vmatprep.subr.bf16.mxu0 0
    %1204 = vmatpush1.bf16.msra.mxu0 0
    %1205 = vmatprep.subr.bf16.mxu0 0
    %1206 = vmatpush1.bf16.msra.mxu0 0
    %1207 = vmatprep.subr.bf16.mxu0 0
    %1208 = vmatpush1.bf16.msra.mxu0 0
    %1209 = vmatprep.subr.bf16.mxu0 0
    %1210 = vmatpush1.bf16.msra.mxu0 0
    %1211 = vmatprep.subr.bf16.mxu0 0
    %1212 = vmatpush1.bf16.msra.mxu0 0
    %1213 = vmatprep.subr.bf16.mxu0 0
    %1214 = vmatpush1.bf16.msra.mxu0 0
    %1215 = vmatprep.subr.bf16.mxu0 0
    %1216 = vmatpush1.bf16.msra.mxu0 0
    %1217 = vmatprep.subr.bf16.mxu0 0
    %1218 = vmatpush1.bf16.msra.mxu0 0
    %1219 = vmatprep.subr.bf16.mxu0 0
    %1220 = vmatpush1.bf16.msra.mxu0 0
    %1221 = vmatprep.subr.bf16.mxu0 0
    %1222 = vmatpush1.bf16.msra.mxu0 0
    %1223 = vmatprep.mubr.bf16.mxu0 0
    %1224 = vmatmul.mubr.bf16.gmra.mrb[0].mxu0 %v1186
    %v1225 = vpop.f32.mrb[0].mxu0
    %v1226 = vadd.f32 0.0, %v1225
    %v1227 = vpop.f32.mrb[0].mxu0
    %v1228 = vpop.f32.mrb[0].mxu0
    %v1229 = vpop.f32.mrb[0].mxu0
    %1230 = vdwg.mxu0
    %v1231 = vld [vmem:[%s5] sm:$0xf]
    %v1232 = vld [vmem:[%s5 + $0x4] sm:$0xf]
    %v1233 = vld [vmem:[%s5 + $0x8] sm:$0xf]
    %v1234 = vld [vmem:[%s5 + $0xc] sm:$0xf]
    %v1235 = vld [vmem:[%s6] sm:$0x1]
    %v1236 = vpack.c.bf16 %v1082, %v632
    %v1237 = vpack.c.bf16 %v1130, %v680
    %v1238 = vpack.c.bf16 %v1178, %v728
    %v1239 = vpack.c.bf16 %v1226, %v776
    %v1241 = vsel %vm346, %v1236, 0
    %v1244 = vsel %vm593, %v1231, 0
    %1246 = vmatprep.subr.bf16.mxu0 0
    %1247 = vmatpush1.bf16.msra.mxu0 %v1244
    %1248 = vmatprep.subr.bf16.mxu0 0
    %1249 = vmatpush1.bf16.msra.mxu0 0
    %1250 = vmatprep.subr.bf16.mxu0 0
    %1251 = vmatpush1.bf16.msra.mxu0 0
    %1252 = vmatprep.subr.bf16.mxu0 0
    %1253 = vmatpush1.bf16.msra.mxu0 0
    %1254 = vmatprep.subr.bf16.mxu0 0
    %1255 = vmatpush1.bf16.msra.mxu0 0
    %1256 = vmatprep.subr.bf16.mxu0 0
    %1257 = vmatpush1.bf16.msra.mxu0 0
    %1258 = vmatprep.subr.bf16.mxu0 0
    %1259 = vmatpush1.bf16.msra.mxu0 0
    %1260 = vmatprep.subr.bf16.mxu0 0
    %1261 = vmatpush1.bf16.msra.mxu0 0
    %1262 = vmatprep.subr.bf16.mxu0 0
    %1263 = vmatpush1.bf16.msra.mxu0 0
    %1264 = vmatprep.subr.bf16.mxu0 0
    %1265 = vmatpush1.bf16.msra.mxu0 0
    %1266 = vmatprep.subr.bf16.mxu0 0
    %1267 = vmatpush1.bf16.msra.mxu0 0
    %1268 = vmatprep.subr.bf16.mxu0 0
    %1269 = vmatpush1.bf16.msra.mxu0 0
    %1270 = vmatprep.subr.bf16.mxu0 0
    %1271 = vmatpush1.bf16.msra.mxu0 0
    %1272 = vmatprep.subr.bf16.mxu0 0
    %1273 = vmatpush1.bf16.msra.mxu0 0
    %1274 = vmatprep.subr.bf16.mxu0 0
    %1275 = vmatpush1.bf16.msra.mxu0 0
    %1276 = vmatprep.subr.bf16.mxu0 0
    %1277 = vmatpush1.bf16.msra.mxu0 0
    %1278 = vmatprep.mubr.bf16.mxu0 0
    %1279 = vmatmul.mubr.bf16.gmra.mrb[0].mxu0 %v1241
    %v1280 = vpop.f32.mrb[0].mxu0
    %v1281 = vadd.f32 0.0, %v1280
    %v1282 = vpop.f32.mrb[0].mxu0
    %v1283 = vpop.f32.mrb[0].mxu0
    %v1284 = vadd.f32 0.0, %v1283
    %v1285 = vpop.f32.mrb[0].mxu0
    %1286 = vdwg.mxu0
    %v1288 = vsel %vm346, %v1237, 0
    %v1291 = vsel %vm593, %v1232, 0
    %1293 = vmatprep.subr.bf16.mxu0 0
    %1294 = vmatpush1.bf16.msra.mxu0 %v1291
    %1295 = vmatprep.subr.bf16.mxu0 0
    %1296 = vmatpush1.bf16.msra.mxu0 0
    %1297 = vmatprep.subr.bf16.mxu0 0
    %1298 = vmatpush1.bf16.msra.mxu0 0
    %1299 = vmatprep.subr.bf16.mxu0 0
    %1300 = vmatpush1.bf16.msra.mxu0 0
    %1301 = vmatprep.subr.bf16.mxu0 0
    %1302 = vmatpush1.bf16.msra.mxu0 0
    %1303 = vmatprep.subr.bf16.mxu0 0
    %1304 = vmatpush1.bf16.msra.mxu0 0
    %1305 = vmatprep.subr.bf16.mxu0 0
    %1306 = vmatpush1.bf16.msra.mxu0 0
    %1307 = vmatprep.subr.bf16.mxu0 0
    %1308 = vmatpush1.bf16.msra.mxu0 0
    %1309 = vmatprep.subr.bf16.mxu0 0
    %1310 = vmatpush1.bf16.msra.mxu0 0
    %1311 = vmatprep.subr.bf16.mxu0 0
    %1312 = vmatpush1.bf16.msra.mxu0 0
    %1313 = vmatprep.subr.bf16.mxu0 0
    %1314 = vmatpush1.bf16.msra.mxu0 0
    %1315 = vmatprep.subr.bf16.mxu0 0
    %1316 = vmatpush1.bf16.msra.mxu0 0
    %1317 = vmatprep.subr.bf16.mxu0 0
    %1318 = vmatpush1.bf16.msra.mxu0 0
    %1319 = vmatprep.subr.bf16.mxu0 0
    %1320 = vmatpush1.bf16.msra.mxu0 0
    %1321 = vmatprep.subr.bf16.mxu0 0
    %1322 = vmatpush1.bf16.msra.mxu0 0
    %1323 = vmatprep.subr.bf16.mxu0 0
    %1324 = vmatpush1.bf16.msra.mxu0 0
    %1325 = vmatprep.mubr.bf16.mxu0 0
    %1326 = vmatmul.mubr.bf16.gmra.mrb[0].mxu0 %v1288
    %v1327 = vpop.f32.mrb[0].mxu0
    %v1328 = vadd.f32 0.0, %v1327
    %v1329 = vpop.f32.mrb[0].mxu0
    %v1330 = vpop.f32.mrb[0].mxu0
    %v1331 = vadd.f32 0.0, %v1330
    %v1332 = vpop.f32.mrb[0].mxu0
    %1333 = vdwg.mxu0
    %v1335 = vsel %vm346, %v1238, 0
    %v1338 = vsel %vm593, %v1233, 0
    %1340 = vmatprep.subr.bf16.mxu0 0
    %1341 = vmatpush1.bf16.msra.mxu0 %v1338
    %1342 = vmatprep.subr.bf16.mxu0 0
    %1343 = vmatpush1.bf16.msra.mxu0 0
    %1344 = vmatprep.subr.bf16.mxu0 0
    %1345 = vmatpush1.bf16.msra.mxu0 0
    %1346 = vmatprep.subr.bf16.mxu0 0
    %1347 = vmatpush1.bf16.msra.mxu0 0
    %1348 = vmatprep.subr.bf16.mxu0 0
    %1349 = vmatpush1.bf16.msra.mxu0 0
    %1350 = vmatprep.subr.bf16.mxu0 0
    %1351 = vmatpush1.bf16.msra.mxu0 0
    %1352 = vmatprep.subr.bf16.mxu0 0
    %1353 = vmatpush1.bf16.msra.mxu0 0
    %1354 = vmatprep.subr.bf16.mxu0 0
    %1355 = vmatpush1.bf16.msra.mxu0 0
    %1356 = vmatprep.subr.bf16.mxu0 0
    %1357 = vmatpush1.bf16.msra.mxu0 0
    %1358 = vmatprep.subr.bf16.mxu0 0
    %1359 = vmatpush1.bf16.msra.mxu0 0
    %1360 = vmatprep.subr.bf16.mxu0 0
    %1361 = vmatpush1.bf16.msra.mxu0 0
    %1362 = vmatprep.subr.bf16.mxu0 0
    %1363 = vmatpush1.bf16.msra.mxu0 0
    %1364 = vmatprep.subr.bf16.mxu0 0
    %1365 = vmatpush1.bf16.msra.mxu0 0
    %1366 = vmatprep.subr.bf16.mxu0 0
    %1367 = vmatpush1.bf16.msra.mxu0 0
    %1368 = vmatprep.subr.bf16.mxu0 0
    %1369 = vmatpush1.bf16.msra.mxu0 0
    %1370 = vmatprep.subr.bf16.mxu0 0
    %1371 = vmatpush1.bf16.msra.mxu0 0
    %1372 = vmatprep.mubr.bf16.mxu0 0
    %1373 = vmatmul.mubr.bf16.gmra.mrb[0].mxu0 %v1335
    %v1374 = vpop.f32.mrb[0].mxu0
    %v1375 = vadd.f32 0.0, %v1374
    %v1376 = vpop.f32.mrb[0].mxu0
    %v1377 = vpop.f32.mrb[0].mxu0
    %v1378 = vadd.f32 0.0, %v1377
    %v1379 = vpop.f32.mrb[0].mxu0
    %1380 = vdwg.mxu0
    %v1382 = vsel %vm346, %v1239, 0
    %v1385 = vsel %vm593, %v1234, 0
    %1387 = vmatprep.subr.bf16.mxu0 0
    %1388 = vmatpush1.bf16.msra.mxu0 %v1385
    %1389 = vmatprep.subr.bf16.mxu0 0
    %1390 = vmatpush1.bf16.msra.mxu0 0
    %1391 = vmatprep.subr.bf16.mxu0 0
    %1392 = vmatpush1.bf16.msra.mxu0 0
    %1393 = vmatprep.subr.bf16.mxu0 0
    %1394 = vmatpush1.bf16.msra.mxu0 0
    %1395 = vmatprep.subr.bf16.mxu0 0
    %1396 = vmatpush1.bf16.msra.mxu0 0
    %1397 = vmatprep.subr.bf16.mxu0 0
    %1398 = vmatpush1.bf16.msra.mxu0 0
    %1399 = vmatprep.subr.bf16.mxu0 0
    %1400 = vmatpush1.bf16.msra.mxu0 0
    %1401 = vmatprep.subr.bf16.mxu0 0
    %1402 = vmatpush1.bf16.msra.mxu0 0
    %1403 = vmatprep.subr.bf16.mxu0 0
    %1404 = vmatpush1.bf16.msra.mxu0 0
    %1405 = vmatprep.subr.bf16.mxu0 0
    %1406 = vmatpush1.bf16.msra.mxu0 0
    %1407 = vmatprep.subr.bf16.mxu0 0
    %1408 = vmatpush1.bf16.msra.mxu0 0
    %1409 = vmatprep.subr.bf16.mxu0 0
    %1410 = vmatpush1.bf16.msra.mxu0 0
    %1411 = vmatprep.subr.bf16.mxu0 0
    %1412 = vmatpush1.bf16.msra.mxu0 0
    %1413 = vmatprep.subr.bf16.mxu0 0
    %1414 = vmatpush1.bf16.msra.mxu0 0
    %1415 = vmatprep.subr.bf16.mxu0 0
    %1416 = vmatpush1.bf16.msra.mxu0 0
    %1417 = vmatprep.subr.bf16.mxu0 0
    %1418 = vmatpush1.bf16.msra.mxu0 0
    %1419 = vmatprep.mubr.bf16.mxu0 0
    %1420 = vmatmul.mubr.bf16.gmra.mrb[0].mxu0 %v1382
    %v1421 = vpop.f32.mrb[0].mxu0
    %v1422 = vadd.f32 0.0, %v1421
    %v1423 = vpop.f32.mrb[0].mxu0
    %v1424 = vpop.f32.mrb[0].mxu0
    %v1425 = vadd.f32 0.0, %v1424
    %v1426 = vpop.f32.mrb[0].mxu0
    %1427 = vdwg.mxu0
    %v1428 = vsel %vm186, %v1281, 0.0
    %v1429 = vsel %vm186, %v1328, 0.0
    %v1430 = vadd.f32 %v1428, %v1429
    %v1431 = vsel %vm186, %v1375, 0.0
    %v1432 = vadd.f32 %v1430, %v1431
    %v1433 = vsel %vm186, %v1422, 0.0
    %v1434 = vadd.f32 %v1432, %v1433
    %v1435 = vsel %vm186, %v1284, 0.0
    %v1436 = vsel %vm186, %v1331, 0.0
    %v1437 = vadd.f32 %v1435, %v1436
    %v1438 = vsel %vm186, %v1378, 0.0
    %v1439 = vadd.f32 %v1437, %v1438
    %v1440 = vsel %vm186, %v1425, 0.0
    %v1441 = vadd.f32 %v1439, %v1440
    %v1443 = vlaneseq
    %v1444 = vshrl.u32 %v1443, 7
    %v1445 = vsub.s32 0, %v1444
    %v1446 = vrot.slane %v1235, %v1445
    %v1448 = vadd.f32 %v1434, %v1446
    %v1449 = vadd.f32 %v1441, %v1446
    %v1450 = vadd.f32 %v152, %v1448
    %v1451 = vadd.f32 %v153, %v1449
    %v1452 = vsel %vm186, %v1450, 0.0
    %1453 = vadd.xlane.f32.xlu0 %v1452
    %v1454 = vpop.xlane.xlu0 %1453
    %v1455 = vsel %vm186, %v1451, 0.0
    %1456 = vadd.xlane.f32.xlu0 %v1455
    %v1457 = vpop.xlane.xlu0 %1456
    %v1458 = vrcp.pop 32.0
    %v1459 = vmul.f32 %v1454, %v1458
    %v1460 = vmul.f32 %v1457, %v1458
    %v1461 = vmul.f32 %v1450, %v1450
    %v1462 = vmul.f32 %v1451, %v1451
    %v1463 = vsel %vm186, %v1461, 0.0
    %1464 = vadd.xlane.f32.xlu0 %v1463
    %v1465 = vpop.xlane.xlu0 %1464
    %v1466 = vsel %vm186, %v1462, 0.0
    %1467 = vadd.xlane.f32.xlu0 %v1466
    %v1468 = vpop.xlane.xlu0 %1467
    %v1469 = vmul.f32 %v1465, %v1458
    %v1470 = vmul.f32 %v1468, %v1458
    %v1471 = vmul.f32 %v1459, %v1459
    %v1472 = vmul.f32 %v1460, %v1460
    %v1473 = vsub.f32 %v1469, %v1471
    %v1474 = vsub.f32 %v1470, %v1472
    %v1475 = vmax.f32 %v1473, 0.0
    %v1476 = vmax.f32 %v1474, 0.0
    %v1477 = vsub.f32 %v1450, %v1459
    %v1478 = vsub.f32 %v1451, %v1460
    %v1479 = vadd.f32 %v1475, 1e-05
    %v1480 = vadd.f32 %v1476, 1e-05
    %v1481 = vrsqrt.pop %v1479
    %v1482 = vrsqrt.pop %v1480
    %v1483 = vmul.f32 %v1477, %v1481
    %v1484 = vmul.f32 %v1478, %v1482
    %v1485 = vlaneseq
    %v1486 = vshrl.u32 %v1485, 7
    %v1487 = vsub.s32 0, %v1486
    %v1488 = vrot.slane %v259, %v1487
    %v1489 = vmul.f32 %v1483, %v1488
    %v1490 = vmul.f32 %v1484, %v1488
    %v1491 = vlaneseq
    %v1492 = vshrl.u32 %v1491, 7
    %v1493 = vsub.s32 0, %v1492
    %v1494 = vrot.slane %v260, %v1493
    %v1495 = vadd.f32 %v1489, %v1494
    %v1496 = vadd.f32 %v1490, %v1494
    %v1497 = vld [vmem:[%s7] sm:$0xf]
    %v1498 = vld [vmem:[%s7 + $0x4] sm:$0xf]
    %v1499 = vld [vmem:[%s7 + $0x8] sm:$0xf]
    %v1500 = vld [vmem:[%s7 + $0xc] sm:$0xf]
    %v1501 = vld [vmem:[%s8] sm:$0x1]
    %v1502 = vpack.c.bf16 %v1496, %v1495
    %v1504 = vlaneseq
    %v1505 = vshrl.u32 %v1504, 7
    %v1506 = vsub.s32 0, %v1505
    %v1507 = vrot.slane %v1501, %v1506
    %v1513 = vunpack.c.l.b16 %v1497
    %v1514 = vunpack.c.l.b16 %v1498
    %v1515 = vunpack.c.l.b16 %v1499
    %v1516 = vunpack.c.l.b16 %v1500
    %v1517 = vpack.c.b16 %v1514, %v1513
    %v1518 = vpack.c.b16 %v1516, %v1515
    %v1522 = vsel %vm186, %v1502, 0
    %1524 = vmatprep.subr.bf16.mxu0 0
    %1525 = vmatpush1.bf16.msra.mxu0 %v1517
    %1526 = vmatprep.subr.bf16.mxu0 0
    %1527 = vmatpush1.bf16.msra.mxu0 %v1518
    %1528 = vmatprep.subr.bf16.mxu0 0
    %1529 = vmatpush1.bf16.msra.mxu0 0
    %1530 = vmatprep.subr.bf16.mxu0 0
    %1531 = vmatpush1.bf16.msra.mxu0 0
    %1532 = vmatprep.subr.bf16.mxu0 0
    %1533 = vmatpush1.bf16.msra.mxu0 0
    %1534 = vmatprep.subr.bf16.mxu0 0
    %1535 = vmatpush1.bf16.msra.mxu0 0
    %1536 = vmatprep.subr.bf16.mxu0 0
    %1537 = vmatpush1.bf16.msra.mxu0 0
    %1538 = vmatprep.subr.bf16.mxu0 0
    %1539 = vmatpush1.bf16.msra.mxu0 0
    %1540 = vmatprep.subr.bf16.mxu0 0
    %1541 = vmatpush1.bf16.msra.mxu0 0
    %1542 = vmatprep.subr.bf16.mxu0 0
    %1543 = vmatpush1.bf16.msra.mxu0 0
    %1544 = vmatprep.subr.bf16.mxu0 0
    %1545 = vmatpush1.bf16.msra.mxu0 0
    %1546 = vmatprep.subr.bf16.mxu0 0
    %1547 = vmatpush1.bf16.msra.mxu0 0
    %1548 = vmatprep.subr.bf16.mxu0 0
    %1549 = vmatpush1.bf16.msra.mxu0 0
    %1550 = vmatprep.subr.bf16.mxu0 0
    %1551 = vmatpush1.bf16.msra.mxu0 0
    %1552 = vmatprep.subr.bf16.mxu0 0
    %1553 = vmatpush1.bf16.msra.mxu0 0
    %1554 = vmatprep.subr.bf16.mxu0 0
    %1555 = vmatpush1.bf16.msra.mxu0 0
    %1556 = vmatprep.mubr.bf16.mxu0 0
    %1557 = vmatmul.mubr.bf16.gmra.mrb[0].mxu0 %v1522
    %v1558 = vpop.f32.mrb[0].mxu0
    %v1559 = vadd.f32 %v1507, %v1558
    %v1560 = vpop.f32.mrb[0].mxu0
    %v1561 = vpop.f32.mrb[0].mxu0
    %v1562 = vadd.f32 %v1507, %v1561
    %v1563 = vpop.f32.mrb[0].mxu0
    %1564 = vdwg.mxu0
    %1566 = vrot.lane.b32.xlu0 %v1559, 120
    %v1567 = vpop.permute.xlu0 %1566
    %1569 = vrot.lane.b32.xlu0 %v1559, 112
    %v1570 = vpop.permute.xlu0 %1569
    %1572 = vrot.lane.b32.xlu0 %v1559, 104
    %v1573 = vpop.permute.xlu0 %1572
    %v1575 = vpack.c.bf16 %v1559, %v1559
    %v1576 = vpack.c.bf16 %v1567, %v1567
    %v1577 = vpack.c.bf16 %v1570, %v1570
    %v1578 = vpack.c.bf16 %v1573, %v1573
    %v1580 = vsel %vm346, %v1575, 0
    %v1583 = vsel %vm346, %v241, 0
    %1585 = vmatprep.subr.bf16.mxu0 0
    %1586 = vmatpush1.bf16.xpose.msra.mxu0 %v1583
    %1587 = vmatprep.subr.bf16.mxu0 0
    %1588 = vmatpush1.bf16.xpose.msra.mxu0 0
    %1589 = vmatprep.subr.bf16.mxu0 0
    %1590 = vmatpush1.bf16.xpose.msra.mxu0 0
    %1591 = vmatprep.subr.bf16.mxu0 0
    %1592 = vmatpush1.bf16.xpose.msra.mxu0 0
    %1593 = vmatprep.subr.bf16.mxu0 0
    %1594 = vmatpush1.bf16.xpose.msra.mxu0 0
    %1595 = vmatprep.subr.bf16.mxu0 0
    %1596 = vmatpush1.bf16.xpose.msra.mxu0 0
    %1597 = vmatprep.subr.bf16.mxu0 0
    %1598 = vmatpush1.bf16.xpose.msra.mxu0 0
    %1599 = vmatprep.subr.bf16.mxu0 0
    %1600 = vmatpush1.bf16.xpose.msra.mxu0 0
    %1601 = vmatprep.subr.bf16.mxu0 0
    %1602 = vmatpush1.bf16.xpose.msra.mxu0 0
    %1603 = vmatprep.subr.bf16.mxu0 0
    %1604 = vmatpush1.bf16.xpose.msra.mxu0 0
    %1605 = vmatprep.subr.bf16.mxu0 0
    %1606 = vmatpush1.bf16.xpose.msra.mxu0 0
    %1607 = vmatprep.subr.bf16.mxu0 0
    %1608 = vmatpush1.bf16.xpose.msra.mxu0 0
    %1609 = vmatprep.subr.bf16.mxu0 0
    %1610 = vmatpush1.bf16.xpose.msra.mxu0 0
    %1611 = vmatprep.subr.bf16.mxu0 0
    %1612 = vmatpush1.bf16.xpose.msra.mxu0 0
    %1613 = vmatprep.subr.bf16.mxu0 0
    %1614 = vmatpush1.bf16.xpose.msra.mxu0 0
    %1615 = vmatprep.subr.bf16.mxu0 0
    %1616 = vmatpush1.bf16.xpose.msra.mxu0 0
    %1617 = vmatprep.mubr.bf16.mxu0 0
    %1618 = vmatmul.mubr.bf16.gmra.mrb[0].mxu0 %v1580
    %v1619 = vpop.f32.mrb[0].mxu0
    %v1620 = vadd.f32 0.0, %v1619
    %v1621 = vpop.f32.mrb[0].mxu0
    %v1622 = vpop.f32.mrb[0].mxu0
    %v1623 = vpop.f32.mrb[0].mxu0
    %1624 = vdwg.mxu0
    %v1626 = vsel %vm346, %v1576, 0
    %v1629 = vsel %vm346, %v242, 0
    %1631 = vmatprep.subr.bf16.mxu0 0
    %1632 = vmatpush1.bf16.xpose.msra.mxu0 %v1629
    %1633 = vmatprep.subr.bf16.mxu0 0
    %1634 = vmatpush1.bf16.xpose.msra.mxu0 0
    %1635 = vmatprep.subr.bf16.mxu0 0
    %1636 = vmatpush1.bf16.xpose.msra.mxu0 0
    %1637 = vmatprep.subr.bf16.mxu0 0
    %1638 = vmatpush1.bf16.xpose.msra.mxu0 0
    %1639 = vmatprep.subr.bf16.mxu0 0
    %1640 = vmatpush1.bf16.xpose.msra.mxu0 0
    %1641 = vmatprep.subr.bf16.mxu0 0
    %1642 = vmatpush1.bf16.xpose.msra.mxu0 0
    %1643 = vmatprep.subr.bf16.mxu0 0
    %1644 = vmatpush1.bf16.xpose.msra.mxu0 0
    %1645 = vmatprep.subr.bf16.mxu0 0
    %1646 = vmatpush1.bf16.xpose.msra.mxu0 0
    %1647 = vmatprep.subr.bf16.mxu0 0
    %1648 = vmatpush1.bf16.xpose.msra.mxu0 0
    %1649 = vmatprep.subr.bf16.mxu0 0
    %1650 = vmatpush1.bf16.xpose.msra.mxu0 0
    %1651 = vmatprep.subr.bf16.mxu0 0
    %1652 = vmatpush1.bf16.xpose.msra.mxu0 0
    %1653 = vmatprep.subr.bf16.mxu0 0
    %1654 = vmatpush1.bf16.xpose.msra.mxu0 0
    %1655 = vmatprep.subr.bf16.mxu0 0
    %1656 = vmatpush1.bf16.xpose.msra.mxu0 0
    %1657 = vmatprep.subr.bf16.mxu0 0
    %1658 = vmatpush1.bf16.xpose.msra.mxu0 0
    %1659 = vmatprep.subr.bf16.mxu0 0
    %1660 = vmatpush1.bf16.xpose.msra.mxu0 0
    %1661 = vmatprep.subr.bf16.mxu0 0
    %1662 = vmatpush1.bf16.xpose.msra.mxu0 0
    %1663 = vmatprep.mubr.bf16.mxu0 0
    %1664 = vmatmul.mubr.bf16.gmra.mrb[0].mxu0 %v1626
    %v1665 = vpop.f32.mrb[0].mxu0
    %v1666 = vadd.f32 0.0, %v1665
    %v1667 = vpop.f32.mrb[0].mxu0
    %v1668 = vpop.f32.mrb[0].mxu0
    %v1669 = vpop.f32.mrb[0].mxu0
    %1670 = vdwg.mxu0
    %v1672 = vsel %vm346, %v1577, 0
    %v1675 = vsel %vm346, %v243, 0
    %1677 = vmatprep.subr.bf16.mxu0 0
    %1678 = vmatpush1.bf16.xpose.msra.mxu0 %v1675
    %1679 = vmatprep.subr.bf16.mxu0 0
    %1680 = vmatpush1.bf16.xpose.msra.mxu0 0
    %1681 = vmatprep.subr.bf16.mxu0 0
    %1682 = vmatpush1.bf16.xpose.msra.mxu0 0
    %1683 = vmatprep.subr.bf16.mxu0 0
    %1684 = vmatpush1.bf16.xpose.msra.mxu0 0
    %1685 = vmatprep.subr.bf16.mxu0 0
    %1686 = vmatpush1.bf16.xpose.msra.mxu0 0
    %1687 = vmatprep.subr.bf16.mxu0 0
    %1688 = vmatpush1.bf16.xpose.msra.mxu0 0
    %1689 = vmatprep.subr.bf16.mxu0 0
    %1690 = vmatpush1.bf16.xpose.msra.mxu0 0
    %1691 = vmatprep.subr.bf16.mxu0 0
    %1692 = vmatpush1.bf16.xpose.msra.mxu0 0
    %1693 = vmatprep.subr.bf16.mxu0 0
    %1694 = vmatpush1.bf16.xpose.msra.mxu0 0
    %1695 = vmatprep.subr.bf16.mxu0 0
    %1696 = vmatpush1.bf16.xpose.msra.mxu0 0
    %1697 = vmatprep.subr.bf16.mxu0 0
    %1698 = vmatpush1.bf16.xpose.msra.mxu0 0
    %1699 = vmatprep.subr.bf16.mxu0 0
    %1700 = vmatpush1.bf16.xpose.msra.mxu0 0
    %1701 = vmatprep.subr.bf16.mxu0 0
    %1702 = vmatpush1.bf16.xpose.msra.mxu0 0
    %1703 = vmatprep.subr.bf16.mxu0 0
    %1704 = vmatpush1.bf16.xpose.msra.mxu0 0
    %1705 = vmatprep.subr.bf16.mxu0 0
    %1706 = vmatpush1.bf16.xpose.msra.mxu0 0
    %1707 = vmatprep.subr.bf16.mxu0 0
    %1708 = vmatpush1.bf16.xpose.msra.mxu0 0
    %1709 = vmatprep.mubr.bf16.mxu0 0
    %1710 = vmatmul.mubr.bf16.gmra.mrb[0].mxu0 %v1672
    %v1711 = vpop.f32.mrb[0].mxu0
    %v1712 = vadd.f32 0.0, %v1711
    %v1713 = vpop.f32.mrb[0].mxu0
    %v1714 = vpop.f32.mrb[0].mxu0
    %v1715 = vpop.f32.mrb[0].mxu0
    %1716 = vdwg.mxu0
    %v1718 = vsel %vm346, %v1578, 0
    %v1721 = vsel %vm346, %v244, 0
    %1723 = vmatprep.subr.bf16.mxu0 0
    %1724 = vmatpush1.bf16.xpose.msra.mxu0 %v1721
    %1725 = vmatprep.subr.bf16.mxu0 0
    %1726 = vmatpush1.bf16.xpose.msra.mxu0 0
    %1727 = vmatprep.subr.bf16.mxu0 0
    %1728 = vmatpush1.bf16.xpose.msra.mxu0 0
    %1729 = vmatprep.subr.bf16.mxu0 0
    %1730 = vmatpush1.bf16.xpose.msra.mxu0 0
    %1731 = vmatprep.subr.bf16.mxu0 0
    %1732 = vmatpush1.bf16.xpose.msra.mxu0 0
    %1733 = vmatprep.subr.bf16.mxu0 0
    %1734 = vmatpush1.bf16.xpose.msra.mxu0 0
    %1735 = vmatprep.subr.bf16.mxu0 0
    %1736 = vmatpush1.bf16.xpose.msra.mxu0 0
    %1737 = vmatprep.subr.bf16.mxu0 0
    %1738 = vmatpush1.bf16.xpose.msra.mxu0 0
    %1739 = vmatprep.subr.bf16.mxu0 0
    %1740 = vmatpush1.bf16.xpose.msra.mxu0 0
    %1741 = vmatprep.subr.bf16.mxu0 0
    %1742 = vmatpush1.bf16.xpose.msra.mxu0 0
    %1743 = vmatprep.subr.bf16.mxu0 0
    %1744 = vmatpush1.bf16.xpose.msra.mxu0 0
    %1745 = vmatprep.subr.bf16.mxu0 0
    %1746 = vmatpush1.bf16.xpose.msra.mxu0 0
    %1747 = vmatprep.subr.bf16.mxu0 0
    %1748 = vmatpush1.bf16.xpose.msra.mxu0 0
    %1749 = vmatprep.subr.bf16.mxu0 0
    %1750 = vmatpush1.bf16.xpose.msra.mxu0 0
    %1751 = vmatprep.subr.bf16.mxu0 0
    %1752 = vmatpush1.bf16.xpose.msra.mxu0 0
    %1753 = vmatprep.subr.bf16.mxu0 0
    %1754 = vmatpush1.bf16.xpose.msra.mxu0 0
    %1755 = vmatprep.mubr.bf16.mxu0 0
    %1756 = vmatmul.mubr.bf16.gmra.mrb[0].mxu0 %v1718
    %v1757 = vpop.f32.mrb[0].mxu0
    %v1758 = vadd.f32 0.0, %v1757
    %v1759 = vpop.f32.mrb[0].mxu0
    %v1760 = vpop.f32.mrb[0].mxu0
    %v1761 = vpop.f32.mrb[0].mxu0
    %1762 = vdwg.mxu0
    %v1763 = vsel %vm346, %v1620, -inf
    %1764 = vmax.xlane.f32.xlu0 %v1763
    %v1765 = vpop.xlane.xlu0 %1764
    %v1766 = vsel %vm346, %v1666, -inf
    %1767 = vmax.xlane.f32.xlu0 %v1766
    %v1768 = vpop.xlane.xlu0 %1767
    %v1769 = vsel %vm346, %v1712, -inf
    %1770 = vmax.xlane.f32.xlu0 %v1769
    %v1771 = vpop.xlane.xlu0 %1770
    %v1772 = vsel %vm346, %v1758, -inf
    %1773 = vmax.xlane.f32.xlu0 %v1772
    %v1774 = vpop.xlane.xlu0 %1773
    %v1775 = vsub.f32 %v1620, %v1765
    %v1776 = vsub.f32 %v1666, %v1768
    %v1777 = vsub.f32 %v1712, %v1771
    %v1778 = vsub.f32 %v1758, %v1774
    %v1779 = vmul.f32 %v1775, 1.442695
    %v1780 = vpow.pop %v1779
    %v1781 = vmul.f32 %v1776, 1.442695
    %v1782 = vpow.pop %v1781
    %v1783 = vmul.f32 %v1777, 1.442695
    %v1784 = vpow.pop %v1783
    %v1785 = vmul.f32 %v1778, 1.442695
    %v1786 = vpow.pop %v1785
    %v1787 = vsel %vm346, %v1780, 0.0
    %1788 = vadd.xlane.f32.xlu0 %v1787
    %v1789 = vpop.xlane.xlu0 %1788
    %v1790 = vsel %vm346, %v1782, 0.0
    %1791 = vadd.xlane.f32.xlu0 %v1790
    %v1792 = vpop.xlane.xlu0 %1791
    %v1793 = vsel %vm346, %v1784, 0.0
    %1794 = vadd.xlane.f32.xlu0 %v1793
    %v1795 = vpop.xlane.xlu0 %1794
    %v1796 = vsel %vm346, %v1786, 0.0
    %1797 = vadd.xlane.f32.xlu0 %v1796
    %v1798 = vpop.xlane.xlu0 %1797
    %v1799 = vrcp.pop %v1789
    %v1800 = vrcp.pop %v1792
    %v1801 = vrcp.pop %v1795
    %v1802 = vrcp.pop %v1798
    %v1803 = vmul.f32 %v1780, %v1799
    %v1804 = vmul.f32 %v1782, %v1800
    %v1805 = vmul.f32 %v1784, %v1801
    %v1806 = vmul.f32 %v1786, %v1802
    %v1807 = vpack.c.bf16 %v1803, %v1803
    %v1808 = vpack.c.bf16 %v1804, %v1804
    %v1809 = vpack.c.bf16 %v1805, %v1805
    %v1810 = vpack.c.bf16 %v1806, %v1806
    %1812 = vrot.lane.b32.xlu0 %v241, 96
    %v1813 = vpop.permute.xlu0 %1812
    %v1815 = vsel %vm346, %v1807, 0
    %v1818 = vsel %vm593, %v1813, 0
    %1820 = vmatprep.subr.bf16.mxu0 0
    %1821 = vmatpush1.bf16.msra.mxu0 %v1818
    %1822 = vmatprep.subr.bf16.mxu0 0
    %1823 = vmatpush1.bf16.msra.mxu0 0
    %1824 = vmatprep.subr.bf16.mxu0 0
    %1825 = vmatpush1.bf16.msra.mxu0 0
    %1826 = vmatprep.subr.bf16.mxu0 0
    %1827 = vmatpush1.bf16.msra.mxu0 0
    %1828 = vmatprep.subr.bf16.mxu0 0
    %1829 = vmatpush1.bf16.msra.mxu0 0
    %1830 = vmatprep.subr.bf16.mxu0 0
    %1831 = vmatpush1.bf16.msra.mxu0 0
    %1832 = vmatprep.subr.bf16.mxu0 0
    %1833 = vmatpush1.bf16.msra.mxu0 0
    %1834 = vmatprep.subr.bf16.mxu0 0
    %1835 = vmatpush1.bf16.msra.mxu0 0
    %1836 = vmatprep.subr.bf16.mxu0 0
    %1837 = vmatpush1.bf16.msra.mxu0 0
    %1838 = vmatprep.subr.bf16.mxu0 0
    %1839 = vmatpush1.bf16.msra.mxu0 0
    %1840 = vmatprep.subr.bf16.mxu0 0
    %1841 = vmatpush1.bf16.msra.mxu0 0
    %1842 = vmatprep.subr.bf16.mxu0 0
    %1843 = vmatpush1.bf16.msra.mxu0 0
    %1844 = vmatprep.subr.bf16.mxu0 0
    %1845 = vmatpush1.bf16.msra.mxu0 0
    %1846 = vmatprep.subr.bf16.mxu0 0
    %1847 = vmatpush1.bf16.msra.mxu0 0
    %1848 = vmatprep.subr.bf16.mxu0 0
    %1849 = vmatpush1.bf16.msra.mxu0 0
    %1850 = vmatprep.subr.bf16.mxu0 0
    %1851 = vmatpush1.bf16.msra.mxu0 0
    %1852 = vmatprep.mubr.bf16.mxu0 0
    %1853 = vmatmul.mubr.bf16.gmra.mrb[0].mxu0 %v1815
    %v1854 = vpop.f32.mrb[0].mxu0
    %v1855 = vadd.f32 0.0, %v1854
    %v1856 = vpop.f32.mrb[0].mxu0
    %v1857 = vpop.f32.mrb[0].mxu0
    %v1858 = vpop.f32.mrb[0].mxu0
    %1859 = vdwg.mxu0
    %1861 = vrot.lane.b32.xlu0 %v242, 96
    %v1862 = vpop.permute.xlu0 %1861
    %v1864 = vsel %vm346, %v1808, 0
    %v1867 = vsel %vm593, %v1862, 0
    %1869 = vmatprep.subr.bf16.mxu0 0
    %1870 = vmatpush1.bf16.msra.mxu0 %v1867
    %1871 = vmatprep.subr.bf16.mxu0 0
    %1872 = vmatpush1.bf16.msra.mxu0 0
    %1873 = vmatprep.subr.bf16.mxu0 0
    %1874 = vmatpush1.bf16.msra.mxu0 0
    %1875 = vmatprep.subr.bf16.mxu0 0
    %1876 = vmatpush1.bf16.msra.mxu0 0
    %1877 = vmatprep.subr.bf16.mxu0 0
    %1878 = vmatpush1.bf16.msra.mxu0 0
    %1879 = vmatprep.subr.bf16.mxu0 0
    %1880 = vmatpush1.bf16.msra.mxu0 0
    %1881 = vmatprep.subr.bf16.mxu0 0
    %1882 = vmatpush1.bf16.msra.mxu0 0
    %1883 = vmatprep.subr.bf16.mxu0 0
    %1884 = vmatpush1.bf16.msra.mxu0 0
    %1885 = vmatprep.subr.bf16.mxu0 0
    %1886 = vmatpush1.bf16.msra.mxu0 0
    %1887 = vmatprep.subr.bf16.mxu0 0
    %1888 = vmatpush1.bf16.msra.mxu0 0
    %1889 = vmatprep.subr.bf16.mxu0 0
    %1890 = vmatpush1.bf16.msra.mxu0 0
    %1891 = vmatprep.subr.bf16.mxu0 0
    %1892 = vmatpush1.bf16.msra.mxu0 0
    %1893 = vmatprep.subr.bf16.mxu0 0
    %1894 = vmatpush1.bf16.msra.mxu0 0
    %1895 = vmatprep.subr.bf16.mxu0 0
    %1896 = vmatpush1.bf16.msra.mxu0 0
    %1897 = vmatprep.subr.bf16.mxu0 0
    %1898 = vmatpush1.bf16.msra.mxu0 0
    %1899 = vmatprep.subr.bf16.mxu0 0
    %1900 = vmatpush1.bf16.msra.mxu0 0
    %1901 = vmatprep.mubr.bf16.mxu0 0
    %1902 = vmatmul.mubr.bf16.gmra.mrb[0].mxu0 %v1864
    %v1903 = vpop.f32.mrb[0].mxu0
    %v1904 = vadd.f32 0.0, %v1903
    %v1905 = vpop.f32.mrb[0].mxu0
    %v1906 = vpop.f32.mrb[0].mxu0
    %v1907 = vpop.f32.mrb[0].mxu0
    %1908 = vdwg.mxu0
    %1910 = vrot.lane.b32.xlu0 %v243, 96
    %v1911 = vpop.permute.xlu0 %1910
    %v1913 = vsel %vm346, %v1809, 0
    %v1916 = vsel %vm593, %v1911, 0
    %1918 = vmatprep.subr.bf16.mxu0 0
    %1919 = vmatpush1.bf16.msra.mxu0 %v1916
    %1920 = vmatprep.subr.bf16.mxu0 0
    %1921 = vmatpush1.bf16.msra.mxu0 0
    %1922 = vmatprep.subr.bf16.mxu0 0
    %1923 = vmatpush1.bf16.msra.mxu0 0
    %1924 = vmatprep.subr.bf16.mxu0 0
    %1925 = vmatpush1.bf16.msra.mxu0 0
    %1926 = vmatprep.subr.bf16.mxu0 0
    %1927 = vmatpush1.bf16.msra.mxu0 0
    %1928 = vmatprep.subr.bf16.mxu0 0
    %1929 = vmatpush1.bf16.msra.mxu0 0
    %1930 = vmatprep.subr.bf16.mxu0 0
    %1931 = vmatpush1.bf16.msra.mxu0 0
    %1932 = vmatprep.subr.bf16.mxu0 0
    %1933 = vmatpush1.bf16.msra.mxu0 0
    %1934 = vmatprep.subr.bf16.mxu0 0
    %1935 = vmatpush1.bf16.msra.mxu0 0
    %1936 = vmatprep.subr.bf16.mxu0 0
    %1937 = vmatpush1.bf16.msra.mxu0 0
    %1938 = vmatprep.subr.bf16.mxu0 0
    %1939 = vmatpush1.bf16.msra.mxu0 0
    %1940 = vmatprep.subr.bf16.mxu0 0
    %1941 = vmatpush1.bf16.msra.mxu0 0
    %1942 = vmatprep.subr.bf16.mxu0 0
    %1943 = vmatpush1.bf16.msra.mxu0 0
    %1944 = vmatprep.subr.bf16.mxu0 0
    %1945 = vmatpush1.bf16.msra.mxu0 0
    %1946 = vmatprep.subr.bf16.mxu0 0
    %1947 = vmatpush1.bf16.msra.mxu0 0
    %1948 = vmatprep.subr.bf16.mxu0 0
    %1949 = vmatpush1.bf16.msra.mxu0 0
    %1950 = vmatprep.mubr.bf16.mxu0 0
    %1951 = vmatmul.mubr.bf16.gmra.mrb[0].mxu0 %v1913
    %v1952 = vpop.f32.mrb[0].mxu0
    %v1953 = vadd.f32 0.0, %v1952
    %v1954 = vpop.f32.mrb[0].mxu0
    %v1955 = vpop.f32.mrb[0].mxu0
    %v1956 = vpop.f32.mrb[0].mxu0
    %1957 = vdwg.mxu0
    %1959 = vrot.lane.b32.xlu0 %v244, 96
    %v1960 = vpop.permute.xlu0 %1959
    %v1962 = vsel %vm346, %v1810, 0
    %v1965 = vsel %vm593, %v1960, 0
    %1967 = vmatprep.subr.bf16.mxu0 0
    %1968 = vmatpush1.bf16.msra.mxu0 %v1965
    %1969 = vmatprep.subr.bf16.mxu0 0
    %1970 = vmatpush1.bf16.msra.mxu0 0
    %1971 = vmatprep.subr.bf16.mxu0 0
    %1972 = vmatpush1.bf16.msra.mxu0 0
    %1973 = vmatprep.subr.bf16.mxu0 0
    %1974 = vmatpush1.bf16.msra.mxu0 0
    %1975 = vmatprep.subr.bf16.mxu0 0
    %1976 = vmatpush1.bf16.msra.mxu0 0
    %1977 = vmatprep.subr.bf16.mxu0 0
    %1978 = vmatpush1.bf16.msra.mxu0 0
    %1979 = vmatprep.subr.bf16.mxu0 0
    %1980 = vmatpush1.bf16.msra.mxu0 0
    %1981 = vmatprep.subr.bf16.mxu0 0
    %1982 = vmatpush1.bf16.msra.mxu0 0
    %1983 = vmatprep.subr.bf16.mxu0 0
    %1984 = vmatpush1.bf16.msra.mxu0 0
    %1985 = vmatprep.subr.bf16.mxu0 0
    %1986 = vmatpush1.bf16.msra.mxu0 0
    %1987 = vmatprep.subr.bf16.mxu0 0
    %1988 = vmatpush1.bf16.msra.mxu0 0
    %1989 = vmatprep.subr.bf16.mxu0 0
    %1990 = vmatpush1.bf16.msra.mxu0 0
    %1991 = vmatprep.subr.bf16.mxu0 0
    %1992 = vmatpush1.bf16.msra.mxu0 0
    %1993 = vmatprep.subr.bf16.mxu0 0
    %1994 = vmatpush1.bf16.msra.mxu0 0
    %1995 = vmatprep.subr.bf16.mxu0 0
    %1996 = vmatpush1.bf16.msra.mxu0 0
    %1997 = vmatprep.subr.bf16.mxu0 0
    %1998 = vmatpush1.bf16.msra.mxu0 0
    %1999 = vmatprep.mubr.bf16.mxu0 0
    %2000 = vmatmul.mubr.bf16.gmra.mrb[0].mxu0 %v1962
    %v2001 = vpop.f32.mrb[0].mxu0
    %v2002 = vadd.f32 0.0, %v2001
    %v2003 = vpop.f32.mrb[0].mxu0
    %v2004 = vpop.f32.mrb[0].mxu0
    %v2005 = vpop.f32.mrb[0].mxu0
    %2006 = vdwg.mxu0
    %2008 = vrot.lane.b32.xlu0 %v1562, 120
    %v2009 = vpop.permute.xlu0 %2008
    %2011 = vrot.lane.b32.xlu0 %v1562, 112
    %v2012 = vpop.permute.xlu0 %2011
    %2014 = vrot.lane.b32.xlu0 %v1562, 104
    %v2015 = vpop.permute.xlu0 %2014
    %v2017 = vpack.c.bf16 %v1562, %v1562
    %v2018 = vpack.c.bf16 %v2009, %v2009
    %v2019 = vpack.c.bf16 %v2012, %v2012
    %v2020 = vpack.c.bf16 %v2015, %v2015
    %v2022 = vsel %vm346, %v2017, 0
    %v2025 = vsel %vm346, %v255, 0
    %2027 = vmatprep.subr.bf16.mxu0 0
    %2028 = vmatpush1.bf16.xpose.msra.mxu0 %v2025
    %2029 = vmatprep.subr.bf16.mxu0 0
    %2030 = vmatpush1.bf16.xpose.msra.mxu0 0
    %2031 = vmatprep.subr.bf16.mxu0 0
    %2032 = vmatpush1.bf16.xpose.msra.mxu0 0
    %2033 = vmatprep.subr.bf16.mxu0 0
    %2034 = vmatpush1.bf16.xpose.msra.mxu0 0
    %2035 = vmatprep.subr.bf16.mxu0 0
    %2036 = vmatpush1.bf16.xpose.msra.mxu0 0
    %2037 = vmatprep.subr.bf16.mxu0 0
    %2038 = vmatpush1.bf16.xpose.msra.mxu0 0
    %2039 = vmatprep.subr.bf16.mxu0 0
    %2040 = vmatpush1.bf16.xpose.msra.mxu0 0
    %2041 = vmatprep.subr.bf16.mxu0 0
    %2042 = vmatpush1.bf16.xpose.msra.mxu0 0
    %2043 = vmatprep.subr.bf16.mxu0 0
    %2044 = vmatpush1.bf16.xpose.msra.mxu0 0
    %2045 = vmatprep.subr.bf16.mxu0 0
    %2046 = vmatpush1.bf16.xpose.msra.mxu0 0
    %2047 = vmatprep.subr.bf16.mxu0 0
    %2048 = vmatpush1.bf16.xpose.msra.mxu0 0
    %2049 = vmatprep.subr.bf16.mxu0 0
    %2050 = vmatpush1.bf16.xpose.msra.mxu0 0
    %2051 = vmatprep.subr.bf16.mxu0 0
    %2052 = vmatpush1.bf16.xpose.msra.mxu0 0
    %2053 = vmatprep.subr.bf16.mxu0 0
    %2054 = vmatpush1.bf16.xpose.msra.mxu0 0
    %2055 = vmatprep.subr.bf16.mxu0 0
    %2056 = vmatpush1.bf16.xpose.msra.mxu0 0
    %2057 = vmatprep.subr.bf16.mxu0 0
    %2058 = vmatpush1.bf16.xpose.msra.mxu0 0
    %2059 = vmatprep.mubr.bf16.mxu0 0
    %2060 = vmatmul.mubr.bf16.gmra.mrb[0].mxu0 %v2022
    %v2061 = vpop.f32.mrb[0].mxu0
    %v2062 = vadd.f32 0.0, %v2061
    %v2063 = vpop.f32.mrb[0].mxu0
    %v2064 = vpop.f32.mrb[0].mxu0
    %v2065 = vpop.f32.mrb[0].mxu0
    %2066 = vdwg.mxu0
    %v2068 = vsel %vm346, %v2018, 0
    %v2071 = vsel %vm346, %v256, 0
    %2073 = vmatprep.subr.bf16.mxu0 0
    %2074 = vmatpush1.bf16.xpose.msra.mxu0 %v2071
    %2075 = vmatprep.subr.bf16.mxu0 0
    %2076 = vmatpush1.bf16.xpose.msra.mxu0 0
    %2077 = vmatprep.subr.bf16.mxu0 0
    %2078 = vmatpush1.bf16.xpose.msra.mxu0 0
    %2079 = vmatprep.subr.bf16.mxu0 0
    %2080 = vmatpush1.bf16.xpose.msra.mxu0 0
    %2081 = vmatprep.subr.bf16.mxu0 0
    %2082 = vmatpush1.bf16.xpose.msra.mxu0 0
    %2083 = vmatprep.subr.bf16.mxu0 0
    %2084 = vmatpush1.bf16.xpose.msra.mxu0 0
    %2085 = vmatprep.subr.bf16.mxu0 0
    %2086 = vmatpush1.bf16.xpose.msra.mxu0 0
    %2087 = vmatprep.subr.bf16.mxu0 0
    %2088 = vmatpush1.bf16.xpose.msra.mxu0 0
    %2089 = vmatprep.subr.bf16.mxu0 0
    %2090 = vmatpush1.bf16.xpose.msra.mxu0 0
    %2091 = vmatprep.subr.bf16.mxu0 0
    %2092 = vmatpush1.bf16.xpose.msra.mxu0 0
    %2093 = vmatprep.subr.bf16.mxu0 0
    %2094 = vmatpush1.bf16.xpose.msra.mxu0 0
    %2095 = vmatprep.subr.bf16.mxu0 0
    %2096 = vmatpush1.bf16.xpose.msra.mxu0 0
    %2097 = vmatprep.subr.bf16.mxu0 0
    %2098 = vmatpush1.bf16.xpose.msra.mxu0 0
    %2099 = vmatprep.subr.bf16.mxu0 0
    %2100 = vmatpush1.bf16.xpose.msra.mxu0 0
    %2101 = vmatprep.subr.bf16.mxu0 0
    %2102 = vmatpush1.bf16.xpose.msra.mxu0 0
    %2103 = vmatprep.subr.bf16.mxu0 0
    %2104 = vmatpush1.bf16.xpose.msra.mxu0 0
    %2105 = vmatprep.mubr.bf16.mxu0 0
    %2106 = vmatmul.mubr.bf16.gmra.mrb[0].mxu0 %v2068
    %v2107 = vpop.f32.mrb[0].mxu0
    %v2108 = vadd.f32 0.0, %v2107
    %v2109 = vpop.f32.mrb[0].mxu0
    %v2110 = vpop.f32.mrb[0].mxu0
    %v2111 = vpop.f32.mrb[0].mxu0
    %2112 = vdwg.mxu0
    %v2114 = vsel %vm346, %v2019, 0
    %v2117 = vsel %vm346, %v257, 0
    %2119 = vmatprep.subr.bf16.mxu0 0
    %2120 = vmatpush1.bf16.xpose.msra.mxu0 %v2117
    %2121 = vmatprep.subr.bf16.mxu0 0
    %2122 = vmatpush1.bf16.xpose.msra.mxu0 0
    %2123 = vmatprep.subr.bf16.mxu0 0
    %2124 = vmatpush1.bf16.xpose.msra.mxu0 0
    %2125 = vmatprep.subr.bf16.mxu0 0
    %2126 = vmatpush1.bf16.xpose.msra.mxu0 0
    %2127 = vmatprep.subr.bf16.mxu0 0
    %2128 = vmatpush1.bf16.xpose.msra.mxu0 0
    %2129 = vmatprep.subr.bf16.mxu0 0
    %2130 = vmatpush1.bf16.xpose.msra.mxu0 0
    %2131 = vmatprep.subr.bf16.mxu0 0
    %2132 = vmatpush1.bf16.xpose.msra.mxu0 0
    %2133 = vmatprep.subr.bf16.mxu0 0
    %2134 = vmatpush1.bf16.xpose.msra.mxu0 0
    %2135 = vmatprep.subr.bf16.mxu0 0
    %2136 = vmatpush1.bf16.xpose.msra.mxu0 0
    %2137 = vmatprep.subr.bf16.mxu0 0
    %2138 = vmatpush1.bf16.xpose.msra.mxu0 0
    %2139 = vmatprep.subr.bf16.mxu0 0
    %2140 = vmatpush1.bf16.xpose.msra.mxu0 0
    %2141 = vmatprep.subr.bf16.mxu0 0
    %2142 = vmatpush1.bf16.xpose.msra.mxu0 0
    %2143 = vmatprep.subr.bf16.mxu0 0
    %2144 = vmatpush1.bf16.xpose.msra.mxu0 0
    %2145 = vmatprep.subr.bf16.mxu0 0
    %2146 = vmatpush1.bf16.xpose.msra.mxu0 0
    %2147 = vmatprep.subr.bf16.mxu0 0
    %2148 = vmatpush1.bf16.xpose.msra.mxu0 0
    %2149 = vmatprep.subr.bf16.mxu0 0
    %2150 = vmatpush1.bf16.xpose.msra.mxu0 0
    %2151 = vmatprep.mubr.bf16.mxu0 0
    %2152 = vmatmul.mubr.bf16.gmra.mrb[0].mxu0 %v2114
    %v2153 = vpop.f32.mrb[0].mxu0
    %v2154 = vadd.f32 0.0, %v2153
    %v2155 = vpop.f32.mrb[0].mxu0
    %v2156 = vpop.f32.mrb[0].mxu0
    %v2157 = vpop.f32.mrb[0].mxu0
    %2158 = vdwg.mxu0
    %v2160 = vsel %vm346, %v2020, 0
    %v2163 = vsel %vm346, %v258, 0
    %2165 = vmatprep.subr.bf16.mxu0 0
    %2166 = vmatpush1.bf16.xpose.msra.mxu0 %v2163
    %2167 = vmatprep.subr.bf16.mxu0 0
    %2168 = vmatpush1.bf16.xpose.msra.mxu0 0
    %2169 = vmatprep.subr.bf16.mxu0 0
    %2170 = vmatpush1.bf16.xpose.msra.mxu0 0
    %2171 = vmatprep.subr.bf16.mxu0 0
    %2172 = vmatpush1.bf16.xpose.msra.mxu0 0
    %2173 = vmatprep.subr.bf16.mxu0 0
    %2174 = vmatpush1.bf16.xpose.msra.mxu0 0
    %2175 = vmatprep.subr.bf16.mxu0 0
    %2176 = vmatpush1.bf16.xpose.msra.mxu0 0
    %2177 = vmatprep.subr.bf16.mxu0 0
    %2178 = vmatpush1.bf16.xpose.msra.mxu0 0
    %2179 = vmatprep.subr.bf16.mxu0 0
    %2180 = vmatpush1.bf16.xpose.msra.mxu0 0
    %2181 = vmatprep.subr.bf16.mxu0 0
    %2182 = vmatpush1.bf16.xpose.msra.mxu0 0
    %2183 = vmatprep.subr.bf16.mxu0 0
    %2184 = vmatpush1.bf16.xpose.msra.mxu0 0
    %2185 = vmatprep.subr.bf16.mxu0 0
    %2186 = vmatpush1.bf16.xpose.msra.mxu0 0
    %2187 = vmatprep.subr.bf16.mxu0 0
    %2188 = vmatpush1.bf16.xpose.msra.mxu0 0
    %2189 = vmatprep.subr.bf16.mxu0 0
    %2190 = vmatpush1.bf16.xpose.msra.mxu0 0
    %2191 = vmatprep.subr.bf16.mxu0 0
    %2192 = vmatpush1.bf16.xpose.msra.mxu0 0
    %2193 = vmatprep.subr.bf16.mxu0 0
    %2194 = vmatpush1.bf16.xpose.msra.mxu0 0
    %2195 = vmatprep.subr.bf16.mxu0 0
    %2196 = vmatpush1.bf16.xpose.msra.mxu0 0
    %2197 = vmatprep.mubr.bf16.mxu0 0
    %2198 = vmatmul.mubr.bf16.gmra.mrb[0].mxu0 %v2160
    %v2199 = vpop.f32.mrb[0].mxu0
    %v2200 = vadd.f32 0.0, %v2199
    %v2201 = vpop.f32.mrb[0].mxu0
    %v2202 = vpop.f32.mrb[0].mxu0
    %v2203 = vpop.f32.mrb[0].mxu0
    %2204 = vdwg.mxu0
    %v2205 = vsel %vm346, %v2062, -inf
    %2206 = vmax.xlane.f32.xlu0 %v2205
    %v2207 = vpop.xlane.xlu0 %2206
    %v2208 = vsel %vm346, %v2108, -inf
    %2209 = vmax.xlane.f32.xlu0 %v2208
    %v2210 = vpop.xlane.xlu0 %2209
    %v2211 = vsel %vm346, %v2154, -inf
    %2212 = vmax.xlane.f32.xlu0 %v2211
    %v2213 = vpop.xlane.xlu0 %2212
    %v2214 = vsel %vm346, %v2200, -inf
    %2215 = vmax.xlane.f32.xlu0 %v2214
    %v2216 = vpop.xlane.xlu0 %2215
    %v2217 = vsub.f32 %v2062, %v2207
    %v2218 = vsub.f32 %v2108, %v2210
    %v2219 = vsub.f32 %v2154, %v2213
    %v2220 = vsub.f32 %v2200, %v2216
    %v2221 = vmul.f32 %v2217, 1.442695
    %v2222 = vpow.pop %v2221
    %v2223 = vmul.f32 %v2218, 1.442695
    %v2224 = vpow.pop %v2223
    %v2225 = vmul.f32 %v2219, 1.442695
    %v2226 = vpow.pop %v2225
    %v2227 = vmul.f32 %v2220, 1.442695
    %v2228 = vpow.pop %v2227
    %v2229 = vsel %vm346, %v2222, 0.0
    %2230 = vadd.xlane.f32.xlu0 %v2229
    %v2231 = vpop.xlane.xlu0 %2230
    %v2232 = vsel %vm346, %v2224, 0.0
    %2233 = vadd.xlane.f32.xlu0 %v2232
    %v2234 = vpop.xlane.xlu0 %2233
    %v2235 = vsel %vm346, %v2226, 0.0
    %2236 = vadd.xlane.f32.xlu0 %v2235
    %v2237 = vpop.xlane.xlu0 %2236
    %v2238 = vsel %vm346, %v2228, 0.0
    %2239 = vadd.xlane.f32.xlu0 %v2238
    %v2240 = vpop.xlane.xlu0 %2239
    %v2241 = vrcp.pop %v2231
    %v2242 = vrcp.pop %v2234
    %v2243 = vrcp.pop %v2237
    %v2244 = vrcp.pop %v2240
    %v2245 = vmul.f32 %v2222, %v2241
    %v2246 = vmul.f32 %v2224, %v2242
    %v2247 = vmul.f32 %v2226, %v2243
    %v2248 = vmul.f32 %v2228, %v2244
    %v2249 = vpack.c.bf16 %v2245, %v2245
    %v2250 = vpack.c.bf16 %v2246, %v2246
    %v2251 = vpack.c.bf16 %v2247, %v2247
    %v2252 = vpack.c.bf16 %v2248, %v2248
    %2254 = vrot.lane.b32.xlu0 %v255, 96
    %v2255 = vpop.permute.xlu0 %2254
    %v2257 = vsel %vm346, %v2249, 0
    %v2260 = vsel %vm593, %v2255, 0
    %2262 = vmatprep.subr.bf16.mxu0 0
    %2263 = vmatpush1.bf16.msra.mxu0 %v2260
    %2264 = vmatprep.subr.bf16.mxu0 0
    %2265 = vmatpush1.bf16.msra.mxu0 0
    %2266 = vmatprep.subr.bf16.mxu0 0
    %2267 = vmatpush1.bf16.msra.mxu0 0
    %2268 = vmatprep.subr.bf16.mxu0 0
    %2269 = vmatpush1.bf16.msra.mxu0 0
    %2270 = vmatprep.subr.bf16.mxu0 0
    %2271 = vmatpush1.bf16.msra.mxu0 0
    %2272 = vmatprep.subr.bf16.mxu0 0
    %2273 = vmatpush1.bf16.msra.mxu0 0
    %2274 = vmatprep.subr.bf16.mxu0 0
    %2275 = vmatpush1.bf16.msra.mxu0 0
    %2276 = vmatprep.subr.bf16.mxu0 0
    %2277 = vmatpush1.bf16.msra.mxu0 0
    %2278 = vmatprep.subr.bf16.mxu0 0
    %2279 = vmatpush1.bf16.msra.mxu0 0
    %2280 = vmatprep.subr.bf16.mxu0 0
    %2281 = vmatpush1.bf16.msra.mxu0 0
    %2282 = vmatprep.subr.bf16.mxu0 0
    %2283 = vmatpush1.bf16.msra.mxu0 0
    %2284 = vmatprep.subr.bf16.mxu0 0
    %2285 = vmatpush1.bf16.msra.mxu0 0
    %2286 = vmatprep.subr.bf16.mxu0 0
    %2287 = vmatpush1.bf16.msra.mxu0 0
    %2288 = vmatprep.subr.bf16.mxu0 0
    %2289 = vmatpush1.bf16.msra.mxu0 0
    %2290 = vmatprep.subr.bf16.mxu0 0
    %2291 = vmatpush1.bf16.msra.mxu0 0
    %2292 = vmatprep.subr.bf16.mxu0 0
    %2293 = vmatpush1.bf16.msra.mxu0 0
    %2294 = vmatprep.mubr.bf16.mxu0 0
    %2295 = vmatmul.mubr.bf16.gmra.mrb[0].mxu0 %v2257
    %v2296 = vpop.f32.mrb[0].mxu0
    %v2297 = vadd.f32 0.0, %v2296
    %v2298 = vpop.f32.mrb[0].mxu0
    %v2299 = vpop.f32.mrb[0].mxu0
    %v2300 = vpop.f32.mrb[0].mxu0
    %2301 = vdwg.mxu0
    %2303 = vrot.lane.b32.xlu0 %v256, 96
    %v2304 = vpop.permute.xlu0 %2303
    %v2306 = vsel %vm346, %v2250, 0
    %v2309 = vsel %vm593, %v2304, 0
    %2311 = vmatprep.subr.bf16.mxu0 0
    %2312 = vmatpush1.bf16.msra.mxu0 %v2309
    %2313 = vmatprep.subr.bf16.mxu0 0
    %2314 = vmatpush1.bf16.msra.mxu0 0
    %2315 = vmatprep.subr.bf16.mxu0 0
    %2316 = vmatpush1.bf16.msra.mxu0 0
    %2317 = vmatprep.subr.bf16.mxu0 0
    %2318 = vmatpush1.bf16.msra.mxu0 0
    %2319 = vmatprep.subr.bf16.mxu0 0
    %2320 = vmatpush1.bf16.msra.mxu0 0
    %2321 = vmatprep.subr.bf16.mxu0 0
    %2322 = vmatpush1.bf16.msra.mxu0 0
    %2323 = vmatprep.subr.bf16.mxu0 0
    %2324 = vmatpush1.bf16.msra.mxu0 0
    %2325 = vmatprep.subr.bf16.mxu0 0
    %2326 = vmatpush1.bf16.msra.mxu0 0
    %2327 = vmatprep.subr.bf16.mxu0 0
    %2328 = vmatpush1.bf16.msra.mxu0 0
    %2329 = vmatprep.subr.bf16.mxu0 0
    %2330 = vmatpush1.bf16.msra.mxu0 0
    %2331 = vmatprep.subr.bf16.mxu0 0
    %2332 = vmatpush1.bf16.msra.mxu0 0
    %2333 = vmatprep.subr.bf16.mxu0 0
    %2334 = vmatpush1.bf16.msra.mxu0 0
    %2335 = vmatprep.subr.bf16.mxu0 0
    %2336 = vmatpush1.bf16.msra.mxu0 0
    %2337 = vmatprep.subr.bf16.mxu0 0
    %2338 = vmatpush1.bf16.msra.mxu0 0
    %2339 = vmatprep.subr.bf16.mxu0 0
    %2340 = vmatpush1.bf16.msra.mxu0 0
    %2341 = vmatprep.subr.bf16.mxu0 0
    %2342 = vmatpush1.bf16.msra.mxu0 0
    %2343 = vmatprep.mubr.bf16.mxu0 0
    %2344 = vmatmul.mubr.bf16.gmra.mrb[0].mxu0 %v2306
    %v2345 = vpop.f32.mrb[0].mxu0
    %v2346 = vadd.f32 0.0, %v2345
    %v2347 = vpop.f32.mrb[0].mxu0
    %v2348 = vpop.f32.mrb[0].mxu0
    %v2349 = vpop.f32.mrb[0].mxu0
    %2350 = vdwg.mxu0
    %2352 = vrot.lane.b32.xlu0 %v257, 96
    %v2353 = vpop.permute.xlu0 %2352
    %v2355 = vsel %vm346, %v2251, 0
    %v2358 = vsel %vm593, %v2353, 0
    %2360 = vmatprep.subr.bf16.mxu0 0
    %2361 = vmatpush1.bf16.msra.mxu0 %v2358
    %2362 = vmatprep.subr.bf16.mxu0 0
    %2363 = vmatpush1.bf16.msra.mxu0 0
    %2364 = vmatprep.subr.bf16.mxu0 0
    %2365 = vmatpush1.bf16.msra.mxu0 0
    %2366 = vmatprep.subr.bf16.mxu0 0
    %2367 = vmatpush1.bf16.msra.mxu0 0
    %2368 = vmatprep.subr.bf16.mxu0 0
    %2369 = vmatpush1.bf16.msra.mxu0 0
    %2370 = vmatprep.subr.bf16.mxu0 0
    %2371 = vmatpush1.bf16.msra.mxu0 0
    %2372 = vmatprep.subr.bf16.mxu0 0
    %2373 = vmatpush1.bf16.msra.mxu0 0
    %2374 = vmatprep.subr.bf16.mxu0 0
    %2375 = vmatpush1.bf16.msra.mxu0 0
    %2376 = vmatprep.subr.bf16.mxu0 0
    %2377 = vmatpush1.bf16.msra.mxu0 0
    %2378 = vmatprep.subr.bf16.mxu0 0
    %2379 = vmatpush1.bf16.msra.mxu0 0
    %2380 = vmatprep.subr.bf16.mxu0 0
    %2381 = vmatpush1.bf16.msra.mxu0 0
    %2382 = vmatprep.subr.bf16.mxu0 0
    %2383 = vmatpush1.bf16.msra.mxu0 0
    %2384 = vmatprep.subr.bf16.mxu0 0
    %2385 = vmatpush1.bf16.msra.mxu0 0
    %2386 = vmatprep.subr.bf16.mxu0 0
    %2387 = vmatpush1.bf16.msra.mxu0 0
    %2388 = vmatprep.subr.bf16.mxu0 0
    %2389 = vmatpush1.bf16.msra.mxu0 0
    %2390 = vmatprep.subr.bf16.mxu0 0
    %2391 = vmatpush1.bf16.msra.mxu0 0
    %2392 = vmatprep.mubr.bf16.mxu0 0
    %2393 = vmatmul.mubr.bf16.gmra.mrb[0].mxu0 %v2355
    %v2394 = vpop.f32.mrb[0].mxu0
    %v2395 = vadd.f32 0.0, %v2394
    %v2396 = vpop.f32.mrb[0].mxu0
    %v2397 = vpop.f32.mrb[0].mxu0
    %v2398 = vpop.f32.mrb[0].mxu0
    %2399 = vdwg.mxu0
    %2401 = vrot.lane.b32.xlu0 %v258, 96
    %v2402 = vpop.permute.xlu0 %2401
    %v2404 = vsel %vm346, %v2252, 0
    %v2407 = vsel %vm593, %v2402, 0
    %2409 = vmatprep.subr.bf16.mxu0 0
    %2410 = vmatpush1.bf16.msra.mxu0 %v2407
    %2411 = vmatprep.subr.bf16.mxu0 0
    %2412 = vmatpush1.bf16.msra.mxu0 0
    %2413 = vmatprep.subr.bf16.mxu0 0
    %2414 = vmatpush1.bf16.msra.mxu0 0
    %2415 = vmatprep.subr.bf16.mxu0 0
    %2416 = vmatpush1.bf16.msra.mxu0 0
    %2417 = vmatprep.subr.bf16.mxu0 0
    %2418 = vmatpush1.bf16.msra.mxu0 0
    %2419 = vmatprep.subr.bf16.mxu0 0
    %2420 = vmatpush1.bf16.msra.mxu0 0
    %2421 = vmatprep.subr.bf16.mxu0 0
    %2422 = vmatpush1.bf16.msra.mxu0 0
    %2423 = vmatprep.subr.bf16.mxu0 0
    %2424 = vmatpush1.bf16.msra.mxu0 0
    %2425 = vmatprep.subr.bf16.mxu0 0
    %2426 = vmatpush1.bf16.msra.mxu0 0
    %2427 = vmatprep.subr.bf16.mxu0 0
    %2428 = vmatpush1.bf16.msra.mxu0 0
    %2429 = vmatprep.subr.bf16.mxu0 0
    %2430 = vmatpush1.bf16.msra.mxu0 0
    %2431 = vmatprep.subr.bf16.mxu0 0
    %2432 = vmatpush1.bf16.msra.mxu0 0
    %2433 = vmatprep.subr.bf16.mxu0 0
    %2434 = vmatpush1.bf16.msra.mxu0 0
    %2435 = vmatprep.subr.bf16.mxu0 0
    %2436 = vmatpush1.bf16.msra.mxu0 0
    %2437 = vmatprep.subr.bf16.mxu0 0
    %2438 = vmatpush1.bf16.msra.mxu0 0
    %2439 = vmatprep.subr.bf16.mxu0 0
    %2440 = vmatpush1.bf16.msra.mxu0 0
    %2441 = vmatprep.mubr.bf16.mxu0 0
    %2442 = vmatmul.mubr.bf16.gmra.mrb[0].mxu0 %v2404
    %v2443 = vpop.f32.mrb[0].mxu0
    %v2444 = vadd.f32 0.0, %v2443
    %v2445 = vpop.f32.mrb[0].mxu0
    %v2446 = vpop.f32.mrb[0].mxu0
    %v2447 = vpop.f32.mrb[0].mxu0
    %2448 = vdwg.mxu0
    %v2449 = vld [vmem:[%s11] sm:$0xf]
    %v2450 = vld [vmem:[%s11 + $0x4] sm:$0xf]
    %v2451 = vld [vmem:[%s11 + $0x8] sm:$0xf]
    %v2452 = vld [vmem:[%s11 + $0xc] sm:$0xf]
    %v2453 = vld [vmem:[%s12] sm:$0x1]
    %v2454 = vpack.c.bf16 %v2297, %v1855
    %v2455 = vpack.c.bf16 %v2346, %v1904
    %v2456 = vpack.c.bf16 %v2395, %v1953
    %v2457 = vpack.c.bf16 %v2444, %v2002
    %v2459 = vsel %vm346, %v2454, 0
    %v2462 = vsel %vm593, %v2449, 0
    %2464 = vmatprep.subr.bf16.mxu0 0
    %2465 = vmatpush1.bf16.msra.mxu0 %v2462
    %2466 = vmatprep.subr.bf16.mxu0 0
    %2467 = vmatpush1.bf16.msra.mxu0 0
    %2468 = vmatprep.subr.bf16.mxu0 0
    %2469 = vmatpush1.bf16.msra.mxu0 0
    %2470 = vmatprep.subr.bf16.mxu0 0
    %2471 = vmatpush1.bf16.msra.mxu0 0
    %2472 = vmatprep.subr.bf16.mxu0 0
    %2473 = vmatpush1.bf16.msra.mxu0 0
    %2474 = vmatprep.subr.bf16.mxu0 0
    %2475 = vmatpush1.bf16.msra.mxu0 0
    %2476 = vmatprep.subr.bf16.mxu0 0
    %2477 = vmatpush1.bf16.msra.mxu0 0
    %2478 = vmatprep.subr.bf16.mxu0 0
    %2479 = vmatpush1.bf16.msra.mxu0 0
    %2480 = vmatprep.subr.bf16.mxu0 0
    %2481 = vmatpush1.bf16.msra.mxu0 0
    %2482 = vmatprep.subr.bf16.mxu0 0
    %2483 = vmatpush1.bf16.msra.mxu0 0
    %2484 = vmatprep.subr.bf16.mxu0 0
    %2485 = vmatpush1.bf16.msra.mxu0 0
    %2486 = vmatprep.subr.bf16.mxu0 0
    %2487 = vmatpush1.bf16.msra.mxu0 0
    %2488 = vmatprep.subr.bf16.mxu0 0
    %2489 = vmatpush1.bf16.msra.mxu0 0
    %2490 = vmatprep.subr.bf16.mxu0 0
    %2491 = vmatpush1.bf16.msra.mxu0 0
    %2492 = vmatprep.subr.bf16.mxu0 0
    %2493 = vmatpush1.bf16.msra.mxu0 0
    %2494 = vmatprep.subr.bf16.mxu0 0
    %2495 = vmatpush1.bf16.msra.mxu0 0
    %2496 = vmatprep.mubr.bf16.mxu0 0
    %2497 = vmatmul.mubr.bf16.gmra.mrb[0].mxu0 %v2459
    %v2498 = vpop.f32.mrb[0].mxu0
    %v2499 = vadd.f32 0.0, %v2498
    %v2500 = vpop.f32.mrb[0].mxu0
    %v2501 = vpop.f32.mrb[0].mxu0
    %v2502 = vadd.f32 0.0, %v2501
    %v2503 = vpop.f32.mrb[0].mxu0
    %2504 = vdwg.mxu0
    %v2506 = vsel %vm346, %v2455, 0
    %v2509 = vsel %vm593, %v2450, 0
    %2511 = vmatprep.subr.bf16.mxu0 0
    %2512 = vmatpush1.bf16.msra.mxu0 %v2509
    %2513 = vmatprep.subr.bf16.mxu0 0
    %2514 = vmatpush1.bf16.msra.mxu0 0
    %2515 = vmatprep.subr.bf16.mxu0 0
    %2516 = vmatpush1.bf16.msra.mxu0 0
    %2517 = vmatprep.subr.bf16.mxu0 0
    %2518 = vmatpush1.bf16.msra.mxu0 0
    %2519 = vmatprep.subr.bf16.mxu0 0
    %2520 = vmatpush1.bf16.msra.mxu0 0
    %2521 = vmatprep.subr.bf16.mxu0 0
    %2522 = vmatpush1.bf16.msra.mxu0 0
    %2523 = vmatprep.subr.bf16.mxu0 0
    %2524 = vmatpush1.bf16.msra.mxu0 0
    %2525 = vmatprep.subr.bf16.mxu0 0
    %2526 = vmatpush1.bf16.msra.mxu0 0
    %2527 = vmatprep.subr.bf16.mxu0 0
    %2528 = vmatpush1.bf16.msra.mxu0 0
    %2529 = vmatprep.subr.bf16.mxu0 0
    %2530 = vmatpush1.bf16.msra.mxu0 0
    %2531 = vmatprep.subr.bf16.mxu0 0
    %2532 = vmatpush1.bf16.msra.mxu0 0
    %2533 = vmatprep.subr.bf16.mxu0 0
    %2534 = vmatpush1.bf16.msra.mxu0 0
    %2535 = vmatprep.subr.bf16.mxu0 0
    %2536 = vmatpush1.bf16.msra.mxu0 0
    %2537 = vmatprep.subr.bf16.mxu0 0
    %2538 = vmatpush1.bf16.msra.mxu0 0
    %2539 = vmatprep.subr.bf16.mxu0 0
    %2540 = vmatpush1.bf16.msra.mxu0 0
    %2541 = vmatprep.subr.bf16.mxu0 0
    %2542 = vmatpush1.bf16.msra.mxu0 0
    %2543 = vmatprep.mubr.bf16.mxu0 0
    %2544 = vmatmul.mubr.bf16.gmra.mrb[0].mxu0 %v2506
    %v2545 = vpop.f32.mrb[0].mxu0
    %v2546 = vadd.f32 0.0, %v2545
    %v2547 = vpop.f32.mrb[0].mxu0
    %v2548 = vpop.f32.mrb[0].mxu0
    %v2549 = vadd.f32 0.0, %v2548
    %v2550 = vpop.f32.mrb[0].mxu0
    %2551 = vdwg.mxu0
    %v2553 = vsel %vm346, %v2456, 0
    %v2556 = vsel %vm593, %v2451, 0
    %2558 = vmatprep.subr.bf16.mxu0 0
    %2559 = vmatpush1.bf16.msra.mxu0 %v2556
    %2560 = vmatprep.subr.bf16.mxu0 0
    %2561 = vmatpush1.bf16.msra.mxu0 0
    %2562 = vmatprep.subr.bf16.mxu0 0
    %2563 = vmatpush1.bf16.msra.mxu0 0
    %2564 = vmatprep.subr.bf16.mxu0 0
    %2565 = vmatpush1.bf16.msra.mxu0 0
    %2566 = vmatprep.subr.bf16.mxu0 0
    %2567 = vmatpush1.bf16.msra.mxu0 0
    %2568 = vmatprep.subr.bf16.mxu0 0
    %2569 = vmatpush1.bf16.msra.mxu0 0
    %2570 = vmatprep.subr.bf16.mxu0 0
    %2571 = vmatpush1.bf16.msra.mxu0 0
    %2572 = vmatprep.subr.bf16.mxu0 0
    %2573 = vmatpush1.bf16.msra.mxu0 0
    %2574 = vmatprep.subr.bf16.mxu0 0
    %2575 = vmatpush1.bf16.msra.mxu0 0
    %2576 = vmatprep.subr.bf16.mxu0 0
    %2577 = vmatpush1.bf16.msra.mxu0 0
    %2578 = vmatprep.subr.bf16.mxu0 0
    %2579 = vmatpush1.bf16.msra.mxu0 0
    %2580 = vmatprep.subr.bf16.mxu0 0
    %2581 = vmatpush1.bf16.msra.mxu0 0
    %2582 = vmatprep.subr.bf16.mxu0 0
    %2583 = vmatpush1.bf16.msra.mxu0 0
    %2584 = vmatprep.subr.bf16.mxu0 0
    %2585 = vmatpush1.bf16.msra.mxu0 0
    %2586 = vmatprep.subr.bf16.mxu0 0
    %2587 = vmatpush1.bf16.msra.mxu0 0
    %2588 = vmatprep.subr.bf16.mxu0 0
    %2589 = vmatpush1.bf16.msra.mxu0 0
    %2590 = vmatprep.mubr.bf16.mxu0 0
    %2591 = vmatmul.mubr.bf16.gmra.mrb[0].mxu0 %v2553
    %v2592 = vpop.f32.mrb[0].mxu0
    %v2593 = vadd.f32 0.0, %v2592
    %v2594 = vpop.f32.mrb[0].mxu0
    %v2595 = vpop.f32.mrb[0].mxu0
    %v2596 = vadd.f32 0.0, %v2595
    %v2597 = vpop.f32.mrb[0].mxu0
    %2598 = vdwg.mxu0
    %v2600 = vsel %vm346, %v2457, 0
    %v2603 = vsel %vm593, %v2452, 0
    %2605 = vmatprep.subr.bf16.mxu0 0
    %2606 = vmatpush1.bf16.msra.mxu0 %v2603
    %2607 = vmatprep.subr.bf16.mxu0 0
    %2608 = vmatpush1.bf16.msra.mxu0 0
    %2609 = vmatprep.subr.bf16.mxu0 0
    %2610 = vmatpush1.bf16.msra.mxu0 0
    %2611 = vmatprep.subr.bf16.mxu0 0
    %2612 = vmatpush1.bf16.msra.mxu0 0
    %2613 = vmatprep.subr.bf16.mxu0 0
    %2614 = vmatpush1.bf16.msra.mxu0 0
    %2615 = vmatprep.subr.bf16.mxu0 0
    %2616 = vmatpush1.bf16.msra.mxu0 0
    %2617 = vmatprep.subr.bf16.mxu0 0
    %2618 = vmatpush1.bf16.msra.mxu0 0
    %2619 = vmatprep.subr.bf16.mxu0 0
    %2620 = vmatpush1.bf16.msra.mxu0 0
    %2621 = vmatprep.subr.bf16.mxu0 0
    %2622 = vmatpush1.bf16.msra.mxu0 0
    %2623 = vmatprep.subr.bf16.mxu0 0
    %2624 = vmatpush1.bf16.msra.mxu0 0
    %2625 = vmatprep.subr.bf16.mxu0 0
    %2626 = vmatpush1.bf16.msra.mxu0 0
    %2627 = vmatprep.subr.bf16.mxu0 0
    %2628 = vmatpush1.bf16.msra.mxu0 0
    %2629 = vmatprep.subr.bf16.mxu0 0
    %2630 = vmatpush1.bf16.msra.mxu0 0
    %2631 = vmatprep.subr.bf16.mxu0 0
    %2632 = vmatpush1.bf16.msra.mxu0 0
    %2633 = vmatprep.subr.bf16.mxu0 0
    %2634 = vmatpush1.bf16.msra.mxu0 0
    %2635 = vmatprep.subr.bf16.mxu0 0
    %2636 = vmatpush1.bf16.msra.mxu0 0
    %2637 = vmatprep.mubr.bf16.mxu0 0
    %2638 = vmatmul.mubr.bf16.gmra.mrb[0].mxu0 %v2600
    %v2639 = vpop.f32.mrb[0].mxu0
    %v2640 = vadd.f32 0.0, %v2639
    %v2641 = vpop.f32.mrb[0].mxu0
    %v2642 = vpop.f32.mrb[0].mxu0
    %v2643 = vadd.f32 0.0, %v2642
    %v2644 = vpop.f32.mrb[0].mxu0
    %2645 = vdwg.mxu0
    %v2646 = vsel %vm186, %v2499, 0.0
    %v2647 = vsel %vm186, %v2546, 0.0
    %v2648 = vadd.f32 %v2646, %v2647
    %v2649 = vsel %vm186, %v2593, 0.0
    %v2650 = vadd.f32 %v2648, %v2649
    %v2651 = vsel %vm186, %v2640, 0.0
    %v2652 = vadd.f32 %v2650, %v2651
    %v2653 = vsel %vm186, %v2502, 0.0
    %v2654 = vsel %vm186, %v2549, 0.0
    %v2655 = vadd.f32 %v2653, %v2654
    %v2656 = vsel %vm186, %v2596, 0.0
    %v2657 = vadd.f32 %v2655, %v2656
    %v2658 = vsel %vm186, %v2643, 0.0
    %v2659 = vadd.f32 %v2657, %v2658
    %v2661 = vlaneseq
    %v2662 = vshrl.u32 %v2661, 7
    %v2663 = vsub.s32 0, %v2662
    %v2664 = vrot.slane %v2453, %v2663
    %v2666 = vadd.f32 %v2652, %v2664
    %v2667 = vadd.f32 %v2659, %v2664
    %v2668 = vadd.f32 %v1495, %v2666
    %v2669 = vadd.f32 %v1496, %v2667
    %v2670 = vsel %vm186, %v2668, 0.0
    %2671 = vadd.xlane.f32.xlu0 %v2670
    %v2672 = vpop.xlane.xlu0 %2671
    %v2673 = vsel %vm186, %v2669, 0.0
    %2674 = vadd.xlane.f32.xlu0 %v2673
    %v2675 = vpop.xlane.xlu0 %2674
    %v2676 = vmul.f32 %v2672, %v1458
    %v2677 = vmul.f32 %v2675, %v1458
    %v2678 = vmul.f32 %v2668, %v2668
    %v2679 = vmul.f32 %v2669, %v2669
    %v2680 = vsel %vm186, %v2678, 0.0
    %2681 = vadd.xlane.f32.xlu0 %v2680
    %v2682 = vpop.xlane.xlu0 %2681
    %v2683 = vsel %vm186, %v2679, 0.0
    %2684 = vadd.xlane.f32.xlu0 %v2683
    %v2685 = vpop.xlane.xlu0 %2684
    %v2686 = vmul.f32 %v2682, %v1458
    %v2687 = vmul.f32 %v2685, %v1458
    %v2688 = vmul.f32 %v2676, %v2676
    %v2689 = vmul.f32 %v2677, %v2677
    %v2690 = vsub.f32 %v2686, %v2688
    %v2691 = vsub.f32 %v2687, %v2689
    %v2692 = vmax.f32 %v2690, 0.0
    %v2693 = vmax.f32 %v2691, 0.0
    %v2694 = vsub.f32 %v2668, %v2676
    %v2695 = vsub.f32 %v2669, %v2677
    %v2696 = vadd.f32 %v2692, 1e-05
    %v2697 = vadd.f32 %v2693, 1e-05
    %v2698 = vrsqrt.pop %v2696
    %v2699 = vrsqrt.pop %v2697
    %v2700 = vmul.f32 %v2694, %v2698
    %v2701 = vmul.f32 %v2695, %v2699
    %v2702 = vlaneseq
    %v2703 = vshrl.u32 %v2702, 7
    %v2704 = vsub.s32 1, %v2703
    %v2705 = vrot.slane %v259, %v2704
    %v2706 = vmul.f32 %v2700, %v2705
    %v2707 = vmul.f32 %v2701, %v2705
    %v2708 = vlaneseq
    %v2709 = vshrl.u32 %v2708, 7
    %v2710 = vsub.s32 1, %v2709
    %v2711 = vrot.slane %v260, %v2710
    %v2712 = vadd.f32 %v2706, %v2711
    %v2713 = vadd.f32 %v2707, %v2711
    %v2714 = vld [vmem:[#allocation7] sm:$0xf]
    %v2715 = vld [vmem:[#allocation7 + $0x4] sm:$0xf]
    %v2716 = vld [vmem:[#allocation7 + $0x8] sm:$0xf]
    %v2717 = vld [vmem:[#allocation7 + $0xc] sm:$0xf]
    %v2718 = vld [vmem:[#allocation8] sm:$0x1]
    %v2719 = vpack.c.bf16 %v2713, %v2712
    %v2721 = vlaneseq
    %v2722 = vshrl.u32 %v2721, 7
    %v2723 = vsub.s32 0, %v2722
    %v2724 = vrot.slane %v2718, %v2723
    %v2730 = vunpack.c.l.b16 %v2714
    %v2731 = vunpack.c.l.b16 %v2715
    %v2732 = vunpack.c.l.b16 %v2716
    %v2733 = vunpack.c.l.b16 %v2717
    %v2734 = vpack.c.b16 %v2731, %v2730
    %v2735 = vpack.c.b16 %v2733, %v2732
    %v2739 = vsel %vm186, %v2719, 0
    %2741 = vmatprep.subr.bf16.mxu0 0
    %2742 = vmatpush1.bf16.msra.mxu0 %v2734
    %2743 = vmatprep.subr.bf16.mxu0 0
    %2744 = vmatpush1.bf16.msra.mxu0 %v2735
    %2745 = vmatprep.subr.bf16.mxu0 0
    %2746 = vmatpush1.bf16.msra.mxu0 0
    %2747 = vmatprep.subr.bf16.mxu0 0
    %2748 = vmatpush1.bf16.msra.mxu0 0
    %2749 = vmatprep.subr.bf16.mxu0 0
    %2750 = vmatpush1.bf16.msra.mxu0 0
    %2751 = vmatprep.subr.bf16.mxu0 0
    %2752 = vmatpush1.bf16.msra.mxu0 0
    %2753 = vmatprep.subr.bf16.mxu0 0
    %2754 = vmatpush1.bf16.msra.mxu0 0
    %2755 = vmatprep.subr.bf16.mxu0 0
    %2756 = vmatpush1.bf16.msra.mxu0 0
    %2757 = vmatprep.subr.bf16.mxu0 0
    %2758 = vmatpush1.bf16.msra.mxu0 0
    %2759 = vmatprep.subr.bf16.mxu0 0
    %2760 = vmatpush1.bf16.msra.mxu0 0
    %2761 = vmatprep.subr.bf16.mxu0 0
    %2762 = vmatpush1.bf16.msra.mxu0 0
    %2763 = vmatprep.subr.bf16.mxu0 0
    %2764 = vmatpush1.bf16.msra.mxu0 0
    %2765 = vmatprep.subr.bf16.mxu0 0
    %2766 = vmatpush1.bf16.msra.mxu0 0
    %2767 = vmatprep.subr.bf16.mxu0 0
    %2768 = vmatpush1.bf16.msra.mxu0 0
    %2769 = vmatprep.subr.bf16.mxu0 0
    %2770 = vmatpush1.bf16.msra.mxu0 0
    %2771 = vmatprep.subr.bf16.mxu0 0
    %2772 = vmatpush1.bf16.msra.mxu0 0
    %2773 = vmatprep.mubr.bf16.mxu0 0
    %2774 = vmatmul.mubr.bf16.gmra.mrb[0].mxu0 %v2739
    %v2775 = vpop.f32.mrb[0].mxu0
    %v2776 = vadd.f32 %v2724, %v2775
    %v2777 = vpop.f32.mrb[0].mxu0
    %v2778 = vpop.f32.mrb[0].mxu0
    %v2779 = vadd.f32 %v2724, %v2778
    %v2780 = vpop.f32.mrb[0].mxu0
    %2781 = vdwg.mxu0
    %v2782 = vmax.f32 %v2776, 0.0
    %v2783 = vmax.f32 %v2779, 0.0
    %v2784 = vld [vmem:[%s15] sm:$0xf]
    %v2785 = vld [vmem:[%s15 + $0x4] sm:$0xf]
    %v2786 = vld [vmem:[%s15 + $0x8] sm:$0xf]
    %v2787 = vld [vmem:[%s15 + $0xc] sm:$0xf]
    %v2788 = vld [vmem:[%s15 + $0x10] sm:$0xf]
    %v2789 = vld [vmem:[%s15 + $0x14] sm:$0xf]
    %v2790 = vld [vmem:[%s15 + $0x18] sm:$0xf]
    %v2791 = vld [vmem:[%s15 + $0x1c] sm:$0xf]
    %v2792 = vld [vmem:[#allocation10] sm:$0x1]
    %v2793 = vpack.c.bf16 %v2783, %v2782
    %v2795 = vlaneseq
    %v2796 = vshrl.u32 %v2795, 7
    %v2797 = vsub.s32 0, %v2796
    %v2798 = vrot.slane %v2792, %v2797
    %v2808 = vunpack.c.l.b16 %v2784
    %v2809 = vunpack.c.l.b16 %v2785
    %v2810 = vunpack.c.l.b16 %v2786
    %v2811 = vunpack.c.l.b16 %v2787
    %v2812 = vunpack.c.l.b16 %v2788
    %v2813 = vunpack.c.l.b16 %v2789
    %v2814 = vunpack.c.l.b16 %v2790
    %v2815 = vunpack.c.l.b16 %v2791
    %v2816 = vpack.c.b16 %v2809, %v2808
    %v2817 = vpack.c.b16 %v2811, %v2810
    %v2818 = vpack.c.b16 %v2813, %v2812
    %v2819 = vpack.c.b16 %v2815, %v2814
    %vm2824 = vcmask 523264
    %v2826 = vsel %vm2824, %v2793, 0
    %2828 = vmatprep.subr.bf16.mxu0 0
    %2829 = vmatpush1.bf16.msra.mxu0 %v2816
    %2830 = vmatprep.subr.bf16.mxu0 0
    %2831 = vmatpush1.bf16.msra.mxu0 %v2817
    %2832 = vmatprep.subr.bf16.mxu0 0
    %2833 = vmatpush1.bf16.msra.mxu0 %v2818
    %2834 = vmatprep.subr.bf16.mxu0 0
    %2835 = vmatpush1.bf16.msra.mxu0 %v2819
    %2836 = vmatprep.subr.bf16.mxu0 0
    %2837 = vmatpush1.bf16.msra.mxu0 0
    %2838 = vmatprep.subr.bf16.mxu0 0
    %2839 = vmatpush1.bf16.msra.mxu0 0
    %2840 = vmatprep.subr.bf16.mxu0 0
    %2841 = vmatpush1.bf16.msra.mxu0 0
    %2842 = vmatprep.subr.bf16.mxu0 0
    %2843 = vmatpush1.bf16.msra.mxu0 0
    %2844 = vmatprep.subr.bf16.mxu0 0
    %2845 = vmatpush1.bf16.msra.mxu0 0
    %2846 = vmatprep.subr.bf16.mxu0 0
    %2847 = vmatpush1.bf16.msra.mxu0 0
    %2848 = vmatprep.subr.bf16.mxu0 0
    %2849 = vmatpush1.bf16.msra.mxu0 0
    %2850 = vmatprep.subr.bf16.mxu0 0
    %2851 = vmatpush1.bf16.msra.mxu0 0
    %2852 = vmatprep.subr.bf16.mxu0 0
    %2853 = vmatpush1.bf16.msra.mxu0 0
    %2854 = vmatprep.subr.bf16.mxu0 0
    %2855 = vmatpush1.bf16.msra.mxu0 0
    %2856 = vmatprep.subr.bf16.mxu0 0
    %2857 = vmatpush1.bf16.msra.mxu0 0
    %2858 = vmatprep.subr.bf16.mxu0 0
    %2859 = vmatpush1.bf16.msra.mxu0 0
    %2860 = vmatprep.mubr.bf16.mxu0 0
    %2861 = vmatmul.mubr.bf16.gmra.mrb[0].mxu0 %v2826
    %v2862 = vpop.f32.mrb[0].mxu0
    %v2863 = vadd.f32 %v2798, %v2862
    %v2864 = vpop.f32.mrb[0].mxu0
    %v2865 = vpop.f32.mrb[0].mxu0
    %v2866 = vadd.f32 %v2798, %v2865
    %v2867 = vpop.f32.mrb[0].mxu0
    %2868 = vdwg.mxu0
    %v2869 = vadd.f32 %v2712, %v2863
    %v2870 = vadd.f32 %v2713, %v2866
    %v2871 = vsel %vm186, %v2869, 0.0
    %2872 = vadd.xlane.f32.xlu0 %v2871
    %v2873 = vpop.xlane.xlu0 %2872
    %v2874 = vsel %vm186, %v2870, 0.0
    %2875 = vadd.xlane.f32.xlu0 %v2874
    %v2876 = vpop.xlane.xlu0 %2875
    %v2877 = vmul.f32 %v2873, %v1458
    %v2878 = vmul.f32 %v2876, %v1458
    %v2879 = vmul.f32 %v2869, %v2869
    %v2880 = vmul.f32 %v2870, %v2870
    %v2881 = vsel %vm186, %v2879, 0.0
    %2882 = vadd.xlane.f32.xlu0 %v2881
    %v2883 = vpop.xlane.xlu0 %2882
    %v2884 = vsel %vm186, %v2880, 0.0
    %2885 = vadd.xlane.f32.xlu0 %v2884
    %v2886 = vpop.xlane.xlu0 %2885
    %v2887 = vmul.f32 %v2883, %v1458
    %v2888 = vmul.f32 %v2886, %v1458
    %v2889 = vmul.f32 %v2877, %v2877
    %v2890 = vmul.f32 %v2878, %v2878
    %v2891 = vsub.f32 %v2887, %v2889
    %v2892 = vsub.f32 %v2888, %v2890
    %v2893 = vmax.f32 %v2891, 0.0
    %v2894 = vmax.f32 %v2892, 0.0
    %v2895 = vsub.f32 %v2869, %v2877
    %v2896 = vsub.f32 %v2870, %v2878
    %v2897 = vadd.f32 %v2893, 1e-05
    %v2898 = vadd.f32 %v2894, 1e-05
    %v2899 = vrsqrt.pop %v2897
    %v2900 = vrsqrt.pop %v2898
    %v2901 = vmul.f32 %v2895, %v2899
    %v2902 = vmul.f32 %v2896, %v2900
    %v2903 = vlaneseq
    %v2904 = vshrl.u32 %v2903, 7
    %v2905 = vsub.s32 2, %v2904
    %v2906 = vrot.slane %v259, %v2905
    %v2907 = vmul.f32 %v2901, %v2906
    %v2908 = vmul.f32 %v2902, %v2906
    %v2909 = vlaneseq
    %v2910 = vshrl.u32 %v2909, 7
    %v2911 = vsub.s32 2, %v2910
    %v2912 = vrot.slane %v260, %v2911
    %v2913 = vadd.f32 %v2907, %v2912
    %v2914 = vadd.f32 %v2908, %v2912
    %s2915 = scalar_lea.vmem %s17, 4
    %v2916 = vld [vmem:[%s2915] sm:$0x7]
    %s2917 = scalar_lea.vmem %s18, 4
    %v2918 = vld [vmem:[%s2917] sm:$0x7]
    %s2919 = scalar_lea.vmem %s3, 16
    %v2920 = vld [vmem:[%s2919] sm:$0xf]
    %v2921 = vld [vmem:[%s2919 + $0x4] sm:$0xf]
    %v2922 = vld [vmem:[%s2919 + $0x8] sm:$0xf]
    %v2923 = vld [vmem:[%s2919 + $0xc] sm:$0xf]
    %s2924 = scalar_lea.vmem %s4, 1
    %v2925 = vld [vmem:[%s2924] sm:$0x1]
    %v2926 = vpack.c.bf16 %v2914, %v2913
    %v2928 = vlaneseq
    %v2929 = vshrl.u32 %v2928, 7
    %v2930 = vsub.s32 0, %v2929
    %v2931 = vrot.slane %v2925, %v2930
    %v2937 = vunpack.c.l.b16 %v2920
    %v2938 = vunpack.c.l.b16 %v2921
    %v2939 = vunpack.c.l.b16 %v2922
    %v2940 = vunpack.c.l.b16 %v2923
    %v2941 = vpack.c.b16 %v2938, %v2937
    %v2942 = vpack.c.b16 %v2940, %v2939
    %v2946 = vsel %vm186, %v2926, 0
    %2948 = vmatprep.subr.bf16.mxu0 0
    %2949 = vmatpush1.bf16.msra.mxu0 %v2941
    %2950 = vmatprep.subr.bf16.mxu0 0
    %2951 = vmatpush1.bf16.msra.mxu0 %v2942
    %2952 = vmatprep.subr.bf16.mxu0 0
    %2953 = vmatpush1.bf16.msra.mxu0 0
    %2954 = vmatprep.subr.bf16.mxu0 0
    %2955 = vmatpush1.bf16.msra.mxu0 0
    %2956 = vmatprep.subr.bf16.mxu0 0
    %2957 = vmatpush1.bf16.msra.mxu0 0
    %2958 = vmatprep.subr.bf16.mxu0 0
    %2959 = vmatpush1.bf16.msra.mxu0 0
    %2960 = vmatprep.subr.bf16.mxu0 0
    %2961 = vmatpush1.bf16.msra.mxu0 0
    %2962 = vmatprep.subr.bf16.mxu0 0
    %2963 = vmatpush1.bf16.msra.mxu0 0
    %2964 = vmatprep.subr.bf16.mxu0 0
    %2965 = vmatpush1.bf16.msra.mxu0 0
    %2966 = vmatprep.subr.bf16.mxu0 0
    %2967 = vmatpush1.bf16.msra.mxu0 0
    %2968 = vmatprep.subr.bf16.mxu0 0
    %2969 = vmatpush1.bf16.msra.mxu0 0
    %2970 = vmatprep.subr.bf16.mxu0 0
    %2971 = vmatpush1.bf16.msra.mxu0 0
    %2972 = vmatprep.subr.bf16.mxu0 0
    %2973 = vmatpush1.bf16.msra.mxu0 0
    %2974 = vmatprep.subr.bf16.mxu0 0
    %2975 = vmatpush1.bf16.msra.mxu0 0
    %2976 = vmatprep.subr.bf16.mxu0 0
    %2977 = vmatpush1.bf16.msra.mxu0 0
    %2978 = vmatprep.subr.bf16.mxu0 0
    %2979 = vmatpush1.bf16.msra.mxu0 0
    %2980 = vmatprep.mubr.bf16.mxu0 0
    %2981 = vmatmul.mubr.bf16.gmra.mrb[0].mxu0 %v2946
    %v2982 = vpop.f32.mrb[0].mxu0
    %v2983 = vadd.f32 %v2931, %v2982
    %v2984 = vpop.f32.mrb[0].mxu0
    %v2985 = vpop.f32.mrb[0].mxu0
    %v2986 = vadd.f32 %v2931, %v2985
    %v2987 = vpop.f32.mrb[0].mxu0
    %2988 = vdwg.mxu0
    %2990 = vrot.lane.b32.xlu0 %v2983, 120
    %v2991 = vpop.permute.xlu0 %2990
    %2993 = vrot.lane.b32.xlu0 %v2983, 112
    %v2994 = vpop.permute.xlu0 %2993
    %2996 = vrot.lane.b32.xlu0 %v2983, 104
    %v2997 = vpop.permute.xlu0 %2996
    %v2999 = vpack.c.bf16 %v2983, %v2983
    %v3000 = vpack.c.bf16 %v2991, %v2991
    %v3001 = vpack.c.bf16 %v2994, %v2994
    %v3002 = vpack.c.bf16 %v2997, %v2997
    %3004 = vrot.lane.b32.xlu0 %v2999, 96
    %v3005 = vpop.permute.xlu0 %3004
    %v3007 = vsel %vm346, %v2999, 0
    %v3010 = vsel %vm346, %v3005, 0
    %3012 = vmatprep.subr.bf16.mxu0 0
    %3013 = vmatpush1.bf16.xpose.msra.mxu0 %v3010
    %3014 = vmatprep.subr.bf16.mxu0 0
    %3015 = vmatpush1.bf16.xpose.msra.mxu0 0
    %3016 = vmatprep.subr.bf16.mxu0 0
    %3017 = vmatpush1.bf16.xpose.msra.mxu0 0
    %3018 = vmatprep.subr.bf16.mxu0 0
    %3019 = vmatpush1.bf16.xpose.msra.mxu0 0
    %3020 = vmatprep.subr.bf16.mxu0 0
    %3021 = vmatpush1.bf16.xpose.msra.mxu0 0
    %3022 = vmatprep.subr.bf16.mxu0 0
    %3023 = vmatpush1.bf16.xpose.msra.mxu0 0
    %3024 = vmatprep.subr.bf16.mxu0 0
    %3025 = vmatpush1.bf16.xpose.msra.mxu0 0
    %3026 = vmatprep.subr.bf16.mxu0 0
    %3027 = vmatpush1.bf16.xpose.msra.mxu0 0
    %3028 = vmatprep.subr.bf16.mxu0 0
    %3029 = vmatpush1.bf16.xpose.msra.mxu0 0
    %3030 = vmatprep.subr.bf16.mxu0 0
    %3031 = vmatpush1.bf16.xpose.msra.mxu0 0
    %3032 = vmatprep.subr.bf16.mxu0 0
    %3033 = vmatpush1.bf16.xpose.msra.mxu0 0
    %3034 = vmatprep.subr.bf16.mxu0 0
    %3035 = vmatpush1.bf16.xpose.msra.mxu0 0
    %3036 = vmatprep.subr.bf16.mxu0 0
    %3037 = vmatpush1.bf16.xpose.msra.mxu0 0
    %3038 = vmatprep.subr.bf16.mxu0 0
    %3039 = vmatpush1.bf16.xpose.msra.mxu0 0
    %3040 = vmatprep.subr.bf16.mxu0 0
    %3041 = vmatpush1.bf16.xpose.msra.mxu0 0
    %3042 = vmatprep.subr.bf16.mxu0 0
    %3043 = vmatpush1.bf16.xpose.msra.mxu0 0
    %3044 = vmatprep.mubr.bf16.mxu0 0
    %3045 = vmatmul.mubr.bf16.gmra.mrb[0].mxu0 %v3007
    %v3046 = vpop.f32.mrb[0].mxu0
    %v3047 = vadd.f32 %v159, %v3046
    %v3048 = vpop.f32.mrb[0].mxu0
    %v3049 = vpop.f32.mrb[0].mxu0
    %v3050 = vpop.f32.mrb[0].mxu0
    %3051 = vdwg.mxu0
    %3053 = vrot.lane.b32.xlu0 %v3000, 96
    %v3054 = vpop.permute.xlu0 %3053
    %v3056 = vsel %vm346, %v3000, 0
    %v3059 = vsel %vm346, %v3054, 0
    %3061 = vmatprep.subr.bf16.mxu0 0
    %3062 = vmatpush1.bf16.xpose.msra.mxu0 %v3059
    %3063 = vmatprep.subr.bf16.mxu0 0
    %3064 = vmatpush1.bf16.xpose.msra.mxu0 0
    %3065 = vmatprep.subr.bf16.mxu0 0
    %3066 = vmatpush1.bf16.xpose.msra.mxu0 0
    %3067 = vmatprep.subr.bf16.mxu0 0
    %3068 = vmatpush1.bf16.xpose.msra.mxu0 0
    %3069 = vmatprep.subr.bf16.mxu0 0
    %3070 = vmatpush1.bf16.xpose.msra.mxu0 0
    %3071 = vmatprep.subr.bf16.mxu0 0
    %3072 = vmatpush1.bf16.xpose.msra.mxu0 0
    %3073 = vmatprep.subr.bf16.mxu0 0
    %3074 = vmatpush1.bf16.xpose.msra.mxu0 0
    %3075 = vmatprep.subr.bf16.mxu0 0
    %3076 = vmatpush1.bf16.xpose.msra.mxu0 0
    %3077 = vmatprep.subr.bf16.mxu0 0
    %3078 = vmatpush1.bf16.xpose.msra.mxu0 0
    %3079 = vmatprep.subr.bf16.mxu0 0
    %3080 = vmatpush1.bf16.xpose.msra.mxu0 0
    %3081 = vmatprep.subr.bf16.mxu0 0
    %3082 = vmatpush1.bf16.xpose.msra.mxu0 0
    %3083 = vmatprep.subr.bf16.mxu0 0
    %3084 = vmatpush1.bf16.xpose.msra.mxu0 0
    %3085 = vmatprep.subr.bf16.mxu0 0
    %3086 = vmatpush1.bf16.xpose.msra.mxu0 0
    %3087 = vmatprep.subr.bf16.mxu0 0
    %3088 = vmatpush1.bf16.xpose.msra.mxu0 0
    %3089 = vmatprep.subr.bf16.mxu0 0
    %3090 = vmatpush1.bf16.xpose.msra.mxu0 0
    %3091 = vmatprep.subr.bf16.mxu0 0
    %3092 = vmatpush1.bf16.xpose.msra.mxu0 0
    %3093 = vmatprep.mubr.bf16.mxu0 0
    %3094 = vmatmul.mubr.bf16.gmra.mrb[0].mxu0 %v3056
    %v3095 = vpop.f32.mrb[0].mxu0
    %v3096 = vadd.f32 %v159, %v3095
    %v3097 = vpop.f32.mrb[0].mxu0
    %v3098 = vpop.f32.mrb[0].mxu0
    %v3099 = vpop.f32.mrb[0].mxu0
    %3100 = vdwg.mxu0
    %3102 = vrot.lane.b32.xlu0 %v3001, 96
    %v3103 = vpop.permute.xlu0 %3102
    %v3105 = vsel %vm346, %v3001, 0
    %v3108 = vsel %vm346, %v3103, 0
    %3110 = vmatprep.subr.bf16.mxu0 0
    %3111 = vmatpush1.bf16.xpose.msra.mxu0 %v3108
    %3112 = vmatprep.subr.bf16.mxu0 0
    %3113 = vmatpush1.bf16.xpose.msra.mxu0 0
    %3114 = vmatprep.subr.bf16.mxu0 0
    %3115 = vmatpush1.bf16.xpose.msra.mxu0 0
    %3116 = vmatprep.subr.bf16.mxu0 0
    %3117 = vmatpush1.bf16.xpose.msra.mxu0 0
    %3118 = vmatprep.subr.bf16.mxu0 0
    %3119 = vmatpush1.bf16.xpose.msra.mxu0 0
    %3120 = vmatprep.subr.bf16.mxu0 0
    %3121 = vmatpush1.bf16.xpose.msra.mxu0 0
    %3122 = vmatprep.subr.bf16.mxu0 0
    %3123 = vmatpush1.bf16.xpose.msra.mxu0 0
    %3124 = vmatprep.subr.bf16.mxu0 0
    %3125 = vmatpush1.bf16.xpose.msra.mxu0 0
    %3126 = vmatprep.subr.bf16.mxu0 0
    %3127 = vmatpush1.bf16.xpose.msra.mxu0 0
    %3128 = vmatprep.subr.bf16.mxu0 0
    %3129 = vmatpush1.bf16.xpose.msra.mxu0 0
    %3130 = vmatprep.subr.bf16.mxu0 0
    %3131 = vmatpush1.bf16.xpose.msra.mxu0 0
    %3132 = vmatprep.subr.bf16.mxu0 0
    %3133 = vmatpush1.bf16.xpose.msra.mxu0 0
    %3134 = vmatprep.subr.bf16.mxu0 0
    %3135 = vmatpush1.bf16.xpose.msra.mxu0 0
    %3136 = vmatprep.subr.bf16.mxu0 0
    %3137 = vmatpush1.bf16.xpose.msra.mxu0 0
    %3138 = vmatprep.subr.bf16.mxu0 0
    %3139 = vmatpush1.bf16.xpose.msra.mxu0 0
    %3140 = vmatprep.subr.bf16.mxu0 0
    %3141 = vmatpush1.bf16.xpose.msra.mxu0 0
    %3142 = vmatprep.mubr.bf16.mxu0 0
    %3143 = vmatmul.mubr.bf16.gmra.mrb[0].mxu0 %v3105
    %v3144 = vpop.f32.mrb[0].mxu0
    %v3145 = vadd.f32 %v159, %v3144
    %v3146 = vpop.f32.mrb[0].mxu0
    %v3147 = vpop.f32.mrb[0].mxu0
    %v3148 = vpop.f32.mrb[0].mxu0
    %3149 = vdwg.mxu0
    %3151 = vrot.lane.b32.xlu0 %v3002, 96
    %v3152 = vpop.permute.xlu0 %3151
    %v3154 = vsel %vm346, %v3002, 0
    %v3157 = vsel %vm346, %v3152, 0
    %3159 = vmatprep.subr.bf16.mxu0 0
    %3160 = vmatpush1.bf16.xpose.msra.mxu0 %v3157
    %3161 = vmatprep.subr.bf16.mxu0 0
    %3162 = vmatpush1.bf16.xpose.msra.mxu0 0
    %3163 = vmatprep.subr.bf16.mxu0 0
    %3164 = vmatpush1.bf16.xpose.msra.mxu0 0
    %3165 = vmatprep.subr.bf16.mxu0 0
    %3166 = vmatpush1.bf16.xpose.msra.mxu0 0
    %3167 = vmatprep.subr.bf16.mxu0 0
    %3168 = vmatpush1.bf16.xpose.msra.mxu0 0
    %3169 = vmatprep.subr.bf16.mxu0 0
    %3170 = vmatpush1.bf16.xpose.msra.mxu0 0
    %3171 = vmatprep.subr.bf16.mxu0 0
    %3172 = vmatpush1.bf16.xpose.msra.mxu0 0
    %3173 = vmatprep.subr.bf16.mxu0 0
    %3174 = vmatpush1.bf16.xpose.msra.mxu0 0
    %3175 = vmatprep.subr.bf16.mxu0 0
    %3176 = vmatpush1.bf16.xpose.msra.mxu0 0
    %3177 = vmatprep.subr.bf16.mxu0 0
    %3178 = vmatpush1.bf16.xpose.msra.mxu0 0
    %3179 = vmatprep.subr.bf16.mxu0 0
    %3180 = vmatpush1.bf16.xpose.msra.mxu0 0
    %3181 = vmatprep.subr.bf16.mxu0 0
    %3182 = vmatpush1.bf16.xpose.msra.mxu0 0
    %3183 = vmatprep.subr.bf16.mxu0 0
    %3184 = vmatpush1.bf16.xpose.msra.mxu0 0
    %3185 = vmatprep.subr.bf16.mxu0 0
    %3186 = vmatpush1.bf16.xpose.msra.mxu0 0
    %3187 = vmatprep.subr.bf16.mxu0 0
    %3188 = vmatpush1.bf16.xpose.msra.mxu0 0
    %3189 = vmatprep.subr.bf16.mxu0 0
    %3190 = vmatpush1.bf16.xpose.msra.mxu0 0
    %3191 = vmatprep.mubr.bf16.mxu0 0
    %3192 = vmatmul.mubr.bf16.gmra.mrb[0].mxu0 %v3154
    %v3193 = vpop.f32.mrb[0].mxu0
    %v3194 = vadd.f32 %v159, %v3193
    %v3195 = vpop.f32.mrb[0].mxu0
    %v3196 = vpop.f32.mrb[0].mxu0
    %v3197 = vpop.f32.mrb[0].mxu0
    %3198 = vdwg.mxu0
    %v3199 = vsel %vm346, %v3047, -inf
    %3200 = vmax.xlane.f32.xlu0 %v3199
    %v3201 = vpop.xlane.xlu0 %3200
    %v3202 = vsel %vm346, %v3096, -inf
    %3203 = vmax.xlane.f32.xlu0 %v3202
    %v3204 = vpop.xlane.xlu0 %3203
    %v3205 = vsel %vm346, %v3145, -inf
    %3206 = vmax.xlane.f32.xlu0 %v3205
    %v3207 = vpop.xlane.xlu0 %3206
    %v3208 = vsel %vm346, %v3194, -inf
    %3209 = vmax.xlane.f32.xlu0 %v3208
    %v3210 = vpop.xlane.xlu0 %3209
    %v3211 = vsub.f32 %v3047, %v3201
    %v3212 = vsub.f32 %v3096, %v3204
    %v3213 = vsub.f32 %v3145, %v3207
    %v3214 = vsub.f32 %v3194, %v3210
    %v3215 = vmul.f32 %v3211, 1.442695
    %v3216 = vpow.pop %v3215
    %v3217 = vmul.f32 %v3212, 1.442695
    %v3218 = vpow.pop %v3217
    %v3219 = vmul.f32 %v3213, 1.442695
    %v3220 = vpow.pop %v3219
    %v3221 = vmul.f32 %v3214, 1.442695
    %v3222 = vpow.pop %v3221
    %v3223 = vsel %vm346, %v3216, 0.0
    %3224 = vadd.xlane.f32.xlu0 %v3223
    %v3225 = vpop.xlane.xlu0 %3224
    %v3226 = vsel %vm346, %v3218, 0.0
    %3227 = vadd.xlane.f32.xlu0 %v3226
    %v3228 = vpop.xlane.xlu0 %3227
    %v3229 = vsel %vm346, %v3220, 0.0
    %3230 = vadd.xlane.f32.xlu0 %v3229
    %v3231 = vpop.xlane.xlu0 %3230
    %v3232 = vsel %vm346, %v3222, 0.0
    %3233 = vadd.xlane.f32.xlu0 %v3232
    %v3234 = vpop.xlane.xlu0 %3233
    %v3235 = vrcp.pop %v3225
    %v3236 = vrcp.pop %v3228
    %v3237 = vrcp.pop %v3231
    %v3238 = vrcp.pop %v3234
    %v3239 = vmul.f32 %v3216, %v3235
    %v3240 = vmul.f32 %v3218, %v3236
    %v3241 = vmul.f32 %v3220, %v3237
    %v3242 = vmul.f32 %v3222, %v3238
    %v3243 = vpack.c.bf16 %v3239, %v3239
    %v3244 = vpack.c.bf16 %v3240, %v3240
    %v3245 = vpack.c.bf16 %v3241, %v3241
    %v3246 = vpack.c.bf16 %v3242, %v3242
    %3247 = vrot.lane.b32.xlu0 %v2999, 64
    %v3248 = vpop.permute.xlu0 %3247
    %v3250 = vsel %vm346, %v3243, 0
    %v3253 = vsel %vm593, %v3248, 0
    %3255 = vmatprep.subr.bf16.mxu0 0
    %3256 = vmatpush1.bf16.msra.mxu0 %v3253
    %3257 = vmatprep.subr.bf16.mxu0 0
    %3258 = vmatpush1.bf16.msra.mxu0 0
    %3259 = vmatprep.subr.bf16.mxu0 0
    %3260 = vmatpush1.bf16.msra.mxu0 0
    %3261 = vmatprep.subr.bf16.mxu0 0
    %3262 = vmatpush1.bf16.msra.mxu0 0
    %3263 = vmatprep.subr.bf16.mxu0 0
    %3264 = vmatpush1.bf16.msra.mxu0 0
    %3265 = vmatprep.subr.bf16.mxu0 0
    %3266 = vmatpush1.bf16.msra.mxu0 0
    %3267 = vmatprep.subr.bf16.mxu0 0
    %3268 = vmatpush1.bf16.msra.mxu0 0
    %3269 = vmatprep.subr.bf16.mxu0 0
    %3270 = vmatpush1.bf16.msra.mxu0 0
    %3271 = vmatprep.subr.bf16.mxu0 0
    %3272 = vmatpush1.bf16.msra.mxu0 0
    %3273 = vmatprep.subr.bf16.mxu0 0
    %3274 = vmatpush1.bf16.msra.mxu0 0
    %3275 = vmatprep.subr.bf16.mxu0 0
    %3276 = vmatpush1.bf16.msra.mxu0 0
    %3277 = vmatprep.subr.bf16.mxu0 0
    %3278 = vmatpush1.bf16.msra.mxu0 0
    %3279 = vmatprep.subr.bf16.mxu0 0
    %3280 = vmatpush1.bf16.msra.mxu0 0
    %3281 = vmatprep.subr.bf16.mxu0 0
    %3282 = vmatpush1.bf16.msra.mxu0 0
    %3283 = vmatprep.subr.bf16.mxu0 0
    %3284 = vmatpush1.bf16.msra.mxu0 0
    %3285 = vmatprep.subr.bf16.mxu0 0
    %3286 = vmatpush1.bf16.msra.mxu0 0
    %3287 = vmatprep.mubr.bf16.mxu0 0
    %3288 = vmatmul.mubr.bf16.gmra.mrb[0].mxu0 %v3250
    %v3289 = vpop.f32.mrb[0].mxu0
    %v3290 = vadd.f32 0.0, %v3289
    %v3291 = vpop.f32.mrb[0].mxu0
    %v3292 = vpop.f32.mrb[0].mxu0
    %v3293 = vpop.f32.mrb[0].mxu0
    %3294 = vdwg.mxu0
    %3295 = vrot.lane.b32.xlu0 %v3000, 64
    %v3296 = vpop.permute.xlu0 %3295
    %v3298 = vsel %vm346, %v3244, 0
    %v3301 = vsel %vm593, %v3296, 0
    %3303 = vmatprep.subr.bf16.mxu0 0
    %3304 = vmatpush1.bf16.msra.mxu0 %v3301
    %3305 = vmatprep.subr.bf16.mxu0 0
    %3306 = vmatpush1.bf16.msra.mxu0 0
    %3307 = vmatprep.subr.bf16.mxu0 0
    %3308 = vmatpush1.bf16.msra.mxu0 0
    %3309 = vmatprep.subr.bf16.mxu0 0
    %3310 = vmatpush1.bf16.msra.mxu0 0
    %3311 = vmatprep.subr.bf16.mxu0 0
    %3312 = vmatpush1.bf16.msra.mxu0 0
    %3313 = vmatprep.subr.bf16.mxu0 0
    %3314 = vmatpush1.bf16.msra.mxu0 0
    %3315 = vmatprep.subr.bf16.mxu0 0
    %3316 = vmatpush1.bf16.msra.mxu0 0
    %3317 = vmatprep.subr.bf16.mxu0 0
    %3318 = vmatpush1.bf16.msra.mxu0 0
    %3319 = vmatprep.subr.bf16.mxu0 0
    %3320 = vmatpush1.bf16.msra.mxu0 0
    %3321 = vmatprep.subr.bf16.mxu0 0
    %3322 = vmatpush1.bf16.msra.mxu0 0
    %3323 = vmatprep.subr.bf16.mxu0 0
    %3324 = vmatpush1.bf16.msra.mxu0 0
    %3325 = vmatprep.subr.bf16.mxu0 0
    %3326 = vmatpush1.bf16.msra.mxu0 0
    %3327 = vmatprep.subr.bf16.mxu0 0
    %3328 = vmatpush1.bf16.msra.mxu0 0
    %3329 = vmatprep.subr.bf16.mxu0 0
    %3330 = vmatpush1.bf16.msra.mxu0 0
    %3331 = vmatprep.subr.bf16.mxu0 0
    %3332 = vmatpush1.bf16.msra.mxu0 0
    %3333 = vmatprep.subr.bf16.mxu0 0
    %3334 = vmatpush1.bf16.msra.mxu0 0
    %3335 = vmatprep.mubr.bf16.mxu0 0
    %3336 = vmatmul.mubr.bf16.gmra.mrb[0].mxu0 %v3298
    %v3337 = vpop.f32.mrb[0].mxu0
    %v3338 = vadd.f32 0.0, %v3337
    %v3339 = vpop.f32.mrb[0].mxu0
    %v3340 = vpop.f32.mrb[0].mxu0
    %v3341 = vpop.f32.mrb[0].mxu0
    %3342 = vdwg.mxu0
    %3343 = vrot.lane.b32.xlu0 %v3001, 64
    %v3344 = vpop.permute.xlu0 %3343
    %v3346 = vsel %vm346, %v3245, 0
    %v3349 = vsel %vm593, %v3344, 0
    %3351 = vmatprep.subr.bf16.mxu0 0
    %3352 = vmatpush1.bf16.msra.mxu0 %v3349
    %3353 = vmatprep.subr.bf16.mxu0 0
    %3354 = vmatpush1.bf16.msra.mxu0 0
    %3355 = vmatprep.subr.bf16.mxu0 0
    %3356 = vmatpush1.bf16.msra.mxu0 0
    %3357 = vmatprep.subr.bf16.mxu0 0
    %3358 = vmatpush1.bf16.msra.mxu0 0
    %3359 = vmatprep.subr.bf16.mxu0 0
    %3360 = vmatpush1.bf16.msra.mxu0 0
    %3361 = vmatprep.subr.bf16.mxu0 0
    %3362 = vmatpush1.bf16.msra.mxu0 0
    %3363 = vmatprep.subr.bf16.mxu0 0
    %3364 = vmatpush1.bf16.msra.mxu0 0
    %3365 = vmatprep.subr.bf16.mxu0 0
    %3366 = vmatpush1.bf16.msra.mxu0 0
    %3367 = vmatprep.subr.bf16.mxu0 0
    %3368 = vmatpush1.bf16.msra.mxu0 0
    %3369 = vmatprep.subr.bf16.mxu0 0
    %3370 = vmatpush1.bf16.msra.mxu0 0
    %3371 = vmatprep.subr.bf16.mxu0 0
    %3372 = vmatpush1.bf16.msra.mxu0 0
    %3373 = vmatprep.subr.bf16.mxu0 0
    %3374 = vmatpush1.bf16.msra.mxu0 0
    %3375 = vmatprep.subr.bf16.mxu0 0
    %3376 = vmatpush1.bf16.msra.mxu0 0
    %3377 = vmatprep.subr.bf16.mxu0 0
    %3378 = vmatpush1.bf16.msra.mxu0 0
    %3379 = vmatprep.subr.bf16.mxu0 0
    %3380 = vmatpush1.bf16.msra.mxu0 0
    %3381 = vmatprep.subr.bf16.mxu0 0
    %3382 = vmatpush1.bf16.msra.mxu0 0
    %3383 = vmatprep.mubr.bf16.mxu0 0
    %3384 = vmatmul.mubr.bf16.gmra.mrb[0].mxu0 %v3346
    %v3385 = vpop.f32.mrb[0].mxu0
    %v3386 = vadd.f32 0.0, %v3385
    %v3387 = vpop.f32.mrb[0].mxu0
    %v3388 = vpop.f32.mrb[0].mxu0
    %v3389 = vpop.f32.mrb[0].mxu0
    %3390 = vdwg.mxu0
    %3391 = vrot.lane.b32.xlu0 %v3002, 64
    %v3392 = vpop.permute.xlu0 %3391
    %v3394 = vsel %vm346, %v3246, 0
    %v3397 = vsel %vm593, %v3392, 0
    %3399 = vmatprep.subr.bf16.mxu0 0
    %3400 = vmatpush1.bf16.msra.mxu0 %v3397
    %3401 = vmatprep.subr.bf16.mxu0 0
    %3402 = vmatpush1.bf16.msra.mxu0 0
    %3403 = vmatprep.subr.bf16.mxu0 0
    %3404 = vmatpush1.bf16.msra.mxu0 0
    %3405 = vmatprep.subr.bf16.mxu0 0
    %3406 = vmatpush1.bf16.msra.mxu0 0
    %3407 = vmatprep.subr.bf16.mxu0 0
    %3408 = vmatpush1.bf16.msra.mxu0 0
    %3409 = vmatprep.subr.bf16.mxu0 0
    %3410 = vmatpush1.bf16.msra.mxu0 0
    %3411 = vmatprep.subr.bf16.mxu0 0
    %3412 = vmatpush1.bf16.msra.mxu0 0
    %3413 = vmatprep.subr.bf16.mxu0 0
    %3414 = vmatpush1.bf16.msra.mxu0 0
    %3415 = vmatprep.subr.bf16.mxu0 0
    %3416 = vmatpush1.bf16.msra.mxu0 0
    %3417 = vmatprep.subr.bf16.mxu0 0
    %3418 = vmatpush1.bf16.msra.mxu0 0
    %3419 = vmatprep.subr.bf16.mxu0 0
    %3420 = vmatpush1.bf16.msra.mxu0 0
    %3421 = vmatprep.subr.bf16.mxu0 0
    %3422 = vmatpush1.bf16.msra.mxu0 0
    %3423 = vmatprep.subr.bf16.mxu0 0
    %3424 = vmatpush1.bf16.msra.mxu0 0
    %3425 = vmatprep.subr.bf16.mxu0 0
    %3426 = vmatpush1.bf16.msra.mxu0 0
    %3427 = vmatprep.subr.bf16.mxu0 0
    %3428 = vmatpush1.bf16.msra.mxu0 0
    %3429 = vmatprep.subr.bf16.mxu0 0
    %3430 = vmatpush1.bf16.msra.mxu0 0
    %3431 = vmatprep.mubr.bf16.mxu0 0
    %3432 = vmatmul.mubr.bf16.gmra.mrb[0].mxu0 %v3394
    %v3433 = vpop.f32.mrb[0].mxu0
    %v3434 = vadd.f32 0.0, %v3433
    %v3435 = vpop.f32.mrb[0].mxu0
    %v3436 = vpop.f32.mrb[0].mxu0
    %v3437 = vpop.f32.mrb[0].mxu0
    %3438 = vdwg.mxu0
    %3440 = vrot.lane.b32.xlu0 %v2986, 120
    %v3441 = vpop.permute.xlu0 %3440
    %3443 = vrot.lane.b32.xlu0 %v2986, 112
    %v3444 = vpop.permute.xlu0 %3443
    %3446 = vrot.lane.b32.xlu0 %v2986, 104
    %v3447 = vpop.permute.xlu0 %3446
    %v3449 = vpack.c.bf16 %v2986, %v2986
    %v3450 = vpack.c.bf16 %v3441, %v3441
    %v3451 = vpack.c.bf16 %v3444, %v3444
    %v3452 = vpack.c.bf16 %v3447, %v3447
    %3454 = vrot.lane.b32.xlu0 %v3449, 96
    %v3455 = vpop.permute.xlu0 %3454
    %v3457 = vsel %vm346, %v3449, 0
    %v3460 = vsel %vm346, %v3455, 0
    %3462 = vmatprep.subr.bf16.mxu0 0
    %3463 = vmatpush1.bf16.xpose.msra.mxu0 %v3460
    %3464 = vmatprep.subr.bf16.mxu0 0
    %3465 = vmatpush1.bf16.xpose.msra.mxu0 0
    %3466 = vmatprep.subr.bf16.mxu0 0
    %3467 = vmatpush1.bf16.xpose.msra.mxu0 0
    %3468 = vmatprep.subr.bf16.mxu0 0
    %3469 = vmatpush1.bf16.xpose.msra.mxu0 0
    %3470 = vmatprep.subr.bf16.mxu0 0
    %3471 = vmatpush1.bf16.xpose.msra.mxu0 0
    %3472 = vmatprep.subr.bf16.mxu0 0
    %3473 = vmatpush1.bf16.xpose.msra.mxu0 0
    %3474 = vmatprep.subr.bf16.mxu0 0
    %3475 = vmatpush1.bf16.xpose.msra.mxu0 0
    %3476 = vmatprep.subr.bf16.mxu0 0
    %3477 = vmatpush1.bf16.xpose.msra.mxu0 0
    %3478 = vmatprep.subr.bf16.mxu0 0
    %3479 = vmatpush1.bf16.xpose.msra.mxu0 0
    %3480 = vmatprep.subr.bf16.mxu0 0
    %3481 = vmatpush1.bf16.xpose.msra.mxu0 0
    %3482 = vmatprep.subr.bf16.mxu0 0
    %3483 = vmatpush1.bf16.xpose.msra.mxu0 0
    %3484 = vmatprep.subr.bf16.mxu0 0
    %3485 = vmatpush1.bf16.xpose.msra.mxu0 0
    %3486 = vmatprep.subr.bf16.mxu0 0
    %3487 = vmatpush1.bf16.xpose.msra.mxu0 0
    %3488 = vmatprep.subr.bf16.mxu0 0
    %3489 = vmatpush1.bf16.xpose.msra.mxu0 0
    %3490 = vmatprep.subr.bf16.mxu0 0
    %3491 = vmatpush1.bf16.xpose.msra.mxu0 0
    %3492 = vmatprep.subr.bf16.mxu0 0
    %3493 = vmatpush1.bf16.xpose.msra.mxu0 0
    %3494 = vmatprep.mubr.bf16.mxu0 0
    %3495 = vmatmul.mubr.bf16.gmra.mrb[0].mxu0 %v3457
    %v3496 = vpop.f32.mrb[0].mxu0
    %v3497 = vadd.f32 %v159, %v3496
    %v3498 = vpop.f32.mrb[0].mxu0
    %v3499 = vpop.f32.mrb[0].mxu0
    %v3500 = vpop.f32.mrb[0].mxu0
    %3501 = vdwg.mxu0
    %3503 = vrot.lane.b32.xlu0 %v3450, 96
    %v3504 = vpop.permute.xlu0 %3503
    %v3506 = vsel %vm346, %v3450, 0
    %v3509 = vsel %vm346, %v3504, 0
    %3511 = vmatprep.subr.bf16.mxu0 0
    %3512 = vmatpush1.bf16.xpose.msra.mxu0 %v3509
    %3513 = vmatprep.subr.bf16.mxu0 0
    %3514 = vmatpush1.bf16.xpose.msra.mxu0 0
    %3515 = vmatprep.subr.bf16.mxu0 0
    %3516 = vmatpush1.bf16.xpose.msra.mxu0 0
    %3517 = vmatprep.subr.bf16.mxu0 0
    %3518 = vmatpush1.bf16.xpose.msra.mxu0 0
    %3519 = vmatprep.subr.bf16.mxu0 0
    %3520 = vmatpush1.bf16.xpose.msra.mxu0 0
    %3521 = vmatprep.subr.bf16.mxu0 0
    %3522 = vmatpush1.bf16.xpose.msra.mxu0 0
    %3523 = vmatprep.subr.bf16.mxu0 0
    %3524 = vmatpush1.bf16.xpose.msra.mxu0 0
    %3525 = vmatprep.subr.bf16.mxu0 0
    %3526 = vmatpush1.bf16.xpose.msra.mxu0 0
    %3527 = vmatprep.subr.bf16.mxu0 0
    %3528 = vmatpush1.bf16.xpose.msra.mxu0 0
    %3529 = vmatprep.subr.bf16.mxu0 0
    %3530 = vmatpush1.bf16.xpose.msra.mxu0 0
    %3531 = vmatprep.subr.bf16.mxu0 0
    %3532 = vmatpush1.bf16.xpose.msra.mxu0 0
    %3533 = vmatprep.subr.bf16.mxu0 0
    %3534 = vmatpush1.bf16.xpose.msra.mxu0 0
    %3535 = vmatprep.subr.bf16.mxu0 0
    %3536 = vmatpush1.bf16.xpose.msra.mxu0 0
    %3537 = vmatprep.subr.bf16.mxu0 0
    %3538 = vmatpush1.bf16.xpose.msra.mxu0 0
    %3539 = vmatprep.subr.bf16.mxu0 0
    %3540 = vmatpush1.bf16.xpose.msra.mxu0 0
    %3541 = vmatprep.subr.bf16.mxu0 0
    %3542 = vmatpush1.bf16.xpose.msra.mxu0 0
    %3543 = vmatprep.mubr.bf16.mxu0 0
    %3544 = vmatmul.mubr.bf16.gmra.mrb[0].mxu0 %v3506
    %v3545 = vpop.f32.mrb[0].mxu0
    %v3546 = vadd.f32 %v159, %v3545
    %v3547 = vpop.f32.mrb[0].mxu0
    %v3548 = vpop.f32.mrb[0].mxu0
    %v3549 = vpop.f32.mrb[0].mxu0
    %3550 = vdwg.mxu0
    %3552 = vrot.lane.b32.xlu0 %v3451, 96
    %v3553 = vpop.permute.xlu0 %3552
    %v3555 = vsel %vm346, %v3451, 0
    %v3558 = vsel %vm346, %v3553, 0
    %3560 = vmatprep.subr.bf16.mxu0 0
    %3561 = vmatpush1.bf16.xpose.msra.mxu0 %v3558
    %3562 = vmatprep.subr.bf16.mxu0 0
    %3563 = vmatpush1.bf16.xpose.msra.mxu0 0
    %3564 = vmatprep.subr.bf16.mxu0 0
    %3565 = vmatpush1.bf16.xpose.msra.mxu0 0
    %3566 = vmatprep.subr.bf16.mxu0 0
    %3567 = vmatpush1.bf16.xpose.msra.mxu0 0
    %3568 = vmatprep.subr.bf16.mxu0 0
    %3569 = vmatpush1.bf16.xpose.msra.mxu0 0
    %3570 = vmatprep.subr.bf16.mxu0 0
    %3571 = vmatpush1.bf16.xpose.msra.mxu0 0
    %3572 = vmatprep.subr.bf16.mxu0 0
    %3573 = vmatpush1.bf16.xpose.msra.mxu0 0
    %3574 = vmatprep.subr.bf16.mxu0 0
    %3575 = vmatpush1.bf16.xpose.msra.mxu0 0
    %3576 = vmatprep.subr.bf16.mxu0 0
    %3577 = vmatpush1.bf16.xpose.msra.mxu0 0
    %3578 = vmatprep.subr.bf16.mxu0 0
    %3579 = vmatpush1.bf16.xpose.msra.mxu0 0
    %3580 = vmatprep.subr.bf16.mxu0 0
    %3581 = vmatpush1.bf16.xpose.msra.mxu0 0
    %3582 = vmatprep.subr.bf16.mxu0 0
    %3583 = vmatpush1.bf16.xpose.msra.mxu0 0
    %3584 = vmatprep.subr.bf16.mxu0 0
    %3585 = vmatpush1.bf16.xpose.msra.mxu0 0
    %3586 = vmatprep.subr.bf16.mxu0 0
    %3587 = vmatpush1.bf16.xpose.msra.mxu0 0
    %3588 = vmatprep.subr.bf16.mxu0 0
    %3589 = vmatpush1.bf16.xpose.msra.mxu0 0
    %3590 = vmatprep.subr.bf16.mxu0 0
    %3591 = vmatpush1.bf16.xpose.msra.mxu0 0
    %3592 = vmatprep.mubr.bf16.mxu0 0
    %3593 = vmatmul.mubr.bf16.gmra.mrb[0].mxu0 %v3555
    %v3594 = vpop.f32.mrb[0].mxu0
    %v3595 = vadd.f32 %v159, %v3594
    %v3596 = vpop.f32.mrb[0].mxu0
    %v3597 = vpop.f32.mrb[0].mxu0
    %v3598 = vpop.f32.mrb[0].mxu0
    %3599 = vdwg.mxu0
    %3601 = vrot.lane.b32.xlu0 %v3452, 96
    %v3602 = vpop.permute.xlu0 %3601
    %v3604 = vsel %vm346, %v3452, 0
    %v3607 = vsel %vm346, %v3602, 0
    %3609 = vmatprep.subr.bf16.mxu0 0
    %3610 = vmatpush1.bf16.xpose.msra.mxu0 %v3607
    %3611 = vmatprep.subr.bf16.mxu0 0
    %3612 = vmatpush1.bf16.xpose.msra.mxu0 0
    %3613 = vmatprep.subr.bf16.mxu0 0
    %3614 = vmatpush1.bf16.xpose.msra.mxu0 0
    %3615 = vmatprep.subr.bf16.mxu0 0
    %3616 = vmatpush1.bf16.xpose.msra.mxu0 0
    %3617 = vmatprep.subr.bf16.mxu0 0
    %3618 = vmatpush1.bf16.xpose.msra.mxu0 0
    %3619 = vmatprep.subr.bf16.mxu0 0
    %3620 = vmatpush1.bf16.xpose.msra.mxu0 0
    %3621 = vmatprep.subr.bf16.mxu0 0
    %3622 = vmatpush1.bf16.xpose.msra.mxu0 0
    %3623 = vmatprep.subr.bf16.mxu0 0
    %3624 = vmatpush1.bf16.xpose.msra.mxu0 0
    %3625 = vmatprep.subr.bf16.mxu0 0
    %3626 = vmatpush1.bf16.xpose.msra.mxu0 0
    %3627 = vmatprep.subr.bf16.mxu0 0
    %3628 = vmatpush1.bf16.xpose.msra.mxu0 0
    %3629 = vmatprep.subr.bf16.mxu0 0
    %3630 = vmatpush1.bf16.xpose.msra.mxu0 0
    %3631 = vmatprep.subr.bf16.mxu0 0
    %3632 = vmatpush1.bf16.xpose.msra.mxu0 0
    %3633 = vmatprep.subr.bf16.mxu0 0
    %3634 = vmatpush1.bf16.xpose.msra.mxu0 0
    %3635 = vmatprep.subr.bf16.mxu0 0
    %3636 = vmatpush1.bf16.xpose.msra.mxu0 0
    %3637 = vmatprep.subr.bf16.mxu0 0
    %3638 = vmatpush1.bf16.xpose.msra.mxu0 0
    %3639 = vmatprep.subr.bf16.mxu0 0
    %3640 = vmatpush1.bf16.xpose.msra.mxu0 0
    %3641 = vmatprep.mubr.bf16.mxu0 0
    %3642 = vmatmul.mubr.bf16.gmra.mrb[0].mxu0 %v3604
    %v3643 = vpop.f32.mrb[0].mxu0
    %v3644 = vadd.f32 %v159, %v3643
    %v3645 = vpop.f32.mrb[0].mxu0
    %v3646 = vpop.f32.mrb[0].mxu0
    %v3647 = vpop.f32.mrb[0].mxu0
    %3648 = vdwg.mxu0
    %v3649 = vsel %vm346, %v3497, -inf
    %3650 = vmax.xlane.f32.xlu0 %v3649
    %v3651 = vpop.xlane.xlu0 %3650
    %v3652 = vsel %vm346, %v3546, -inf
    %3653 = vmax.xlane.f32.xlu0 %v3652
    %v3654 = vpop.xlane.xlu0 %3653
    %v3655 = vsel %vm346, %v3595, -inf
    %3656 = vmax.xlane.f32.xlu0 %v3655
    %v3657 = vpop.xlane.xlu0 %3656
    %v3658 = vsel %vm346, %v3644, -inf
    %3659 = vmax.xlane.f32.xlu0 %v3658
    %v3660 = vpop.xlane.xlu0 %3659
    %v3661 = vsub.f32 %v3497, %v3651
    %v3662 = vsub.f32 %v3546, %v3654
    %v3663 = vsub.f32 %v3595, %v3657
    %v3664 = vsub.f32 %v3644, %v3660
    %v3665 = vmul.f32 %v3661, 1.442695
    %v3666 = vpow.pop %v3665
    %v3667 = vmul.f32 %v3662, 1.442695
    %v3668 = vpow.pop %v3667
    %v3669 = vmul.f32 %v3663, 1.442695
    %v3670 = vpow.pop %v3669
    %v3671 = vmul.f32 %v3664, 1.442695
    %v3672 = vpow.pop %v3671
    %v3673 = vsel %vm346, %v3666, 0.0
    %3674 = vadd.xlane.f32.xlu0 %v3673
    %v3675 = vpop.xlane.xlu0 %3674
    %v3676 = vsel %vm346, %v3668, 0.0
    %3677 = vadd.xlane.f32.xlu0 %v3676
    %v3678 = vpop.xlane.xlu0 %3677
    %v3679 = vsel %vm346, %v3670, 0.0
    %3680 = vadd.xlane.f32.xlu0 %v3679
    %v3681 = vpop.xlane.xlu0 %3680
    %v3682 = vsel %vm346, %v3672, 0.0
    %3683 = vadd.xlane.f32.xlu0 %v3682
    %v3684 = vpop.xlane.xlu0 %3683
    %v3685 = vrcp.pop %v3675
    %v3686 = vrcp.pop %v3678
    %v3687 = vrcp.pop %v3681
    %v3688 = vrcp.pop %v3684
    %v3689 = vmul.f32 %v3666, %v3685
    %v3690 = vmul.f32 %v3668, %v3686
    %v3691 = vmul.f32 %v3670, %v3687
    %v3692 = vmul.f32 %v3672, %v3688
    %v3693 = vpack.c.bf16 %v3689, %v3689
    %v3694 = vpack.c.bf16 %v3690, %v3690
    %v3695 = vpack.c.bf16 %v3691, %v3691
    %v3696 = vpack.c.bf16 %v3692, %v3692
    %3697 = vrot.lane.b32.xlu0 %v3449, 64
    %v3698 = vpop.permute.xlu0 %3697
    %v3700 = vsel %vm346, %v3693, 0
    %v3703 = vsel %vm593, %v3698, 0
    %3705 = vmatprep.subr.bf16.mxu0 0
    %3706 = vmatpush1.bf16.msra.mxu0 %v3703
    %3707 = vmatprep.subr.bf16.mxu0 0
    %3708 = vmatpush1.bf16.msra.mxu0 0
    %3709 = vmatprep.subr.bf16.mxu0 0
    %3710 = vmatpush1.bf16.msra.mxu0 0
    %3711 = vmatprep.subr.bf16.mxu0 0
    %3712 = vmatpush1.bf16.msra.mxu0 0
    %3713 = vmatprep.subr.bf16.mxu0 0
    %3714 = vmatpush1.bf16.msra.mxu0 0
    %3715 = vmatprep.subr.bf16.mxu0 0
    %3716 = vmatpush1.bf16.msra.mxu0 0
    %3717 = vmatprep.subr.bf16.mxu0 0
    %3718 = vmatpush1.bf16.msra.mxu0 0
    %3719 = vmatprep.subr.bf16.mxu0 0
    %3720 = vmatpush1.bf16.msra.mxu0 0
    %3721 = vmatprep.subr.bf16.mxu0 0
    %3722 = vmatpush1.bf16.msra.mxu0 0
    %3723 = vmatprep.subr.bf16.mxu0 0
    %3724 = vmatpush1.bf16.msra.mxu0 0
    %3725 = vmatprep.subr.bf16.mxu0 0
    %3726 = vmatpush1.bf16.msra.mxu0 0
    %3727 = vmatprep.subr.bf16.mxu0 0
    %3728 = vmatpush1.bf16.msra.mxu0 0
    %3729 = vmatprep.subr.bf16.mxu0 0
    %3730 = vmatpush1.bf16.msra.mxu0 0
    %3731 = vmatprep.subr.bf16.mxu0 0
    %3732 = vmatpush1.bf16.msra.mxu0 0
    %3733 = vmatprep.subr.bf16.mxu0 0
    %3734 = vmatpush1.bf16.msra.mxu0 0
    %3735 = vmatprep.subr.bf16.mxu0 0
    %3736 = vmatpush1.bf16.msra.mxu0 0
    %3737 = vmatprep.mubr.bf16.mxu0 0
    %3738 = vmatmul.mubr.bf16.gmra.mrb[0].mxu0 %v3700
    %v3739 = vpop.f32.mrb[0].mxu0
    %v3740 = vadd.f32 0.0, %v3739
    %v3741 = vpop.f32.mrb[0].mxu0
    %v3742 = vpop.f32.mrb[0].mxu0
    %v3743 = vpop.f32.mrb[0].mxu0
    %3744 = vdwg.mxu0
    %3745 = vrot.lane.b32.xlu0 %v3450, 64
    %v3746 = vpop.permute.xlu0 %3745
    %v3748 = vsel %vm346, %v3694, 0
    %v3751 = vsel %vm593, %v3746, 0
    %3753 = vmatprep.subr.bf16.mxu0 0
    %3754 = vmatpush1.bf16.msra.mxu0 %v3751
    %3755 = vmatprep.subr.bf16.mxu0 0
    %3756 = vmatpush1.bf16.msra.mxu0 0
    %3757 = vmatprep.subr.bf16.mxu0 0
    %3758 = vmatpush1.bf16.msra.mxu0 0
    %3759 = vmatprep.subr.bf16.mxu0 0
    %3760 = vmatpush1.bf16.msra.mxu0 0
    %3761 = vmatprep.subr.bf16.mxu0 0
    %3762 = vmatpush1.bf16.msra.mxu0 0
    %3763 = vmatprep.subr.bf16.mxu0 0
    %3764 = vmatpush1.bf16.msra.mxu0 0
    %3765 = vmatprep.subr.bf16.mxu0 0
    %3766 = vmatpush1.bf16.msra.mxu0 0
    %3767 = vmatprep.subr.bf16.mxu0 0
    %3768 = vmatpush1.bf16.msra.mxu0 0
    %3769 = vmatprep.subr.bf16.mxu0 0
    %3770 = vmatpush1.bf16.msra.mxu0 0
    %3771 = vmatprep.subr.bf16.mxu0 0
    %3772 = vmatpush1.bf16.msra.mxu0 0
    %3773 = vmatprep.subr.bf16.mxu0 0
    %3774 = vmatpush1.bf16.msra.mxu0 0
    %3775 = vmatprep.subr.bf16.mxu0 0
    %3776 = vmatpush1.bf16.msra.mxu0 0
    %3777 = vmatprep.subr.bf16.mxu0 0
    %3778 = vmatpush1.bf16.msra.mxu0 0
    %3779 = vmatprep.subr.bf16.mxu0 0
    %3780 = vmatpush1.bf16.msra.mxu0 0
    %3781 = vmatprep.subr.bf16.mxu0 0
    %3782 = vmatpush1.bf16.msra.mxu0 0
    %3783 = vmatprep.subr.bf16.mxu0 0
    %3784 = vmatpush1.bf16.msra.mxu0 0
    %3785 = vmatprep.mubr.bf16.mxu0 0
    %3786 = vmatmul.mubr.bf16.gmra.mrb[0].mxu0 %v3748
    %v3787 = vpop.f32.mrb[0].mxu0
    %v3788 = vadd.f32 0.0, %v3787
    %v3789 = vpop.f32.mrb[0].mxu0
    %v3790 = vpop.f32.mrb[0].mxu0
    %v3791 = vpop.f32.mrb[0].mxu0
    %3792 = vdwg.mxu0
    %3793 = vrot.lane.b32.xlu0 %v3451, 64
    %v3794 = vpop.permute.xlu0 %3793
    %v3796 = vsel %vm346, %v3695, 0
    %v3799 = vsel %vm593, %v3794, 0
    %3801 = vmatprep.subr.bf16.mxu0 0
    %3802 = vmatpush1.bf16.msra.mxu0 %v3799
    %3803 = vmatprep.subr.bf16.mxu0 0
    %3804 = vmatpush1.bf16.msra.mxu0 0
    %3805 = vmatprep.subr.bf16.mxu0 0
    %3806 = vmatpush1.bf16.msra.mxu0 0
    %3807 = vmatprep.subr.bf16.mxu0 0
    %3808 = vmatpush1.bf16.msra.mxu0 0
    %3809 = vmatprep.subr.bf16.mxu0 0
    %3810 = vmatpush1.bf16.msra.mxu0 0
    %3811 = vmatprep.subr.bf16.mxu0 0
    %3812 = vmatpush1.bf16.msra.mxu0 0
    %3813 = vmatprep.subr.bf16.mxu0 0
    %3814 = vmatpush1.bf16.msra.mxu0 0
    %3815 = vmatprep.subr.bf16.mxu0 0
    %3816 = vmatpush1.bf16.msra.mxu0 0
    %3817 = vmatprep.subr.bf16.mxu0 0
    %3818 = vmatpush1.bf16.msra.mxu0 0
    %3819 = vmatprep.subr.bf16.mxu0 0
    %3820 = vmatpush1.bf16.msra.mxu0 0
    %3821 = vmatprep.subr.bf16.mxu0 0
    %3822 = vmatpush1.bf16.msra.mxu0 0
    %3823 = vmatprep.subr.bf16.mxu0 0
    %3824 = vmatpush1.bf16.msra.mxu0 0
    %3825 = vmatprep.subr.bf16.mxu0 0
    %3826 = vmatpush1.bf16.msra.mxu0 0
    %3827 = vmatprep.subr.bf16.mxu0 0
    %3828 = vmatpush1.bf16.msra.mxu0 0
    %3829 = vmatprep.subr.bf16.mxu0 0
    %3830 = vmatpush1.bf16.msra.mxu0 0
    %3831 = vmatprep.subr.bf16.mxu0 0
    %3832 = vmatpush1.bf16.msra.mxu0 0
    %3833 = vmatprep.mubr.bf16.mxu0 0
    %3834 = vmatmul.mubr.bf16.gmra.mrb[0].mxu0 %v3796
    %v3835 = vpop.f32.mrb[0].mxu0
    %v3836 = vadd.f32 0.0, %v3835
    %v3837 = vpop.f32.mrb[0].mxu0
    %v3838 = vpop.f32.mrb[0].mxu0
    %v3839 = vpop.f32.mrb[0].mxu0
    %3840 = vdwg.mxu0
    %3841 = vrot.lane.b32.xlu0 %v3452, 64
    %v3842 = vpop.permute.xlu0 %3841
    %v3844 = vsel %vm346, %v3696, 0
    %v3847 = vsel %vm593, %v3842, 0
    %3849 = vmatprep.subr.bf16.mxu0 0
    %3850 = vmatpush1.bf16.msra.mxu0 %v3847
    %3851 = vmatprep.subr.bf16.mxu0 0
    %3852 = vmatpush1.bf16.msra.mxu0 0
    %3853 = vmatprep.subr.bf16.mxu0 0
    %3854 = vmatpush1.bf16.msra.mxu0 0
    %3855 = vmatprep.subr.bf16.mxu0 0
    %3856 = vmatpush1.bf16.msra.mxu0 0
    %3857 = vmatprep.subr.bf16.mxu0 0
    %3858 = vmatpush1.bf16.msra.mxu0 0
    %3859 = vmatprep.subr.bf16.mxu0 0
    %3860 = vmatpush1.bf16.msra.mxu0 0
    %3861 = vmatprep.subr.bf16.mxu0 0
    %3862 = vmatpush1.bf16.msra.mxu0 0
    %3863 = vmatprep.subr.bf16.mxu0 0
    %3864 = vmatpush1.bf16.msra.mxu0 0
    %3865 = vmatprep.subr.bf16.mxu0 0
    %3866 = vmatpush1.bf16.msra.mxu0 0
    %3867 = vmatprep.subr.bf16.mxu0 0
    %3868 = vmatpush1.bf16.msra.mxu0 0
    %3869 = vmatprep.subr.bf16.mxu0 0
    %3870 = vmatpush1.bf16.msra.mxu0 0
    %3871 = vmatprep.subr.bf16.mxu0 0
    %3872 = vmatpush1.bf16.msra.mxu0 0
    %3873 = vmatprep.subr.bf16.mxu0 0
    %3874 = vmatpush1.bf16.msra.mxu0 0
    %3875 = vmatprep.subr.bf16.mxu0 0
    %3876 = vmatpush1.bf16.msra.mxu0 0
    %3877 = vmatprep.subr.bf16.mxu0 0
    %3878 = vmatpush1.bf16.msra.mxu0 0
    %3879 = vmatprep.subr.bf16.mxu0 0
    %3880 = vmatpush1.bf16.msra.mxu0 0
    %3881 = vmatprep.mubr.bf16.mxu0 0
    %3882 = vmatmul.mubr.bf16.gmra.mrb[0].mxu0 %v3844
    %v3883 = vpop.f32.mrb[0].mxu0
    %v3884 = vadd.f32 0.0, %v3883
    %v3885 = vpop.f32.mrb[0].mxu0
    %v3886 = vpop.f32.mrb[0].mxu0
    %v3887 = vpop.f32.mrb[0].mxu0
    %3888 = vdwg.mxu0
    %s3889 = scalar_lea.vmem %s5, 16
    %v3890 = vld [vmem:[%s3889] sm:$0xf]
    %v3891 = vld [vmem:[%s3889 + $0x4] sm:$0xf]
    %v3892 = vld [vmem:[%s3889 + $0x8] sm:$0xf]
    %v3893 = vld [vmem:[%s3889 + $0xc] sm:$0xf]
    %s3894 = scalar_lea.vmem %s6, 1
    %v3895 = vld [vmem:[%s3894] sm:$0x1]
    %v3896 = vpack.c.bf16 %v3740, %v3290
    %v3897 = vpack.c.bf16 %v3788, %v3338
    %v3898 = vpack.c.bf16 %v3836, %v3386
    %v3899 = vpack.c.bf16 %v3884, %v3434
    %v3901 = vsel %vm346, %v3896, 0
    %v3904 = vsel %vm593, %v3890, 0
    %3906 = vmatprep.subr.bf16.mxu0 0
    %3907 = vmatpush1.bf16.msra.mxu0 %v3904
    %3908 = vmatprep.subr.bf16.mxu0 0
    %3909 = vmatpush1.bf16.msra.mxu0 0
    %3910 = vmatprep.subr.bf16.mxu0 0
    %3911 = vmatpush1.bf16.msra.mxu0 0
    %3912 = vmatprep.subr.bf16.mxu0 0
    %3913 = vmatpush1.bf16.msra.mxu0 0
    %3914 = vmatprep.subr.bf16.mxu0 0
    %3915 = vmatpush1.bf16.msra.mxu0 0
    %3916 = vmatprep.subr.bf16.mxu0 0
    %3917 = vmatpush1.bf16.msra.mxu0 0
    %3918 = vmatprep.subr.bf16.mxu0 0
    %3919 = vmatpush1.bf16.msra.mxu0 0
    %3920 = vmatprep.subr.bf16.mxu0 0
    %3921 = vmatpush1.bf16.msra.mxu0 0
    %3922 = vmatprep.subr.bf16.mxu0 0
    %3923 = vmatpush1.bf16.msra.mxu0 0
    %3924 = vmatprep.subr.bf16.mxu0 0
    %3925 = vmatpush1.bf16.msra.mxu0 0
    %3926 = vmatprep.subr.bf16.mxu0 0
    %3927 = vmatpush1.bf16.msra.mxu0 0
    %3928 = vmatprep.subr.bf16.mxu0 0
    %3929 = vmatpush1.bf16.msra.mxu0 0
    %3930 = vmatprep.subr.bf16.mxu0 0
    %3931 = vmatpush1.bf16.msra.mxu0 0
    %3932 = vmatprep.subr.bf16.mxu0 0
    %3933 = vmatpush1.bf16.msra.mxu0 0
    %3934 = vmatprep.subr.bf16.mxu0 0
    %3935 = vmatpush1.bf16.msra.mxu0 0
    %3936 = vmatprep.subr.bf16.mxu0 0
    %3937 = vmatpush1.bf16.msra.mxu0 0
    %3938 = vmatprep.mubr.bf16.mxu0 0
    %3939 = vmatmul.mubr.bf16.gmra.mrb[0].mxu0 %v3901
    %v3940 = vpop.f32.mrb[0].mxu0
    %v3941 = vadd.f32 0.0, %v3940
    %v3942 = vpop.f32.mrb[0].mxu0
    %v3943 = vpop.f32.mrb[0].mxu0
    %v3944 = vadd.f32 0.0, %v3943
    %v3945 = vpop.f32.mrb[0].mxu0
    %3946 = vdwg.mxu0
    %v3948 = vsel %vm346, %v3897, 0
    %v3951 = vsel %vm593, %v3891, 0
    %3953 = vmatprep.subr.bf16.mxu0 0
    %3954 = vmatpush1.bf16.msra.mxu0 %v3951
    %3955 = vmatprep.subr.bf16.mxu0 0
    %3956 = vmatpush1.bf16.msra.mxu0 0
    %3957 = vmatprep.subr.bf16.mxu0 0
    %3958 = vmatpush1.bf16.msra.mxu0 0
    %3959 = vmatprep.subr.bf16.mxu0 0
    %3960 = vmatpush1.bf16.msra.mxu0 0
    %3961 = vmatprep.subr.bf16.mxu0 0
    %3962 = vmatpush1.bf16.msra.mxu0 0
    %3963 = vmatprep.subr.bf16.mxu0 0
    %3964 = vmatpush1.bf16.msra.mxu0 0
    %3965 = vmatprep.subr.bf16.mxu0 0
    %3966 = vmatpush1.bf16.msra.mxu0 0
    %3967 = vmatprep.subr.bf16.mxu0 0
    %3968 = vmatpush1.bf16.msra.mxu0 0
    %3969 = vmatprep.subr.bf16.mxu0 0
    %3970 = vmatpush1.bf16.msra.mxu0 0
    %3971 = vmatprep.subr.bf16.mxu0 0
    %3972 = vmatpush1.bf16.msra.mxu0 0
    %3973 = vmatprep.subr.bf16.mxu0 0
    %3974 = vmatpush1.bf16.msra.mxu0 0
    %3975 = vmatprep.subr.bf16.mxu0 0
    %3976 = vmatpush1.bf16.msra.mxu0 0
    %3977 = vmatprep.subr.bf16.mxu0 0
    %3978 = vmatpush1.bf16.msra.mxu0 0
    %3979 = vmatprep.subr.bf16.mxu0 0
    %3980 = vmatpush1.bf16.msra.mxu0 0
    %3981 = vmatprep.subr.bf16.mxu0 0
    %3982 = vmatpush1.bf16.msra.mxu0 0
    %3983 = vmatprep.subr.bf16.mxu0 0
    %3984 = vmatpush1.bf16.msra.mxu0 0
    %3985 = vmatprep.mubr.bf16.mxu0 0
    %3986 = vmatmul.mubr.bf16.gmra.mrb[0].mxu0 %v3948
    %v3987 = vpop.f32.mrb[0].mxu0
    %v3988 = vadd.f32 0.0, %v3987
    %v3989 = vpop.f32.mrb[0].mxu0
    %v3990 = vpop.f32.mrb[0].mxu0
    %v3991 = vadd.f32 0.0, %v3990
    %v3992 = vpop.f32.mrb[0].mxu0
    %3993 = vdwg.mxu0
    %v3995 = vsel %vm346, %v3898, 0
    %v3998 = vsel %vm593, %v3892, 0
    %4000 = vmatprep.subr.bf16.mxu0 0
    %4001 = vmatpush1.bf16.msra.mxu0 %v3998
    %4002 = vmatprep.subr.bf16.mxu0 0
    %4003 = vmatpush1.bf16.msra.mxu0 0
    %4004 = vmatprep.subr.bf16.mxu0 0
    %4005 = vmatpush1.bf16.msra.mxu0 0
    %4006 = vmatprep.subr.bf16.mxu0 0
    %4007 = vmatpush1.bf16.msra.mxu0 0
    %4008 = vmatprep.subr.bf16.mxu0 0
    %4009 = vmatpush1.bf16.msra.mxu0 0
    %4010 = vmatprep.subr.bf16.mxu0 0
    %4011 = vmatpush1.bf16.msra.mxu0 0
    %4012 = vmatprep.subr.bf16.mxu0 0
    %4013 = vmatpush1.bf16.msra.mxu0 0
    %4014 = vmatprep.subr.bf16.mxu0 0
    %4015 = vmatpush1.bf16.msra.mxu0 0
    %4016 = vmatprep.subr.bf16.mxu0 0
    %4017 = vmatpush1.bf16.msra.mxu0 0
    %4018 = vmatprep.subr.bf16.mxu0 0
    %4019 = vmatpush1.bf16.msra.mxu0 0
    %4020 = vmatprep.subr.bf16.mxu0 0
    %4021 = vmatpush1.bf16.msra.mxu0 0
    %4022 = vmatprep.subr.bf16.mxu0 0
    %4023 = vmatpush1.bf16.msra.mxu0 0
    %4024 = vmatprep.subr.bf16.mxu0 0
    %4025 = vmatpush1.bf16.msra.mxu0 0
    %4026 = vmatprep.subr.bf16.mxu0 0
    %4027 = vmatpush1.bf16.msra.mxu0 0
    %4028 = vmatprep.subr.bf16.mxu0 0
    %4029 = vmatpush1.bf16.msra.mxu0 0
    %4030 = vmatprep.subr.bf16.mxu0 0
    %4031 = vmatpush1.bf16.msra.mxu0 0
    %4032 = vmatprep.mubr.bf16.mxu0 0
    %4033 = vmatmul.mubr.bf16.gmra.mrb[0].mxu0 %v3995
    %v4034 = vpop.f32.mrb[0].mxu0
    %v4035 = vadd.f32 0.0, %v4034
    %v4036 = vpop.f32.mrb[0].mxu0
    %v4037 = vpop.f32.mrb[0].mxu0
    %v4038 = vadd.f32 0.0, %v4037
    %v4039 = vpop.f32.mrb[0].mxu0
    %4040 = vdwg.mxu0
    %v4042 = vsel %vm346, %v3899, 0
    %v4045 = vsel %vm593, %v3893, 0
    %4047 = vmatprep.subr.bf16.mxu0 0
    %4048 = vmatpush1.bf16.msra.mxu0 %v4045
    %4049 = vmatprep.subr.bf16.mxu0 0
    %4050 = vmatpush1.bf16.msra.mxu0 0
    %4051 = vmatprep.subr.bf16.mxu0 0
    %4052 = vmatpush1.bf16.msra.mxu0 0
    %4053 = vmatprep.subr.bf16.mxu0 0
    %4054 = vmatpush1.bf16.msra.mxu0 0
    %4055 = vmatprep.subr.bf16.mxu0 0
    %4056 = vmatpush1.bf16.msra.mxu0 0
    %4057 = vmatprep.subr.bf16.mxu0 0
    %4058 = vmatpush1.bf16.msra.mxu0 0
    %4059 = vmatprep.subr.bf16.mxu0 0
    %4060 = vmatpush1.bf16.msra.mxu0 0
    %4061 = vmatprep.subr.bf16.mxu0 0
    %4062 = vmatpush1.bf16.msra.mxu0 0
    %4063 = vmatprep.subr.bf16.mxu0 0
    %4064 = vmatpush1.bf16.msra.mxu0 0
    %4065 = vmatprep.subr.bf16.mxu0 0
    %4066 = vmatpush1.bf16.msra.mxu0 0
    %4067 = vmatprep.subr.bf16.mxu0 0
    %4068 = vmatpush1.bf16.msra.mxu0 0
    %4069 = vmatprep.subr.bf16.mxu0 0
    %4070 = vmatpush1.bf16.msra.mxu0 0
    %4071 = vmatprep.subr.bf16.mxu0 0
    %4072 = vmatpush1.bf16.msra.mxu0 0
    %4073 = vmatprep.subr.bf16.mxu0 0
    %4074 = vmatpush1.bf16.msra.mxu0 0
    %4075 = vmatprep.subr.bf16.mxu0 0
    %4076 = vmatpush1.bf16.msra.mxu0 0
    %4077 = vmatprep.subr.bf16.mxu0 0
    %4078 = vmatpush1.bf16.msra.mxu0 0
    %4079 = vmatprep.mubr.bf16.mxu0 0
    %4080 = vmatmul.mubr.bf16.gmra.mrb[0].mxu0 %v4042
    %v4081 = vpop.f32.mrb[0].mxu0
    %v4082 = vadd.f32 0.0, %v4081
    %v4083 = vpop.f32.mrb[0].mxu0
    %v4084 = vpop.f32.mrb[0].mxu0
    %v4085 = vadd.f32 0.0, %v4084
    %v4086 = vpop.f32.mrb[0].mxu0
    %4087 = vdwg.mxu0
    %v4088 = vsel %vm186, %v3941, 0.0
    %v4089 = vsel %vm186, %v3988, 0.0
    %v4090 = vadd.f32 %v4088, %v4089
    %v4091 = vsel %vm186, %v4035, 0.0
    %v4092 = vadd.f32 %v4090, %v4091
    %v4093 = vsel %vm186, %v4082, 0.0
    %v4094 = vadd.f32 %v4092, %v4093
    %v4095 = vsel %vm186, %v3944, 0.0
    %v4096 = vsel %vm186, %v3991, 0.0
    %v4097 = vadd.f32 %v4095, %v4096
    %v4098 = vsel %vm186, %v4038, 0.0
    %v4099 = vadd.f32 %v4097, %v4098
    %v4100 = vsel %vm186, %v4085, 0.0
    %v4101 = vadd.f32 %v4099, %v4100
    %v4103 = vlaneseq
    %v4104 = vshrl.u32 %v4103, 7
    %v4105 = vsub.s32 0, %v4104
    %v4106 = vrot.slane %v3895, %v4105
    %v4108 = vadd.f32 %v4094, %v4106
    %v4109 = vadd.f32 %v4101, %v4106
    %v4110 = vadd.f32 %v2913, %v4108
    %v4111 = vadd.f32 %v2914, %v4109
    %v4112 = vsel %vm186, %v4110, 0.0
    %4113 = vadd.xlane.f32.xlu0 %v4112
    %v4114 = vpop.xlane.xlu0 %4113
    %v4115 = vsel %vm186, %v4111, 0.0
    %4116 = vadd.xlane.f32.xlu0 %v4115
    %v4117 = vpop.xlane.xlu0 %4116
    %v4118 = vmul.f32 %v4114, %v1458
    %v4119 = vmul.f32 %v4117, %v1458
    %v4120 = vmul.f32 %v4110, %v4110
    %v4121 = vmul.f32 %v4111, %v4111
    %v4122 = vsel %vm186, %v4120, 0.0
    %4123 = vadd.xlane.f32.xlu0 %v4122
    %v4124 = vpop.xlane.xlu0 %4123
    %v4125 = vsel %vm186, %v4121, 0.0
    %4126 = vadd.xlane.f32.xlu0 %v4125
    %v4127 = vpop.xlane.xlu0 %4126
    %v4128 = vmul.f32 %v4124, %v1458
    %v4129 = vmul.f32 %v4127, %v1458
    %v4130 = vmul.f32 %v4118, %v4118
    %v4131 = vmul.f32 %v4119, %v4119
    %v4132 = vsub.f32 %v4128, %v4130
    %v4133 = vsub.f32 %v4129, %v4131
    %v4134 = vmax.f32 %v4132, 0.0
    %v4135 = vmax.f32 %v4133, 0.0
    %v4136 = vsub.f32 %v4110, %v4118
    %v4137 = vsub.f32 %v4111, %v4119
    %v4138 = vadd.f32 %v4134, 1e-05
    %v4139 = vadd.f32 %v4135, 1e-05
    %v4140 = vrsqrt.pop %v4138
    %v4141 = vrsqrt.pop %v4139
    %v4142 = vmul.f32 %v4136, %v4140
    %v4143 = vmul.f32 %v4137, %v4141
    %v4144 = vlaneseq
    %v4145 = vshrl.u32 %v4144, 7
    %v4146 = vsub.s32 0, %v4145
    %v4147 = vrot.slane %v2916, %v4146
    %v4148 = vmul.f32 %v4142, %v4147
    %v4149 = vmul.f32 %v4143, %v4147
    %v4150 = vlaneseq
    %v4151 = vshrl.u32 %v4150, 7
    %v4152 = vsub.s32 0, %v4151
    %v4153 = vrot.slane %v2918, %v4152
    %v4154 = vadd.f32 %v4148, %v4153
    %v4155 = vadd.f32 %v4149, %v4153
    %s4156 = scalar_lea.vmem %s7, 16
    %v4157 = vld [vmem:[%s4156] sm:$0xf]
    %v4158 = vld [vmem:[%s4156 + $0x4] sm:$0xf]
    %v4159 = vld [vmem:[%s4156 + $0x8] sm:$0xf]
    %v4160 = vld [vmem:[%s4156 + $0xc] sm:$0xf]
    %s4161 = scalar_lea.vmem %s8, 1
    %v4162 = vld [vmem:[%s4161] sm:$0x1]
    %v4163 = vpack.c.bf16 %v4155, %v4154
    %v4165 = vlaneseq
    %v4166 = vshrl.u32 %v4165, 7
    %v4167 = vsub.s32 0, %v4166
    %v4168 = vrot.slane %v4162, %v4167
    %v4174 = vunpack.c.l.b16 %v4157
    %v4175 = vunpack.c.l.b16 %v4158
    %v4176 = vunpack.c.l.b16 %v4159
    %v4177 = vunpack.c.l.b16 %v4160
    %v4178 = vpack.c.b16 %v4175, %v4174
    %v4179 = vpack.c.b16 %v4177, %v4176
    %v4183 = vsel %vm186, %v4163, 0
    %4185 = vmatprep.subr.bf16.mxu0 0
    %4186 = vmatpush1.bf16.msra.mxu0 %v4178
    %4187 = vmatprep.subr.bf16.mxu0 0
    %4188 = vmatpush1.bf16.msra.mxu0 %v4179
    %4189 = vmatprep.subr.bf16.mxu0 0
    %4190 = vmatpush1.bf16.msra.mxu0 0
    %4191 = vmatprep.subr.bf16.mxu0 0
    %4192 = vmatpush1.bf16.msra.mxu0 0
    %4193 = vmatprep.subr.bf16.mxu0 0
    %4194 = vmatpush1.bf16.msra.mxu0 0
    %4195 = vmatprep.subr.bf16.mxu0 0
    %4196 = vmatpush1.bf16.msra.mxu0 0
    %4197 = vmatprep.subr.bf16.mxu0 0
    %4198 = vmatpush1.bf16.msra.mxu0 0
    %4199 = vmatprep.subr.bf16.mxu0 0
    %4200 = vmatpush1.bf16.msra.mxu0 0
    %4201 = vmatprep.subr.bf16.mxu0 0
    %4202 = vmatpush1.bf16.msra.mxu0 0
    %4203 = vmatprep.subr.bf16.mxu0 0
    %4204 = vmatpush1.bf16.msra.mxu0 0
    %4205 = vmatprep.subr.bf16.mxu0 0
    %4206 = vmatpush1.bf16.msra.mxu0 0
    %4207 = vmatprep.subr.bf16.mxu0 0
    %4208 = vmatpush1.bf16.msra.mxu0 0
    %4209 = vmatprep.subr.bf16.mxu0 0
    %4210 = vmatpush1.bf16.msra.mxu0 0
    %4211 = vmatprep.subr.bf16.mxu0 0
    %4212 = vmatpush1.bf16.msra.mxu0 0
    %4213 = vmatprep.subr.bf16.mxu0 0
    %4214 = vmatpush1.bf16.msra.mxu0 0
    %4215 = vmatprep.subr.bf16.mxu0 0
    %4216 = vmatpush1.bf16.msra.mxu0 0
    %4217 = vmatprep.mubr.bf16.mxu0 0
    %4218 = vmatmul.mubr.bf16.gmra.mrb[0].mxu0 %v4183
    %v4219 = vpop.f32.mrb[0].mxu0
    %v4220 = vadd.f32 %v4168, %v4219
    %v4221 = vpop.f32.mrb[0].mxu0
    %v4222 = vpop.f32.mrb[0].mxu0
    %v4223 = vadd.f32 %v4168, %v4222
    %v4224 = vpop.f32.mrb[0].mxu0
    %4225 = vdwg.mxu0
    %4227 = vrot.lane.b32.xlu0 %v4220, 120
    %v4228 = vpop.permute.xlu0 %4227
    %4230 = vrot.lane.b32.xlu0 %v4220, 112
    %v4231 = vpop.permute.xlu0 %4230
    %4233 = vrot.lane.b32.xlu0 %v4220, 104
    %v4234 = vpop.permute.xlu0 %4233
    %v4236 = vpack.c.bf16 %v4220, %v4220
    %v4237 = vpack.c.bf16 %v4228, %v4228
    %v4238 = vpack.c.bf16 %v4231, %v4231
    %v4239 = vpack.c.bf16 %v4234, %v4234
    %4240 = vrot.lane.b32.xlu0 %v241, 64
    %v4241 = vpop.permute.xlu0 %4240
    %v4243 = vsel %vm346, %v4236, 0
    %v4246 = vsel %vm346, %v4241, 0
    %4248 = vmatprep.subr.bf16.mxu0 0
    %4249 = vmatpush1.bf16.xpose.msra.mxu0 %v4246
    %4250 = vmatprep.subr.bf16.mxu0 0
    %4251 = vmatpush1.bf16.xpose.msra.mxu0 0
    %4252 = vmatprep.subr.bf16.mxu0 0
    %4253 = vmatpush1.bf16.xpose.msra.mxu0 0
    %4254 = vmatprep.subr.bf16.mxu0 0
    %4255 = vmatpush1.bf16.xpose.msra.mxu0 0
    %4256 = vmatprep.subr.bf16.mxu0 0
    %4257 = vmatpush1.bf16.xpose.msra.mxu0 0
    %4258 = vmatprep.subr.bf16.mxu0 0
    %4259 = vmatpush1.bf16.xpose.msra.mxu0 0
    %4260 = vmatprep.subr.bf16.mxu0 0
    %4261 = vmatpush1.bf16.xpose.msra.mxu0 0
    %4262 = vmatprep.subr.bf16.mxu0 0
    %4263 = vmatpush1.bf16.xpose.msra.mxu0 0
    %4264 = vmatprep.subr.bf16.mxu0 0
    %4265 = vmatpush1.bf16.xpose.msra.mxu0 0
    %4266 = vmatprep.subr.bf16.mxu0 0
    %4267 = vmatpush1.bf16.xpose.msra.mxu0 0
    %4268 = vmatprep.subr.bf16.mxu0 0
    %4269 = vmatpush1.bf16.xpose.msra.mxu0 0
    %4270 = vmatprep.subr.bf16.mxu0 0
    %4271 = vmatpush1.bf16.xpose.msra.mxu0 0
    %4272 = vmatprep.subr.bf16.mxu0 0
    %4273 = vmatpush1.bf16.xpose.msra.mxu0 0
    %4274 = vmatprep.subr.bf16.mxu0 0
    %4275 = vmatpush1.bf16.xpose.msra.mxu0 0
    %4276 = vmatprep.subr.bf16.mxu0 0
    %4277 = vmatpush1.bf16.xpose.msra.mxu0 0
    %4278 = vmatprep.subr.bf16.mxu0 0
    %4279 = vmatpush1.bf16.xpose.msra.mxu0 0
    %4280 = vmatprep.mubr.bf16.mxu0 0
    %4281 = vmatmul.mubr.bf16.gmra.mrb[0].mxu0 %v4243
    %v4282 = vpop.f32.mrb[0].mxu0
    %v4283 = vadd.f32 0.0, %v4282
    %v4284 = vpop.f32.mrb[0].mxu0
    %v4285 = vpop.f32.mrb[0].mxu0
    %v4286 = vpop.f32.mrb[0].mxu0
    %4287 = vdwg.mxu0
    %4288 = vrot.lane.b32.xlu0 %v242, 64
    %v4289 = vpop.permute.xlu0 %4288
    %v4291 = vsel %vm346, %v4237, 0
    %v4294 = vsel %vm346, %v4289, 0
    %4296 = vmatprep.subr.bf16.mxu0 0
    %4297 = vmatpush1.bf16.xpose.msra.mxu0 %v4294
    %4298 = vmatprep.subr.bf16.mxu0 0
    %4299 = vmatpush1.bf16.xpose.msra.mxu0 0
    %4300 = vmatprep.subr.bf16.mxu0 0
    %4301 = vmatpush1.bf16.xpose.msra.mxu0 0
    %4302 = vmatprep.subr.bf16.mxu0 0
    %4303 = vmatpush1.bf16.xpose.msra.mxu0 0
    %4304 = vmatprep.subr.bf16.mxu0 0
    %4305 = vmatpush1.bf16.xpose.msra.mxu0 0
    %4306 = vmatprep.subr.bf16.mxu0 0
    %4307 = vmatpush1.bf16.xpose.msra.mxu0 0
    %4308 = vmatprep.subr.bf16.mxu0 0
    %4309 = vmatpush1.bf16.xpose.msra.mxu0 0
    %4310 = vmatprep.subr.bf16.mxu0 0
    %4311 = vmatpush1.bf16.xpose.msra.mxu0 0
    %4312 = vmatprep.subr.bf16.mxu0 0
    %4313 = vmatpush1.bf16.xpose.msra.mxu0 0
    %4314 = vmatprep.subr.bf16.mxu0 0
    %4315 = vmatpush1.bf16.xpose.msra.mxu0 0
    %4316 = vmatprep.subr.bf16.mxu0 0
    %4317 = vmatpush1.bf16.xpose.msra.mxu0 0
    %4318 = vmatprep.subr.bf16.mxu0 0
    %4319 = vmatpush1.bf16.xpose.msra.mxu0 0
    %4320 = vmatprep.subr.bf16.mxu0 0
    %4321 = vmatpush1.bf16.xpose.msra.mxu0 0
    %4322 = vmatprep.subr.bf16.mxu0 0
    %4323 = vmatpush1.bf16.xpose.msra.mxu0 0
    %4324 = vmatprep.subr.bf16.mxu0 0
    %4325 = vmatpush1.bf16.xpose.msra.mxu0 0
    %4326 = vmatprep.subr.bf16.mxu0 0
    %4327 = vmatpush1.bf16.xpose.msra.mxu0 0
    %4328 = vmatprep.mubr.bf16.mxu0 0
    %4329 = vmatmul.mubr.bf16.gmra.mrb[0].mxu0 %v4291
    %v4330 = vpop.f32.mrb[0].mxu0
    %v4331 = vadd.f32 0.0, %v4330
    %v4332 = vpop.f32.mrb[0].mxu0
    %v4333 = vpop.f32.mrb[0].mxu0
    %v4334 = vpop.f32.mrb[0].mxu0
    %4335 = vdwg.mxu0
    %4336 = vrot.lane.b32.xlu0 %v243, 64
    %v4337 = vpop.permute.xlu0 %4336
    %v4339 = vsel %vm346, %v4238, 0
    %v4342 = vsel %vm346, %v4337, 0
    %4344 = vmatprep.subr.bf16.mxu0 0
    %4345 = vmatpush1.bf16.xpose.msra.mxu0 %v4342
    %4346 = vmatprep.subr.bf16.mxu0 0
    %4347 = vmatpush1.bf16.xpose.msra.mxu0 0
    %4348 = vmatprep.subr.bf16.mxu0 0
    %4349 = vmatpush1.bf16.xpose.msra.mxu0 0
    %4350 = vmatprep.subr.bf16.mxu0 0
    %4351 = vmatpush1.bf16.xpose.msra.mxu0 0
    %4352 = vmatprep.subr.bf16.mxu0 0
    %4353 = vmatpush1.bf16.xpose.msra.mxu0 0
    %4354 = vmatprep.subr.bf16.mxu0 0
    %4355 = vmatpush1.bf16.xpose.msra.mxu0 0
    %4356 = vmatprep.subr.bf16.mxu0 0
    %4357 = vmatpush1.bf16.xpose.msra.mxu0 0
    %4358 = vmatprep.subr.bf16.mxu0 0
    %4359 = vmatpush1.bf16.xpose.msra.mxu0 0
    %4360 = vmatprep.subr.bf16.mxu0 0
    %4361 = vmatpush1.bf16.xpose.msra.mxu0 0
    %4362 = vmatprep.subr.bf16.mxu0 0
    %4363 = vmatpush1.bf16.xpose.msra.mxu0 0
    %4364 = vmatprep.subr.bf16.mxu0 0
    %4365 = vmatpush1.bf16.xpose.msra.mxu0 0
    %4366 = vmatprep.subr.bf16.mxu0 0
    %4367 = vmatpush1.bf16.xpose.msra.mxu0 0
    %4368 = vmatprep.subr.bf16.mxu0 0
    %4369 = vmatpush1.bf16.xpose.msra.mxu0 0
    %4370 = vmatprep.subr.bf16.mxu0 0
    %4371 = vmatpush1.bf16.xpose.msra.mxu0 0
    %4372 = vmatprep.subr.bf16.mxu0 0
    %4373 = vmatpush1.bf16.xpose.msra.mxu0 0
    %4374 = vmatprep.subr.bf16.mxu0 0
    %4375 = vmatpush1.bf16.xpose.msra.mxu0 0
    %4376 = vmatprep.mubr.bf16.mxu0 0
    %4377 = vmatmul.mubr.bf16.gmra.mrb[0].mxu0 %v4339
    %v4378 = vpop.f32.mrb[0].mxu0
    %v4379 = vadd.f32 0.0, %v4378
    %v4380 = vpop.f32.mrb[0].mxu0
    %v4381 = vpop.f32.mrb[0].mxu0
    %v4382 = vpop.f32.mrb[0].mxu0
    %4383 = vdwg.mxu0
    %4384 = vrot.lane.b32.xlu0 %v244, 64
    %v4385 = vpop.permute.xlu0 %4384
    %v4387 = vsel %vm346, %v4239, 0
    %v4390 = vsel %vm346, %v4385, 0
    %4392 = vmatprep.subr.bf16.mxu0 0
    %4393 = vmatpush1.bf16.xpose.msra.mxu0 %v4390
    %4394 = vmatprep.subr.bf16.mxu0 0
    %4395 = vmatpush1.bf16.xpose.msra.mxu0 0
    %4396 = vmatprep.subr.bf16.mxu0 0
    %4397 = vmatpush1.bf16.xpose.msra.mxu0 0
    %4398 = vmatprep.subr.bf16.mxu0 0
    %4399 = vmatpush1.bf16.xpose.msra.mxu0 0
    %4400 = vmatprep.subr.bf16.mxu0 0
    %4401 = vmatpush1.bf16.xpose.msra.mxu0 0
    %4402 = vmatprep.subr.bf16.mxu0 0
    %4403 = vmatpush1.bf16.xpose.msra.mxu0 0
    %4404 = vmatprep.subr.bf16.mxu0 0
    %4405 = vmatpush1.bf16.xpose.msra.mxu0 0
    %4406 = vmatprep.subr.bf16.mxu0 0
    %4407 = vmatpush1.bf16.xpose.msra.mxu0 0
    %4408 = vmatprep.subr.bf16.mxu0 0
    %4409 = vmatpush1.bf16.xpose.msra.mxu0 0
    %4410 = vmatprep.subr.bf16.mxu0 0
    %4411 = vmatpush1.bf16.xpose.msra.mxu0 0
    %4412 = vmatprep.subr.bf16.mxu0 0
    %4413 = vmatpush1.bf16.xpose.msra.mxu0 0
    %4414 = vmatprep.subr.bf16.mxu0 0
    %4415 = vmatpush1.bf16.xpose.msra.mxu0 0
    %4416 = vmatprep.subr.bf16.mxu0 0
    %4417 = vmatpush1.bf16.xpose.msra.mxu0 0
    %4418 = vmatprep.subr.bf16.mxu0 0
    %4419 = vmatpush1.bf16.xpose.msra.mxu0 0
    %4420 = vmatprep.subr.bf16.mxu0 0
    %4421 = vmatpush1.bf16.xpose.msra.mxu0 0
    %4422 = vmatprep.subr.bf16.mxu0 0
    %4423 = vmatpush1.bf16.xpose.msra.mxu0 0
    %4424 = vmatprep.mubr.bf16.mxu0 0
    %4425 = vmatmul.mubr.bf16.gmra.mrb[0].mxu0 %v4387
    %v4426 = vpop.f32.mrb[0].mxu0
    %v4427 = vadd.f32 0.0, %v4426
    %v4428 = vpop.f32.mrb[0].mxu0
    %v4429 = vpop.f32.mrb[0].mxu0
    %v4430 = vpop.f32.mrb[0].mxu0
    %4431 = vdwg.mxu0
    %v4432 = vsel %vm346, %v4283, -inf
    %4433 = vmax.xlane.f32.xlu0 %v4432
    %v4434 = vpop.xlane.xlu0 %4433
    %v4435 = vsel %vm346, %v4331, -inf
    %4436 = vmax.xlane.f32.xlu0 %v4435
    %v4437 = vpop.xlane.xlu0 %4436
    %v4438 = vsel %vm346, %v4379, -inf
    %4439 = vmax.xlane.f32.xlu0 %v4438
    %v4440 = vpop.xlane.xlu0 %4439
    %v4441 = vsel %vm346, %v4427, -inf
    %4442 = vmax.xlane.f32.xlu0 %v4441
    %v4443 = vpop.xlane.xlu0 %4442
    %v4444 = vsub.f32 %v4283, %v4434
    %v4445 = vsub.f32 %v4331, %v4437
    %v4446 = vsub.f32 %v4379, %v4440
    %v4447 = vsub.f32 %v4427, %v4443
    %v4448 = vmul.f32 %v4444, 1.442695
    %v4449 = vpow.pop %v4448
    %v4450 = vmul.f32 %v4445, 1.442695
    %v4451 = vpow.pop %v4450
    %v4452 = vmul.f32 %v4446, 1.442695
    %v4453 = vpow.pop %v4452
    %v4454 = vmul.f32 %v4447, 1.442695
    %v4455 = vpow.pop %v4454
    %v4456 = vsel %vm346, %v4449, 0.0
    %4457 = vadd.xlane.f32.xlu0 %v4456
    %v4458 = vpop.xlane.xlu0 %4457
    %v4459 = vsel %vm346, %v4451, 0.0
    %4460 = vadd.xlane.f32.xlu0 %v4459
    %v4461 = vpop.xlane.xlu0 %4460
    %v4462 = vsel %vm346, %v4453, 0.0
    %4463 = vadd.xlane.f32.xlu0 %v4462
    %v4464 = vpop.xlane.xlu0 %4463
    %v4465 = vsel %vm346, %v4455, 0.0
    %4466 = vadd.xlane.f32.xlu0 %v4465
    %v4467 = vpop.xlane.xlu0 %4466
    %v4468 = vrcp.pop %v4458
    %v4469 = vrcp.pop %v4461
    %v4470 = vrcp.pop %v4464
    %v4471 = vrcp.pop %v4467
    %v4472 = vmul.f32 %v4449, %v4468
    %v4473 = vmul.f32 %v4451, %v4469
    %v4474 = vmul.f32 %v4453, %v4470
    %v4475 = vmul.f32 %v4455, %v4471
    %v4476 = vpack.c.bf16 %v4472, %v4472
    %v4477 = vpack.c.bf16 %v4473, %v4473
    %v4478 = vpack.c.bf16 %v4474, %v4474
    %v4479 = vpack.c.bf16 %v4475, %v4475
    %4480 = vrot.lane.b32.xlu0 %v241, 32
    %v4481 = vpop.permute.xlu0 %4480
    %v4483 = vsel %vm346, %v4476, 0
    %v4486 = vsel %vm593, %v4481, 0
    %4488 = vmatprep.subr.bf16.mxu0 0
    %4489 = vmatpush1.bf16.msra.mxu0 %v4486
    %4490 = vmatprep.subr.bf16.mxu0 0
    %4491 = vmatpush1.bf16.msra.mxu0 0
    %4492 = vmatprep.subr.bf16.mxu0 0
    %4493 = vmatpush1.bf16.msra.mxu0 0
    %4494 = vmatprep.subr.bf16.mxu0 0
    %4495 = vmatpush1.bf16.msra.mxu0 0
    %4496 = vmatprep.subr.bf16.mxu0 0
    %4497 = vmatpush1.bf16.msra.mxu0 0
    %4498 = vmatprep.subr.bf16.mxu0 0
    %4499 = vmatpush1.bf16.msra.mxu0 0
    %4500 = vmatprep.subr.bf16.mxu0 0
    %4501 = vmatpush1.bf16.msra.mxu0 0
    %4502 = vmatprep.subr.bf16.mxu0 0
    %4503 = vmatpush1.bf16.msra.mxu0 0
    %4504 = vmatprep.subr.bf16.mxu0 0
    %4505 = vmatpush1.bf16.msra.mxu0 0
    %4506 = vmatprep.subr.bf16.mxu0 0
    %4507 = vmatpush1.bf16.msra.mxu0 0
    %4508 = vmatprep.subr.bf16.mxu0 0
    %4509 = vmatpush1.bf16.msra.mxu0 0
    %4510 = vmatprep.subr.bf16.mxu0 0
    %4511 = vmatpush1.bf16.msra.mxu0 0
    %4512 = vmatprep.subr.bf16.mxu0 0
    %4513 = vmatpush1.bf16.msra.mxu0 0
    %4514 = vmatprep.subr.bf16.mxu0 0
    %4515 = vmatpush1.bf16.msra.mxu0 0
    %4516 = vmatprep.subr.bf16.mxu0 0
    %4517 = vmatpush1.bf16.msra.mxu0 0
    %4518 = vmatprep.subr.bf16.mxu0 0
    %4519 = vmatpush1.bf16.msra.mxu0 0
    %4520 = vmatprep.mubr.bf16.mxu0 0
    %4521 = vmatmul.mubr.bf16.gmra.mrb[0].mxu0 %v4483
    %v4522 = vpop.f32.mrb[0].mxu0
    %v4523 = vadd.f32 0.0, %v4522
    %v4524 = vpop.f32.mrb[0].mxu0
    %v4525 = vpop.f32.mrb[0].mxu0
    %v4526 = vpop.f32.mrb[0].mxu0
    %4527 = vdwg.mxu0
    %4528 = vrot.lane.b32.xlu0 %v242, 32
    %v4529 = vpop.permute.xlu0 %4528
    %v4531 = vsel %vm346, %v4477, 0
    %v4534 = vsel %vm593, %v4529, 0
    %4536 = vmatprep.subr.bf16.mxu0 0
    %4537 = vmatpush1.bf16.msra.mxu0 %v4534
    %4538 = vmatprep.subr.bf16.mxu0 0
    %4539 = vmatpush1.bf16.msra.mxu0 0
    %4540 = vmatprep.subr.bf16.mxu0 0
    %4541 = vmatpush1.bf16.msra.mxu0 0
    %4542 = vmatprep.subr.bf16.mxu0 0
    %4543 = vmatpush1.bf16.msra.mxu0 0
    %4544 = vmatprep.subr.bf16.mxu0 0
    %4545 = vmatpush1.bf16.msra.mxu0 0
    %4546 = vmatprep.subr.bf16.mxu0 0
    %4547 = vmatpush1.bf16.msra.mxu0 0
    %4548 = vmatprep.subr.bf16.mxu0 0
    %4549 = vmatpush1.bf16.msra.mxu0 0
    %4550 = vmatprep.subr.bf16.mxu0 0
    %4551 = vmatpush1.bf16.msra.mxu0 0
    %4552 = vmatprep.subr.bf16.mxu0 0
    %4553 = vmatpush1.bf16.msra.mxu0 0
    %4554 = vmatprep.subr.bf16.mxu0 0
    %4555 = vmatpush1.bf16.msra.mxu0 0
    %4556 = vmatprep.subr.bf16.mxu0 0
    %4557 = vmatpush1.bf16.msra.mxu0 0
    %4558 = vmatprep.subr.bf16.mxu0 0
    %4559 = vmatpush1.bf16.msra.mxu0 0
    %4560 = vmatprep.subr.bf16.mxu0 0
    %4561 = vmatpush1.bf16.msra.mxu0 0
    %4562 = vmatprep.subr.bf16.mxu0 0
    %4563 = vmatpush1.bf16.msra.mxu0 0
    %4564 = vmatprep.subr.bf16.mxu0 0
    %4565 = vmatpush1.bf16.msra.mxu0 0
    %4566 = vmatprep.subr.bf16.mxu0 0
    %4567 = vmatpush1.bf16.msra.mxu0 0
    %4568 = vmatprep.mubr.bf16.mxu0 0
    %4569 = vmatmul.mubr.bf16.gmra.mrb[0].mxu0 %v4531
    %v4570 = vpop.f32.mrb[0].mxu0
    %v4571 = vadd.f32 0.0, %v4570
    %v4572 = vpop.f32.mrb[0].mxu0
    %v4573 = vpop.f32.mrb[0].mxu0
    %v4574 = vpop.f32.mrb[0].mxu0
    %4575 = vdwg.mxu0
    %4576 = vrot.lane.b32.xlu0 %v243, 32
    %v4577 = vpop.permute.xlu0 %4576
    %v4579 = vsel %vm346, %v4478, 0
    %v4582 = vsel %vm593, %v4577, 0
    %4584 = vmatprep.subr.bf16.mxu0 0
    %4585 = vmatpush1.bf16.msra.mxu0 %v4582
    %4586 = vmatprep.subr.bf16.mxu0 0
    %4587 = vmatpush1.bf16.msra.mxu0 0
    %4588 = vmatprep.subr.bf16.mxu0 0
    %4589 = vmatpush1.bf16.msra.mxu0 0
    %4590 = vmatprep.subr.bf16.mxu0 0
    %4591 = vmatpush1.bf16.msra.mxu0 0
    %4592 = vmatprep.subr.bf16.mxu0 0
    %4593 = vmatpush1.bf16.msra.mxu0 0
    %4594 = vmatprep.subr.bf16.mxu0 0
    %4595 = vmatpush1.bf16.msra.mxu0 0
    %4596 = vmatprep.subr.bf16.mxu0 0
    %4597 = vmatpush1.bf16.msra.mxu0 0
    %4598 = vmatprep.subr.bf16.mxu0 0
    %4599 = vmatpush1.bf16.msra.mxu0 0
    %4600 = vmatprep.subr.bf16.mxu0 0
    %4601 = vmatpush1.bf16.msra.mxu0 0
    %4602 = vmatprep.subr.bf16.mxu0 0
    %4603 = vmatpush1.bf16.msra.mxu0 0
    %4604 = vmatprep.subr.bf16.mxu0 0
    %4605 = vmatpush1.bf16.msra.mxu0 0
    %4606 = vmatprep.subr.bf16.mxu0 0
    %4607 = vmatpush1.bf16.msra.mxu0 0
    %4608 = vmatprep.subr.bf16.mxu0 0
    %4609 = vmatpush1.bf16.msra.mxu0 0
    %4610 = vmatprep.subr.bf16.mxu0 0
    %4611 = vmatpush1.bf16.msra.mxu0 0
    %4612 = vmatprep.subr.bf16.mxu0 0
    %4613 = vmatpush1.bf16.msra.mxu0 0
    %4614 = vmatprep.subr.bf16.mxu0 0
    %4615 = vmatpush1.bf16.msra.mxu0 0
    %4616 = vmatprep.mubr.bf16.mxu0 0
    %4617 = vmatmul.mubr.bf16.gmra.mrb[0].mxu0 %v4579
    %v4618 = vpop.f32.mrb[0].mxu0
    %v4619 = vadd.f32 0.0, %v4618
    %v4620 = vpop.f32.mrb[0].mxu0
    %v4621 = vpop.f32.mrb[0].mxu0
    %v4622 = vpop.f32.mrb[0].mxu0
    %4623 = vdwg.mxu0
    %4624 = vrot.lane.b32.xlu0 %v244, 32
    %v4625 = vpop.permute.xlu0 %4624
    %v4627 = vsel %vm346, %v4479, 0
    %v4630 = vsel %vm593, %v4625, 0
    %4632 = vmatprep.subr.bf16.mxu0 0
    %4633 = vmatpush1.bf16.msra.mxu0 %v4630
    %4634 = vmatprep.subr.bf16.mxu0 0
    %4635 = vmatpush1.bf16.msra.mxu0 0
    %4636 = vmatprep.subr.bf16.mxu0 0
    %4637 = vmatpush1.bf16.msra.mxu0 0
    %4638 = vmatprep.subr.bf16.mxu0 0
    %4639 = vmatpush1.bf16.msra.mxu0 0
    %4640 = vmatprep.subr.bf16.mxu0 0
    %4641 = vmatpush1.bf16.msra.mxu0 0
    %4642 = vmatprep.subr.bf16.mxu0 0
    %4643 = vmatpush1.bf16.msra.mxu0 0
    %4644 = vmatprep.subr.bf16.mxu0 0
    %4645 = vmatpush1.bf16.msra.mxu0 0
    %4646 = vmatprep.subr.bf16.mxu0 0
    %4647 = vmatpush1.bf16.msra.mxu0 0
    %4648 = vmatprep.subr.bf16.mxu0 0
    %4649 = vmatpush1.bf16.msra.mxu0 0
    %4650 = vmatprep.subr.bf16.mxu0 0
    %4651 = vmatpush1.bf16.msra.mxu0 0
    %4652 = vmatprep.subr.bf16.mxu0 0
    %4653 = vmatpush1.bf16.msra.mxu0 0
    %4654 = vmatprep.subr.bf16.mxu0 0
    %4655 = vmatpush1.bf16.msra.mxu0 0
    %4656 = vmatprep.subr.bf16.mxu0 0
    %4657 = vmatpush1.bf16.msra.mxu0 0
    %4658 = vmatprep.subr.bf16.mxu0 0
    %4659 = vmatpush1.bf16.msra.mxu0 0
    %4660 = vmatprep.subr.bf16.mxu0 0
    %4661 = vmatpush1.bf16.msra.mxu0 0
    %4662 = vmatprep.subr.bf16.mxu0 0
    %4663 = vmatpush1.bf16.msra.mxu0 0
    %4664 = vmatprep.mubr.bf16.mxu0 0
    %4665 = vmatmul.mubr.bf16.gmra.mrb[0].mxu0 %v4627
    %v4666 = vpop.f32.mrb[0].mxu0
    %v4667 = vadd.f32 0.0, %v4666
    %v4668 = vpop.f32.mrb[0].mxu0
    %v4669 = vpop.f32.mrb[0].mxu0
    %v4670 = vpop.f32.mrb[0].mxu0
    %4671 = vdwg.mxu0
    %4673 = vrot.lane.b32.xlu0 %v4223, 120
    %v4674 = vpop.permute.xlu0 %4673
    %4676 = vrot.lane.b32.xlu0 %v4223, 112
    %v4677 = vpop.permute.xlu0 %4676
    %4679 = vrot.lane.b32.xlu0 %v4223, 104
    %v4680 = vpop.permute.xlu0 %4679
    %v4682 = vpack.c.bf16 %v4223, %v4223
    %v4683 = vpack.c.bf16 %v4674, %v4674
    %v4684 = vpack.c.bf16 %v4677, %v4677
    %v4685 = vpack.c.bf16 %v4680, %v4680
    %4686 = vrot.lane.b32.xlu0 %v255, 64
    %v4687 = vpop.permute.xlu0 %4686
    %v4689 = vsel %vm346, %v4682, 0
    %v4692 = vsel %vm346, %v4687, 0
    %4694 = vmatprep.subr.bf16.mxu0 0
    %4695 = vmatpush1.bf16.xpose.msra.mxu0 %v4692
    %4696 = vmatprep.subr.bf16.mxu0 0
    %4697 = vmatpush1.bf16.xpose.msra.mxu0 0
    %4698 = vmatprep.subr.bf16.mxu0 0
    %4699 = vmatpush1.bf16.xpose.msra.mxu0 0
    %4700 = vmatprep.subr.bf16.mxu0 0
    %4701 = vmatpush1.bf16.xpose.msra.mxu0 0
    %4702 = vmatprep.subr.bf16.mxu0 0
    %4703 = vmatpush1.bf16.xpose.msra.mxu0 0
    %4704 = vmatprep.subr.bf16.mxu0 0
    %4705 = vmatpush1.bf16.xpose.msra.mxu0 0
    %4706 = vmatprep.subr.bf16.mxu0 0
    %4707 = vmatpush1.bf16.xpose.msra.mxu0 0
    %4708 = vmatprep.subr.bf16.mxu0 0
    %4709 = vmatpush1.bf16.xpose.msra.mxu0 0
    %4710 = vmatprep.subr.bf16.mxu0 0
    %4711 = vmatpush1.bf16.xpose.msra.mxu0 0
    %4712 = vmatprep.subr.bf16.mxu0 0
    %4713 = vmatpush1.bf16.xpose.msra.mxu0 0
    %4714 = vmatprep.subr.bf16.mxu0 0
    %4715 = vmatpush1.bf16.xpose.msra.mxu0 0
    %4716 = vmatprep.subr.bf16.mxu0 0
    %4717 = vmatpush1.bf16.xpose.msra.mxu0 0
    %4718 = vmatprep.subr.bf16.mxu0 0
    %4719 = vmatpush1.bf16.xpose.msra.mxu0 0
    %4720 = vmatprep.subr.bf16.mxu0 0
    %4721 = vmatpush1.bf16.xpose.msra.mxu0 0
    %4722 = vmatprep.subr.bf16.mxu0 0
    %4723 = vmatpush1.bf16.xpose.msra.mxu0 0
    %4724 = vmatprep.subr.bf16.mxu0 0
    %4725 = vmatpush1.bf16.xpose.msra.mxu0 0
    %4726 = vmatprep.mubr.bf16.mxu0 0
    %4727 = vmatmul.mubr.bf16.gmra.mrb[0].mxu0 %v4689
    %v4728 = vpop.f32.mrb[0].mxu0
    %v4729 = vadd.f32 0.0, %v4728
    %v4730 = vpop.f32.mrb[0].mxu0
    %v4731 = vpop.f32.mrb[0].mxu0
    %v4732 = vpop.f32.mrb[0].mxu0
    %4733 = vdwg.mxu0
    %4734 = vrot.lane.b32.xlu0 %v256, 64
    %v4735 = vpop.permute.xlu0 %4734
    %v4737 = vsel %vm346, %v4683, 0
    %v4740 = vsel %vm346, %v4735, 0
    %4742 = vmatprep.subr.bf16.mxu0 0
    %4743 = vmatpush1.bf16.xpose.msra.mxu0 %v4740
    %4744 = vmatprep.subr.bf16.mxu0 0
    %4745 = vmatpush1.bf16.xpose.msra.mxu0 0
    %4746 = vmatprep.subr.bf16.mxu0 0
    %4747 = vmatpush1.bf16.xpose.msra.mxu0 0
    %4748 = vmatprep.subr.bf16.mxu0 0
    %4749 = vmatpush1.bf16.xpose.msra.mxu0 0
    %4750 = vmatprep.subr.bf16.mxu0 0
    %4751 = vmatpush1.bf16.xpose.msra.mxu0 0
    %4752 = vmatprep.subr.bf16.mxu0 0
    %4753 = vmatpush1.bf16.xpose.msra.mxu0 0
    %4754 = vmatprep.subr.bf16.mxu0 0
    %4755 = vmatpush1.bf16.xpose.msra.mxu0 0
    %4756 = vmatprep.subr.bf16.mxu0 0
    %4757 = vmatpush1.bf16.xpose.msra.mxu0 0
    %4758 = vmatprep.subr.bf16.mxu0 0
    %4759 = vmatpush1.bf16.xpose.msra.mxu0 0
    %4760 = vmatprep.subr.bf16.mxu0 0
    %4761 = vmatpush1.bf16.xpose.msra.mxu0 0
    %4762 = vmatprep.subr.bf16.mxu0 0
    %4763 = vmatpush1.bf16.xpose.msra.mxu0 0
    %4764 = vmatprep.subr.bf16.mxu0 0
    %4765 = vmatpush1.bf16.xpose.msra.mxu0 0
    %4766 = vmatprep.subr.bf16.mxu0 0
    %4767 = vmatpush1.bf16.xpose.msra.mxu0 0
    %4768 = vmatprep.subr.bf16.mxu0 0
    %4769 = vmatpush1.bf16.xpose.msra.mxu0 0
    %4770 = vmatprep.subr.bf16.mxu0 0
    %4771 = vmatpush1.bf16.xpose.msra.mxu0 0
    %4772 = vmatprep.subr.bf16.mxu0 0
    %4773 = vmatpush1.bf16.xpose.msra.mxu0 0
    %4774 = vmatprep.mubr.bf16.mxu0 0
    %4775 = vmatmul.mubr.bf16.gmra.mrb[0].mxu0 %v4737
    %v4776 = vpop.f32.mrb[0].mxu0
    %v4777 = vadd.f32 0.0, %v4776
    %v4778 = vpop.f32.mrb[0].mxu0
    %v4779 = vpop.f32.mrb[0].mxu0
    %v4780 = vpop.f32.mrb[0].mxu0
    %4781 = vdwg.mxu0
    %4782 = vrot.lane.b32.xlu0 %v257, 64
    %v4783 = vpop.permute.xlu0 %4782
    %v4785 = vsel %vm346, %v4684, 0
    %v4788 = vsel %vm346, %v4783, 0
    %4790 = vmatprep.subr.bf16.mxu0 0
    %4791 = vmatpush1.bf16.xpose.msra.mxu0 %v4788
    %4792 = vmatprep.subr.bf16.mxu0 0
    %4793 = vmatpush1.bf16.xpose.msra.mxu0 0
    %4794 = vmatprep.subr.bf16.mxu0 0
    %4795 = vmatpush1.bf16.xpose.msra.mxu0 0
    %4796 = vmatprep.subr.bf16.mxu0 0
    %4797 = vmatpush1.bf16.xpose.msra.mxu0 0
    %4798 = vmatprep.subr.bf16.mxu0 0
    %4799 = vmatpush1.bf16.xpose.msra.mxu0 0
    %4800 = vmatprep.subr.bf16.mxu0 0
    %4801 = vmatpush1.bf16.xpose.msra.mxu0 0
    %4802 = vmatprep.subr.bf16.mxu0 0
    %4803 = vmatpush1.bf16.xpose.msra.mxu0 0
    %4804 = vmatprep.subr.bf16.mxu0 0
    %4805 = vmatpush1.bf16.xpose.msra.mxu0 0
    %4806 = vmatprep.subr.bf16.mxu0 0
    %4807 = vmatpush1.bf16.xpose.msra.mxu0 0
    %4808 = vmatprep.subr.bf16.mxu0 0
    %4809 = vmatpush1.bf16.xpose.msra.mxu0 0
    %4810 = vmatprep.subr.bf16.mxu0 0
    %4811 = vmatpush1.bf16.xpose.msra.mxu0 0
    %4812 = vmatprep.subr.bf16.mxu0 0
    %4813 = vmatpush1.bf16.xpose.msra.mxu0 0
    %4814 = vmatprep.subr.bf16.mxu0 0
    %4815 = vmatpush1.bf16.xpose.msra.mxu0 0
    %4816 = vmatprep.subr.bf16.mxu0 0
    %4817 = vmatpush1.bf16.xpose.msra.mxu0 0
    %4818 = vmatprep.subr.bf16.mxu0 0
    %4819 = vmatpush1.bf16.xpose.msra.mxu0 0
    %4820 = vmatprep.subr.bf16.mxu0 0
    %4821 = vmatpush1.bf16.xpose.msra.mxu0 0
    %4822 = vmatprep.mubr.bf16.mxu0 0
    %4823 = vmatmul.mubr.bf16.gmra.mrb[0].mxu0 %v4785
    %v4824 = vpop.f32.mrb[0].mxu0
    %v4825 = vadd.f32 0.0, %v4824
    %v4826 = vpop.f32.mrb[0].mxu0
    %v4827 = vpop.f32.mrb[0].mxu0
    %v4828 = vpop.f32.mrb[0].mxu0
    %4829 = vdwg.mxu0
    %4830 = vrot.lane.b32.xlu0 %v258, 64
    %v4831 = vpop.permute.xlu0 %4830
    %v4833 = vsel %vm346, %v4685, 0
    %v4836 = vsel %vm346, %v4831, 0
    %4838 = vmatprep.subr.bf16.mxu0 0
    %4839 = vmatpush1.bf16.xpose.msra.mxu0 %v4836
    %4840 = vmatprep.subr.bf16.mxu0 0
    %4841 = vmatpush1.bf16.xpose.msra.mxu0 0
    %4842 = vmatprep.subr.bf16.mxu0 0
    %4843 = vmatpush1.bf16.xpose.msra.mxu0 0
    %4844 = vmatprep.subr.bf16.mxu0 0
    %4845 = vmatpush1.bf16.xpose.msra.mxu0 0
    %4846 = vmatprep.subr.bf16.mxu0 0
    %4847 = vmatpush1.bf16.xpose.msra.mxu0 0
    %4848 = vmatprep.subr.bf16.mxu0 0
    %4849 = vmatpush1.bf16.xpose.msra.mxu0 0
    %4850 = vmatprep.subr.bf16.mxu0 0
    %4851 = vmatpush1.bf16.xpose.msra.mxu0 0
    %4852 = vmatprep.subr.bf16.mxu0 0
    %4853 = vmatpush1.bf16.xpose.msra.mxu0 0
    %4854 = vmatprep.subr.bf16.mxu0 0
    %4855 = vmatpush1.bf16.xpose.msra.mxu0 0
    %4856 = vmatprep.subr.bf16.mxu0 0
    %4857 = vmatpush1.bf16.xpose.msra.mxu0 0
    %4858 = vmatprep.subr.bf16.mxu0 0
    %4859 = vmatpush1.bf16.xpose.msra.mxu0 0
    %4860 = vmatprep.subr.bf16.mxu0 0
    %4861 = vmatpush1.bf16.xpose.msra.mxu0 0
    %4862 = vmatprep.subr.bf16.mxu0 0
    %4863 = vmatpush1.bf16.xpose.msra.mxu0 0
    %4864 = vmatprep.subr.bf16.mxu0 0
    %4865 = vmatpush1.bf16.xpose.msra.mxu0 0
    %4866 = vmatprep.subr.bf16.mxu0 0
    %4867 = vmatpush1.bf16.xpose.msra.mxu0 0
    %4868 = vmatprep.subr.bf16.mxu0 0
    %4869 = vmatpush1.bf16.xpose.msra.mxu0 0
    %4870 = vmatprep.mubr.bf16.mxu0 0
    %4871 = vmatmul.mubr.bf16.gmra.mrb[0].mxu0 %v4833
    %v4872 = vpop.f32.mrb[0].mxu0
    %v4873 = vadd.f32 0.0, %v4872
    %v4874 = vpop.f32.mrb[0].mxu0
    %v4875 = vpop.f32.mrb[0].mxu0
    %v4876 = vpop.f32.mrb[0].mxu0
    %4877 = vdwg.mxu0
    %v4878 = vsel %vm346, %v4729, -inf
    %4879 = vmax.xlane.f32.xlu0 %v4878
    %v4880 = vpop.xlane.xlu0 %4879
    %v4881 = vsel %vm346, %v4777, -inf
    %4882 = vmax.xlane.f32.xlu0 %v4881
    %v4883 = vpop.xlane.xlu0 %4882
    %v4884 = vsel %vm346, %v4825, -inf
    %4885 = vmax.xlane.f32.xlu0 %v4884
    %v4886 = vpop.xlane.xlu0 %4885
    %v4887 = vsel %vm346, %v4873, -inf
    %4888 = vmax.xlane.f32.xlu0 %v4887
    %v4889 = vpop.xlane.xlu0 %4888
    %v4890 = vsub.f32 %v4729, %v4880
    %v4891 = vsub.f32 %v4777, %v4883
    %v4892 = vsub.f32 %v4825, %v4886
    %v4893 = vsub.f32 %v4873, %v4889
    %v4894 = vmul.f32 %v4890, 1.442695
    %v4895 = vpow.pop %v4894
    %v4896 = vmul.f32 %v4891, 1.442695
    %v4897 = vpow.pop %v4896
    %v4898 = vmul.f32 %v4892, 1.442695
    %v4899 = vpow.pop %v4898
    %v4900 = vmul.f32 %v4893, 1.442695
    %v4901 = vpow.pop %v4900
    %v4902 = vsel %vm346, %v4895, 0.0
    %4903 = vadd.xlane.f32.xlu0 %v4902
    %v4904 = vpop.xlane.xlu0 %4903
    %v4905 = vsel %vm346, %v4897, 0.0
    %4906 = vadd.xlane.f32.xlu0 %v4905
    %v4907 = vpop.xlane.xlu0 %4906
    %v4908 = vsel %vm346, %v4899, 0.0
    %4909 = vadd.xlane.f32.xlu0 %v4908
    %v4910 = vpop.xlane.xlu0 %4909
    %v4911 = vsel %vm346, %v4901, 0.0
    %4912 = vadd.xlane.f32.xlu0 %v4911
    %v4913 = vpop.xlane.xlu0 %4912
    %v4914 = vrcp.pop %v4904
    %v4915 = vrcp.pop %v4907
    %v4916 = vrcp.pop %v4910
    %v4917 = vrcp.pop %v4913
    %v4918 = vmul.f32 %v4895, %v4914
    %v4919 = vmul.f32 %v4897, %v4915
    %v4920 = vmul.f32 %v4899, %v4916
    %v4921 = vmul.f32 %v4901, %v4917
    %v4922 = vpack.c.bf16 %v4918, %v4918
    %v4923 = vpack.c.bf16 %v4919, %v4919
    %v4924 = vpack.c.bf16 %v4920, %v4920
    %v4925 = vpack.c.bf16 %v4921, %v4921
    %4926 = vrot.lane.b32.xlu0 %v255, 32
    %v4927 = vpop.permute.xlu0 %4926
    %v4929 = vsel %vm346, %v4922, 0
    %v4932 = vsel %vm593, %v4927, 0
    %4934 = vmatprep.subr.bf16.mxu0 0
    %4935 = vmatpush1.bf16.msra.mxu0 %v4932
    %4936 = vmatprep.subr.bf16.mxu0 0
    %4937 = vmatpush1.bf16.msra.mxu0 0
    %4938 = vmatprep.subr.bf16.mxu0 0
    %4939 = vmatpush1.bf16.msra.mxu0 0
    %4940 = vmatprep.subr.bf16.mxu0 0
    %4941 = vmatpush1.bf16.msra.mxu0 0
    %4942 = vmatprep.subr.bf16.mxu0 0
    %4943 = vmatpush1.bf16.msra.mxu0 0
    %4944 = vmatprep.subr.bf16.mxu0 0
    %4945 = vmatpush1.bf16.msra.mxu0 0
    %4946 = vmatprep.subr.bf16.mxu0 0
    %4947 = vmatpush1.bf16.msra.mxu0 0
    %4948 = vmatprep.subr.bf16.mxu0 0
    %4949 = vmatpush1.bf16.msra.mxu0 0
    %4950 = vmatprep.subr.bf16.mxu0 0
    %4951 = vmatpush1.bf16.msra.mxu0 0
    %4952 = vmatprep.subr.bf16.mxu0 0
    %4953 = vmatpush1.bf16.msra.mxu0 0
    %4954 = vmatprep.subr.bf16.mxu0 0
    %4955 = vmatpush1.bf16.msra.mxu0 0
    %4956 = vmatprep.subr.bf16.mxu0 0
    %4957 = vmatpush1.bf16.msra.mxu0 0
    %4958 = vmatprep.subr.bf16.mxu0 0
    %4959 = vmatpush1.bf16.msra.mxu0 0
    %4960 = vmatprep.subr.bf16.mxu0 0
    %4961 = vmatpush1.bf16.msra.mxu0 0
    %4962 = vmatprep.subr.bf16.mxu0 0
    %4963 = vmatpush1.bf16.msra.mxu0 0
    %4964 = vmatprep.subr.bf16.mxu0 0
    %4965 = vmatpush1.bf16.msra.mxu0 0
    %4966 = vmatprep.mubr.bf16.mxu0 0
    %4967 = vmatmul.mubr.bf16.gmra.mrb[0].mxu0 %v4929
    %v4968 = vpop.f32.mrb[0].mxu0
    %v4969 = vadd.f32 0.0, %v4968
    %v4970 = vpop.f32.mrb[0].mxu0
    %v4971 = vpop.f32.mrb[0].mxu0
    %v4972 = vpop.f32.mrb[0].mxu0
    %4973 = vdwg.mxu0
    %4974 = vrot.lane.b32.xlu0 %v256, 32
    %v4975 = vpop.permute.xlu0 %4974
    %v4977 = vsel %vm346, %v4923, 0
    %v4980 = vsel %vm593, %v4975, 0
    %4982 = vmatprep.subr.bf16.mxu0 0
    %4983 = vmatpush1.bf16.msra.mxu0 %v4980
    %4984 = vmatprep.subr.bf16.mxu0 0
    %4985 = vmatpush1.bf16.msra.mxu0 0
    %4986 = vmatprep.subr.bf16.mxu0 0
    %4987 = vmatpush1.bf16.msra.mxu0 0
    %4988 = vmatprep.subr.bf16.mxu0 0
    %4989 = vmatpush1.bf16.msra.mxu0 0
    %4990 = vmatprep.subr.bf16.mxu0 0
    %4991 = vmatpush1.bf16.msra.mxu0 0
    %4992 = vmatprep.subr.bf16.mxu0 0
    %4993 = vmatpush1.bf16.msra.mxu0 0
    %4994 = vmatprep.subr.bf16.mxu0 0
    %4995 = vmatpush1.bf16.msra.mxu0 0
    %4996 = vmatprep.subr.bf16.mxu0 0
    %4997 = vmatpush1.bf16.msra.mxu0 0
    %4998 = vmatprep.subr.bf16.mxu0 0
    %4999 = vmatpush1.bf16.msra.mxu0 0
    %5000 = vmatprep.subr.bf16.mxu0 0
    %5001 = vmatpush1.bf16.msra.mxu0 0
    %5002 = vmatprep.subr.bf16.mxu0 0
    %5003 = vmatpush1.bf16.msra.mxu0 0
    %5004 = vmatprep.subr.bf16.mxu0 0
    %5005 = vmatpush1.bf16.msra.mxu0 0
    %5006 = vmatprep.subr.bf16.mxu0 0
    %5007 = vmatpush1.bf16.msra.mxu0 0
    %5008 = vmatprep.subr.bf16.mxu0 0
    %5009 = vmatpush1.bf16.msra.mxu0 0
    %5010 = vmatprep.subr.bf16.mxu0 0
    %5011 = vmatpush1.bf16.msra.mxu0 0
    %5012 = vmatprep.subr.bf16.mxu0 0
    %5013 = vmatpush1.bf16.msra.mxu0 0
    %5014 = vmatprep.mubr.bf16.mxu0 0
    %5015 = vmatmul.mubr.bf16.gmra.mrb[0].mxu0 %v4977
    %v5016 = vpop.f32.mrb[0].mxu0
    %v5017 = vadd.f32 0.0, %v5016
    %v5018 = vpop.f32.mrb[0].mxu0
    %v5019 = vpop.f32.mrb[0].mxu0
    %v5020 = vpop.f32.mrb[0].mxu0
    %5021 = vdwg.mxu0
    %5022 = vrot.lane.b32.xlu0 %v257, 32
    %v5023 = vpop.permute.xlu0 %5022
    %v5025 = vsel %vm346, %v4924, 0
    %v5028 = vsel %vm593, %v5023, 0
    %5030 = vmatprep.subr.bf16.mxu0 0
    %5031 = vmatpush1.bf16.msra.mxu0 %v5028
    %5032 = vmatprep.subr.bf16.mxu0 0
    %5033 = vmatpush1.bf16.msra.mxu0 0
    %5034 = vmatprep.subr.bf16.mxu0 0
    %5035 = vmatpush1.bf16.msra.mxu0 0
    %5036 = vmatprep.subr.bf16.mxu0 0
    %5037 = vmatpush1.bf16.msra.mxu0 0
    %5038 = vmatprep.subr.bf16.mxu0 0
    %5039 = vmatpush1.bf16.msra.mxu0 0
    %5040 = vmatprep.subr.bf16.mxu0 0
    %5041 = vmatpush1.bf16.msra.mxu0 0
    %5042 = vmatprep.subr.bf16.mxu0 0
    %5043 = vmatpush1.bf16.msra.mxu0 0
    %5044 = vmatprep.subr.bf16.mxu0 0
    %5045 = vmatpush1.bf16.msra.mxu0 0
    %5046 = vmatprep.subr.bf16.mxu0 0
    %5047 = vmatpush1.bf16.msra.mxu0 0
    %5048 = vmatprep.subr.bf16.mxu0 0
    %5049 = vmatpush1.bf16.msra.mxu0 0
    %5050 = vmatprep.subr.bf16.mxu0 0
    %5051 = vmatpush1.bf16.msra.mxu0 0
    %5052 = vmatprep.subr.bf16.mxu0 0
    %5053 = vmatpush1.bf16.msra.mxu0 0
    %5054 = vmatprep.subr.bf16.mxu0 0
    %5055 = vmatpush1.bf16.msra.mxu0 0
    %5056 = vmatprep.subr.bf16.mxu0 0
    %5057 = vmatpush1.bf16.msra.mxu0 0
    %5058 = vmatprep.subr.bf16.mxu0 0
    %5059 = vmatpush1.bf16.msra.mxu0 0
    %5060 = vmatprep.subr.bf16.mxu0 0
    %5061 = vmatpush1.bf16.msra.mxu0 0
    %5062 = vmatprep.mubr.bf16.mxu0 0
    %5063 = vmatmul.mubr.bf16.gmra.mrb[0].mxu0 %v5025
    %v5064 = vpop.f32.mrb[0].mxu0
    %v5065 = vadd.f32 0.0, %v5064
    %v5066 = vpop.f32.mrb[0].mxu0
    %v5067 = vpop.f32.mrb[0].mxu0
    %v5068 = vpop.f32.mrb[0].mxu0
    %5069 = vdwg.mxu0
    %5070 = vrot.lane.b32.xlu0 %v258, 32
    %v5071 = vpop.permute.xlu0 %5070
    %v5073 = vsel %vm346, %v4925, 0
    %v5076 = vsel %vm593, %v5071, 0
    %5078 = vmatprep.subr.bf16.mxu0 0
    %5079 = vmatpush1.bf16.msra.mxu0 %v5076
    %5080 = vmatprep.subr.bf16.mxu0 0
    %5081 = vmatpush1.bf16.msra.mxu0 0
    %5082 = vmatprep.subr.bf16.mxu0 0
    %5083 = vmatpush1.bf16.msra.mxu0 0
    %5084 = vmatprep.subr.bf16.mxu0 0
    %5085 = vmatpush1.bf16.msra.mxu0 0
    %5086 = vmatprep.subr.bf16.mxu0 0
    %5087 = vmatpush1.bf16.msra.mxu0 0
    %5088 = vmatprep.subr.bf16.mxu0 0
    %5089 = vmatpush1.bf16.msra.mxu0 0
    %5090 = vmatprep.subr.bf16.mxu0 0
    %5091 = vmatpush1.bf16.msra.mxu0 0
    %5092 = vmatprep.subr.bf16.mxu0 0
    %5093 = vmatpush1.bf16.msra.mxu0 0
    %5094 = vmatprep.subr.bf16.mxu0 0
    %5095 = vmatpush1.bf16.msra.mxu0 0
    %5096 = vmatprep.subr.bf16.mxu0 0
    %5097 = vmatpush1.bf16.msra.mxu0 0
    %5098 = vmatprep.subr.bf16.mxu0 0
    %5099 = vmatpush1.bf16.msra.mxu0 0
    %5100 = vmatprep.subr.bf16.mxu0 0
    %5101 = vmatpush1.bf16.msra.mxu0 0
    %5102 = vmatprep.subr.bf16.mxu0 0
    %5103 = vmatpush1.bf16.msra.mxu0 0
    %5104 = vmatprep.subr.bf16.mxu0 0
    %5105 = vmatpush1.bf16.msra.mxu0 0
    %5106 = vmatprep.subr.bf16.mxu0 0
    %5107 = vmatpush1.bf16.msra.mxu0 0
    %5108 = vmatprep.subr.bf16.mxu0 0
    %5109 = vmatpush1.bf16.msra.mxu0 0
    %5110 = vmatprep.mubr.bf16.mxu0 0
    %5111 = vmatmul.mubr.bf16.gmra.mrb[0].mxu0 %v5073
    %v5112 = vpop.f32.mrb[0].mxu0
    %v5113 = vadd.f32 0.0, %v5112
    %v5114 = vpop.f32.mrb[0].mxu0
    %v5115 = vpop.f32.mrb[0].mxu0
    %v5116 = vpop.f32.mrb[0].mxu0
    %5117 = vdwg.mxu0
    %s5118 = scalar_lea.vmem %s11, 16
    %v5119 = vld [vmem:[%s5118] sm:$0xf]
    %v5120 = vld [vmem:[%s5118 + $0x4] sm:$0xf]
    %v5121 = vld [vmem:[%s5118 + $0x8] sm:$0xf]
    %v5122 = vld [vmem:[%s5118 + $0xc] sm:$0xf]
    %s5123 = scalar_lea.vmem %s12, 1
    %v5124 = vld [vmem:[%s5123] sm:$0x1]
    %v5125 = vpack.c.bf16 %v4969, %v4523
    %v5126 = vpack.c.bf16 %v5017, %v4571
    %v5127 = vpack.c.bf16 %v5065, %v4619
    %v5128 = vpack.c.bf16 %v5113, %v4667
    %v5130 = vsel %vm346, %v5125, 0
    %v5133 = vsel %vm593, %v5119, 0
    %5135 = vmatprep.subr.bf16.mxu0 0
    %5136 = vmatpush1.bf16.msra.mxu0 %v5133
    %5137 = vmatprep.subr.bf16.mxu0 0
    %5138 = vmatpush1.bf16.msra.mxu0 0
    %5139 = vmatprep.subr.bf16.mxu0 0
    %5140 = vmatpush1.bf16.msra.mxu0 0
    %5141 = vmatprep.subr.bf16.mxu0 0
    %5142 = vmatpush1.bf16.msra.mxu0 0
    %5143 = vmatprep.subr.bf16.mxu0 0
    %5144 = vmatpush1.bf16.msra.mxu0 0
    %5145 = vmatprep.subr.bf16.mxu0 0
    %5146 = vmatpush1.bf16.msra.mxu0 0
    %5147 = vmatprep.subr.bf16.mxu0 0
    %5148 = vmatpush1.bf16.msra.mxu0 0
    %5149 = vmatprep.subr.bf16.mxu0 0
    %5150 = vmatpush1.bf16.msra.mxu0 0
    %5151 = vmatprep.subr.bf16.mxu0 0
    %5152 = vmatpush1.bf16.msra.mxu0 0
    %5153 = vmatprep.subr.bf16.mxu0 0
    %5154 = vmatpush1.bf16.msra.mxu0 0
    %5155 = vmatprep.subr.bf16.mxu0 0
    %5156 = vmatpush1.bf16.msra.mxu0 0
    %5157 = vmatprep.subr.bf16.mxu0 0
    %5158 = vmatpush1.bf16.msra.mxu0 0
    %5159 = vmatprep.subr.bf16.mxu0 0
    %5160 = vmatpush1.bf16.msra.mxu0 0
    %5161 = vmatprep.subr.bf16.mxu0 0
    %5162 = vmatpush1.bf16.msra.mxu0 0
    %5163 = vmatprep.subr.bf16.mxu0 0
    %5164 = vmatpush1.bf16.msra.mxu0 0
    %5165 = vmatprep.subr.bf16.mxu0 0
    %5166 = vmatpush1.bf16.msra.mxu0 0
    %5167 = vmatprep.mubr.bf16.mxu0 0
    %5168 = vmatmul.mubr.bf16.gmra.mrb[0].mxu0 %v5130
    %v5169 = vpop.f32.mrb[0].mxu0
    %v5170 = vadd.f32 0.0, %v5169
    %v5171 = vpop.f32.mrb[0].mxu0
    %v5172 = vpop.f32.mrb[0].mxu0
    %v5173 = vadd.f32 0.0, %v5172
    %v5174 = vpop.f32.mrb[0].mxu0
    %5175 = vdwg.mxu0
    %v5177 = vsel %vm346, %v5126, 0
    %v5180 = vsel %vm593, %v5120, 0
    %5182 = vmatprep.subr.bf16.mxu0 0
    %5183 = vmatpush1.bf16.msra.mxu0 %v5180
    %5184 = vmatprep.subr.bf16.mxu0 0
    %5185 = vmatpush1.bf16.msra.mxu0 0
    %5186 = vmatprep.subr.bf16.mxu0 0
    %5187 = vmatpush1.bf16.msra.mxu0 0
    %5188 = vmatprep.subr.bf16.mxu0 0
    %5189 = vmatpush1.bf16.msra.mxu0 0
    %5190 = vmatprep.subr.bf16.mxu0 0
    %5191 = vmatpush1.bf16.msra.mxu0 0
    %5192 = vmatprep.subr.bf16.mxu0 0
    %5193 = vmatpush1.bf16.msra.mxu0 0
    %5194 = vmatprep.subr.bf16.mxu0 0
    %5195 = vmatpush1.bf16.msra.mxu0 0
    %5196 = vmatprep.subr.bf16.mxu0 0
    %5197 = vmatpush1.bf16.msra.mxu0 0
    %5198 = vmatprep.subr.bf16.mxu0 0
    %5199 = vmatpush1.bf16.msra.mxu0 0
    %5200 = vmatprep.subr.bf16.mxu0 0
    %5201 = vmatpush1.bf16.msra.mxu0 0
    %5202 = vmatprep.subr.bf16.mxu0 0
    %5203 = vmatpush1.bf16.msra.mxu0 0
    %5204 = vmatprep.subr.bf16.mxu0 0
    %5205 = vmatpush1.bf16.msra.mxu0 0
    %5206 = vmatprep.subr.bf16.mxu0 0
    %5207 = vmatpush1.bf16.msra.mxu0 0
    %5208 = vmatprep.subr.bf16.mxu0 0
    %5209 = vmatpush1.bf16.msra.mxu0 0
    %5210 = vmatprep.subr.bf16.mxu0 0
    %5211 = vmatpush1.bf16.msra.mxu0 0
    %5212 = vmatprep.subr.bf16.mxu0 0
    %5213 = vmatpush1.bf16.msra.mxu0 0
    %5214 = vmatprep.mubr.bf16.mxu0 0
    %5215 = vmatmul.mubr.bf16.gmra.mrb[0].mxu0 %v5177
    %v5216 = vpop.f32.mrb[0].mxu0
    %v5217 = vadd.f32 0.0, %v5216
    %v5218 = vpop.f32.mrb[0].mxu0
    %v5219 = vpop.f32.mrb[0].mxu0
    %v5220 = vadd.f32 0.0, %v5219
    %v5221 = vpop.f32.mrb[0].mxu0
    %5222 = vdwg.mxu0
    %v5224 = vsel %vm346, %v5127, 0
    %v5227 = vsel %vm593, %v5121, 0
    %5229 = vmatprep.subr.bf16.mxu0 0
    %5230 = vmatpush1.bf16.msra.mxu0 %v5227
    %5231 = vmatprep.subr.bf16.mxu0 0
    %5232 = vmatpush1.bf16.msra.mxu0 0
    %5233 = vmatprep.subr.bf16.mxu0 0
    %5234 = vmatpush1.bf16.msra.mxu0 0
    %5235 = vmatprep.subr.bf16.mxu0 0
    %5236 = vmatpush1.bf16.msra.mxu0 0
    %5237 = vmatprep.subr.bf16.mxu0 0
    %5238 = vmatpush1.bf16.msra.mxu0 0
    %5239 = vmatprep.subr.bf16.mxu0 0
    %5240 = vmatpush1.bf16.msra.mxu0 0
    %5241 = vmatprep.subr.bf16.mxu0 0
    %5242 = vmatpush1.bf16.msra.mxu0 0
    %5243 = vmatprep.subr.bf16.mxu0 0
    %5244 = vmatpush1.bf16.msra.mxu0 0
    %5245 = vmatprep.subr.bf16.mxu0 0
    %5246 = vmatpush1.bf16.msra.mxu0 0
    %5247 = vmatprep.subr.bf16.mxu0 0
    %5248 = vmatpush1.bf16.msra.mxu0 0
    %5249 = vmatprep.subr.bf16.mxu0 0
    %5250 = vmatpush1.bf16.msra.mxu0 0
    %5251 = vmatprep.subr.bf16.mxu0 0
    %5252 = vmatpush1.bf16.msra.mxu0 0
    %5253 = vmatprep.subr.bf16.mxu0 0
    %5254 = vmatpush1.bf16.msra.mxu0 0
    %5255 = vmatprep.subr.bf16.mxu0 0
    %5256 = vmatpush1.bf16.msra.mxu0 0
    %5257 = vmatprep.subr.bf16.mxu0 0
    %5258 = vmatpush1.bf16.msra.mxu0 0
    %5259 = vmatprep.subr.bf16.mxu0 0
    %5260 = vmatpush1.bf16.msra.mxu0 0
    %5261 = vmatprep.mubr.bf16.mxu0 0
    %5262 = vmatmul.mubr.bf16.gmra.mrb[0].mxu0 %v5224
    %v5263 = vpop.f32.mrb[0].mxu0
    %v5264 = vadd.f32 0.0, %v5263
    %v5265 = vpop.f32.mrb[0].mxu0
    %v5266 = vpop.f32.mrb[0].mxu0
    %v5267 = vadd.f32 0.0, %v5266
    %v5268 = vpop.f32.mrb[0].mxu0
    %5269 = vdwg.mxu0
    %v5271 = vsel %vm346, %v5128, 0
    %v5274 = vsel %vm593, %v5122, 0
    %5276 = vmatprep.subr.bf16.mxu0 0
    %5277 = vmatpush1.bf16.msra.mxu0 %v5274
    %5278 = vmatprep.subr.bf16.mxu0 0
    %5279 = vmatpush1.bf16.msra.mxu0 0
    %5280 = vmatprep.subr.bf16.mxu0 0
    %5281 = vmatpush1.bf16.msra.mxu0 0
    %5282 = vmatprep.subr.bf16.mxu0 0
    %5283 = vmatpush1.bf16.msra.mxu0 0
    %5284 = vmatprep.subr.bf16.mxu0 0
    %5285 = vmatpush1.bf16.msra.mxu0 0
    %5286 = vmatprep.subr.bf16.mxu0 0
    %5287 = vmatpush1.bf16.msra.mxu0 0
    %5288 = vmatprep.subr.bf16.mxu0 0
    %5289 = vmatpush1.bf16.msra.mxu0 0
    %5290 = vmatprep.subr.bf16.mxu0 0
    %5291 = vmatpush1.bf16.msra.mxu0 0
    %5292 = vmatprep.subr.bf16.mxu0 0
    %5293 = vmatpush1.bf16.msra.mxu0 0
    %5294 = vmatprep.subr.bf16.mxu0 0
    %5295 = vmatpush1.bf16.msra.mxu0 0
    %5296 = vmatprep.subr.bf16.mxu0 0
    %5297 = vmatpush1.bf16.msra.mxu0 0
    %5298 = vmatprep.subr.bf16.mxu0 0
    %5299 = vmatpush1.bf16.msra.mxu0 0
    %5300 = vmatprep.subr.bf16.mxu0 0
    %5301 = vmatpush1.bf16.msra.mxu0 0
    %5302 = vmatprep.subr.bf16.mxu0 0
    %5303 = vmatpush1.bf16.msra.mxu0 0
    %5304 = vmatprep.subr.bf16.mxu0 0
    %5305 = vmatpush1.bf16.msra.mxu0 0
    %5306 = vmatprep.subr.bf16.mxu0 0
    %5307 = vmatpush1.bf16.msra.mxu0 0
    %5308 = vmatprep.mubr.bf16.mxu0 0
    %5309 = vmatmul.mubr.bf16.gmra.mrb[0].mxu0 %v5271
    %v5310 = vpop.f32.mrb[0].mxu0
    %v5311 = vadd.f32 0.0, %v5310
    %v5312 = vpop.f32.mrb[0].mxu0
    %v5313 = vpop.f32.mrb[0].mxu0
    %v5314 = vadd.f32 0.0, %v5313
    %v5315 = vpop.f32.mrb[0].mxu0
    %5316 = vdwg.mxu0
    %v5317 = vsel %vm186, %v5170, 0.0
    %v5318 = vsel %vm186, %v5217, 0.0
    %v5319 = vadd.f32 %v5317, %v5318
    %v5320 = vsel %vm186, %v5264, 0.0
    %v5321 = vadd.f32 %v5319, %v5320
    %v5322 = vsel %vm186, %v5311, 0.0
    %v5323 = vadd.f32 %v5321, %v5322
    %v5324 = vsel %vm186, %v5173, 0.0
    %v5325 = vsel %vm186, %v5220, 0.0
    %v5326 = vadd.f32 %v5324, %v5325
    %v5327 = vsel %vm186, %v5267, 0.0
    %v5328 = vadd.f32 %v5326, %v5327
    %v5329 = vsel %vm186, %v5314, 0.0
    %v5330 = vadd.f32 %v5328, %v5329
    %v5332 = vlaneseq
    %v5333 = vshrl.u32 %v5332, 7
    %v5334 = vsub.s32 0, %v5333
    %v5335 = vrot.slane %v5124, %v5334
    %v5337 = vadd.f32 %v5323, %v5335
    %v5338 = vadd.f32 %v5330, %v5335
    %v5339 = vadd.f32 %v4154, %v5337
    %v5340 = vadd.f32 %v4155, %v5338
    %v5341 = vsel %vm186, %v5339, 0.0
    %5342 = vadd.xlane.f32.xlu0 %v5341
    %v5343 = vpop.xlane.xlu0 %5342
    %v5344 = vsel %vm186, %v5340, 0.0
    %5345 = vadd.xlane.f32.xlu0 %v5344
    %v5346 = vpop.xlane.xlu0 %5345
    %v5347 = vmul.f32 %v5343, %v1458
    %v5348 = vmul.f32 %v5346, %v1458
    %v5349 = vmul.f32 %v5339, %v5339
    %v5350 = vmul.f32 %v5340, %v5340
    %v5351 = vsel %vm186, %v5349, 0.0
    %5352 = vadd.xlane.f32.xlu0 %v5351
    %v5353 = vpop.xlane.xlu0 %5352
    %v5354 = vsel %vm186, %v5350, 0.0
    %5355 = vadd.xlane.f32.xlu0 %v5354
    %v5356 = vpop.xlane.xlu0 %5355
    %v5357 = vmul.f32 %v5353, %v1458
    %v5358 = vmul.f32 %v5356, %v1458
    %v5359 = vmul.f32 %v5347, %v5347
    %v5360 = vmul.f32 %v5348, %v5348
    %v5361 = vsub.f32 %v5357, %v5359
    %v5362 = vsub.f32 %v5358, %v5360
    %v5363 = vmax.f32 %v5361, 0.0
    %v5364 = vmax.f32 %v5362, 0.0
    %v5365 = vsub.f32 %v5339, %v5347
    %v5366 = vsub.f32 %v5340, %v5348
    %v5367 = vadd.f32 %v5363, 1e-05
    %v5368 = vadd.f32 %v5364, 1e-05
    %v5369 = vrsqrt.pop %v5367
    %v5370 = vrsqrt.pop %v5368
    %v5371 = vmul.f32 %v5365, %v5369
    %v5372 = vmul.f32 %v5366, %v5370
    %v5373 = vlaneseq
    %v5374 = vshrl.u32 %v5373, 7
    %v5375 = vsub.s32 1, %v5374
    %v5376 = vrot.slane %v2916, %v5375
    %v5377 = vmul.f32 %v5371, %v5376
    %v5378 = vmul.f32 %v5372, %v5376
    %v5379 = vlaneseq
    %v5380 = vshrl.u32 %v5379, 7
    %v5381 = vsub.s32 1, %v5380
    %v5382 = vrot.slane %v2918, %v5381
    %v5383 = vadd.f32 %v5377, %v5382
    %v5384 = vadd.f32 %v5378, %v5382
    %s5385 = scalar_lea.vmem [#allocation7], 16
    %v5386 = vld [vmem:[%s5385] sm:$0xf]
    %v5387 = vld [vmem:[%s5385 + $0x4] sm:$0xf]
    %v5388 = vld [vmem:[%s5385 + $0x8] sm:$0xf]
    %v5389 = vld [vmem:[%s5385 + $0xc] sm:$0xf]
    %s5390 = scalar_lea.vmem [#allocation8], 1
    %v5391 = vld [vmem:[%s5390] sm:$0x1]
    %v5392 = vpack.c.bf16 %v5384, %v5383
    %v5394 = vlaneseq
    %v5395 = vshrl.u32 %v5394, 7
    %v5396 = vsub.s32 0, %v5395
    %v5397 = vrot.slane %v5391, %v5396
    %v5403 = vunpack.c.l.b16 %v5386
    %v5404 = vunpack.c.l.b16 %v5387
    %v5405 = vunpack.c.l.b16 %v5388
    %v5406 = vunpack.c.l.b16 %v5389
    %v5407 = vpack.c.b16 %v5404, %v5403
    %v5408 = vpack.c.b16 %v5406, %v5405
    %v5412 = vsel %vm186, %v5392, 0
    %5414 = vmatprep.subr.bf16.mxu0 0
    %5415 = vmatpush1.bf16.msra.mxu0 %v5407
    %5416 = vmatprep.subr.bf16.mxu0 0
    %5417 = vmatpush1.bf16.msra.mxu0 %v5408
    %5418 = vmatprep.subr.bf16.mxu0 0
    %5419 = vmatpush1.bf16.msra.mxu0 0
    %5420 = vmatprep.subr.bf16.mxu0 0
    %5421 = vmatpush1.bf16.msra.mxu0 0
    %5422 = vmatprep.subr.bf16.mxu0 0
    %5423 = vmatpush1.bf16.msra.mxu0 0
    %5424 = vmatprep.subr.bf16.mxu0 0
    %5425 = vmatpush1.bf16.msra.mxu0 0
    %5426 = vmatprep.subr.bf16.mxu0 0
    %5427 = vmatpush1.bf16.msra.mxu0 0
    %5428 = vmatprep.subr.bf16.mxu0 0
    %5429 = vmatpush1.bf16.msra.mxu0 0
    %5430 = vmatprep.subr.bf16.mxu0 0
    %5431 = vmatpush1.bf16.msra.mxu0 0
    %5432 = vmatprep.subr.bf16.mxu0 0
    %5433 = vmatpush1.bf16.msra.mxu0 0
    %5434 = vmatprep.subr.bf16.mxu0 0
    %5435 = vmatpush1.bf16.msra.mxu0 0
    %5436 = vmatprep.subr.bf16.mxu0 0
    %5437 = vmatpush1.bf16.msra.mxu0 0
    %5438 = vmatprep.subr.bf16.mxu0 0
    %5439 = vmatpush1.bf16.msra.mxu0 0
    %5440 = vmatprep.subr.bf16.mxu0 0
    %5441 = vmatpush1.bf16.msra.mxu0 0
    %5442 = vmatprep.subr.bf16.mxu0 0
    %5443 = vmatpush1.bf16.msra.mxu0 0
    %5444 = vmatprep.subr.bf16.mxu0 0
    %5445 = vmatpush1.bf16.msra.mxu0 0
    %5446 = vmatprep.mubr.bf16.mxu0 0
    %5447 = vmatmul.mubr.bf16.gmra.mrb[0].mxu0 %v5412
    %v5448 = vpop.f32.mrb[0].mxu0
    %v5449 = vadd.f32 %v5397, %v5448
    %v5450 = vpop.f32.mrb[0].mxu0
    %v5451 = vpop.f32.mrb[0].mxu0
    %v5452 = vadd.f32 %v5397, %v5451
    %v5453 = vpop.f32.mrb[0].mxu0
    %5454 = vdwg.mxu0
    %v5455 = vmax.f32 %v5449, 0.0
    %v5456 = vmax.f32 %v5452, 0.0
    %s5457 = scalar_lea.vmem %s15, 32
    %v5458 = vld [vmem:[%s5457] sm:$0xf]
    %v5459 = vld [vmem:[%s5457 + $0x4] sm:$0xf]
    %v5460 = vld [vmem:[%s5457 + $0x8] sm:$0xf]
    %v5461 = vld [vmem:[%s5457 + $0xc] sm:$0xf]
    %v5462 = vld [vmem:[%s5457 + $0x10] sm:$0xf]
    %v5463 = vld [vmem:[%s5457 + $0x14] sm:$0xf]
    %v5464 = vld [vmem:[%s5457 + $0x18] sm:$0xf]
    %v5465 = vld [vmem:[%s5457 + $0x1c] sm:$0xf]
    %s5466 = scalar_lea.vmem [#allocation10], 1
    %v5467 = vld [vmem:[%s5466] sm:$0x1]
    %v5468 = vpack.c.bf16 %v5456, %v5455
    %v5470 = vlaneseq
    %v5471 = vshrl.u32 %v5470, 7
    %v5472 = vsub.s32 0, %v5471
    %v5473 = vrot.slane %v5467, %v5472
    %v5483 = vunpack.c.l.b16 %v5458
    %v5484 = vunpack.c.l.b16 %v5459
    %v5485 = vunpack.c.l.b16 %v5460
    %v5486 = vunpack.c.l.b16 %v5461
    %v5487 = vunpack.c.l.b16 %v5462
    %v5488 = vunpack.c.l.b16 %v5463
    %v5489 = vunpack.c.l.b16 %v5464
    %v5490 = vunpack.c.l.b16 %v5465
    %v5491 = vpack.c.b16 %v5484, %v5483
    %v5492 = vpack.c.b16 %v5486, %v5485
    %v5493 = vpack.c.b16 %v5488, %v5487
    %v5494 = vpack.c.b16 %v5490, %v5489
    %v5500 = vsel %vm2824, %v5468, 0
    %5502 = vmatprep.subr.bf16.mxu0 0
    %5503 = vmatpush1.bf16.msra.mxu0 %v5491
    %5504 = vmatprep.subr.bf16.mxu0 0
    %5505 = vmatpush1.bf16.msra.mxu0 %v5492
    %5506 = vmatprep.subr.bf16.mxu0 0
    %5507 = vmatpush1.bf16.msra.mxu0 %v5493
    %5508 = vmatprep.subr.bf16.mxu0 0
    %5509 = vmatpush1.bf16.msra.mxu0 %v5494
    %5510 = vmatprep.subr.bf16.mxu0 0
    %5511 = vmatpush1.bf16.msra.mxu0 0
    %5512 = vmatprep.subr.bf16.mxu0 0
    %5513 = vmatpush1.bf16.msra.mxu0 0
    %5514 = vmatprep.subr.bf16.mxu0 0
    %5515 = vmatpush1.bf16.msra.mxu0 0
    %5516 = vmatprep.subr.bf16.mxu0 0
    %5517 = vmatpush1.bf16.msra.mxu0 0
    %5518 = vmatprep.subr.bf16.mxu0 0
    %5519 = vmatpush1.bf16.msra.mxu0 0
    %5520 = vmatprep.subr.bf16.mxu0 0
    %5521 = vmatpush1.bf16.msra.mxu0 0
    %5522 = vmatprep.subr.bf16.mxu0 0
    %5523 = vmatpush1.bf16.msra.mxu0 0
    %5524 = vmatprep.subr.bf16.mxu0 0
    %5525 = vmatpush1.bf16.msra.mxu0 0
    %5526 = vmatprep.subr.bf16.mxu0 0
    %5527 = vmatpush1.bf16.msra.mxu0 0
    %5528 = vmatprep.subr.bf16.mxu0 0
    %5529 = vmatpush1.bf16.msra.mxu0 0
    %5530 = vmatprep.subr.bf16.mxu0 0
    %5531 = vmatpush1.bf16.msra.mxu0 0
    %5532 = vmatprep.subr.bf16.mxu0 0
    %5533 = vmatpush1.bf16.msra.mxu0 0
    %5534 = vmatprep.mubr.bf16.mxu0 0
    %5535 = vmatmul.mubr.bf16.gmra.mrb[0].mxu0 %v5500
    %v5536 = vpop.f32.mrb[0].mxu0
    %v5537 = vadd.f32 %v5473, %v5536
    %v5538 = vpop.f32.mrb[0].mxu0
    %v5539 = vpop.f32.mrb[0].mxu0
    %v5540 = vadd.f32 %v5473, %v5539
    %v5541 = vpop.f32.mrb[0].mxu0
    %5542 = vdwg.mxu0
    %v5543 = vadd.f32 %v5383, %v5537
    %v5544 = vadd.f32 %v5384, %v5540
    %v5545 = vsel %vm186, %v5543, 0.0
    %5546 = vadd.xlane.f32.xlu0 %v5545
    %v5547 = vpop.xlane.xlu0 %5546
    %v5548 = vsel %vm186, %v5544, 0.0
    %5549 = vadd.xlane.f32.xlu0 %v5548
    %v5550 = vpop.xlane.xlu0 %5549
    %v5551 = vmul.f32 %v5547, %v1458
    %v5552 = vmul.f32 %v5550, %v1458
    %v5553 = vmul.f32 %v5543, %v5543
    %v5554 = vmul.f32 %v5544, %v5544
    %v5555 = vsel %vm186, %v5553, 0.0
    %5556 = vadd.xlane.f32.xlu0 %v5555
    %v5557 = vpop.xlane.xlu0 %5556
    %v5558 = vsel %vm186, %v5554, 0.0
    %5559 = vadd.xlane.f32.xlu0 %v5558
    %v5560 = vpop.xlane.xlu0 %5559
    %v5561 = vmul.f32 %v5557, %v1458
    %v5562 = vmul.f32 %v5560, %v1458
    %v5563 = vmul.f32 %v5551, %v5551
    %v5564 = vmul.f32 %v5552, %v5552
    %v5565 = vsub.f32 %v5561, %v5563
    %v5566 = vsub.f32 %v5562, %v5564
    %v5567 = vmax.f32 %v5565, 0.0
    %v5568 = vmax.f32 %v5566, 0.0
    %v5569 = vsub.f32 %v5543, %v5551
    %v5570 = vsub.f32 %v5544, %v5552
    %v5571 = vadd.f32 %v5567, 1e-05
    %v5572 = vadd.f32 %v5568, 1e-05
    %v5573 = vrsqrt.pop %v5571
    %v5574 = vrsqrt.pop %v5572
    %v5575 = vmul.f32 %v5569, %v5573
    %v5576 = vmul.f32 %v5570, %v5574
    %v5577 = vlaneseq
    %v5578 = vshrl.u32 %v5577, 7
    %v5579 = vsub.s32 2, %v5578
    %v5580 = vrot.slane %v2916, %v5579
    %v5581 = vmul.f32 %v5575, %v5580
    %v5582 = vmul.f32 %v5576, %v5580
    %v5583 = vlaneseq
    %v5584 = vshrl.u32 %v5583, 7
    %v5585 = vsub.s32 2, %v5584
    %v5586 = vrot.slane %v2918, %v5585
    %v5587 = vadd.f32 %v5581, %v5586
    %v5588 = vadd.f32 %v5582, %v5586
    %v5589 = vld [vmem:[%s19] sm:$0xf]
    %v5590 = vld [vmem:[%s19 + $0x4] sm:$0xf]
    %v5591 = vld [vmem:[%s19 + $0x8] sm:$0xf]
    %v5592 = vld [vmem:[%s19 + $0xc] sm:$0xf]
    %v5593 = vld [vmem:[#allocation11] sm:$0x1]
    %v5594 = vpack.c.bf16 %v5588, %v5587
    %v5596 = vlaneseq
    %v5597 = vshrl.u32 %v5596, 7
    %v5598 = vsub.s32 0, %v5597
    %v5599 = vrot.slane %v5593, %v5598
    %v5605 = vunpack.c.l.b16 %v5589
    %v5606 = vunpack.c.l.b16 %v5590
    %v5607 = vunpack.c.l.b16 %v5591
    %v5608 = vunpack.c.l.b16 %v5592
    %v5609 = vpack.c.b16 %v5606, %v5605
    %v5610 = vpack.c.b16 %v5608, %v5607
    %v5614 = vsel %vm186, %v5594, 0
    %5616 = vmatprep.subr.bf16.mxu0 0
    %5617 = vmatpush1.bf16.msra.mxu0 %v5609
    %5618 = vmatprep.subr.bf16.mxu0 0
    %5619 = vmatpush1.bf16.msra.mxu0 %v5610
    %5620 = vmatprep.subr.bf16.mxu0 0
    %5621 = vmatpush1.bf16.msra.mxu0 0
    %5622 = vmatprep.subr.bf16.mxu0 0
    %5623 = vmatpush1.bf16.msra.mxu0 0
    %5624 = vmatprep.subr.bf16.mxu0 0
    %5625 = vmatpush1.bf16.msra.mxu0 0
    %5626 = vmatprep.subr.bf16.mxu0 0
    %5627 = vmatpush1.bf16.msra.mxu0 0
    %5628 = vmatprep.subr.bf16.mxu0 0
    %5629 = vmatpush1.bf16.msra.mxu0 0
    %5630 = vmatprep.subr.bf16.mxu0 0
    %5631 = vmatpush1.bf16.msra.mxu0 0
    %5632 = vmatprep.subr.bf16.mxu0 0
    %5633 = vmatpush1.bf16.msra.mxu0 0
    %5634 = vmatprep.subr.bf16.mxu0 0
    %5635 = vmatpush1.bf16.msra.mxu0 0
    %5636 = vmatprep.subr.bf16.mxu0 0
    %5637 = vmatpush1.bf16.msra.mxu0 0
    %5638 = vmatprep.subr.bf16.mxu0 0
    %5639 = vmatpush1.bf16.msra.mxu0 0
    %5640 = vmatprep.subr.bf16.mxu0 0
    %5641 = vmatpush1.bf16.msra.mxu0 0
    %5642 = vmatprep.subr.bf16.mxu0 0
    %5643 = vmatpush1.bf16.msra.mxu0 0
    %5644 = vmatprep.subr.bf16.mxu0 0
    %5645 = vmatpush1.bf16.msra.mxu0 0
    %5646 = vmatprep.subr.bf16.mxu0 0
    %5647 = vmatpush1.bf16.msra.mxu0 0
    %5648 = vmatprep.mubr.bf16.mxu0 0
    %5649 = vmatmul.mubr.bf16.gmra.mrb[0].mxu0 %v5614
    %v5650 = vpop.f32.mrb[0].mxu0
    %v5651 = vadd.f32 %v5599, %v5650
    %v5652 = vpop.f32.mrb[0].mxu0
    %v5653 = vpop.f32.mrb[0].mxu0
    %v5654 = vadd.f32 %v5599, %v5653
    %v5655 = vpop.f32.mrb[0].mxu0
    %5656 = vdwg.mxu0
    %5657 = vst [vmem:[#allocation13] sm:$0xff] %v5651
    %5658 = vst [vmem:[#allocation13 + $0x8] sm:$0xff] %v5654
    // Predicated region
    $region110: #{decoder_forward.1} parent=1 // pred_check
      _
    $region111: #{decoder_forward.1} parent=1 // pred_check_branch
      %5660 = sbr.rel (0) target = $region113
    $region112: #{decoder_forward.1} parent=1 // pred_region
      %s5662 = ssub.s32 256, 256
      %5663 = vsyncadd [#allocation4], %s5662
      %s5664 = sshll.u32 [#allocation13], 4
      %s5665 = int_to_ptr.vmem [resolvable:$true] %s5664
      %5670 = dma.vmem_to_hbm [thread:$0]  %s5665, 256, %s21, [#allocation4], 128, 128, 8
    $region113: #{decoder_forward.1} parent=1 // pred_fallthru
      _
    // Predicated region
    $region114: #{decoder_forward.1} parent=1 // pred_check
      _
    $region115: #{decoder_forward.1} parent=1 // pred_check_branch
      %5672 = sbr.rel (0) target = $region117
    $region116: #{decoder_forward.1} parent=1 // pred_region
      %5673 = dma.done [#allocation4], 256
    $region117: #{decoder_forward.1} parent=1 // pred_fallthru
      _
    %5674 = vsyncpa [#allocation3], 1
    %5675 = vsyncpa [#allocation6], 1
    %5676 = vsyncpa [#allocation9], 1
    %5677 = vsyncpa [#allocation12], 1
    %5678 = vsyncpa [#allocation4], 1

</llo_original>
